<compile_context>
chip_gen: v6e
topology: v6e:2x2x1
jax: 0.10.0
libtpu: 0.0.40
codegen_flags: <defaults>
</compile_context>

<pallas_src>
import functools

import jax
import jax.numpy as jnp
from jax import lax
from jax.experimental import pallas as pl
from jax.experimental.pallas import tpu as pltpu

BN_EPS = 1e-5


# ----------------------------- Pallas kernels --------------------------------

def _block_s1_kernel(x_ref, s_ref, w1_ref, b1_ref, wd_ref, bd_ref, w2_ref, b2_ref,
                     o_ref, y1p_ref, *, H, W, C, mid):
    """Fused stride-1 block: shuffle + pw1/BN/ReLU + dw3x3/BN + pw2/BN/ReLU + concat."""
    Hp, Wp = H + 2, W + 2
    xpad = x_ref[0]                                          # (Hp, Wp, C) f32

    # pw1 + BN + ReLU (channel shuffle folded into w1 rows), bf16 on the MXU.
    y1 = jnp.dot(xpad.reshape(Hp * Wp, C).astype(jnp.bfloat16), w1_ref[...],
                 preferred_element_type=jnp.float32) + b1_ref[...]
    y1 = jnp.maximum(y1, 0.0).reshape(Hp, Wp, mid)
    # The 3x3 conv zero-pads its *input*, so force the pad ring of y1 to zero.
    ri = lax.broadcasted_iota(jnp.int32, (Hp, Wp, 1), 0)
    ci = lax.broadcasted_iota(jnp.int32, (Hp, Wp, 1), 1)
    inside = (ri >= 1) & (ri <= H) & (ci >= 1) & (ci <= W)
    y1p_ref[...] = jnp.where(inside, y1, 0.0)                # VMEM-resident intermediate

    # Even-channel passthrough of the shuffle (exact f32 selection matmul).
    x2d = xpad[1:H + 1, 1:W + 1, :].reshape(H * W, C)
    keep = jnp.dot(x2d, s_ref[...], preferred_element_type=jnp.float32)

    # Depthwise 3x3 (stride 1) + BN (scale folded into taps), f32 on the VPU.
    wd = wd_ref[...]                                         # (9, mid)
    acc = jnp.zeros((H, W, mid), jnp.float32)
    for t in range(9):
        ky, kx = t // 3, t % 3
        acc = acc + y1p_ref[ky:ky + H, kx:kx + W, :] * wd[t].reshape(1, 1, mid)
    acc = acc + bd_ref[...].reshape(1, 1, mid)

    # pw2 + BN + ReLU.
    y2 = jnp.dot(acc.reshape(H * W, mid).astype(jnp.bfloat16), w2_ref[...],
                 preferred_element_type=jnp.float32) + b2_ref[...]
    y2 = jnp.maximum(y2, 0.0)

    o_ref[0] = jnp.concatenate([keep, y2], axis=-1)          # single wide store


def _block_s2_kernel(p00_ref, p01_ref, p10_ref, p11_ref,
                     w1_ref, b1_ref, wdM_ref, bdM_ref, w2_ref, b2_ref,
                     wdm_ref, bdm_ref, wm_ref, bm_ref,
                     o_ref, y00_ref, y01_ref, y10_ref, y11_ref,
                     *, Ho, Wo, Cin, mid):
    """Fused stride-2 block: minor + major branches share one input read."""
    R, Q = Ho + 1, Wo + 1
    x_refs = (p00_ref, p01_ref, p10_ref, p11_ref)
    y_refs = (y00_ref, y01_ref, y10_ref, y11_ref)

    ri = lax.broadcasted_iota(jnp.int32, (R, Q, 1), 0)
    ci = lax.broadcasted_iota(jnp.int32, (R, Q, 1), 1)

    # Phase values of the zero-padded input (shared by both branches).
    xv = [x_refs[i][0] for i in range(4)]                    # each (R, Q, Cin) f32

    # Major pw1 + BN + ReLU on every phase; pad-ring positions forced to zero.
    for i, (p, q) in enumerate(((0, 0), (0, 1), (1, 0), (1, 1))):
        y = jnp.dot(xv[i].reshape(R * Q, Cin).astype(jnp.bfloat16), w1_ref[...],
                    preferred_element_type=jnp.float32) + b1_ref[...]
        y = jnp.maximum(y, 0.0).reshape(R, Q, mid)
        pad_row = 0 if p == 0 else Ho
        pad_col = 0 if q == 0 else Wo
        y_refs[i][...] = jnp.where((ri != pad_row) & (ci != pad_col), y, 0.0)

    # Depthwise 3x3 stride 2 for both branches via unit-stride phase windows.
    wdM = wdM_ref[...]                                       # (9, mid)
    wdm = wdm_ref[...]                                       # (9, Cin)
    accM = jnp.zeros((Ho, Wo, mid), jnp.float32)
    accm = jnp.zeros((Ho, Wo, Cin), jnp.float32)
    for t in range(9):
        ky, kx = t // 3, t % 3
        i = (ky % 2) * 2 + (kx % 2)
        ro, co = ky // 2, kx // 2
        accM = accM + y_refs[i][ro:ro + Ho, co:co + Wo, :] * wdM[t].reshape(1, 1, mid)
        accm = accm + xv[i][ro:ro + Ho, co:co + Wo, :] * wdm[t].reshape(1, 1, Cin)
    accM = (accM + bdM_ref[...].reshape(1, 1, mid)).reshape(Ho * Wo, mid)
    accm = (accm + bdm_ref[...].reshape(1, 1, Cin)).reshape(Ho * Wo, Cin)

    # Pointwise convs + BN + ReLU (bf16 MXU, f32 accumulate).
    major = jnp.dot(accM.astype(jnp.bfloat16), w2_ref[...],
                    preferred_element_type=jnp.float32) + b2_ref[...]
    major = jnp.maximum(major, 0.0)
    minor = jnp.dot(accm.astype(jnp.bfloat16), wm_ref[...],
                    preferred_element_type=jnp.float32) + bm_ref[...]
    minor = jnp.maximum(minor, 0.0)

    o_ref[0] = jnp.concatenate([minor, major], axis=-1)      # torch concat order


# ----------------------------- Host-side helpers ------------------------------

def _bcast_spec(shape):
    zeros = (0,) * len(shape)
    return pl.BlockSpec(shape, lambda n: zeros)


def _fold_bn(bn):
    scale = bn['gamma'] / jnp.sqrt(bn['var'] + BN_EPS)
    bias = bn['beta'] - bn['mean'] * scale
    return scale, bias


def _prep_pw(w, bn):
    scale, bias = _fold_bn(bn)
    return (w * scale[None, :]).astype(jnp.bfloat16), bias[None, :].astype(jnp.float32)


def _prep_dw(w, bn):
    scale, bias = _fold_bn(bn)
    wf = (w * scale[None, None, :]).reshape(9, -1).astype(jnp.float32)
    return wf, bias[None, :].astype(jnp.float32)


def shufflenet_block_forward(x_nchw, params):
    stride = params['stride']
    x = jnp.transpose(x_nchw, (0, 2, 3, 1)).astype(jnp.float32)    # NCHW -> NHWC
    N, H, W, Cin = x.shape
    mj = params['major']
    mid = mj['w1'].shape[1]
    out_major = mj['w2'].shape[1]

    w1, b1 = _prep_pw(mj['w1'], mj['bn1'])
    wdM, bdM = _prep_dw(mj['wd'], mj['bnd'])
    w2, b2 = _prep_pw(mj['w2'], mj['bn2'])

    compiler_params = pltpu.CompilerParams(
        dimension_semantics=("parallel",),
        vmem_limit_bytes=32 * 1024 * 1024)

    if stride == 1:
        assert Cin % 4 == 0, "channel shuffle requires C % 4 == 0"
        half = Cin // 2
        # Fold the odd-channel selection of the shuffle into pw1's rows.
        w1s = jnp.zeros((Cin, mid), w1.dtype).at[1::2, :].set(w1)
        # Even-channel passthrough as an exact 0/1 selection matrix (f32 MXU).
        sel = jnp.zeros((Cin, half), jnp.float32)
        sel = sel.at[jnp.arange(0, Cin, 2), jnp.arange(half)].set(1.0)

        xpad = jnp.pad(x, ((0, 0), (1, 1), (1, 1), (0, 0)))
        cout = half + out_major
        kernel = functools.partial(_block_s1_kernel, H=H, W=W, C=Cin, mid=mid)
        flops = N * (2 * (H + 2) * (W + 2) * Cin * mid + 2 * H * W * Cin * half
                     + 18 * H * W * mid + 2 * H * W * mid * out_major)
        bytes_accessed = 4 * (xpad.size + N * H * W * cout) + 2 * (w1s.size + w2.size)
        out = pl.pallas_call(
            kernel,
            out_shape=jax.ShapeDtypeStruct((N, H * W, cout), jnp.float32),
            grid=(N,),
            in_specs=[pl.BlockSpec((1, H + 2, W + 2, Cin), lambda n: (n, 0, 0, 0)),
                      _bcast_spec(sel.shape), _bcast_spec(w1s.shape),
                      _bcast_spec(b1.shape), _bcast_spec(wdM.shape),
                      _bcast_spec(bdM.shape), _bcast_spec(w2.shape),
                      _bcast_spec(b2.shape)],
            out_specs=pl.BlockSpec((1, H * W, cout), lambda n: (n, 0, 0)),
            scratch_shapes=[pltpu.VMEM((H + 2, W + 2, mid), jnp.float32)],
            compiler_params=compiler_params,
            cost_estimate=pl.CostEstimate(flops=int(flops), transcendentals=0,
                                          bytes_accessed=int(bytes_accessed)),
        )(xpad, sel, w1s, b1, wdM, bdM, w2, b2)
        Ho, Wo = H, W
    else:
        assert H % 2 == 0 and W % 2 == 0, "stride-2 path assumes even H, W"
        # TODO(synk): odd spatial sizes need one extra pad row/col for the phases.
        Ho, Wo = H // 2, W // 2
        mn = params['minor']
        wdm, bdm = _prep_dw(mn['wd'], mn['bnd'])
        wm, bm = _prep_pw(mn['w'], mn['bn'])

        xpad = jnp.pad(x, ((0, 0), (1, 1), (1, 1), (0, 0)))
        # Four spatial phases of the padded input: every in-kernel read becomes a
        # unit-stride window (no strided lane/sublane access, no 9x im2col).
        phases = [xpad[:, p::2, q::2, :] for p in (0, 1) for q in (0, 1)]
        cout = Cin + out_major
        kernel = functools.partial(_block_s2_kernel, Ho=Ho, Wo=Wo, Cin=Cin, mid=mid)
        flops = N * (8 * (Ho + 1) * (Wo + 1) * Cin * mid
                     + 18 * Ho * Wo * (mid + Cin)
                     + 2 * Ho * Wo * (mid * out_major + Cin * Cin))
        bytes_accessed = (4 * (4 * N * (Ho + 1) * (Wo + 1) * Cin + N * Ho * Wo * cout)
                          + 2 * (w1.size + w2.size + wm.size))
        phase_spec = pl.BlockSpec((1, Ho + 1, Wo + 1, Cin), lambda n: (n, 0, 0, 0))
        out = pl.pallas_call(
            kernel,
            out_shape=jax.ShapeDtypeStruct((N, Ho * Wo, cout), jnp.float32),
            grid=(N,),
            in_specs=[phase_spec, phase_spec, phase_spec, phase_spec,
                      _bcast_spec(w1.shape), _bcast_spec(b1.shape),
                      _bcast_spec(wdM.shape), _bcast_spec(bdM.shape),
                      _bcast_spec(w2.shape), _bcast_spec(b2.shape),
                      _bcast_spec(wdm.shape), _bcast_spec(bdm.shape),
                      _bcast_spec(wm.shape), _bcast_spec(bm.shape)],
            out_specs=pl.BlockSpec((1, Ho * Wo, cout), lambda n: (n, 0, 0)),
            scratch_shapes=[pltpu.VMEM((Ho + 1, Wo + 1, mid), jnp.float32)
                            for _ in range(4)],
            compiler_params=compiler_params,
            cost_estimate=pl.CostEstimate(flops=int(flops), transcendentals=0,
                                          bytes_accessed=int(bytes_accessed)),
        )(*phases, w1, b1, wdM, bdM, w2, b2, wdm, bdm, wm, bm)

    out = out.reshape(N, Ho, Wo, -1)
    return jnp.transpose(out, (0, 3, 1, 2))                  # back to NCHW


# ----------------------------- Parameters ------------------------------------

def init_block_params(key, block_in, block_out, stride):
    assert stride in (1, 2)
    in_ch = block_in if stride == 2 else block_in // 2
    out_ch = block_out - in_ch
    mid = block_out // 2
    ks = jax.random.split(key, 10)

    def conv1x1(k, cin, cout):
        return (1.0 / cin) * jax.random.normal(k, (cin, cout), jnp.float32)

    def dw3x3(k, c):
        return 0.5 * jax.random.normal(k, (3, 3, c), jnp.float32)

    def bn(k, c):
        k1, k2, k3, k4 = jax.random.split(k, 4)
        return dict(gamma=0.5 + jax.random.uniform(k1, (c,), jnp.float32),
                    beta=0.2 * jax.random.normal(k2, (c,), jnp.float32),
                    mean=0.2 * jax.random.normal(k3, (c,), jnp.float32),
                    var=0.5 + jax.random.uniform(k4, (c,), jnp.float32))

    params = dict(
        stride=stride, block_in=block_in, block_out=block_out,
        major=dict(w1=conv1x1(ks[0], in_ch, mid), bn1=bn(ks[1], mid),
                   wd=dw3x3(ks[2], mid), bnd=bn(ks[3], mid),
                   w2=conv1x1(ks[4], mid, out_ch), bn2=bn(ks[5], out_ch)))
    if stride == 2:
        params['minor'] = dict(wd=dw3x3(ks[6], in_ch), bnd=bn(ks[7], in_ch),
                               w=conv1x1(ks[8], in_ch, in_ch), bn=bn(ks[9], in_ch))
    return params


# ----------------------------- Pure-JAX reference ------------------------------

def _ref_bn(x, bn):
    return (x - bn['mean']) / jnp.sqrt(bn['var'] + BN_EPS) * bn['gamma'] + bn['beta']


def _ref_pw(x, w):
    return jnp.einsum('nhwc,cd->nhwd', x, w)


def _ref_dw(x, w, stride):
    N, H, W, C = x.shape
    Ho = (H - 1) // stride + 1
    Wo = (W - 1) // stride + 1
    xp = jnp.pad(x, ((0, 0), (1, 1), (1, 1), (0, 0)))
    out = jnp.zeros((N, Ho, Wo, C), jnp.float32)
    for ky in range(3):
        for kx in range(3):
            sl = xp[:, ky:ky + (Ho - 1) * stride + 1:stride,
                    kx:kx + (Wo - 1) * stride + 1:stride, :]
            out = out + sl * w[ky, kx]
    return out


def ref_block_forward(x_nchw, params):
    x = jnp.transpose(x_nchw, (0, 2, 3, 1)).astype(jnp.float32)
    mj = params['major']

    def major(z, stride):
        z = jax.nn.relu(_ref_bn(_ref_pw(z, mj['w1']), mj['bn1']))
        z = _ref_bn(_ref_dw(z, mj['wd'], stride), mj['bnd'])
        return jax.nn.relu(_ref_bn(_ref_pw(z, mj['w2']), mj['bn2']))

    if params['stride'] == 1:
        in1, in2 = x[..., 0::2], x[..., 1::2]      # torch shuffle: even keep, odd -> major
        y = jnp.concatenate([in1, major(in2, 1)], axis=-1)
    else:
        mn = params['minor']
        z = _ref_bn(_ref_dw(x, mn['wd'], 2), mn['bnd'])
        z = jax.nn.relu(_ref_bn(_ref_pw(z, mn['w']), mn['bn']))
        y = jnp.concatenate([z, major(x, 2)], axis=-1)
    return jnp.transpose(y, (0, 3, 1, 2))


def _rel_err(a, b):
    return float(jnp.linalg.norm((a - b).ravel()) /
                 (jnp.linalg.norm(b.ravel()) + 1e-9))


# ----------------------------- Main --------------------------------------------

if __name__ == "__main__":
    key = jax.random.PRNGKey(0)
    kx2, kp2, kx1, kp1 = jax.random.split(key, 4)

    # stride-2 (downsampling) block: 32 -> 64 channels, 16x16 -> 8x8
    x_s2 = jax.random.normal(kx2, (2, 32, 16, 16), jnp.float32)
    p_s2 = init_block_params(kp2, 32, 64, stride=2)
    f_s2 = jax.jit(lambda inp: shufflenet_block_forward(inp, p_s2))
    o_s2 = jax.block_until_ready(f_s2(x_s2))
    assert o_s2.shape == (2, 64, 8, 8), o_s2.shape
    err2 = _rel_err(o_s2, ref_block_forward(x_s2, p_s2))
    assert err2 < 3e-2, f"stride-2 mismatch: rel err {err2}"

    # stride-1 block: 64 -> 64 channels, 8x8 spatial
    x_s1 = jax.random.normal(kx1, (2, 64, 8, 8), jnp.float32)
    p_s1 = init_block_params(kp1, 64, 64, stride=1)
    f_s1 = jax.jit(lambda inp: shufflenet_block_forward(inp, p_s1))
    o_s1 = jax.block_until_ready(f_s1(x_s1))
    assert o_s1.shape == (2, 64, 8, 8), o_s1.shape
    err1 = _rel_err(o_s1, ref_block_forward(x_s1, p_s1))
    assert err1 < 3e-2, f"stride-1 mismatch: rel err {err1}"

    print("KERNEL_OK")
</pallas_src>

<mosaic_0001>
module attributes {stable_mosaic.version = 11 : i64} {
  func.func @_block_s2_kernel(%arg0: i32, %arg1: memref<1x9x9x32xf32, #tpu.memory_space<vmem>>, %arg2: memref<1x9x9x32xf32, #tpu.memory_space<vmem>>, %arg3: memref<1x9x9x32xf32, #tpu.memory_space<vmem>>, %arg4: memref<1x9x9x32xf32, #tpu.memory_space<vmem>>, %arg5: memref<32x32xbf16, #tpu.memory_space<vmem>>, %arg6: memref<1x32xf32, #tpu.memory_space<vmem>>, %arg7: memref<9x32xf32, #tpu.memory_space<vmem>>, %arg8: memref<1x32xf32, #tpu.memory_space<vmem>>, %arg9: memref<32x32xbf16, #tpu.memory_space<vmem>>, %arg10: memref<1x32xf32, #tpu.memory_space<vmem>>, %arg11: memref<9x32xf32, #tpu.memory_space<vmem>>, %arg12: memref<1x32xf32, #tpu.memory_space<vmem>>, %arg13: memref<32x32xbf16, #tpu.memory_space<vmem>>, %arg14: memref<1x32xf32, #tpu.memory_space<vmem>>, %arg15: memref<1x64x64xf32, #tpu.memory_space<vmem>>, %arg16: memref<9x9x32xf32, #tpu.memory_space<vmem>>, %arg17: memref<9x9x32xf32, #tpu.memory_space<vmem>>, %arg18: memref<9x9x32xf32, #tpu.memory_space<vmem>>, %arg19: memref<9x9x32xf32, #tpu.memory_space<vmem>>) attributes {dimension_semantics = [#tpu.dimension_semantics<parallel>], iteration_bounds = array<i64: 2>, scalar_prefetch = 0 : i64, scratch_operands = 4 : i64, tpu.core_type = #tpu.core_type<tc>, window_params = [{transform_indices = @transform_0, window_bounds = array<i64: 1, 9, 9, 32>}, {transform_indices = @transform_1, window_bounds = array<i64: 1, 9, 9, 32>}, {transform_indices = @transform_2, window_bounds = array<i64: 1, 9, 9, 32>}, {transform_indices = @transform_3, window_bounds = array<i64: 1, 9, 9, 32>}, {pipeline_mode = #tpu.pipeline_mode<synchronous>, transform_indices = @transform_4, window_bounds = array<i64: 32, 32>}, {pipeline_mode = #tpu.pipeline_mode<synchronous>, transform_indices = @transform_5, window_bounds = array<i64: 1, 32>}, {pipeline_mode = #tpu.pipeline_mode<synchronous>, transform_indices = @transform_6, window_bounds = array<i64: 9, 32>}, {pipeline_mode = #tpu.pipeline_mode<synchronous>, transform_indices = @transform_7, window_bounds = array<i64: 1, 32>}, {pipeline_mode = #tpu.pipeline_mode<synchronous>, transform_indices = @transform_8, window_bounds = array<i64: 32, 32>}, {pipeline_mode = #tpu.pipeline_mode<synchronous>, transform_indices = @transform_9, window_bounds = array<i64: 1, 32>}, {pipeline_mode = #tpu.pipeline_mode<synchronous>, transform_indices = @transform_10, window_bounds = array<i64: 9, 32>}, {pipeline_mode = #tpu.pipeline_mode<synchronous>, transform_indices = @transform_11, window_bounds = array<i64: 1, 32>}, {pipeline_mode = #tpu.pipeline_mode<synchronous>, transform_indices = @transform_12, window_bounds = array<i64: 32, 32>}, {pipeline_mode = #tpu.pipeline_mode<synchronous>, transform_indices = @transform_13, window_bounds = array<i64: 1, 32>}, {transform_indices = @transform_14, window_bounds = array<i64: 1, 64, 64>}]} {
    %0 = tpu.iota {dimensions = array<i32: 0>} : vector<9x9x1xi32>
    %1 = tpu.iota {dimensions = array<i32: 1>} : vector<9x9x1xi32>
    %c0 = arith.constant 0 : index
    %c0_0 = arith.constant 0 : index
    %c0_1 = arith.constant 0 : index
    %c0_2 = arith.constant 0 : index
    %2 = vector.load %arg1[%c0, %c0_0, %c0_1, %c0_2] : memref<1x9x9x32xf32, #tpu.memory_space<vmem>>, vector<1x9x9x32xf32>
    %3 = vector.shape_cast %2 : vector<1x9x9x32xf32> to vector<9x9x32xf32>
    %c0_3 = arith.constant 0 : index
    %c0_4 = arith.constant 0 : index
    %c0_5 = arith.constant 0 : index
    %c0_6 = arith.constant 0 : index
    %4 = vector.load %arg2[%c0_3, %c0_4, %c0_5, %c0_6] : memref<1x9x9x32xf32, #tpu.memory_space<vmem>>, vector<1x9x9x32xf32>
    %5 = vector.shape_cast %4 : vector<1x9x9x32xf32> to vector<9x9x32xf32>
    %c0_7 = arith.constant 0 : index
    %c0_8 = arith.constant 0 : index
    %c0_9 = arith.constant 0 : index
    %c0_10 = arith.constant 0 : index
    %6 = vector.load %arg3[%c0_7, %c0_8, %c0_9, %c0_10] : memref<1x9x9x32xf32, #tpu.memory_space<vmem>>, vector<1x9x9x32xf32>
    %7 = vector.shape_cast %6 : vector<1x9x9x32xf32> to vector<9x9x32xf32>
    %c0_11 = arith.constant 0 : index
    %c0_12 = arith.constant 0 : index
    %c0_13 = arith.constant 0 : index
    %c0_14 = arith.constant 0 : index
    %8 = vector.load %arg4[%c0_11, %c0_12, %c0_13, %c0_14] : memref<1x9x9x32xf32, #tpu.memory_space<vmem>>, vector<1x9x9x32xf32>
    %9 = vector.shape_cast %8 : vector<1x9x9x32xf32> to vector<9x9x32xf32>
    %10 = vector.shape_cast %3 : vector<9x9x32xf32> to vector<81x32xf32>
    %11 = arith.truncf %10 : vector<81x32xf32> to vector<81x32xbf16>
    %c0_15 = arith.constant 0 : index
    %c0_16 = arith.constant 0 : index
    %12 = vector.load %arg5[%c0_15, %c0_16] : memref<32x32xbf16, #tpu.memory_space<vmem>>, vector<32x32xbf16>
    %cst = arith.constant dense<0.000000e+00> : vector<81x32xf32>
    %13 = tpu.matmul %11, %12, %cst {dimension_numbers = #tpu.dot_dimension_numbers<[1], [0], [0], [1], [0, 0, 1, 1], [], []>} : vector<81x32xbf16>, vector<32x32xbf16>, vector<81x32xf32> -> vector<81x32xf32>
    %c0_17 = arith.constant 0 : index
    %c0_18 = arith.constant 0 : index
    %14 = vector.load %arg6[%c0_17, %c0_18] : memref<1x32xf32, #tpu.memory_space<vmem>>, vector<1x32xf32>
    %15 = vector.broadcast %14 : vector<1x32xf32> to vector<81x32xf32>
    %16 = arith.addf %13, %15 : vector<81x32xf32>
    %cst_19 = arith.constant 0.000000e+00 : f32
    %17 = vector.broadcast %cst_19 : f32 to vector<81x32xf32>
    %18 = arith.maximumf %16, %17 : vector<81x32xf32>
    %19 = vector.shape_cast %18 : vector<81x32xf32> to vector<9x9x32xf32>
    %c0_i32 = arith.constant 0 : i32
    %20 = vector.broadcast %c0_i32 : i32 to vector<9x9x1xi32>
    %21 = arith.cmpi ne, %0, %20 : vector<9x9x1xi32>
    %c0_i32_20 = arith.constant 0 : i32
    %22 = vector.broadcast %c0_i32_20 : i32 to vector<9x9x1xi32>
    %23 = arith.cmpi ne, %1, %22 : vector<9x9x1xi32>
    %24 = arith.andi %21, %23 : vector<9x9x1xi1>
    %cst_21 = arith.constant 0.000000e+00 : f32
    %25 = vector.shape_cast %24 : vector<9x9x1xi1> to vector<9x9x1xi1>
    %26 = vector.broadcast %25 : vector<9x9x1xi1> to vector<9x9x32xi1>
    %27 = vector.broadcast %cst_21 : f32 to vector<9x9x32xf32>
    %28 = arith.select %26, %19, %27 : vector<9x9x32xi1>, vector<9x9x32xf32>
    %c0_22 = arith.constant 0 : index
    %c0_23 = arith.constant 0 : index
    %c0_24 = arith.constant 0 : index
    %29 = vector.load %arg16[%c0_22, %c0_23, %c0_24] : memref<9x9x32xf32, #tpu.memory_space<vmem>>, vector<9x9x32xf32>
    tpu.vector_store %arg16[%c0_22, %c0_23, %c0_24], %28 {strides = array<i32>} : memref<9x9x32xf32, #tpu.memory_space<vmem>>, vector<9x9x32xf32>,
    %30 = vector.shape_cast %5 : vector<9x9x32xf32> to vector<81x32xf32>
    %31 = arith.truncf %30 : vector<81x32xf32> to vector<81x32xbf16>
    %c0_25 = arith.constant 0 : index
    %c0_26 = arith.constant 0 : index
    %32 = vector.load %arg5[%c0_25, %c0_26] : memref<32x32xbf16, #tpu.memory_space<vmem>>, vector<32x32xbf16>
    %cst_27 = arith.constant dense<0.000000e+00> : vector<81x32xf32>
    %33 = tpu.matmul %31, %32, %cst_27 {dimension_numbers = #tpu.dot_dimension_numbers<[1], [0], [0], [1], [0, 0, 1, 1], [], []>} : vector<81x32xbf16>, vector<32x32xbf16>, vector<81x32xf32> -> vector<81x32xf32>
    %c0_28 = arith.constant 0 : index
    %c0_29 = arith.constant 0 : index
    %34 = vector.load %arg6[%c0_28, %c0_29] : memref<1x32xf32, #tpu.memory_space<vmem>>, vector<1x32xf32>
    %35 = vector.broadcast %34 : vector<1x32xf32> to vector<81x32xf32>
    %36 = arith.addf %33, %35 : vector<81x32xf32>
    %cst_30 = arith.constant 0.000000e+00 : f32
    %37 = vector.broadcast %cst_30 : f32 to vector<81x32xf32>
    %38 = arith.maximumf %36, %37 : vector<81x32xf32>
    %39 = vector.shape_cast %38 : vector<81x32xf32> to vector<9x9x32xf32>
    %c0_i32_31 = arith.constant 0 : i32
    %40 = vector.broadcast %c0_i32_31 : i32 to vector<9x9x1xi32>
    %41 = arith.cmpi ne, %0, %40 : vector<9x9x1xi32>
    %c8_i32 = arith.constant 8 : i32
    %42 = vector.broadcast %c8_i32 : i32 to vector<9x9x1xi32>
    %43 = arith.cmpi ne, %1, %42 : vector<9x9x1xi32>
    %44 = arith.andi %41, %43 : vector<9x9x1xi1>
    %cst_32 = arith.constant 0.000000e+00 : f32
    %45 = vector.shape_cast %44 : vector<9x9x1xi1> to vector<9x9x1xi1>
    %46 = vector.broadcast %45 : vector<9x9x1xi1> to vector<9x9x32xi1>
    %47 = vector.broadcast %cst_32 : f32 to vector<9x9x32xf32>
    %48 = arith.select %46, %39, %47 : vector<9x9x32xi1>, vector<9x9x32xf32>
    %c0_33 = arith.constant 0 : index
    %c0_34 = arith.constant 0 : index
    %c0_35 = arith.constant 0 : index
    %49 = vector.load %arg17[%c0_33, %c0_34, %c0_35] : memref<9x9x32xf32, #tpu.memory_space<vmem>>, vector<9x9x32xf32>
    tpu.vector_store %arg17[%c0_33, %c0_34, %c0_35], %48 {strides = array<i32>} : memref<9x9x32xf32, #tpu.memory_space<vmem>>, vector<9x9x32xf32>,
    %50 = vector.shape_cast %7 : vector<9x9x32xf32> to vector<81x32xf32>
    %51 = arith.truncf %50 : vector<81x32xf32> to vector<81x32xbf16>
    %c0_36 = arith.constant 0 : index
    %c0_37 = arith.constant 0 : index
    %52 = vector.load %arg5[%c0_36, %c0_37] : memref<32x32xbf16, #tpu.memory_space<vmem>>, vector<32x32xbf16>
    %cst_38 = arith.constant dense<0.000000e+00> : vector<81x32xf32>
    %53 = tpu.matmul %51, %52, %cst_38 {dimension_numbers = #tpu.dot_dimension_numbers<[1], [0], [0], [1], [0, 0, 1, 1], [], []>} : vector<81x32xbf16>, vector<32x32xbf16>, vector<81x32xf32> -> vector<81x32xf32>
    %c0_39 = arith.constant 0 : index
    %c0_40 = arith.constant 0 : index
    %54 = vector.load %arg6[%c0_39, %c0_40] : memref<1x32xf32, #tpu.memory_space<vmem>>, vector<1x32xf32>
    %55 = vector.broadcast %54 : vector<1x32xf32> to vector<81x32xf32>
    %56 = arith.addf %53, %55 : vector<81x32xf32>
    %cst_41 = arith.constant 0.000000e+00 : f32
    %57 = vector.broadcast %cst_41 : f32 to vector<81x32xf32>
    %58 = arith.maximumf %56, %57 : vector<81x32xf32>
    %59 = vector.shape_cast %58 : vector<81x32xf32> to vector<9x9x32xf32>
    %c8_i32_42 = arith.constant 8 : i32
    %60 = vector.broadcast %c8_i32_42 : i32 to vector<9x9x1xi32>
    %61 = arith.cmpi ne, %0, %60 : vector<9x9x1xi32>
    %c0_i32_43 = arith.constant 0 : i32
    %62 = vector.broadcast %c0_i32_43 : i32 to vector<9x9x1xi32>
    %63 = arith.cmpi ne, %1, %62 : vector<9x9x1xi32>
    %64 = arith.andi %61, %63 : vector<9x9x1xi1>
    %cst_44 = arith.constant 0.000000e+00 : f32
    %65 = vector.shape_cast %64 : vector<9x9x1xi1> to vector<9x9x1xi1>
    %66 = vector.broadcast %65 : vector<9x9x1xi1> to vector<9x9x32xi1>
    %67 = vector.broadcast %cst_44 : f32 to vector<9x9x32xf32>
    %68 = arith.select %66, %59, %67 : vector<9x9x32xi1>, vector<9x9x32xf32>
    %c0_45 = arith.constant 0 : index
    %c0_46 = arith.constant 0 : index
    %c0_47 = arith.constant 0 : index
    %69 = vector.load %arg18[%c0_45, %c0_46, %c0_47] : memref<9x9x32xf32, #tpu.memory_space<vmem>>, vector<9x9x32xf32>
    tpu.vector_store %arg18[%c0_45, %c0_46, %c0_47], %68 {strides = array<i32>} : memref<9x9x32xf32, #tpu.memory_space<vmem>>, vector<9x9x32xf32>,
    %70 = vector.shape_cast %9 : vector<9x9x32xf32> to vector<81x32xf32>
    %71 = arith.truncf %70 : vector<81x32xf32> to vector<81x32xbf16>
    %c0_48 = arith.constant 0 : index
    %c0_49 = arith.constant 0 : index
    %72 = vector.load %arg5[%c0_48, %c0_49] : memref<32x32xbf16, #tpu.memory_space<vmem>>, vector<32x32xbf16>
    %cst_50 = arith.constant dense<0.000000e+00> : vector<81x32xf32>
    %73 = tpu.matmul %71, %72, %cst_50 {dimension_numbers = #tpu.dot_dimension_numbers<[1], [0], [0], [1], [0, 0, 1, 1], [], []>} : vector<81x32xbf16>, vector<32x32xbf16>, vector<81x32xf32> -> vector<81x32xf32>
    %c0_51 = arith.constant 0 : index
    %c0_52 = arith.constant 0 : index
    %74 = vector.load %arg6[%c0_51, %c0_52] : memref<1x32xf32, #tpu.memory_space<vmem>>, vector<1x32xf32>
    %75 = vector.broadcast %74 : vector<1x32xf32> to vector<81x32xf32>
    %76 = arith.addf %73, %75 : vector<81x32xf32>
    %cst_53 = arith.constant 0.000000e+00 : f32
    %77 = vector.broadcast %cst_53 : f32 to vector<81x32xf32>
    %78 = arith.maximumf %76, %77 : vector<81x32xf32>
    %79 = vector.shape_cast %78 : vector<81x32xf32> to vector<9x9x32xf32>
    %c8_i32_54 = arith.constant 8 : i32
    %80 = vector.broadcast %c8_i32_54 : i32 to vector<9x9x1xi32>
    %81 = arith.cmpi ne, %0, %80 : vector<9x9x1xi32>
    %c8_i32_55 = arith.constant 8 : i32
    %82 = vector.broadcast %c8_i32_55 : i32 to vector<9x9x1xi32>
    %83 = arith.cmpi ne, %1, %82 : vector<9x9x1xi32>
    %84 = arith.andi %81, %83 : vector<9x9x1xi1>
    %cst_56 = arith.constant 0.000000e+00 : f32
    %85 = vector.shape_cast %84 : vector<9x9x1xi1> to vector<9x9x1xi1>
    %86 = vector.broadcast %85 : vector<9x9x1xi1> to vector<9x9x32xi1>
    %87 = vector.broadcast %cst_56 : f32 to vector<9x9x32xf32>
    %88 = arith.select %86, %79, %87 : vector<9x9x32xi1>, vector<9x9x32xf32>
    %c0_57 = arith.constant 0 : index
    %c0_58 = arith.constant 0 : index
    %c0_59 = arith.constant 0 : index
    %89 = vector.load %arg19[%c0_57, %c0_58, %c0_59] : memref<9x9x32xf32, #tpu.memory_space<vmem>>, vector<9x9x32xf32>
    tpu.vector_store %arg19[%c0_57, %c0_58, %c0_59], %88 {strides = array<i32>} : memref<9x9x32xf32, #tpu.memory_space<vmem>>, vector<9x9x32xf32>,
    %c0_60 = arith.constant 0 : index
    %c0_61 = arith.constant 0 : index
    %90 = vector.load %arg7[%c0_60, %c0_61] : memref<9x32xf32, #tpu.memory_space<vmem>>, vector<9x32xf32>
    %c0_62 = arith.constant 0 : index
    %c0_63 = arith.constant 0 : index
    %91 = vector.load %arg11[%c0_62, %c0_63] : memref<9x32xf32, #tpu.memory_space<vmem>>, vector<9x32xf32>
    %cst_64 = arith.constant 0.000000e+00 : f32
    %92 = vector.broadcast %cst_64 : f32 to vector<8x8x32xf32>
    %cst_65 = arith.constant 0.000000e+00 : f32
    %93 = vector.broadcast %cst_65 : f32 to vector<8x8x32xf32>
    %c0_66 = arith.constant 0 : index
    %c0_67 = arith.constant 0 : index
    %c0_68 = arith.constant 0 : index
    %94 = vector.load %arg16[%c0_66, %c0_67, %c0_68] : memref<9x9x32xf32, #tpu.memory_space<vmem>>, vector<8x8x32xf32>
    %95 = vector.extract_strided_slice %90 {offsets = [0, 0], sizes = [1, 32], strides = [1, 1]} : vector<9x32xf32> to vector<1x32xf32>
    %96 = vector.shape_cast %95 : vector<1x32xf32> to vector<32xf32>
    %97 = vector.shape_cast %96 : vector<32xf32> to vector<1x1x32xf32>
    %98 = vector.broadcast %97 : vector<1x1x32xf32> to vector<8x8x32xf32>
    %99 = arith.mulf %94, %98 : vector<8x8x32xf32>
    %100 = arith.addf %92, %99 : vector<8x8x32xf32>
    %101 = vector.extract_strided_slice %3 {offsets = [0, 0, 0], sizes = [8, 8, 32], strides = [1, 1, 1]} : vector<9x9x32xf32> to vector<8x8x32xf32>
    %102 = vector.extract_strided_slice %91 {offsets = [0, 0], sizes = [1, 32], strides = [1, 1]} : vector<9x32xf32> to vector<1x32xf32>
    %103 = vector.shape_cast %102 : vector<1x32xf32> to vector<32xf32>
    %104 = vector.shape_cast %103 : vector<32xf32> to vector<1x1x32xf32>
    %105 = vector.broadcast %104 : vector<1x1x32xf32> to vector<8x8x32xf32>
    %106 = arith.mulf %101, %105 : vector<8x8x32xf32>
    %107 = arith.addf %93, %106 : vector<8x8x32xf32>
    %c0_69 = arith.constant 0 : index
    %c0_70 = arith.constant 0 : index
    %c0_71 = arith.constant 0 : index
    %108 = vector.load %arg17[%c0_69, %c0_70, %c0_71] : memref<9x9x32xf32, #tpu.memory_space<vmem>>, vector<8x8x32xf32>
    %109 = vector.extract_strided_slice %90 {offsets = [1, 0], sizes = [1, 32], strides = [1, 1]} : vector<9x32xf32> to vector<1x32xf32>
    %110 = vector.shape_cast %109 : vector<1x32xf32> to vector<32xf32>
    %111 = vector.shape_cast %110 : vector<32xf32> to vector<1x1x32xf32>
    %112 = vector.broadcast %111 : vector<1x1x32xf32> to vector<8x8x32xf32>
    %113 = arith.mulf %108, %112 : vector<8x8x32xf32>
    %114 = arith.addf %100, %113 : vector<8x8x32xf32>
    %115 = vector.extract_strided_slice %5 {offsets = [0, 0, 0], sizes = [8, 8, 32], strides = [1, 1, 1]} : vector<9x9x32xf32> to vector<8x8x32xf32>
    %116 = vector.extract_strided_slice %91 {offsets = [1, 0], sizes = [1, 32], strides = [1, 1]} : vector<9x32xf32> to vector<1x32xf32>
    %117 = vector.shape_cast %116 : vector<1x32xf32> to vector<32xf32>
    %118 = vector.shape_cast %117 : vector<32xf32> to vector<1x1x32xf32>
    %119 = vector.broadcast %118 : vector<1x1x32xf32> to vector<8x8x32xf32>
    %120 = arith.mulf %115, %119 : vector<8x8x32xf32>
    %121 = arith.addf %107, %120 : vector<8x8x32xf32>
    %c0_72 = arith.constant 0 : index
    %c1 = arith.constant 1 : index
    %c0_73 = arith.constant 0 : index
    %122 = vector.load %arg16[%c0_72, %c1, %c0_73] : memref<9x9x32xf32, #tpu.memory_space<vmem>>, vector<8x8x32xf32>
    %123 = vector.extract_strided_slice %90 {offsets = [2, 0], sizes = [1, 32], strides = [1, 1]} : vector<9x32xf32> to vector<1x32xf32>
    %124 = vector.shape_cast %123 : vector<1x32xf32> to vector<32xf32>
    %125 = vector.shape_cast %124 : vector<32xf32> to vector<1x1x32xf32>
    %126 = vector.broadcast %125 : vector<1x1x32xf32> to vector<8x8x32xf32>
    %127 = arith.mulf %122, %126 : vector<8x8x32xf32>
    %128 = arith.addf %114, %127 : vector<8x8x32xf32>
    %129 = vector.extract_strided_slice %3 {offsets = [0, 1, 0], sizes = [8, 8, 32], strides = [1, 1, 1]} : vector<9x9x32xf32> to vector<8x8x32xf32>
    %130 = vector.extract_strided_slice %91 {offsets = [2, 0], sizes = [1, 32], strides = [1, 1]} : vector<9x32xf32> to vector<1x32xf32>
    %131 = vector.shape_cast %130 : vector<1x32xf32> to vector<32xf32>
    %132 = vector.shape_cast %131 : vector<32xf32> to vector<1x1x32xf32>
    %133 = vector.broadcast %132 : vector<1x1x32xf32> to vector<8x8x32xf32>
    %134 = arith.mulf %129, %133 : vector<8x8x32xf32>
    %135 = arith.addf %121, %134 : vector<8x8x32xf32>
    %c0_74 = arith.constant 0 : index
    %c0_75 = arith.constant 0 : index
    %c0_76 = arith.constant 0 : index
    %136 = vector.load %arg18[%c0_74, %c0_75, %c0_76] : memref<9x9x32xf32, #tpu.memory_space<vmem>>, vector<8x8x32xf32>
    %137 = vector.extract_strided_slice %90 {offsets = [3, 0], sizes = [1, 32], strides = [1, 1]} : vector<9x32xf32> to vector<1x32xf32>
    %138 = vector.shape_cast %137 : vector<1x32xf32> to vector<32xf32>
    %139 = vector.shape_cast %138 : vector<32xf32> to vector<1x1x32xf32>
    %140 = vector.broadcast %139 : vector<1x1x32xf32> to vector<8x8x32xf32>
    %141 = arith.mulf %136, %140 : vector<8x8x32xf32>
    %142 = arith.addf %128, %141 : vector<8x8x32xf32>
    %143 = vector.extract_strided_slice %7 {offsets = [0, 0, 0], sizes = [8, 8, 32], strides = [1, 1, 1]} : vector<9x9x32xf32> to vector<8x8x32xf32>
    %144 = vector.extract_strided_slice %91 {offsets = [3, 0], sizes = [1, 32], strides = [1, 1]} : vector<9x32xf32> to vector<1x32xf32>
    %145 = vector.shape_cast %144 : vector<1x32xf32> to vector<32xf32>
    %146 = vector.shape_cast %145 : vector<32xf32> to vector<1x1x32xf32>
    %147 = vector.broadcast %146 : vector<1x1x32xf32> to vector<8x8x32xf32>
    %148 = arith.mulf %143, %147 : vector<8x8x32xf32>
    %149 = arith.addf %135, %148 : vector<8x8x32xf32>
    %c0_77 = arith.constant 0 : index
    %c0_78 = arith.constant 0 : index
    %c0_79 = arith.constant 0 : index
    %150 = vector.load %arg19[%c0_77, %c0_78, %c0_79] : memref<9x9x32xf32, #tpu.memory_space<vmem>>, vector<8x8x32xf32>
    %151 = vector.extract_strided_slice %90 {offsets = [4, 0], sizes = [1, 32], strides = [1, 1]} : vector<9x32xf32> to vector<1x32xf32>
    %152 = vector.shape_cast %151 : vector<1x32xf32> to vector<32xf32>
    %153 = vector.shape_cast %152 : vector<32xf32> to vector<1x1x32xf32>
    %154 = vector.broadcast %153 : vector<1x1x32xf32> to vector<8x8x32xf32>
    %155 = arith.mulf %150, %154 : vector<8x8x32xf32>
    %156 = arith.addf %142, %155 : vector<8x8x32xf32>
    %157 = vector.extract_strided_slice %9 {offsets = [0, 0, 0], sizes = [8, 8, 32], strides = [1, 1, 1]} : vector<9x9x32xf32> to vector<8x8x32xf32>
    %158 = vector.extract_strided_slice %91 {offsets = [4, 0], sizes = [1, 32], strides = [1, 1]} : vector<9x32xf32> to vector<1x32xf32>
    %159 = vector.shape_cast %158 : vector<1x32xf32> to vector<32xf32>
    %160 = vector.shape_cast %159 : vector<32xf32> to vector<1x1x32xf32>
    %161 = vector.broadcast %160 : vector<1x1x32xf32> to vector<8x8x32xf32>
    %162 = arith.mulf %157, %161 : vector<8x8x32xf32>
    %163 = arith.addf %149, %162 : vector<8x8x32xf32>
    %c0_80 = arith.constant 0 : index
    %c1_81 = arith.constant 1 : index
    %c0_82 = arith.constant 0 : index
    %164 = vector.load %arg18[%c0_80, %c1_81, %c0_82] : memref<9x9x32xf32, #tpu.memory_space<vmem>>, vector<8x8x32xf32>
    %165 = vector.extract_strided_slice %90 {offsets = [5, 0], sizes = [1, 32], strides = [1, 1]} : vector<9x32xf32> to vector<1x32xf32>
    %166 = vector.shape_cast %165 : vector<1x32xf32> to vector<32xf32>
    %167 = vector.shape_cast %166 : vector<32xf32> to vector<1x1x32xf32>
    %168 = vector.broadcast %167 : vector<1x1x32xf32> to vector<8x8x32xf32>
    %169 = arith.mulf %164, %168 : vector<8x8x32xf32>
    %170 = arith.addf %156, %169 : vector<8x8x32xf32>
    %171 = vector.extract_strided_slice %7 {offsets = [0, 1, 0], sizes = [8, 8, 32], strides = [1, 1, 1]} : vector<9x9x32xf32> to vector<8x8x32xf32>
    %172 = vector.extract_strided_slice %91 {offsets = [5, 0], sizes = [1, 32], strides = [1, 1]} : vector<9x32xf32> to vector<1x32xf32>
    %173 = vector.shape_cast %172 : vector<1x32xf32> to vector<32xf32>
    %174 = vector.shape_cast %173 : vector<32xf32> to vector<1x1x32xf32>
    %175 = vector.broadcast %174 : vector<1x1x32xf32> to vector<8x8x32xf32>
    %176 = arith.mulf %171, %175 : vector<8x8x32xf32>
    %177 = arith.addf %163, %176 : vector<8x8x32xf32>
    %c1_83 = arith.constant 1 : index
    %c0_84 = arith.constant 0 : index
    %c0_85 = arith.constant 0 : index
    %178 = vector.load %arg16[%c1_83, %c0_84, %c0_85] : memref<9x9x32xf32, #tpu.memory_space<vmem>>, vector<8x8x32xf32>
    %179 = vector.extract_strided_slice %90 {offsets = [6, 0], sizes = [1, 32], strides = [1, 1]} : vector<9x32xf32> to vector<1x32xf32>
    %180 = vector.shape_cast %179 : vector<1x32xf32> to vector<32xf32>
    %181 = vector.shape_cast %180 : vector<32xf32> to vector<1x1x32xf32>
    %182 = vector.broadcast %181 : vector<1x1x32xf32> to vector<8x8x32xf32>
    %183 = arith.mulf %178, %182 : vector<8x8x32xf32>
    %184 = arith.addf %170, %183 : vector<8x8x32xf32>
    %185 = vector.extract_strided_slice %3 {offsets = [1, 0, 0], sizes = [8, 8, 32], strides = [1, 1, 1]} : vector<9x9x32xf32> to vector<8x8x32xf32>
    %186 = vector.extract_strided_slice %91 {offsets = [6, 0], sizes = [1, 32], strides = [1, 1]} : vector<9x32xf32> to vector<1x32xf32>
    %187 = vector.shape_cast %186 : vector<1x32xf32> to vector<32xf32>
    %188 = vector.shape_cast %187 : vector<32xf32> to vector<1x1x32xf32>
    %189 = vector.broadcast %188 : vector<1x1x32xf32> to vector<8x8x32xf32>
    %190 = arith.mulf %185, %189 : vector<8x8x32xf32>
    %191 = arith.addf %177, %190 : vector<8x8x32xf32>
    %c1_86 = arith.constant 1 : index
    %c0_87 = arith.constant 0 : index
    %c0_88 = arith.constant 0 : index
    %192 = vector.load %arg17[%c1_86, %c0_87, %c0_88] : memref<9x9x32xf32, #tpu.memory_space<vmem>>, vector<8x8x32xf32>
    %193 = vector.extract_strided_slice %90 {offsets = [7, 0], sizes = [1, 32], strides = [1, 1]} : vector<9x32xf32> to vector<1x32xf32>
    %194 = vector.shape_cast %193 : vector<1x32xf32> to vector<32xf32>
    %195 = vector.shape_cast %194 : vector<32xf32> to vector<1x1x32xf32>
    %196 = vector.broadcast %195 : vector<1x1x32xf32> to vector<8x8x32xf32>
    %197 = arith.mulf %192, %196 : vector<8x8x32xf32>
    %198 = arith.addf %184, %197 : vector<8x8x32xf32>
    %199 = vector.extract_strided_slice %5 {offsets = [1, 0, 0], sizes = [8, 8, 32], strides = [1, 1, 1]} : vector<9x9x32xf32> to vector<8x8x32xf32>
    %200 = vector.extract_strided_slice %91 {offsets = [7, 0], sizes = [1, 32], strides = [1, 1]} : vector<9x32xf32> to vector<1x32xf32>
    %201 = vector.shape_cast %200 : vector<1x32xf32> to vector<32xf32>
    %202 = vector.shape_cast %201 : vector<32xf32> to vector<1x1x32xf32>
    %203 = vector.broadcast %202 : vector<1x1x32xf32> to vector<8x8x32xf32>
    %204 = arith.mulf %199, %203 : vector<8x8x32xf32>
    %205 = arith.addf %191, %204 : vector<8x8x32xf32>
    %c1_89 = arith.constant 1 : index
    %c1_90 = arith.constant 1 : index
    %c0_91 = arith.constant 0 : index
    %206 = vector.load %arg16[%c1_89, %c1_90, %c0_91] : memref<9x9x32xf32, #tpu.memory_space<vmem>>, vector<8x8x32xf32>
    %207 = vector.extract_strided_slice %90 {offsets = [8, 0], sizes = [1, 32], strides = [1, 1]} : vector<9x32xf32> to vector<1x32xf32>
    %208 = vector.shape_cast %207 : vector<1x32xf32> to vector<32xf32>
    %209 = vector.shape_cast %208 : vector<32xf32> to vector<1x1x32xf32>
    %210 = vector.broadcast %209 : vector<1x1x32xf32> to vector<8x8x32xf32>
    %211 = arith.mulf %206, %210 : vector<8x8x32xf32>
    %212 = arith.addf %198, %211 : vector<8x8x32xf32>
    %213 = vector.extract_strided_slice %3 {offsets = [1, 1, 0], sizes = [8, 8, 32], strides = [1, 1, 1]} : vector<9x9x32xf32> to vector<8x8x32xf32>
    %214 = vector.extract_strided_slice %91 {offsets = [8, 0], sizes = [1, 32], strides = [1, 1]} : vector<9x32xf32> to vector<1x32xf32>
    %215 = vector.shape_cast %214 : vector<1x32xf32> to vector<32xf32>
    %216 = vector.shape_cast %215 : vector<32xf32> to vector<1x1x32xf32>
    %217 = vector.broadcast %216 : vector<1x1x32xf32> to vector<8x8x32xf32>
    %218 = arith.mulf %213, %217 : vector<8x8x32xf32>
    %219 = arith.addf %205, %218 : vector<8x8x32xf32>
    %c0_92 = arith.constant 0 : index
    %c0_93 = arith.constant 0 : index
    %220 = vector.load %arg8[%c0_92, %c0_93] : memref<1x32xf32, #tpu.memory_space<vmem>>, vector<1x32xf32>
    %221 = vector.shape_cast %220 : vector<1x32xf32> to vector<1x1x32xf32>
    %222 = vector.broadcast %221 : vector<1x1x32xf32> to vector<8x8x32xf32>
    %223 = arith.addf %212, %222 : vector<8x8x32xf32>
    %224 = vector.shape_cast %223 : vector<8x8x32xf32> to vector<64x32xf32>
    %c0_94 = arith.constant 0 : index
    %c0_95 = arith.constant 0 : index
    %225 = vector.load %arg12[%c0_94, %c0_95] : memref<1x32xf32, #tpu.memory_space<vmem>>, vector<1x32xf32>
    %226 = vector.shape_cast %225 : vector<1x32xf32> to vector<1x1x32xf32>
    %227 = vector.broadcast %226 : vector<1x1x32xf32> to vector<8x8x32xf32>
    %228 = arith.addf %219, %227 : vector<8x8x32xf32>
    %229 = vector.shape_cast %228 : vector<8x8x32xf32> to vector<64x32xf32>
    %230 = arith.truncf %224 : vector<64x32xf32> to vector<64x32xbf16>
    %c0_96 = arith.constant 0 : index
    %c0_97 = arith.constant 0 : index
    %231 = vector.load %arg9[%c0_96, %c0_97] : memref<32x32xbf16, #tpu.memory_space<vmem>>, vector<32x32xbf16>
    %cst_98 = arith.constant dense<0.000000e+00> : vector<64x32xf32>
    %232 = tpu.matmul %230, %231, %cst_98 {dimension_numbers = #tpu.dot_dimension_numbers<[1], [0], [0], [1], [0, 0, 1, 1], [], []>} : vector<64x32xbf16>, vector<32x32xbf16>, vector<64x32xf32> -> vector<64x32xf32>
    %c0_99 = arith.constant 0 : index
    %c0_100 = arith.constant 0 : index
    %233 = vector.load %arg10[%c0_99, %c0_100] : memref<1x32xf32, #tpu.memory_space<vmem>>, vector<1x32xf32>
    %234 = vector.broadcast %233 : vector<1x32xf32> to vector<64x32xf32>
    %235 = arith.addf %232, %234 : vector<64x32xf32>
    %cst_101 = arith.constant 0.000000e+00 : f32
    %236 = vector.broadcast %cst_101 : f32 to vector<64x32xf32>
    %237 = arith.maximumf %235, %236 : vector<64x32xf32>
    %238 = arith.truncf %229 : vector<64x32xf32> to vector<64x32xbf16>
    %c0_102 = arith.constant 0 : index
    %c0_103 = arith.constant 0 : index
    %239 = vector.load %arg13[%c0_102, %c0_103] : memref<32x32xbf16, #tpu.memory_space<vmem>>, vector<32x32xbf16>
    %cst_104 = arith.constant dense<0.000000e+00> : vector<64x32xf32>
    %240 = tpu.matmul %238, %239, %cst_104 {dimension_numbers = #tpu.dot_dimension_numbers<[1], [0], [0], [1], [0, 0, 1, 1], [], []>} : vector<64x32xbf16>, vector<32x32xbf16>, vector<64x32xf32> -> vector<64x32xf32>
    %c0_105 = arith.constant 0 : index
    %c0_106 = arith.constant 0 : index
    %241 = vector.load %arg14[%c0_105, %c0_106] : memref<1x32xf32, #tpu.memory_space<vmem>>, vector<1x32xf32>
    %242 = vector.broadcast %241 : vector<1x32xf32> to vector<64x32xf32>
    %243 = arith.addf %240, %242 : vector<64x32xf32>
    %cst_107 = arith.constant 0.000000e+00 : f32
    %244 = vector.broadcast %cst_107 : f32 to vector<64x32xf32>
    %245 = arith.maximumf %243, %244 : vector<64x32xf32>
    %246 = tpu.concatenate %245, %237 in 1 : vector<64x32xf32>, vector<64x32xf32> -> vector<64x64xf32>
    %c0_108 = arith.constant 0 : index
    %c0_109 = arith.constant 0 : index
    %c0_110 = arith.constant 0 : index
    %247 = vector.load %arg15[%c0_108, %c0_109, %c0_110] : memref<1x64x64xf32, #tpu.memory_space<vmem>>, vector<1x64x64xf32>
    %248 = vector.shape_cast %247 : vector<1x64x64xf32> to vector<64x64xf32>
    %249 = vector.shape_cast %246 : vector<64x64xf32> to vector<1x64x64xf32>
    tpu.vector_store %arg15[%c0_108, %c0_109, %c0_110], %249 {strides = array<i32>} : memref<1x64x64xf32, #tpu.memory_space<vmem>>, vector<1x64x64xf32>,
    return
  }
  func.func @transform_0(%arg0: i32) -> (i32, i32, i32, i32) {
    %c0_i32 = arith.constant 0 : i32
    %c0_i32_0 = arith.constant 0 : i32
    %c0_i32_1 = arith.constant 0 : i32
    %c0_i32_2 = arith.constant 0 : i32
    return %arg0, %c0_i32, %c0_i32_0, %c0_i32_1 : i32, i32, i32, i32
  }
  func.func @transform_1(%arg0: i32) -> (i32, i32, i32, i32) {
    %c0_i32 = arith.constant 0 : i32
    %c0_i32_0 = arith.constant 0 : i32
    %c0_i32_1 = arith.constant 0 : i32
    %c0_i32_2 = arith.constant 0 : i32
    return %arg0, %c0_i32, %c0_i32_0, %c0_i32_1 : i32, i32, i32, i32
  }
  func.func @transform_2(%arg0: i32) -> (i32, i32, i32, i32) {
    %c0_i32 = arith.constant 0 : i32
    %c0_i32_0 = arith.constant 0 : i32
    %c0_i32_1 = arith.constant 0 : i32
    %c0_i32_2 = arith.constant 0 : i32
    return %arg0, %c0_i32, %c0_i32_0, %c0_i32_1 : i32, i32, i32, i32
  }
  func.func @transform_3(%arg0: i32) -> (i32, i32, i32, i32) {
    %c0_i32 = arith.constant 0 : i32
    %c0_i32_0 = arith.constant 0 : i32
    %c0_i32_1 = arith.constant 0 : i32
    %c0_i32_2 = arith.constant 0 : i32
    return %arg0, %c0_i32, %c0_i32_0, %c0_i32_1 : i32, i32, i32, i32
  }
  func.func @transform_4(%arg0: i32) -> (i32, i32) {
    %c0_i32 = arith.constant 0 : i32
    %c0_i32_0 = arith.constant 0 : i32
    %c0_i32_1 = arith.constant 0 : i32
    return %c0_i32, %c0_i32_0 : i32, i32
  }
  func.func @transform_5(%arg0: i32) -> (i32, i32) {
    %c0_i32 = arith.constant 0 : i32
    %c0_i32_0 = arith.constant 0 : i32
    %c0_i32_1 = arith.constant 0 : i32
    return %c0_i32, %c0_i32_0 : i32, i32
  }
  func.func @transform_6(%arg0: i32) -> (i32, i32) {
    %c0_i32 = arith.constant 0 : i32
    %c0_i32_0 = arith.constant 0 : i32
    %c0_i32_1 = arith.constant 0 : i32
    return %c0_i32, %c0_i32_0 : i32, i32
  }
  func.func @transform_7(%arg0: i32) -> (i32, i32) {
    %c0_i32 = arith.constant 0 : i32
    %c0_i32_0 = arith.constant 0 : i32
    %c0_i32_1 = arith.constant 0 : i32
    return %c0_i32, %c0_i32_0 : i32, i32
  }
  func.func @transform_8(%arg0: i32) -> (i32, i32) {
    %c0_i32 = arith.constant 0 : i32
    %c0_i32_0 = arith.constant 0 : i32
    %c0_i32_1 = arith.constant 0 : i32
    return %c0_i32, %c0_i32_0 : i32, i32
  }
  func.func @transform_9(%arg0: i32) -> (i32, i32) {
    %c0_i32 = arith.constant 0 : i32
    %c0_i32_0 = arith.constant 0 : i32
    %c0_i32_1 = arith.constant 0 : i32
    return %c0_i32, %c0_i32_0 : i32, i32
  }
  func.func @transform_10(%arg0: i32) -> (i32, i32) {
    %c0_i32 = arith.constant 0 : i32
    %c0_i32_0 = arith.constant 0 : i32
    %c0_i32_1 = arith.constant 0 : i32
    return %c0_i32, %c0_i32_0 : i32, i32
  }
  func.func @transform_11(%arg0: i32) -> (i32, i32) {
    %c0_i32 = arith.constant 0 : i32
    %c0_i32_0 = arith.constant 0 : i32
    %c0_i32_1 = arith.constant 0 : i32
    return %c0_i32, %c0_i32_0 : i32, i32
  }
  func.func @transform_12(%arg0: i32) -> (i32, i32) {
    %c0_i32 = arith.constant 0 : i32
    %c0_i32_0 = arith.constant 0 : i32
    %c0_i32_1 = arith.constant 0 : i32
    return %c0_i32, %c0_i32_0 : i32, i32
  }
  func.func @transform_13(%arg0: i32) -> (i32, i32) {
    %c0_i32 = arith.constant 0 : i32
    %c0_i32_0 = arith.constant 0 : i32
    %c0_i32_1 = arith.constant 0 : i32
    return %c0_i32, %c0_i32_0 : i32, i32
  }
  func.func @transform_14(%arg0: i32) -> (i32, i32, i32) {
    %c0_i32 = arith.constant 0 : i32
    %c0_i32_0 = arith.constant 0 : i32
    %c0_i32_1 = arith.constant 0 : i32
    return %arg0, %c0_i32, %c0_i32_0 : i32, i32, i32
  }
}

</mosaic_0001>

<llo_original>
// kernel: _lambda_.1
$region0: #{_lambda_.1}
  #allocation0 [shape = 'u32[]', space=smem, size = 0x4, offset = 0x4, fixed_abs, tag = 'smem constant byte address 0x4 - core index']
  #allocation1 [shape = 'u32[144,128]{1,0:T(1,128)}', space=vmem, size = 0x12000, scoped, tag = 'internal scratch']
  #allocation2 [shape = 'f32[9,9,32]{2,1,0:T(8,128)}', space=vmem, size = 0x12000, scoped, tag = 'scratch operand']
  #allocation3 [shape = 'f32[9,9,32]{2,1,0:T(8,128)}', space=vmem, size = 0x12000, scoped, tag = 'scratch operand']
  #allocation4 [shape = 'f32[9,9,32]{2,1,0:T(8,128)}', space=vmem, size = 0x12000, scoped, tag = 'scratch operand']
  #allocation5 [shape = 'f32[9,9,32]{2,1,0:T(8,128)}', space=vmem, size = 0x12000, scoped, tag = 'scratch operand']
  %s0 = inlined_call_operand.vmem [shape: f32[2,9,9,32], index: 0, kind: input, shape index: {}]
  %s1 = inlined_call_operand.vmem [shape: f32[2,9,9,32], index: 1, kind: input, shape index: {}]
  %s2 = inlined_call_operand.vmem [shape: f32[2,9,9,32], index: 2, kind: input, shape index: {}]
  %s3 = inlined_call_operand.vmem [shape: f32[2,9,9,32], index: 3, kind: input, shape index: {}]
  %s4 = inlined_call_operand.vmem [shape: bf16[32,32], index: 4, kind: input, shape index: {}]
  %s5 = inlined_call_operand.vmem [shape: f32[1,32], index: 5, kind: input, shape index: {}]
  %s6 = inlined_call_operand.vmem [shape: f32[9,32], index: 6, kind: input, shape index: {}]
  %s7 = inlined_call_operand.vmem [shape: f32[1,32], index: 7, kind: input, shape index: {}]
  %s8 = inlined_call_operand.vmem [shape: bf16[32,32], index: 8, kind: input, shape index: {}]
  %s9 = inlined_call_operand.vmem [shape: f32[1,32], index: 9, kind: input, shape index: {}]
  %s10 = inlined_call_operand.vmem [shape: f32[9,32], index: 10, kind: input, shape index: {}]
  %s11 = inlined_call_operand.vmem [shape: f32[1,32], index: 11, kind: input, shape index: {}]
  %s12 = inlined_call_operand.vmem [shape: bf16[32,32], index: 12, kind: input, shape index: {}]
  %s13 = inlined_call_operand.vmem [shape: f32[1,32], index: 13, kind: input, shape index: {}]
  %s14 = inlined_call_operand.hbm [shape: f32[2,64,64], index: 14, kind: output, shape index: {}]
  %s15 = sld [smem:[#allocation0]]
  $region89: #{_lambda_.1} parent=0
    _
  %s17 = ssub.s32 1, %s15
  %s18 = scalar_select 0, %s17, %s15
  $region1: #{_lambda_.1} parent=0
    #allocation6 [shape = 'u8[65536]{0}', space=vmem, size = 0x10000, scoped, tag = 'output window, operand 0']
    #allocation7 [shape = 's32[2]{0}', space=sflag, size = 0x8, scoped, tag = 'scoped memory for _lambda_.1']
    %19 = vsyncpa [#allocation7], 0
    %s20 = scalar_lea.sflag [#allocation7], 1
    %21 = vsyncpa %s20, 0
    loop: start=0, step=1, limit=4
    $region2: #{_lambda_.1} parent=1 // loop_pre_header
      _
    $region3: #{_lambda_.1} parent=1 // loop_header
      %s23 = sphi 0, %s27
      %p24 = scmp.ge.s32.totalorder %s23, 4
      %s33 = sphi 0, %s35
      %s36 = sphi 0, %s33
      %s37 = sphi 0, %s36
      %s53 = sphi 0, %s37
      %s59 = sphi 0, %s61
      %s62 = sphi 0, %s59
      %s63 = sphi 0, %s62
      %s79 = sphi 0, %s63
      %s85 = sphi 0, %s87
      %s88 = sphi 0, %s85
      %s89 = sphi 0, %s88
      %s105 = sphi 0, %s89
      %s111 = sphi 0, %s113
      %s114 = sphi 0, %s111
      %s115 = sphi 0, %s114
      %s131 = sphi 0, %s115
      %s135 = sphi 0, %s135
      %s137 = sphi 0, %s135
      %s138 = sphi 0, %s137
      %s152 = sphi 0, %s138
      %s156 = sphi 0, %s156
      %s158 = sphi 0, %s156
      %s159 = sphi 0, %s158
      %s173 = sphi 0, %s159
      %s177 = sphi 0, %s177
      %s179 = sphi 0, %s177
      %s180 = sphi 0, %s179
      %s194 = sphi 0, %s180
      %s198 = sphi 0, %s198
      %s200 = sphi 0, %s198
      %s201 = sphi 0, %s200
      %s215 = sphi 0, %s201
      %s219 = sphi 0, %s219
      %s221 = sphi 0, %s219
      %s222 = sphi 0, %s221
      %s236 = sphi 0, %s222
      %s240 = sphi 0, %s240
      %s242 = sphi 0, %s240
      %s243 = sphi 0, %s242
      %s257 = sphi 0, %s243
      %s261 = sphi 0, %s261
      %s263 = sphi 0, %s261
      %s264 = sphi 0, %s263
      %s278 = sphi 0, %s264
      %s282 = sphi 0, %s282
      %s284 = sphi 0, %s282
      %s285 = sphi 0, %s284
      %s299 = sphi 0, %s285
      %s303 = sphi 0, %s303
      %s305 = sphi 0, %s303
      %s306 = sphi 0, %s305
      %s320 = sphi 0, %s306
      %s324 = sphi 0, %s324
      %s326 = sphi 0, %s324
      %s327 = sphi 0, %s326
      %s341 = sphi 0, %s327
      %s347 = sphi 0, %s349
      %s350 = sphi 0, %s347
      %s351 = sphi 0, %s350
      %s367 = sphi 0, %s351
    $region4: #{_lambda_.1} parent=1 // loop_header_branch
      %26 = sbr.rel (%p24) target = $region8
    $region5: #{_lambda_.1} parent=1 // loop_body
      %s28 = ssub.s32 %s23, 1
      %s29 = ssub.s32 %s23, 2
      %s30 = sadd.s32 %s23, 1
      %s31 = ssub.s32 %s23, %s30
      %p32 = scmp.eq.s32.totalorder %s31, 0
      %s34 = sadd.s32 %s33, 1
      %s35 = scalar_select %p32, %s33, %s34
      %p38 = pneg %p32
      %p39 = scmp.eq.s32.totalorder %s23, 1
      %p40 = por %p38, %p39
      %p41 = scmp.ne.s32.totalorder %s33, %s36
      %p42 = scmp.eq.s32.totalorder %s23, 0
      %p43 = por %p41, %p42
      %p44 = scmp.ne.s32.totalorder %s33, %s36
      %p45 = scmp.eq.s32.totalorder %s28, 1
      %p46 = por %p44, %p45
      %p47 = scmp.ne.s32.totalorder %s36, %s37
      %p48 = scmp.eq.s32.totalorder %s28, 0
      %p49 = por %p47, %p48
      %p50 = scmp.ne.s32.totalorder %s36, %s37
      %p51 = scmp.eq.s32.totalorder %s29, 1
      %p52 = por %p50, %p51
      %p54 = scmp.ne.s32.totalorder %s37, %s53
      %p55 = scmp.eq.s32.totalorder %s29, 0
      %p56 = por %p54, %p55
      %s57 = ssub.s32 %s23, %s30
      %p58 = scmp.eq.s32.totalorder %s57, 0
      %s60 = sadd.s32 %s59, 1
      %s61 = scalar_select %p58, %s59, %s60
      %p64 = pneg %p58
      %p65 = scmp.eq.s32.totalorder %s23, 1
      %p66 = por %p64, %p65
      %p67 = scmp.ne.s32.totalorder %s59, %s62
      %p68 = scmp.eq.s32.totalorder %s23, 0
      %p69 = por %p67, %p68
      %p70 = scmp.ne.s32.totalorder %s59, %s62
      %p71 = scmp.eq.s32.totalorder %s28, 1
      %p72 = por %p70, %p71
      %p73 = scmp.ne.s32.totalorder %s62, %s63
      %p74 = scmp.eq.s32.totalorder %s28, 0
      %p75 = por %p73, %p74
      %p76 = scmp.ne.s32.totalorder %s62, %s63
      %p77 = scmp.eq.s32.totalorder %s29, 1
      %p78 = por %p76, %p77
      %p80 = scmp.ne.s32.totalorder %s63, %s79
      %p81 = scmp.eq.s32.totalorder %s29, 0
      %p82 = por %p80, %p81
      %s83 = ssub.s32 %s23, %s30
      %p84 = scmp.eq.s32.totalorder %s83, 0
      %s86 = sadd.s32 %s85, 1
      %s87 = scalar_select %p84, %s85, %s86
      %p90 = pneg %p84
      %p91 = scmp.eq.s32.totalorder %s23, 1
      %p92 = por %p90, %p91
      %p93 = scmp.ne.s32.totalorder %s85, %s88
      %p94 = scmp.eq.s32.totalorder %s23, 0
      %p95 = por %p93, %p94
      %p96 = scmp.ne.s32.totalorder %s85, %s88
      %p97 = scmp.eq.s32.totalorder %s28, 1
      %p98 = por %p96, %p97
      %p99 = scmp.ne.s32.totalorder %s88, %s89
      %p100 = scmp.eq.s32.totalorder %s28, 0
      %p101 = por %p99, %p100
      %p102 = scmp.ne.s32.totalorder %s88, %s89
      %p103 = scmp.eq.s32.totalorder %s29, 1
      %p104 = por %p102, %p103
      %p106 = scmp.ne.s32.totalorder %s89, %s105
      %p107 = scmp.eq.s32.totalorder %s29, 0
      %p108 = por %p106, %p107
      %s109 = ssub.s32 %s23, %s30
      %p110 = scmp.eq.s32.totalorder %s109, 0
      %s112 = sadd.s32 %s111, 1
      %s113 = scalar_select %p110, %s111, %s112
      %p116 = pneg %p110
      %p117 = scmp.eq.s32.totalorder %s23, 1
      %p118 = por %p116, %p117
      %p119 = scmp.ne.s32.totalorder %s111, %s114
      %p120 = scmp.eq.s32.totalorder %s23, 0
      %p121 = por %p119, %p120
      %p122 = scmp.ne.s32.totalorder %s111, %s114
      %p123 = scmp.eq.s32.totalorder %s28, 1
      %p124 = por %p122, %p123
      %p125 = scmp.ne.s32.totalorder %s114, %s115
      %p126 = scmp.eq.s32.totalorder %s28, 0
      %p127 = por %p125, %p126
      %p128 = scmp.ne.s32.totalorder %s114, %s115
      %p129 = scmp.eq.s32.totalorder %s29, 1
      %p130 = por %p128, %p129
      %p132 = scmp.ne.s32.totalorder %s115, %s131
      %p133 = scmp.eq.s32.totalorder %s29, 0
      %p134 = por %p132, %p133
      %s136 = sadd.s32 %s135, 1
      %p139 = scmp.eq.s32.totalorder %s23, 1
      %p140 = scmp.ne.s32.totalorder %s135, %s137
      %p141 = scmp.eq.s32.totalorder %s23, 0
      %p142 = por %p140, %p141
      %p143 = scmp.ne.s32.totalorder %s135, %s137
      %p144 = scmp.eq.s32.totalorder %s28, 1
      %p145 = por %p143, %p144
      %p146 = scmp.ne.s32.totalorder %s137, %s138
      %p147 = scmp.eq.s32.totalorder %s28, 0
      %p148 = por %p146, %p147
      %p149 = scmp.ne.s32.totalorder %s137, %s138
      %p150 = scmp.eq.s32.totalorder %s29, 1
      %p151 = por %p149, %p150
      %p153 = scmp.ne.s32.totalorder %s138, %s152
      %p154 = scmp.eq.s32.totalorder %s29, 0
      %p155 = por %p153, %p154
      %s157 = sadd.s32 %s156, 1
      %p160 = scmp.eq.s32.totalorder %s23, 1
      %p161 = scmp.ne.s32.totalorder %s156, %s158
      %p162 = scmp.eq.s32.totalorder %s23, 0
      %p163 = por %p161, %p162
      %p164 = scmp.ne.s32.totalorder %s156, %s158
      %p165 = scmp.eq.s32.totalorder %s28, 1
      %p166 = por %p164, %p165
      %p167 = scmp.ne.s32.totalorder %s158, %s159
      %p168 = scmp.eq.s32.totalorder %s28, 0
      %p169 = por %p167, %p168
      %p170 = scmp.ne.s32.totalorder %s158, %s159
      %p171 = scmp.eq.s32.totalorder %s29, 1
      %p172 = por %p170, %p171
      %p174 = scmp.ne.s32.totalorder %s159, %s173
      %p175 = scmp.eq.s32.totalorder %s29, 0
      %p176 = por %p174, %p175
      %s178 = sadd.s32 %s177, 1
      %p181 = scmp.eq.s32.totalorder %s23, 1
      %p182 = scmp.ne.s32.totalorder %s177, %s179
      %p183 = scmp.eq.s32.totalorder %s23, 0
      %p184 = por %p182, %p183
      %p185 = scmp.ne.s32.totalorder %s177, %s179
      %p186 = scmp.eq.s32.totalorder %s28, 1
      %p187 = por %p185, %p186
      %p188 = scmp.ne.s32.totalorder %s179, %s180
      %p189 = scmp.eq.s32.totalorder %s28, 0
      %p190 = por %p188, %p189
      %p191 = scmp.ne.s32.totalorder %s179, %s180
      %p192 = scmp.eq.s32.totalorder %s29, 1
      %p193 = por %p191, %p192
      %p195 = scmp.ne.s32.totalorder %s180, %s194
      %p196 = scmp.eq.s32.totalorder %s29, 0
      %p197 = por %p195, %p196
      %s199 = sadd.s32 %s198, 1
      %p202 = scmp.eq.s32.totalorder %s23, 1
      %p203 = scmp.ne.s32.totalorder %s198, %s200
      %p204 = scmp.eq.s32.totalorder %s23, 0
      %p205 = por %p203, %p204
      %p206 = scmp.ne.s32.totalorder %s198, %s200
      %p207 = scmp.eq.s32.totalorder %s28, 1
      %p208 = por %p206, %p207
      %p209 = scmp.ne.s32.totalorder %s200, %s201
      %p210 = scmp.eq.s32.totalorder %s28, 0
      %p211 = por %p209, %p210
      %p212 = scmp.ne.s32.totalorder %s200, %s201
      %p213 = scmp.eq.s32.totalorder %s29, 1
      %p214 = por %p212, %p213
      %p216 = scmp.ne.s32.totalorder %s201, %s215
      %p217 = scmp.eq.s32.totalorder %s29, 0
      %p218 = por %p216, %p217
      %s220 = sadd.s32 %s219, 1
      %p223 = scmp.eq.s32.totalorder %s23, 1
      %p224 = scmp.ne.s32.totalorder %s219, %s221
      %p225 = scmp.eq.s32.totalorder %s23, 0
      %p226 = por %p224, %p225
      %p227 = scmp.ne.s32.totalorder %s219, %s221
      %p228 = scmp.eq.s32.totalorder %s28, 1
      %p229 = por %p227, %p228
      %p230 = scmp.ne.s32.totalorder %s221, %s222
      %p231 = scmp.eq.s32.totalorder %s28, 0
      %p232 = por %p230, %p231
      %p233 = scmp.ne.s32.totalorder %s221, %s222
      %p234 = scmp.eq.s32.totalorder %s29, 1
      %p235 = por %p233, %p234
      %p237 = scmp.ne.s32.totalorder %s222, %s236
      %p238 = scmp.eq.s32.totalorder %s29, 0
      %p239 = por %p237, %p238
      %s241 = sadd.s32 %s240, 1
      %p244 = scmp.eq.s32.totalorder %s23, 1
      %p245 = scmp.ne.s32.totalorder %s240, %s242
      %p246 = scmp.eq.s32.totalorder %s23, 0
      %p247 = por %p245, %p246
      %p248 = scmp.ne.s32.totalorder %s240, %s242
      %p249 = scmp.eq.s32.totalorder %s28, 1
      %p250 = por %p248, %p249
      %p251 = scmp.ne.s32.totalorder %s242, %s243
      %p252 = scmp.eq.s32.totalorder %s28, 0
      %p253 = por %p251, %p252
      %p254 = scmp.ne.s32.totalorder %s242, %s243
      %p255 = scmp.eq.s32.totalorder %s29, 1
      %p256 = por %p254, %p255
      %p258 = scmp.ne.s32.totalorder %s243, %s257
      %p259 = scmp.eq.s32.totalorder %s29, 0
      %p260 = por %p258, %p259
      %s262 = sadd.s32 %s261, 1
      %p265 = scmp.eq.s32.totalorder %s23, 1
      %p266 = scmp.ne.s32.totalorder %s261, %s263
      %p267 = scmp.eq.s32.totalorder %s23, 0
      %p268 = por %p266, %p267
      %p269 = scmp.ne.s32.totalorder %s261, %s263
      %p270 = scmp.eq.s32.totalorder %s28, 1
      %p271 = por %p269, %p270
      %p272 = scmp.ne.s32.totalorder %s263, %s264
      %p273 = scmp.eq.s32.totalorder %s28, 0
      %p274 = por %p272, %p273
      %p275 = scmp.ne.s32.totalorder %s263, %s264
      %p276 = scmp.eq.s32.totalorder %s29, 1
      %p277 = por %p275, %p276
      %p279 = scmp.ne.s32.totalorder %s264, %s278
      %p280 = scmp.eq.s32.totalorder %s29, 0
      %p281 = por %p279, %p280
      %s283 = sadd.s32 %s282, 1
      %p286 = scmp.eq.s32.totalorder %s23, 1
      %p287 = scmp.ne.s32.totalorder %s282, %s284
      %p288 = scmp.eq.s32.totalorder %s23, 0
      %p289 = por %p287, %p288
      %p290 = scmp.ne.s32.totalorder %s282, %s284
      %p291 = scmp.eq.s32.totalorder %s28, 1
      %p292 = por %p290, %p291
      %p293 = scmp.ne.s32.totalorder %s284, %s285
      %p294 = scmp.eq.s32.totalorder %s28, 0
      %p295 = por %p293, %p294
      %p296 = scmp.ne.s32.totalorder %s284, %s285
      %p297 = scmp.eq.s32.totalorder %s29, 1
      %p298 = por %p296, %p297
      %p300 = scmp.ne.s32.totalorder %s285, %s299
      %p301 = scmp.eq.s32.totalorder %s29, 0
      %p302 = por %p300, %p301
      %s304 = sadd.s32 %s303, 1
      %p307 = scmp.eq.s32.totalorder %s23, 1
      %p308 = scmp.ne.s32.totalorder %s303, %s305
      %p309 = scmp.eq.s32.totalorder %s23, 0
      %p310 = por %p308, %p309
      %p311 = scmp.ne.s32.totalorder %s303, %s305
      %p312 = scmp.eq.s32.totalorder %s28, 1
      %p313 = por %p311, %p312
      %p314 = scmp.ne.s32.totalorder %s305, %s306
      %p315 = scmp.eq.s32.totalorder %s28, 0
      %p316 = por %p314, %p315
      %p317 = scmp.ne.s32.totalorder %s305, %s306
      %p318 = scmp.eq.s32.totalorder %s29, 1
      %p319 = por %p317, %p318
      %p321 = scmp.ne.s32.totalorder %s306, %s320
      %p322 = scmp.eq.s32.totalorder %s29, 0
      %p323 = por %p321, %p322
      %s325 = sadd.s32 %s324, 1
      %p328 = scmp.eq.s32.totalorder %s23, 1
      %p329 = scmp.ne.s32.totalorder %s324, %s326
      %p330 = scmp.eq.s32.totalorder %s23, 0
      %p331 = por %p329, %p330
      %p332 = scmp.ne.s32.totalorder %s324, %s326
      %p333 = scmp.eq.s32.totalorder %s28, 1
      %p334 = por %p332, %p333
      %p335 = scmp.ne.s32.totalorder %s326, %s327
      %p336 = scmp.eq.s32.totalorder %s28, 0
      %p337 = por %p335, %p336
      %p338 = scmp.ne.s32.totalorder %s326, %s327
      %p339 = scmp.eq.s32.totalorder %s29, 1
      %p340 = por %p338, %p339
      %p342 = scmp.ne.s32.totalorder %s327, %s341
      %p343 = scmp.eq.s32.totalorder %s29, 0
      %p344 = por %p342, %p343
      %s345 = ssub.s32 %s23, %s30
      %p346 = scmp.eq.s32.totalorder %s345, 0
      %s348 = sadd.s32 %s347, 1
      %s349 = scalar_select %p346, %s347, %s348
      %p352 = pneg %p346
      %p353 = scmp.eq.s32.totalorder %s23, 1
      %p354 = por %p352, %p353
      %p355 = scmp.ne.s32.totalorder %s347, %s350
      %p356 = scmp.eq.s32.totalorder %s23, 0
      %p357 = por %p355, %p356
      %p358 = scmp.ne.s32.totalorder %s347, %s350
      %p359 = scmp.eq.s32.totalorder %s28, 1
      %p360 = por %p358, %p359
      %p361 = scmp.ne.s32.totalorder %s350, %s351
      %p362 = scmp.eq.s32.totalorder %s28, 0
      %p363 = por %p361, %p362
      %p364 = scmp.ne.s32.totalorder %s350, %s351
      %p365 = scmp.eq.s32.totalorder %s29, 1
      %p366 = por %p364, %p365
      %p368 = scmp.ne.s32.totalorder %s351, %s367
      %p369 = scmp.eq.s32.totalorder %s29, 0
      %p370 = por %p368, %p369
      %p371 = scmp.le.s32.totalorder 1, %s23
      %p372 = scmp.lt.s32.totalorder %s23, 3
      %p373 = pnand %p371, %p372
      %p374 = pneg %p373
      // Predicated region
      $region9: #{_lambda_.1} parent=5 // pred_check
        _
      $region10: #{_lambda_.1} parent=5 // pred_check_branch
        %376 = sbr.rel (%p373) target = $region12
      $region11: #{_lambda_.1} parent=5 // pred_region
        %s377 = ssub.s32 %s23, 1
        // Predicated region
        $region13: #{_lambda_.1} parent=11 // pred_check
          %p378 = pneg %p148
        $region14: #{_lambda_.1} parent=11 // pred_check_branch
          %380 = sbr.rel (%p378) target = $region16
        $region15: #{_lambda_.1} parent=11 // pred_region
          _
        $region16: #{_lambda_.1} parent=11 // pred_fallthru
          _
        // Predicated region
        $region17: #{_lambda_.1} parent=11 // pred_check
          %p381 = pneg %p169
        $region18: #{_lambda_.1} parent=11 // pred_check_branch
          %383 = sbr.rel (%p381) target = $region20
        $region19: #{_lambda_.1} parent=11 // pred_region
          _
        $region20: #{_lambda_.1} parent=11 // pred_fallthru
          _
        // Predicated region
        $region21: #{_lambda_.1} parent=11 // pred_check
          %p384 = pneg %p190
        $region22: #{_lambda_.1} parent=11 // pred_check_branch
          %386 = sbr.rel (%p384) target = $region24
        $region23: #{_lambda_.1} parent=11 // pred_region
          _
        $region24: #{_lambda_.1} parent=11 // pred_fallthru
          _
        // Predicated region
        $region25: #{_lambda_.1} parent=11 // pred_check
          %p387 = pneg %p211
        $region26: #{_lambda_.1} parent=11 // pred_check_branch
          %389 = sbr.rel (%p387) target = $region28
        $region27: #{_lambda_.1} parent=11 // pred_region
          _
        $region28: #{_lambda_.1} parent=11 // pred_fallthru
          _
        // Predicated region
        $region29: #{_lambda_.1} parent=11 // pred_check
          %p390 = pneg %p232
        $region30: #{_lambda_.1} parent=11 // pred_check_branch
          %392 = sbr.rel (%p390) target = $region32
        $region31: #{_lambda_.1} parent=11 // pred_region
          _
        $region32: #{_lambda_.1} parent=11 // pred_fallthru
          _
        // Predicated region
        $region33: #{_lambda_.1} parent=11 // pred_check
          %p393 = pneg %p253
        $region34: #{_lambda_.1} parent=11 // pred_check_branch
          %395 = sbr.rel (%p393) target = $region36
        $region35: #{_lambda_.1} parent=11 // pred_region
          _
        $region36: #{_lambda_.1} parent=11 // pred_fallthru
          _
        // Predicated region
        $region37: #{_lambda_.1} parent=11 // pred_check
          %p396 = pneg %p274
        $region38: #{_lambda_.1} parent=11 // pred_check_branch
          %398 = sbr.rel (%p396) target = $region40
        $region39: #{_lambda_.1} parent=11 // pred_region
          _
        $region40: #{_lambda_.1} parent=11 // pred_fallthru
          _
        // Predicated region
        $region41: #{_lambda_.1} parent=11 // pred_check
          %p399 = pneg %p295
        $region42: #{_lambda_.1} parent=11 // pred_check_branch
          %401 = sbr.rel (%p399) target = $region44
        $region43: #{_lambda_.1} parent=11 // pred_region
          _
        $region44: #{_lambda_.1} parent=11 // pred_fallthru
          _
        // Predicated region
        $region45: #{_lambda_.1} parent=11 // pred_check
          %p402 = pneg %p316
        $region46: #{_lambda_.1} parent=11 // pred_check_branch
          %404 = sbr.rel (%p402) target = $region48
        $region47: #{_lambda_.1} parent=11 // pred_region
          _
        $region48: #{_lambda_.1} parent=11 // pred_fallthru
          _
        // Predicated region
        $region49: #{_lambda_.1} parent=11 // pred_check
          %p405 = pneg %p337
        $region50: #{_lambda_.1} parent=11 // pred_check_branch
          %407 = sbr.rel (%p405) target = $region52
        $region51: #{_lambda_.1} parent=11 // pred_region
          _
        $region52: #{_lambda_.1} parent=11 // pred_fallthru
          _
      $region12: #{_lambda_.1} parent=5 // pred_fallthru
        _
      %p408 = scmp.lt.s32.totalorder %s23, 2
      // Predicated region
      $region53: #{_lambda_.1} parent=5 // pred_check
        %p409 = pneg %p408
      $region54: #{_lambda_.1} parent=5 // pred_check_branch
        %411 = sbr.rel (%p409) target = $region56
      $region55: #{_lambda_.1} parent=5 // pred_region
        // Predicated region
        $region57: #{_lambda_.1} parent=55 // pred_check
          %p412 = pneg %p43
        $region58: #{_lambda_.1} parent=55 // pred_check_branch
          %414 = sbr.rel (%p412) target = $region60
        $region59: #{_lambda_.1} parent=55 // pred_region
          %p415 = scmp.lt.s32.totalorder %s23, 1
          %s416 = scalar_select %p415, %s23, 1
          %s417 = smul.addr %s416, 18
          %s418 = smul.addr %s417, 8
          %s419 = scalar_lea.vmem %s0, %s418
        $region60: #{_lambda_.1} parent=55 // pred_fallthru
          _
        // Predicated region
        $region61: #{_lambda_.1} parent=55 // pred_check
          %p420 = pneg %p69
        $region62: #{_lambda_.1} parent=55 // pred_check_branch
          %422 = sbr.rel (%p420) target = $region64
        $region63: #{_lambda_.1} parent=55 // pred_region
          %p423 = scmp.lt.s32.totalorder %s23, 1
          %s424 = scalar_select %p423, %s23, 1
          %s425 = smul.addr %s424, 18
          %s426 = smul.addr %s425, 8
          %s427 = scalar_lea.vmem %s1, %s426
        $region64: #{_lambda_.1} parent=55 // pred_fallthru
          _
        // Predicated region
        $region65: #{_lambda_.1} parent=55 // pred_check
          %p428 = pneg %p95
        $region66: #{_lambda_.1} parent=55 // pred_check_branch
          %430 = sbr.rel (%p428) target = $region68
        $region67: #{_lambda_.1} parent=55 // pred_region
          %p431 = scmp.lt.s32.totalorder %s23, 1
          %s432 = scalar_select %p431, %s23, 1
          %s433 = smul.addr %s432, 18
          %s434 = smul.addr %s433, 8
          %s435 = scalar_lea.vmem %s2, %s434
        $region68: #{_lambda_.1} parent=55 // pred_fallthru
          _
        // Predicated region
        $region69: #{_lambda_.1} parent=55 // pred_check
          %p436 = pneg %p121
        $region70: #{_lambda_.1} parent=55 // pred_check_branch
          %438 = sbr.rel (%p436) target = $region72
        $region71: #{_lambda_.1} parent=55 // pred_region
          %p439 = scmp.lt.s32.totalorder %s23, 1
          %s440 = scalar_select %p439, %s23, 1
          %s441 = smul.addr %s440, 18
          %s442 = smul.addr %s441, 8
          %s443 = scalar_lea.vmem %s3, %s442
        $region72: #{_lambda_.1} parent=55 // pred_fallthru
          _
      $region56: #{_lambda_.1} parent=5 // pred_fallthru
        _
      %p444 = scmp.le.s32.totalorder 1, %s23
      %p445 = scmp.lt.s32.totalorder %s23, 3
      %p446 = pnand %p444, %p445
      %p447 = pneg %p446
      // Predicated region
      $region73: #{_lambda_.1} parent=5 // pred_check
        _
      $region74: #{_lambda_.1} parent=5 // pred_check_branch
        %449 = sbr.rel (%p446) target = $region76
      $region75: #{_lambda_.1} parent=5 // pred_region
        %s450 = ssub.s32 %s23, 1
        %p451 = scmp.lt.s32.totalorder %s28, 1
        %s452 = scalar_select %p451, %s28, 1
        %s453 = smul.addr %s452, 18
        %s454 = smul.addr %s453, 8
        %s455 = scalar_lea.vmem %s0, %s454
        %p456 = pneg %p49
        %p457 = pneg %p46
        %p458 = scmp.lt.s32.totalorder %s28, 1
        %s459 = scalar_select %p458, %s28, 1
        %s460 = smul.addr %s459, 18
        %s461 = smul.addr %s460, 8
        %s462 = scalar_lea.vmem %s1, %s461
        %p463 = pneg %p75
        %p464 = pneg %p72
        %p465 = scmp.lt.s32.totalorder %s28, 1
        %s466 = scalar_select %p465, %s28, 1
        %s467 = smul.addr %s466, 18
        %s468 = smul.addr %s467, 8
        %s469 = scalar_lea.vmem %s2, %s468
        %p470 = pneg %p101
        %p471 = pneg %p98
        %p472 = scmp.lt.s32.totalorder %s28, 1
        %s473 = scalar_select %p472, %s28, 1
        %s474 = smul.addr %s473, 18
        %s475 = smul.addr %s474, 8
        %s476 = scalar_lea.vmem %s3, %s475
        %p477 = pneg %p127
        %p478 = pneg %p124
        %p479 = pneg %p148
        %p480 = pneg %p145
        %p481 = pneg %p169
        %p482 = pneg %p166
        %p483 = pneg %p190
        %p484 = pneg %p187
        %p485 = pneg %p211
        %p486 = pneg %p208
        %p487 = pneg %p232
        %p488 = pneg %p229
        %p489 = pneg %p253
        %p490 = pneg %p250
        %p491 = pneg %p274
        %p492 = pneg %p271
        %p493 = pneg %p295
        %p494 = pneg %p292
        %p495 = pneg %p316
        %p496 = pneg %p313
        %p497 = pneg %p337
        %p498 = pneg %p334
        %p499 = pneg %p363
        %p500 = pneg %p360
        %s501 = sand.u32 %s350, 1
        %s502 = scalar_lea.sflag [#allocation7], %s501
        %s503 = sand.u32 %s350, 1
        %s504 = smul.addr %s503, 64
        %s505 = scalar_lea.vmem [#allocation6], %s504
        %p506 = scmp.lt.s32.totalorder %s28, 1
        %s507 = scalar_select %p506, %s28, 1
        %s508 = smul.addr %s507, 18
        %s509 = smul.addr %s508, 8
        %s510 = scalar_lea.vmem %s0, %s509
        %p511 = scmp.lt.s32.totalorder %s28, 1
        %s512 = scalar_select %p511, %s28, 1
        %s513 = smul.addr %s512, 18
        %s514 = smul.addr %s513, 8
        %s515 = scalar_lea.vmem %s1, %s514
        %p516 = scmp.lt.s32.totalorder %s28, 1
        %s517 = scalar_select %p516, %s28, 1
        %s518 = smul.addr %s517, 18
        %s519 = smul.addr %s518, 8
        %s520 = scalar_lea.vmem %s2, %s519
        %p521 = scmp.lt.s32.totalorder %s28, 1
        %s522 = scalar_select %p521, %s28, 1
        %s523 = smul.addr %s522, 18
        %s524 = smul.addr %s523, 8
        %s525 = scalar_lea.vmem %s3, %s524
        %v527 = vlaneseq
        %v528 = vshrl.u32 %v527, 7
        %v529 = vadd.s32 %v528, 8
        %v530 = vld [vmem:[%s510] sm:$0xff]
        %v531 = vld [vmem:[%s510 + $0x8] sm:$0x1]
        %v532 = vld [vmem:[%s510 + $0x10] sm:$0xff]
        %v533 = vld [vmem:[%s510 + $0x18] sm:$0x1]
        %v534 = vld [vmem:[%s510 + $0x20] sm:$0xff]
        %v535 = vld [vmem:[%s510 + $0x28] sm:$0x1]
        %v536 = vld [vmem:[%s510 + $0x30] sm:$0xff]
        %v537 = vld [vmem:[%s510 + $0x38] sm:$0x1]
        %v538 = vld [vmem:[%s510 + $0x40] sm:$0xff]
        %v539 = vld [vmem:[%s510 + $0x48] sm:$0x1]
        %v540 = vld [vmem:[%s510 + $0x50] sm:$0xff]
        %v541 = vld [vmem:[%s510 + $0x58] sm:$0x1]
        %v542 = vld [vmem:[%s510 + $0x60] sm:$0xff]
        %v543 = vld [vmem:[%s510 + $0x68] sm:$0x1]
        %v544 = vld [vmem:[%s510 + $0x70] sm:$0xff]
        %v545 = vld [vmem:[%s510 + $0x78] sm:$0x1]
        %v546 = vld [vmem:[%s510 + $0x80] sm:$0xff]
        %v547 = vld [vmem:[%s510 + $0x88] sm:$0x1]
        %v548 = vld [vmem:[%s515] sm:$0xff]
        %v549 = vld [vmem:[%s515 + $0x8] sm:$0x1]
        %v550 = vld [vmem:[%s515 + $0x10] sm:$0xff]
        %v551 = vld [vmem:[%s515 + $0x18] sm:$0x1]
        %v552 = vld [vmem:[%s515 + $0x20] sm:$0xff]
        %v553 = vld [vmem:[%s515 + $0x28] sm:$0x1]
        %v554 = vld [vmem:[%s515 + $0x30] sm:$0xff]
        %v555 = vld [vmem:[%s515 + $0x38] sm:$0x1]
        %v556 = vld [vmem:[%s515 + $0x40] sm:$0xff]
        %v557 = vld [vmem:[%s515 + $0x48] sm:$0x1]
        %v558 = vld [vmem:[%s515 + $0x50] sm:$0xff]
        %v559 = vld [vmem:[%s515 + $0x58] sm:$0x1]
        %v560 = vld [vmem:[%s515 + $0x60] sm:$0xff]
        %v561 = vld [vmem:[%s515 + $0x68] sm:$0x1]
        %v562 = vld [vmem:[%s515 + $0x70] sm:$0xff]
        %v563 = vld [vmem:[%s515 + $0x78] sm:$0x1]
        %v564 = vld [vmem:[%s515 + $0x80] sm:$0xff]
        %v565 = vld [vmem:[%s515 + $0x88] sm:$0x1]
        %v566 = vld [vmem:[%s520] sm:$0xff]
        %v567 = vld [vmem:[%s520 + $0x8] sm:$0x1]
        %v568 = vld [vmem:[%s520 + $0x10] sm:$0xff]
        %v569 = vld [vmem:[%s520 + $0x18] sm:$0x1]
        %v570 = vld [vmem:[%s520 + $0x20] sm:$0xff]
        %v571 = vld [vmem:[%s520 + $0x28] sm:$0x1]
        %v572 = vld [vmem:[%s520 + $0x30] sm:$0xff]
        %v573 = vld [vmem:[%s520 + $0x38] sm:$0x1]
        %v574 = vld [vmem:[%s520 + $0x40] sm:$0xff]
        %v575 = vld [vmem:[%s520 + $0x48] sm:$0x1]
        %v576 = vld [vmem:[%s520 + $0x50] sm:$0xff]
        %v577 = vld [vmem:[%s520 + $0x58] sm:$0x1]
        %v578 = vld [vmem:[%s520 + $0x60] sm:$0xff]
        %v579 = vld [vmem:[%s520 + $0x68] sm:$0x1]
        %v580 = vld [vmem:[%s520 + $0x70] sm:$0xff]
        %v581 = vld [vmem:[%s520 + $0x78] sm:$0x1]
        %v582 = vld [vmem:[%s520 + $0x80] sm:$0xff]
        %v583 = vld [vmem:[%s520 + $0x88] sm:$0x1]
        %v584 = vld [vmem:[%s525] sm:$0xff]
        %v585 = vld [vmem:[%s525 + $0x8] sm:$0x1]
        %v586 = vld [vmem:[%s525 + $0x10] sm:$0xff]
        %v587 = vld [vmem:[%s525 + $0x18] sm:$0x1]
        %v588 = vld [vmem:[%s525 + $0x20] sm:$0xff]
        %v589 = vld [vmem:[%s525 + $0x28] sm:$0x1]
        %v590 = vld [vmem:[%s525 + $0x30] sm:$0xff]
        %v591 = vld [vmem:[%s525 + $0x38] sm:$0x1]
        %v592 = vld [vmem:[%s525 + $0x40] sm:$0xff]
        %v593 = vld [vmem:[%s525 + $0x48] sm:$0x1]
        %v594 = vld [vmem:[%s525 + $0x50] sm:$0xff]
        %v595 = vld [vmem:[%s525 + $0x58] sm:$0x1]
        %v596 = vld [vmem:[%s525 + $0x60] sm:$0xff]
        %v597 = vld [vmem:[%s525 + $0x68] sm:$0x1]
        %v598 = vld [vmem:[%s525 + $0x70] sm:$0xff]
        %v599 = vld [vmem:[%s525 + $0x78] sm:$0x1]
        %v600 = vld [vmem:[%s525 + $0x80] sm:$0xff]
        %v601 = vld [vmem:[%s525 + $0x88] sm:$0x1]
        %v620 = vcombine.high %v530, %v530
        %v622 = vunpack.c.l.s4 1966171168
        %v623 = vunpack.c.0.s8 %v622
        %v624 = vlaneseq
        %v625 = vshrl.u32 %v624, 7
        %v626 = vsub.s32 %v623, %v625
        %v627 = vrot.slane %v530, %v626
        %v629 = vunpack.c.l.s4 1966171168
        %v630 = vunpack.c.0.s8 %v629
        %v631 = vlaneseq
        %v632 = vshrl.u32 %v631, 7
        %v633 = vsub.s32 %v630, %v632
        %v634 = vrot.slane %v620, %v633
        %v635 = vcombine.high %v627, %v627
        %v636 = vcombine.high %v634, %v634
        %v638 = vunpack.c.l.s4 1966171168
        %v639 = vunpack.c.0.s8 %v638
        %v640 = vlaneseq
        %v641 = vshrl.u32 %v640, 7
        %v642 = vsub.s32 %v639, %v641
        %v643 = vrot.slane %v627, %v642
        %v645 = vunpack.c.l.s4 1966171168
        %v646 = vunpack.c.0.s8 %v645
        %v647 = vlaneseq
        %v648 = vshrl.u32 %v647, 7
        %v649 = vsub.s32 %v646, %v648
        %v650 = vrot.slane %v634, %v649
        %v652 = vunpack.c.l.s4 1966171168
        %v653 = vunpack.c.0.s8 %v652
        %v654 = vlaneseq
        %v655 = vshrl.u32 %v654, 7
        %v656 = vsub.s32 %v653, %v655
        %v657 = vrot.slane %v635, %v656
        %v659 = vunpack.c.l.s4 1966171168
        %v660 = vunpack.c.0.s8 %v659
        %v661 = vlaneseq
        %v662 = vshrl.u32 %v661, 7
        %v663 = vsub.s32 %v660, %v662
        %v664 = vrot.slane %v636, %v663
        %v665 = vcombine.high %v643, %v643
        %v666 = vcombine.high %v650, %v650
        %v667 = vcombine.high %v657, %v657
        %v668 = vcombine.high %v664, %v664
        %v670 = vunpack.c.l.s4 1966171168
        %v671 = vunpack.c.0.s8 %v670
        %v672 = vlaneseq
        %v673 = vshrl.u32 %v672, 7
        %v674 = vsub.s32 %v671, %v673
        %v675 = vrot.slane %v531, %v674
        %v677 = vunpack.c.l.s4 1966171168
        %v678 = vunpack.c.0.s8 %v677
        %v679 = vlaneseq
        %v680 = vshrl.u32 %v679, 7
        %v681 = vsub.s32 %v678, %v680
        %v682 = vrot.slane %v675, %v681
        %v683 = vcombine.high %v532, %v532
        %v685 = vunpack.c.l.s4 1966171168
        %v686 = vunpack.c.0.s8 %v685
        %v687 = vlaneseq
        %v688 = vshrl.u32 %v687, 7
        %v689 = vsub.s32 %v686, %v688
        %v690 = vrot.slane %v532, %v689
        %v692 = vunpack.c.l.s4 1966171168
        %v693 = vunpack.c.0.s8 %v692
        %v694 = vlaneseq
        %v695 = vshrl.u32 %v694, 7
        %v696 = vsub.s32 %v693, %v695
        %v697 = vrot.slane %v683, %v696
        %v698 = vcombine.high %v690, %v690
        %v699 = vcombine.high %v697, %v697
        %v701 = vunpack.c.l.s4 1966171168
        %v702 = vunpack.c.0.s8 %v701
        %v703 = vlaneseq
        %v704 = vshrl.u32 %v703, 7
        %v705 = vsub.s32 %v702, %v704
        %v706 = vrot.slane %v690, %v705
        %v708 = vunpack.c.l.s4 1966171168
        %v709 = vunpack.c.0.s8 %v708
        %v710 = vlaneseq
        %v711 = vshrl.u32 %v710, 7
        %v712 = vsub.s32 %v709, %v711
        %v713 = vrot.slane %v697, %v712
        %v715 = vunpack.c.l.s4 1966171168
        %v716 = vunpack.c.0.s8 %v715
        %v717 = vlaneseq
        %v718 = vshrl.u32 %v717, 7
        %v719 = vsub.s32 %v716, %v718
        %v720 = vrot.slane %v698, %v719
        %v722 = vunpack.c.l.s4 1966171168
        %v723 = vunpack.c.0.s8 %v722
        %v724 = vlaneseq
        %v725 = vshrl.u32 %v724, 7
        %v726 = vsub.s32 %v723, %v725
        %v727 = vrot.slane %v699, %v726
        %v728 = vcombine.high %v706, %v706
        %v729 = vcombine.high %v713, %v713
        %v730 = vcombine.high %v720, %v720
        %v731 = vcombine.high %v727, %v727
        %v733 = vunpack.c.l.s4 1966171168
        %v734 = vunpack.c.0.s8 %v733
        %v735 = vlaneseq
        %v736 = vshrl.u32 %v735, 7
        %v737 = vsub.s32 %v734, %v736
        %v738 = vrot.slane %v533, %v737
        %v740 = vunpack.c.l.s4 1966171168
        %v741 = vunpack.c.0.s8 %v740
        %v742 = vlaneseq
        %v743 = vshrl.u32 %v742, 7
        %v744 = vsub.s32 %v741, %v743
        %v745 = vrot.slane %v738, %v744
        %v746 = vcombine.high %v534, %v534
        %v748 = vunpack.c.l.s4 1966171168
        %v749 = vunpack.c.0.s8 %v748
        %v750 = vlaneseq
        %v751 = vshrl.u32 %v750, 7
        %v752 = vsub.s32 %v749, %v751
        %v753 = vrot.slane %v534, %v752
        %v755 = vunpack.c.l.s4 1966171168
        %v756 = vunpack.c.0.s8 %v755
        %v757 = vlaneseq
        %v758 = vshrl.u32 %v757, 7
        %v759 = vsub.s32 %v756, %v758
        %v760 = vrot.slane %v746, %v759
        %v761 = vcombine.high %v753, %v753
        %v762 = vcombine.high %v760, %v760
        %v764 = vunpack.c.l.s4 1966171168
        %v765 = vunpack.c.0.s8 %v764
        %v766 = vlaneseq
        %v767 = vshrl.u32 %v766, 7
        %v768 = vsub.s32 %v765, %v767
        %v769 = vrot.slane %v753, %v768
        %v771 = vunpack.c.l.s4 1966171168
        %v772 = vunpack.c.0.s8 %v771
        %v773 = vlaneseq
        %v774 = vshrl.u32 %v773, 7
        %v775 = vsub.s32 %v772, %v774
        %v776 = vrot.slane %v760, %v775
        %v778 = vunpack.c.l.s4 1966171168
        %v779 = vunpack.c.0.s8 %v778
        %v780 = vlaneseq
        %v781 = vshrl.u32 %v780, 7
        %v782 = vsub.s32 %v779, %v781
        %v783 = vrot.slane %v761, %v782
        %v785 = vunpack.c.l.s4 1966171168
        %v786 = vunpack.c.0.s8 %v785
        %v787 = vlaneseq
        %v788 = vshrl.u32 %v787, 7
        %v789 = vsub.s32 %v786, %v788
        %v790 = vrot.slane %v762, %v789
        %v791 = vcombine.high %v769, %v769
        %v792 = vcombine.high %v776, %v776
        %v793 = vcombine.high %v783, %v783
        %v794 = vcombine.high %v790, %v790
        %v796 = vunpack.c.l.s4 1966171168
        %v797 = vunpack.c.0.s8 %v796
        %v798 = vlaneseq
        %v799 = vshrl.u32 %v798, 7
        %v800 = vsub.s32 %v797, %v799
        %v801 = vrot.slane %v535, %v800
        %v803 = vunpack.c.l.s4 1966171168
        %v804 = vunpack.c.0.s8 %v803
        %v805 = vlaneseq
        %v806 = vshrl.u32 %v805, 7
        %v807 = vsub.s32 %v804, %v806
        %v808 = vrot.slane %v801, %v807
        %v809 = vcombine.high %v536, %v536
        %v811 = vunpack.c.l.s4 1966171168
        %v812 = vunpack.c.0.s8 %v811
        %v813 = vlaneseq
        %v814 = vshrl.u32 %v813, 7
        %v815 = vsub.s32 %v812, %v814
        %v816 = vrot.slane %v536, %v815
        %v818 = vunpack.c.l.s4 1966171168
        %v819 = vunpack.c.0.s8 %v818
        %v820 = vlaneseq
        %v821 = vshrl.u32 %v820, 7
        %v822 = vsub.s32 %v819, %v821
        %v823 = vrot.slane %v809, %v822
        %v824 = vcombine.high %v816, %v816
        %v825 = vcombine.high %v823, %v823
        %v827 = vunpack.c.l.s4 1966171168
        %v828 = vunpack.c.0.s8 %v827
        %v829 = vlaneseq
        %v830 = vshrl.u32 %v829, 7
        %v831 = vsub.s32 %v828, %v830
        %v832 = vrot.slane %v816, %v831
        %v834 = vunpack.c.l.s4 1966171168
        %v835 = vunpack.c.0.s8 %v834
        %v836 = vlaneseq
        %v837 = vshrl.u32 %v836, 7
        %v838 = vsub.s32 %v835, %v837
        %v839 = vrot.slane %v823, %v838
        %v841 = vunpack.c.l.s4 1966171168
        %v842 = vunpack.c.0.s8 %v841
        %v843 = vlaneseq
        %v844 = vshrl.u32 %v843, 7
        %v845 = vsub.s32 %v842, %v844
        %v846 = vrot.slane %v824, %v845
        %v848 = vunpack.c.l.s4 1966171168
        %v849 = vunpack.c.0.s8 %v848
        %v850 = vlaneseq
        %v851 = vshrl.u32 %v850, 7
        %v852 = vsub.s32 %v849, %v851
        %v853 = vrot.slane %v825, %v852
        %v854 = vcombine.high %v832, %v832
        %v855 = vcombine.high %v839, %v839
        %v856 = vcombine.high %v846, %v846
        %v857 = vcombine.high %v853, %v853
        %v859 = vunpack.c.l.s4 1966171168
        %v860 = vunpack.c.0.s8 %v859
        %v861 = vlaneseq
        %v862 = vshrl.u32 %v861, 7
        %v863 = vsub.s32 %v860, %v862
        %v864 = vrot.slane %v537, %v863
        %v866 = vunpack.c.l.s4 1966171168
        %v867 = vunpack.c.0.s8 %v866
        %v868 = vlaneseq
        %v869 = vshrl.u32 %v868, 7
        %v870 = vsub.s32 %v867, %v869
        %v871 = vrot.slane %v864, %v870
        %v872 = vcombine.high %v538, %v538
        %v874 = vunpack.c.l.s4 1966171168
        %v875 = vunpack.c.0.s8 %v874
        %v876 = vlaneseq
        %v877 = vshrl.u32 %v876, 7
        %v878 = vsub.s32 %v875, %v877
        %v879 = vrot.slane %v538, %v878
        %v881 = vunpack.c.l.s4 1966171168
        %v882 = vunpack.c.0.s8 %v881
        %v883 = vlaneseq
        %v884 = vshrl.u32 %v883, 7
        %v885 = vsub.s32 %v882, %v884
        %v886 = vrot.slane %v872, %v885
        %v887 = vcombine.high %v879, %v879
        %v888 = vcombine.high %v886, %v886
        %v890 = vunpack.c.l.s4 1966171168
        %v891 = vunpack.c.0.s8 %v890
        %v892 = vlaneseq
        %v893 = vshrl.u32 %v892, 7
        %v894 = vsub.s32 %v891, %v893
        %v895 = vrot.slane %v879, %v894
        %v897 = vunpack.c.l.s4 1966171168
        %v898 = vunpack.c.0.s8 %v897
        %v899 = vlaneseq
        %v900 = vshrl.u32 %v899, 7
        %v901 = vsub.s32 %v898, %v900
        %v902 = vrot.slane %v886, %v901
        %v904 = vunpack.c.l.s4 1966171168
        %v905 = vunpack.c.0.s8 %v904
        %v906 = vlaneseq
        %v907 = vshrl.u32 %v906, 7
        %v908 = vsub.s32 %v905, %v907
        %v909 = vrot.slane %v887, %v908
        %v911 = vunpack.c.l.s4 1966171168
        %v912 = vunpack.c.0.s8 %v911
        %v913 = vlaneseq
        %v914 = vshrl.u32 %v913, 7
        %v915 = vsub.s32 %v912, %v914
        %v916 = vrot.slane %v888, %v915
        %v917 = vcombine.high %v895, %v895
        %v918 = vcombine.high %v902, %v902
        %v919 = vcombine.high %v909, %v909
        %v920 = vcombine.high %v916, %v916
        %v922 = vunpack.c.l.s4 1966171168
        %v923 = vunpack.c.0.s8 %v922
        %v924 = vlaneseq
        %v925 = vshrl.u32 %v924, 7
        %v926 = vsub.s32 %v923, %v925
        %v927 = vrot.slane %v539, %v926
        %v929 = vunpack.c.l.s4 1966171168
        %v930 = vunpack.c.0.s8 %v929
        %v931 = vlaneseq
        %v932 = vshrl.u32 %v931, 7
        %v933 = vsub.s32 %v930, %v932
        %v934 = vrot.slane %v927, %v933
        %v935 = vcombine.high %v540, %v540
        %v937 = vunpack.c.l.s4 1966171168
        %v938 = vunpack.c.0.s8 %v937
        %v939 = vlaneseq
        %v940 = vshrl.u32 %v939, 7
        %v941 = vsub.s32 %v938, %v940
        %v942 = vrot.slane %v540, %v941
        %v944 = vunpack.c.l.s4 1966171168
        %v945 = vunpack.c.0.s8 %v944
        %v946 = vlaneseq
        %v947 = vshrl.u32 %v946, 7
        %v948 = vsub.s32 %v945, %v947
        %v949 = vrot.slane %v935, %v948
        %v950 = vcombine.high %v942, %v942
        %v951 = vcombine.high %v949, %v949
        %v953 = vunpack.c.l.s4 1966171168
        %v954 = vunpack.c.0.s8 %v953
        %v955 = vlaneseq
        %v956 = vshrl.u32 %v955, 7
        %v957 = vsub.s32 %v954, %v956
        %v958 = vrot.slane %v942, %v957
        %v960 = vunpack.c.l.s4 1966171168
        %v961 = vunpack.c.0.s8 %v960
        %v962 = vlaneseq
        %v963 = vshrl.u32 %v962, 7
        %v964 = vsub.s32 %v961, %v963
        %v965 = vrot.slane %v949, %v964
        %v967 = vunpack.c.l.s4 1966171168
        %v968 = vunpack.c.0.s8 %v967
        %v969 = vlaneseq
        %v970 = vshrl.u32 %v969, 7
        %v971 = vsub.s32 %v968, %v970
        %v972 = vrot.slane %v950, %v971
        %v974 = vunpack.c.l.s4 1966171168
        %v975 = vunpack.c.0.s8 %v974
        %v976 = vlaneseq
        %v977 = vshrl.u32 %v976, 7
        %v978 = vsub.s32 %v975, %v977
        %v979 = vrot.slane %v951, %v978
        %v980 = vcombine.high %v958, %v958
        %v981 = vcombine.high %v965, %v965
        %v982 = vcombine.high %v972, %v972
        %v983 = vcombine.high %v979, %v979
        %v985 = vunpack.c.l.s4 1966171168
        %v986 = vunpack.c.0.s8 %v985
        %v987 = vlaneseq
        %v988 = vshrl.u32 %v987, 7
        %v989 = vsub.s32 %v986, %v988
        %v990 = vrot.slane %v541, %v989
        %v992 = vunpack.c.l.s4 1966171168
        %v993 = vunpack.c.0.s8 %v992
        %v994 = vlaneseq
        %v995 = vshrl.u32 %v994, 7
        %v996 = vsub.s32 %v993, %v995
        %v997 = vrot.slane %v990, %v996
        %v998 = vcombine.high %v542, %v542
        %v1000 = vunpack.c.l.s4 1966171168
        %v1001 = vunpack.c.0.s8 %v1000
        %v1002 = vlaneseq
        %v1003 = vshrl.u32 %v1002, 7
        %v1004 = vsub.s32 %v1001, %v1003
        %v1005 = vrot.slane %v542, %v1004
        %v1007 = vunpack.c.l.s4 1966171168
        %v1008 = vunpack.c.0.s8 %v1007
        %v1009 = vlaneseq
        %v1010 = vshrl.u32 %v1009, 7
        %v1011 = vsub.s32 %v1008, %v1010
        %v1012 = vrot.slane %v998, %v1011
        %v1013 = vcombine.high %v1005, %v1005
        %v1014 = vcombine.high %v1012, %v1012
        %v1016 = vunpack.c.l.s4 1966171168
        %v1017 = vunpack.c.0.s8 %v1016
        %v1018 = vlaneseq
        %v1019 = vshrl.u32 %v1018, 7
        %v1020 = vsub.s32 %v1017, %v1019
        %v1021 = vrot.slane %v1005, %v1020
        %v1023 = vunpack.c.l.s4 1966171168
        %v1024 = vunpack.c.0.s8 %v1023
        %v1025 = vlaneseq
        %v1026 = vshrl.u32 %v1025, 7
        %v1027 = vsub.s32 %v1024, %v1026
        %v1028 = vrot.slane %v1012, %v1027
        %v1030 = vunpack.c.l.s4 1966171168
        %v1031 = vunpack.c.0.s8 %v1030
        %v1032 = vlaneseq
        %v1033 = vshrl.u32 %v1032, 7
        %v1034 = vsub.s32 %v1031, %v1033
        %v1035 = vrot.slane %v1013, %v1034
        %v1037 = vunpack.c.l.s4 1966171168
        %v1038 = vunpack.c.0.s8 %v1037
        %v1039 = vlaneseq
        %v1040 = vshrl.u32 %v1039, 7
        %v1041 = vsub.s32 %v1038, %v1040
        %v1042 = vrot.slane %v1014, %v1041
        %v1043 = vcombine.high %v1021, %v1021
        %v1044 = vcombine.high %v1028, %v1028
        %v1045 = vcombine.high %v1035, %v1035
        %v1046 = vcombine.high %v1042, %v1042
        %v1048 = vunpack.c.l.s4 1966171168
        %v1049 = vunpack.c.0.s8 %v1048
        %v1050 = vlaneseq
        %v1051 = vshrl.u32 %v1050, 7
        %v1052 = vsub.s32 %v1049, %v1051
        %v1053 = vrot.slane %v543, %v1052
        %v1055 = vunpack.c.l.s4 1966171168
        %v1056 = vunpack.c.0.s8 %v1055
        %v1057 = vlaneseq
        %v1058 = vshrl.u32 %v1057, 7
        %v1059 = vsub.s32 %v1056, %v1058
        %v1060 = vrot.slane %v1053, %v1059
        %v1061 = vcombine.high %v544, %v544
        %v1063 = vunpack.c.l.s4 1966171168
        %v1064 = vunpack.c.0.s8 %v1063
        %v1065 = vlaneseq
        %v1066 = vshrl.u32 %v1065, 7
        %v1067 = vsub.s32 %v1064, %v1066
        %v1068 = vrot.slane %v544, %v1067
        %v1070 = vunpack.c.l.s4 1966171168
        %v1071 = vunpack.c.0.s8 %v1070
        %v1072 = vlaneseq
        %v1073 = vshrl.u32 %v1072, 7
        %v1074 = vsub.s32 %v1071, %v1073
        %v1075 = vrot.slane %v1061, %v1074
        %v1076 = vcombine.high %v1068, %v1068
        %v1077 = vcombine.high %v1075, %v1075
        %v1079 = vunpack.c.l.s4 1966171168
        %v1080 = vunpack.c.0.s8 %v1079
        %v1081 = vlaneseq
        %v1082 = vshrl.u32 %v1081, 7
        %v1083 = vsub.s32 %v1080, %v1082
        %v1084 = vrot.slane %v1068, %v1083
        %v1086 = vunpack.c.l.s4 1966171168
        %v1087 = vunpack.c.0.s8 %v1086
        %v1088 = vlaneseq
        %v1089 = vshrl.u32 %v1088, 7
        %v1090 = vsub.s32 %v1087, %v1089
        %v1091 = vrot.slane %v1075, %v1090
        %v1093 = vunpack.c.l.s4 1966171168
        %v1094 = vunpack.c.0.s8 %v1093
        %v1095 = vlaneseq
        %v1096 = vshrl.u32 %v1095, 7
        %v1097 = vsub.s32 %v1094, %v1096
        %v1098 = vrot.slane %v1076, %v1097
        %v1100 = vunpack.c.l.s4 1966171168
        %v1101 = vunpack.c.0.s8 %v1100
        %v1102 = vlaneseq
        %v1103 = vshrl.u32 %v1102, 7
        %v1104 = vsub.s32 %v1101, %v1103
        %v1105 = vrot.slane %v1077, %v1104
        %v1106 = vcombine.high %v1084, %v1084
        %v1107 = vcombine.high %v1091, %v1091
        %v1108 = vcombine.high %v1098, %v1098
        %v1109 = vcombine.high %v1105, %v1105
        %v1111 = vunpack.c.l.s4 1966171168
        %v1112 = vunpack.c.0.s8 %v1111
        %v1113 = vlaneseq
        %v1114 = vshrl.u32 %v1113, 7
        %v1115 = vsub.s32 %v1112, %v1114
        %v1116 = vrot.slane %v545, %v1115
        %v1118 = vunpack.c.l.s4 1966171168
        %v1119 = vunpack.c.0.s8 %v1118
        %v1120 = vlaneseq
        %v1121 = vshrl.u32 %v1120, 7
        %v1122 = vsub.s32 %v1119, %v1121
        %v1123 = vrot.slane %v1116, %v1122
        %v1124 = vcombine.high %v546, %v546
        %v1126 = vunpack.c.l.s4 1966171168
        %v1127 = vunpack.c.0.s8 %v1126
        %v1128 = vlaneseq
        %v1129 = vshrl.u32 %v1128, 7
        %v1130 = vsub.s32 %v1127, %v1129
        %v1131 = vrot.slane %v546, %v1130
        %v1133 = vunpack.c.l.s4 1966171168
        %v1134 = vunpack.c.0.s8 %v1133
        %v1135 = vlaneseq
        %v1136 = vshrl.u32 %v1135, 7
        %v1137 = vsub.s32 %v1134, %v1136
        %v1138 = vrot.slane %v1124, %v1137
        %v1139 = vcombine.high %v1131, %v1131
        %v1140 = vcombine.high %v1138, %v1138
        %v1142 = vunpack.c.l.s4 1966171168
        %v1143 = vunpack.c.0.s8 %v1142
        %v1144 = vlaneseq
        %v1145 = vshrl.u32 %v1144, 7
        %v1146 = vsub.s32 %v1143, %v1145
        %v1147 = vrot.slane %v1131, %v1146
        %v1149 = vunpack.c.l.s4 1966171168
        %v1150 = vunpack.c.0.s8 %v1149
        %v1151 = vlaneseq
        %v1152 = vshrl.u32 %v1151, 7
        %v1153 = vsub.s32 %v1150, %v1152
        %v1154 = vrot.slane %v1138, %v1153
        %v1156 = vunpack.c.l.s4 1966171168
        %v1157 = vunpack.c.0.s8 %v1156
        %v1158 = vlaneseq
        %v1159 = vshrl.u32 %v1158, 7
        %v1160 = vsub.s32 %v1157, %v1159
        %v1161 = vrot.slane %v1139, %v1160
        %v1163 = vunpack.c.l.s4 1966171168
        %v1164 = vunpack.c.0.s8 %v1163
        %v1165 = vlaneseq
        %v1166 = vshrl.u32 %v1165, 7
        %v1167 = vsub.s32 %v1164, %v1166
        %v1168 = vrot.slane %v1140, %v1167
        %v1169 = vcombine.high %v1147, %v1147
        %v1170 = vcombine.high %v1154, %v1154
        %v1171 = vcombine.high %v1161, %v1161
        %v1172 = vcombine.high %v1168, %v1168
        %v1174 = vunpack.c.l.s4 1966171168
        %v1175 = vunpack.c.0.s8 %v1174
        %v1176 = vlaneseq
        %v1177 = vshrl.u32 %v1176, 7
        %v1178 = vsub.s32 %v1175, %v1177
        %v1179 = vrot.slane %v547, %v1178
        %v1181 = vunpack.c.l.s4 1966171168
        %v1182 = vunpack.c.0.s8 %v1181
        %v1183 = vlaneseq
        %v1184 = vshrl.u32 %v1183, 7
        %v1185 = vsub.s32 %v1182, %v1184
        %v1186 = vrot.slane %v1179, %v1185
        %v1187 = vcombine.low %v643, %v657
        %v1188 = vcombine.low %v665, %v667
        %v1189 = vcombine.low %v650, %v664
        %v1190 = vcombine.low %v666, %v668
        %v1192 = vunpack.c.l.s4 1966171168
        %v1193 = vunpack.c.0.s8 %v1192
        %v1194 = vlaneseq
        %v1195 = vshrl.u32 %v1194, 7
        %v1196 = vsub.s32 %v1193, %v1195
        %v1197 = vrot.slane %v1187, %v1196
        %v1199 = vunpack.c.l.s4 1966171168
        %v1200 = vunpack.c.0.s8 %v1199
        %v1201 = vlaneseq
        %v1202 = vshrl.u32 %v1201, 7
        %v1203 = vsub.s32 %v1200, %v1202
        %v1204 = vrot.slane %v1188, %v1203
        %v1206 = vunpack.c.l.s4 1966171168
        %v1207 = vunpack.c.0.s8 %v1206
        %v1208 = vlaneseq
        %v1209 = vshrl.u32 %v1208, 7
        %v1210 = vsub.s32 %v1207, %v1209
        %v1211 = vrot.slane %v1189, %v1210
        %v1213 = vunpack.c.l.s4 1966171168
        %v1214 = vunpack.c.0.s8 %v1213
        %v1215 = vlaneseq
        %v1216 = vshrl.u32 %v1215, 7
        %v1217 = vsub.s32 %v1214, %v1216
        %v1218 = vrot.slane %v1190, %v1217
        %v1219 = vcombine.low %v1197, %v1204
        %v1220 = vcombine.low %v1211, %v1218
        %v1222 = vunpack.c.l.s4 1966171168
        %v1223 = vunpack.c.0.s8 %v1222
        %v1224 = vlaneseq
        %v1225 = vshrl.u32 %v1224, 7
        %v1226 = vsub.s32 %v1223, %v1225
        %v1227 = vrot.slane %v1219, %v1226
        %v1229 = vunpack.c.l.s4 1966171168
        %v1230 = vunpack.c.0.s8 %v1229
        %v1231 = vlaneseq
        %v1232 = vshrl.u32 %v1231, 7
        %v1233 = vsub.s32 %v1230, %v1232
        %v1234 = vrot.slane %v1220, %v1233
        %v1235 = vcombine.low %v1227, %v1234
        %v1236 = vcombine.low %v682, %v706
        %v1237 = vcombine.low %v720, %v728
        %v1238 = vcombine.low %v730, %v713
        %v1239 = vcombine.low %v727, %v729
        %v1241 = vunpack.c.l.s4 1966171168
        %v1242 = vunpack.c.0.s8 %v1241
        %v1243 = vlaneseq
        %v1244 = vshrl.u32 %v1243, 7
        %v1245 = vsub.s32 %v1242, %v1244
        %v1246 = vrot.slane %v1236, %v1245
        %v1248 = vunpack.c.l.s4 1966171168
        %v1249 = vunpack.c.0.s8 %v1248
        %v1250 = vlaneseq
        %v1251 = vshrl.u32 %v1250, 7
        %v1252 = vsub.s32 %v1249, %v1251
        %v1253 = vrot.slane %v1237, %v1252
        %v1255 = vunpack.c.l.s4 1966171168
        %v1256 = vunpack.c.0.s8 %v1255
        %v1257 = vlaneseq
        %v1258 = vshrl.u32 %v1257, 7
        %v1259 = vsub.s32 %v1256, %v1258
        %v1260 = vrot.slane %v1238, %v1259
        %v1262 = vunpack.c.l.s4 1966171168
        %v1263 = vunpack.c.0.s8 %v1262
        %v1264 = vlaneseq
        %v1265 = vshrl.u32 %v1264, 7
        %v1266 = vsub.s32 %v1263, %v1265
        %v1267 = vrot.slane %v1239, %v1266
        %v1268 = vcombine.low %v1246, %v1253
        %v1269 = vcombine.low %v1260, %v1267
        %v1271 = vunpack.c.l.s4 1966171168
        %v1272 = vunpack.c.0.s8 %v1271
        %v1273 = vlaneseq
        %v1274 = vshrl.u32 %v1273, 7
        %v1275 = vsub.s32 %v1272, %v1274
        %v1276 = vrot.slane %v1268, %v1275
        %v1278 = vunpack.c.l.s4 1966171168
        %v1279 = vunpack.c.0.s8 %v1278
        %v1280 = vlaneseq
        %v1281 = vshrl.u32 %v1280, 7
        %v1282 = vsub.s32 %v1279, %v1281
        %v1283 = vrot.slane %v1269, %v1282
        %v1284 = vcombine.low %v1276, %v1283
        %v1285 = vcombine.low %v731, %v745
        %v1286 = vcombine.low %v769, %v783
        %v1287 = vcombine.low %v791, %v793
        %v1288 = vcombine.low %v776, %v790
        %v1290 = vunpack.c.l.s4 1966171168
        %v1291 = vunpack.c.0.s8 %v1290
        %v1292 = vlaneseq
        %v1293 = vshrl.u32 %v1292, 7
        %v1294 = vsub.s32 %v1291, %v1293
        %v1295 = vrot.slane %v1285, %v1294
        %v1297 = vunpack.c.l.s4 1966171168
        %v1298 = vunpack.c.0.s8 %v1297
        %v1299 = vlaneseq
        %v1300 = vshrl.u32 %v1299, 7
        %v1301 = vsub.s32 %v1298, %v1300
        %v1302 = vrot.slane %v1286, %v1301
        %v1304 = vunpack.c.l.s4 1966171168
        %v1305 = vunpack.c.0.s8 %v1304
        %v1306 = vlaneseq
        %v1307 = vshrl.u32 %v1306, 7
        %v1308 = vsub.s32 %v1305, %v1307
        %v1309 = vrot.slane %v1287, %v1308
        %v1311 = vunpack.c.l.s4 1966171168
        %v1312 = vunpack.c.0.s8 %v1311
        %v1313 = vlaneseq
        %v1314 = vshrl.u32 %v1313, 7
        %v1315 = vsub.s32 %v1312, %v1314
        %v1316 = vrot.slane %v1288, %v1315
        %v1317 = vcombine.low %v1295, %v1302
        %v1318 = vcombine.low %v1309, %v1316
        %v1320 = vunpack.c.l.s4 1966171168
        %v1321 = vunpack.c.0.s8 %v1320
        %v1322 = vlaneseq
        %v1323 = vshrl.u32 %v1322, 7
        %v1324 = vsub.s32 %v1321, %v1323
        %v1325 = vrot.slane %v1317, %v1324
        %v1327 = vunpack.c.l.s4 1966171168
        %v1328 = vunpack.c.0.s8 %v1327
        %v1329 = vlaneseq
        %v1330 = vshrl.u32 %v1329, 7
        %v1331 = vsub.s32 %v1328, %v1330
        %v1332 = vrot.slane %v1318, %v1331
        %v1333 = vcombine.low %v1325, %v1332
        %v1334 = vcombine.low %v792, %v794
        %v1335 = vcombine.low %v808, %v832
        %v1336 = vcombine.low %v846, %v854
        %v1337 = vcombine.low %v856, %v839
        %v1339 = vunpack.c.l.s4 1966171168
        %v1340 = vunpack.c.0.s8 %v1339
        %v1341 = vlaneseq
        %v1342 = vshrl.u32 %v1341, 7
        %v1343 = vsub.s32 %v1340, %v1342
        %v1344 = vrot.slane %v1334, %v1343
        %v1346 = vunpack.c.l.s4 1966171168
        %v1347 = vunpack.c.0.s8 %v1346
        %v1348 = vlaneseq
        %v1349 = vshrl.u32 %v1348, 7
        %v1350 = vsub.s32 %v1347, %v1349
        %v1351 = vrot.slane %v1335, %v1350
        %v1353 = vunpack.c.l.s4 1966171168
        %v1354 = vunpack.c.0.s8 %v1353
        %v1355 = vlaneseq
        %v1356 = vshrl.u32 %v1355, 7
        %v1357 = vsub.s32 %v1354, %v1356
        %v1358 = vrot.slane %v1336, %v1357
        %v1360 = vunpack.c.l.s4 1966171168
        %v1361 = vunpack.c.0.s8 %v1360
        %v1362 = vlaneseq
        %v1363 = vshrl.u32 %v1362, 7
        %v1364 = vsub.s32 %v1361, %v1363
        %v1365 = vrot.slane %v1337, %v1364
        %v1366 = vcombine.low %v1344, %v1351
        %v1367 = vcombine.low %v1358, %v1365
        %v1369 = vunpack.c.l.s4 1966171168
        %v1370 = vunpack.c.0.s8 %v1369
        %v1371 = vlaneseq
        %v1372 = vshrl.u32 %v1371, 7
        %v1373 = vsub.s32 %v1370, %v1372
        %v1374 = vrot.slane %v1366, %v1373
        %v1376 = vunpack.c.l.s4 1966171168
        %v1377 = vunpack.c.0.s8 %v1376
        %v1378 = vlaneseq
        %v1379 = vshrl.u32 %v1378, 7
        %v1380 = vsub.s32 %v1377, %v1379
        %v1381 = vrot.slane %v1367, %v1380
        %v1382 = vcombine.low %v1374, %v1381
        %v1383 = vcombine.low %v853, %v855
        %v1384 = vcombine.low %v857, %v871
        %v1385 = vcombine.low %v895, %v909
        %v1386 = vcombine.low %v917, %v919
        %v1388 = vunpack.c.l.s4 1966171168
        %v1389 = vunpack.c.0.s8 %v1388
        %v1390 = vlaneseq
        %v1391 = vshrl.u32 %v1390, 7
        %v1392 = vsub.s32 %v1389, %v1391
        %v1393 = vrot.slane %v1383, %v1392
        %v1395 = vunpack.c.l.s4 1966171168
        %v1396 = vunpack.c.0.s8 %v1395
        %v1397 = vlaneseq
        %v1398 = vshrl.u32 %v1397, 7
        %v1399 = vsub.s32 %v1396, %v1398
        %v1400 = vrot.slane %v1384, %v1399
        %v1402 = vunpack.c.l.s4 1966171168
        %v1403 = vunpack.c.0.s8 %v1402
        %v1404 = vlaneseq
        %v1405 = vshrl.u32 %v1404, 7
        %v1406 = vsub.s32 %v1403, %v1405
        %v1407 = vrot.slane %v1385, %v1406
        %v1409 = vunpack.c.l.s4 1966171168
        %v1410 = vunpack.c.0.s8 %v1409
        %v1411 = vlaneseq
        %v1412 = vshrl.u32 %v1411, 7
        %v1413 = vsub.s32 %v1410, %v1412
        %v1414 = vrot.slane %v1386, %v1413
        %v1415 = vcombine.low %v1393, %v1400
        %v1416 = vcombine.low %v1407, %v1414
        %v1418 = vunpack.c.l.s4 1966171168
        %v1419 = vunpack.c.0.s8 %v1418
        %v1420 = vlaneseq
        %v1421 = vshrl.u32 %v1420, 7
        %v1422 = vsub.s32 %v1419, %v1421
        %v1423 = vrot.slane %v1415, %v1422
        %v1425 = vunpack.c.l.s4 1966171168
        %v1426 = vunpack.c.0.s8 %v1425
        %v1427 = vlaneseq
        %v1428 = vshrl.u32 %v1427, 7
        %v1429 = vsub.s32 %v1426, %v1428
        %v1430 = vrot.slane %v1416, %v1429
        %v1431 = vcombine.low %v1423, %v1430
        %v1432 = vcombine.low %v902, %v916
        %v1433 = vcombine.low %v918, %v920
        %v1434 = vcombine.low %v934, %v958
        %v1435 = vcombine.low %v972, %v980
        %v1437 = vunpack.c.l.s4 1966171168
        %v1438 = vunpack.c.0.s8 %v1437
        %v1439 = vlaneseq
        %v1440 = vshrl.u32 %v1439, 7
        %v1441 = vsub.s32 %v1438, %v1440
        %v1442 = vrot.slane %v1432, %v1441
        %v1444 = vunpack.c.l.s4 1966171168
        %v1445 = vunpack.c.0.s8 %v1444
        %v1446 = vlaneseq
        %v1447 = vshrl.u32 %v1446, 7
        %v1448 = vsub.s32 %v1445, %v1447
        %v1449 = vrot.slane %v1433, %v1448
        %v1451 = vunpack.c.l.s4 1966171168
        %v1452 = vunpack.c.0.s8 %v1451
        %v1453 = vlaneseq
        %v1454 = vshrl.u32 %v1453, 7
        %v1455 = vsub.s32 %v1452, %v1454
        %v1456 = vrot.slane %v1434, %v1455
        %v1458 = vunpack.c.l.s4 1966171168
        %v1459 = vunpack.c.0.s8 %v1458
        %v1460 = vlaneseq
        %v1461 = vshrl.u32 %v1460, 7
        %v1462 = vsub.s32 %v1459, %v1461
        %v1463 = vrot.slane %v1435, %v1462
        %v1464 = vcombine.low %v1442, %v1449
        %v1465 = vcombine.low %v1456, %v1463
        %v1467 = vunpack.c.l.s4 1966171168
        %v1468 = vunpack.c.0.s8 %v1467
        %v1469 = vlaneseq
        %v1470 = vshrl.u32 %v1469, 7
        %v1471 = vsub.s32 %v1468, %v1470
        %v1472 = vrot.slane %v1464, %v1471
        %v1474 = vunpack.c.l.s4 1966171168
        %v1475 = vunpack.c.0.s8 %v1474
        %v1476 = vlaneseq
        %v1477 = vshrl.u32 %v1476, 7
        %v1478 = vsub.s32 %v1475, %v1477
        %v1479 = vrot.slane %v1465, %v1478
        %v1480 = vcombine.low %v1472, %v1479
        %v1481 = vcombine.low %v982, %v965
        %v1482 = vcombine.low %v979, %v981
        %v1483 = vcombine.low %v983, %v997
        %v1484 = vcombine.low %v1021, %v1035
        %v1486 = vunpack.c.l.s4 1966171168
        %v1487 = vunpack.c.0.s8 %v1486
        %v1488 = vlaneseq
        %v1489 = vshrl.u32 %v1488, 7
        %v1490 = vsub.s32 %v1487, %v1489
        %v1491 = vrot.slane %v1481, %v1490
        %v1493 = vunpack.c.l.s4 1966171168
        %v1494 = vunpack.c.0.s8 %v1493
        %v1495 = vlaneseq
        %v1496 = vshrl.u32 %v1495, 7
        %v1497 = vsub.s32 %v1494, %v1496
        %v1498 = vrot.slane %v1482, %v1497
        %v1500 = vunpack.c.l.s4 1966171168
        %v1501 = vunpack.c.0.s8 %v1500
        %v1502 = vlaneseq
        %v1503 = vshrl.u32 %v1502, 7
        %v1504 = vsub.s32 %v1501, %v1503
        %v1505 = vrot.slane %v1483, %v1504
        %v1507 = vunpack.c.l.s4 1966171168
        %v1508 = vunpack.c.0.s8 %v1507
        %v1509 = vlaneseq
        %v1510 = vshrl.u32 %v1509, 7
        %v1511 = vsub.s32 %v1508, %v1510
        %v1512 = vrot.slane %v1484, %v1511
        %v1513 = vcombine.low %v1491, %v1498
        %v1514 = vcombine.low %v1505, %v1512
        %v1516 = vunpack.c.l.s4 1966171168
        %v1517 = vunpack.c.0.s8 %v1516
        %v1518 = vlaneseq
        %v1519 = vshrl.u32 %v1518, 7
        %v1520 = vsub.s32 %v1517, %v1519
        %v1521 = vrot.slane %v1513, %v1520
        %v1523 = vunpack.c.l.s4 1966171168
        %v1524 = vunpack.c.0.s8 %v1523
        %v1525 = vlaneseq
        %v1526 = vshrl.u32 %v1525, 7
        %v1527 = vsub.s32 %v1524, %v1526
        %v1528 = vrot.slane %v1514, %v1527
        %v1529 = vcombine.low %v1521, %v1528
        %v1530 = vcombine.low %v1043, %v1045
        %v1531 = vcombine.low %v1028, %v1042
        %v1532 = vcombine.low %v1044, %v1046
        %v1533 = vcombine.low %v1060, %v1084
        %v1535 = vunpack.c.l.s4 1966171168
        %v1536 = vunpack.c.0.s8 %v1535
        %v1537 = vlaneseq
        %v1538 = vshrl.u32 %v1537, 7
        %v1539 = vsub.s32 %v1536, %v1538
        %v1540 = vrot.slane %v1530, %v1539
        %v1542 = vunpack.c.l.s4 1966171168
        %v1543 = vunpack.c.0.s8 %v1542
        %v1544 = vlaneseq
        %v1545 = vshrl.u32 %v1544, 7
        %v1546 = vsub.s32 %v1543, %v1545
        %v1547 = vrot.slane %v1531, %v1546
        %v1549 = vunpack.c.l.s4 1966171168
        %v1550 = vunpack.c.0.s8 %v1549
        %v1551 = vlaneseq
        %v1552 = vshrl.u32 %v1551, 7
        %v1553 = vsub.s32 %v1550, %v1552
        %v1554 = vrot.slane %v1532, %v1553
        %v1556 = vunpack.c.l.s4 1966171168
        %v1557 = vunpack.c.0.s8 %v1556
        %v1558 = vlaneseq
        %v1559 = vshrl.u32 %v1558, 7
        %v1560 = vsub.s32 %v1557, %v1559
        %v1561 = vrot.slane %v1533, %v1560
        %v1562 = vcombine.low %v1540, %v1547
        %v1563 = vcombine.low %v1554, %v1561
        %v1565 = vunpack.c.l.s4 1966171168
        %v1566 = vunpack.c.0.s8 %v1565
        %v1567 = vlaneseq
        %v1568 = vshrl.u32 %v1567, 7
        %v1569 = vsub.s32 %v1566, %v1568
        %v1570 = vrot.slane %v1562, %v1569
        %v1572 = vunpack.c.l.s4 1966171168
        %v1573 = vunpack.c.0.s8 %v1572
        %v1574 = vlaneseq
        %v1575 = vshrl.u32 %v1574, 7
        %v1576 = vsub.s32 %v1573, %v1575
        %v1577 = vrot.slane %v1563, %v1576
        %v1578 = vcombine.low %v1570, %v1577
        %v1579 = vcombine.low %v1098, %v1106
        %v1580 = vcombine.low %v1108, %v1091
        %v1581 = vcombine.low %v1105, %v1107
        %v1582 = vcombine.low %v1109, %v1123
        %v1584 = vunpack.c.l.s4 1966171168
        %v1585 = vunpack.c.0.s8 %v1584
        %v1586 = vlaneseq
        %v1587 = vshrl.u32 %v1586, 7
        %v1588 = vsub.s32 %v1585, %v1587
        %v1589 = vrot.slane %v1579, %v1588
        %v1591 = vunpack.c.l.s4 1966171168
        %v1592 = vunpack.c.0.s8 %v1591
        %v1593 = vlaneseq
        %v1594 = vshrl.u32 %v1593, 7
        %v1595 = vsub.s32 %v1592, %v1594
        %v1596 = vrot.slane %v1580, %v1595
        %v1598 = vunpack.c.l.s4 1966171168
        %v1599 = vunpack.c.0.s8 %v1598
        %v1600 = vlaneseq
        %v1601 = vshrl.u32 %v1600, 7
        %v1602 = vsub.s32 %v1599, %v1601
        %v1603 = vrot.slane %v1581, %v1602
        %v1605 = vunpack.c.l.s4 1966171168
        %v1606 = vunpack.c.0.s8 %v1605
        %v1607 = vlaneseq
        %v1608 = vshrl.u32 %v1607, 7
        %v1609 = vsub.s32 %v1606, %v1608
        %v1610 = vrot.slane %v1582, %v1609
        %v1611 = vcombine.low %v1589, %v1596
        %v1612 = vcombine.low %v1603, %v1610
        %v1614 = vunpack.c.l.s4 1966171168
        %v1615 = vunpack.c.0.s8 %v1614
        %v1616 = vlaneseq
        %v1617 = vshrl.u32 %v1616, 7
        %v1618 = vsub.s32 %v1615, %v1617
        %v1619 = vrot.slane %v1611, %v1618
        %v1621 = vunpack.c.l.s4 1966171168
        %v1622 = vunpack.c.0.s8 %v1621
        %v1623 = vlaneseq
        %v1624 = vshrl.u32 %v1623, 7
        %v1625 = vsub.s32 %v1622, %v1624
        %v1626 = vrot.slane %v1612, %v1625
        %v1627 = vcombine.low %v1619, %v1626
        %v1628 = vcombine.low %v1147, %v1161
        %v1629 = vcombine.low %v1169, %v1171
        %v1630 = vcombine.low %v1154, %v1168
        %v1631 = vcombine.low %v1170, %v1172
        %v1633 = vunpack.c.l.s4 1966171168
        %v1634 = vunpack.c.0.s8 %v1633
        %v1635 = vlaneseq
        %v1636 = vshrl.u32 %v1635, 7
        %v1637 = vsub.s32 %v1634, %v1636
        %v1638 = vrot.slane %v1628, %v1637
        %v1640 = vunpack.c.l.s4 1966171168
        %v1641 = vunpack.c.0.s8 %v1640
        %v1642 = vlaneseq
        %v1643 = vshrl.u32 %v1642, 7
        %v1644 = vsub.s32 %v1641, %v1643
        %v1645 = vrot.slane %v1629, %v1644
        %v1647 = vunpack.c.l.s4 1966171168
        %v1648 = vunpack.c.0.s8 %v1647
        %v1649 = vlaneseq
        %v1650 = vshrl.u32 %v1649, 7
        %v1651 = vsub.s32 %v1648, %v1650
        %v1652 = vrot.slane %v1630, %v1651
        %v1654 = vunpack.c.l.s4 1966171168
        %v1655 = vunpack.c.0.s8 %v1654
        %v1656 = vlaneseq
        %v1657 = vshrl.u32 %v1656, 7
        %v1658 = vsub.s32 %v1655, %v1657
        %v1659 = vrot.slane %v1631, %v1658
        %v1660 = vcombine.low %v1638, %v1645
        %v1661 = vcombine.low %v1652, %v1659
        %v1663 = vunpack.c.l.s4 1966171168
        %v1664 = vunpack.c.0.s8 %v1663
        %v1665 = vlaneseq
        %v1666 = vshrl.u32 %v1665, 7
        %v1667 = vsub.s32 %v1664, %v1666
        %v1668 = vrot.slane %v1660, %v1667
        %v1670 = vunpack.c.l.s4 1966171168
        %v1671 = vunpack.c.0.s8 %v1670
        %v1672 = vlaneseq
        %v1673 = vshrl.u32 %v1672, 7
        %v1674 = vsub.s32 %v1671, %v1673
        %v1675 = vrot.slane %v1661, %v1674
        %v1676 = vcombine.low %v1668, %v1675
        %v1678 = vunpack.c.l.s4 1966171168
        %v1679 = vunpack.c.0.s8 %v1678
        %v1680 = vlaneseq
        %v1681 = vshrl.u32 %v1680, 7
        %v1682 = vsub.s32 %v1679, %v1681
        %v1683 = vrot.slane %v1186, %v1682
        %v1685 = vunpack.c.l.s4 1966171168
        %v1686 = vunpack.c.0.s8 %v1685
        %v1687 = vlaneseq
        %v1688 = vshrl.u32 %v1687, 7
        %v1689 = vsub.s32 %v1686, %v1688
        %v1690 = vrot.slane %v1683, %v1689
        %v1702 = vpack.c.bf16 %v1284, %v1235
        %v1703 = vpack.c.bf16 %v1382, %v1333
        %v1704 = vpack.c.bf16 %v1480, %v1431
        %v1705 = vpack.c.bf16 %v1578, %v1529
        %v1706 = vpack.c.bf16 %v1676, %v1627
        %v1707 = vpack.c.bf16 %v1690, %v1690
        %v1708 = vld [vmem:[%s4] sm:$0xf]
        %v1709 = vld [vmem:[%s4 + $0x4] sm:$0xf]
        %v1710 = vld [vmem:[%s4 + $0x8] sm:$0xf]
        %v1711 = vld [vmem:[%s4 + $0xc] sm:$0xf]
        %v1712 = vld [vmem:[%s5] sm:$0x1]
        %v1714 = vlaneseq
        %v1715 = vshrl.u32 %v1714, 7
        %v1716 = vsub.s32 0, %v1715
        %v1717 = vrot.slane %v1712, %v1716
        %v1723 = vunpack.c.l.b16 %v1708
        %v1724 = vunpack.c.l.b16 %v1709
        %v1725 = vunpack.c.l.b16 %v1710
        %v1726 = vunpack.c.l.b16 %v1711
        %v1727 = vpack.c.b16 %v1724, %v1723
        %v1728 = vpack.c.b16 %v1726, %v1725
        %vm1731 = vcmask 261120
        %v1733 = vsel %vm1731, %v1702, 0
        %v1736 = vsel %vm1731, %v1703, 0
        %v1739 = vsel %vm1731, %v1704, 0
        %v1742 = vsel %vm1731, %v1705, 0
        %v1745 = vsel %vm1731, %v1706, 0
        %v1748 = vsel %vm1731, %v1707, 0
        %1750 = vmatprep.subr.bf16.mxu0 0
        %1751 = vmatpush1.bf16.msra.mxu0 0
        %1752 = vmatprep.subr.bf16.mxu0 0
        %1753 = vmatpush1.bf16.msra.mxu0 0
        %1754 = vmatprep.subr.bf16.mxu0 0
        %1755 = vmatpush1.bf16.msra.mxu0 0
        %1756 = vmatprep.subr.bf16.mxu0 0
        %1757 = vmatpush1.bf16.msra.mxu0 0
        %1758 = vmatprep.subr.bf16.mxu0 0
        %1759 = vmatpush1.bf16.msra.mxu0 0
        %1760 = vmatprep.subr.bf16.mxu0 0
        %1761 = vmatpush1.bf16.msra.mxu0 0
        %1762 = vmatprep.subr.bf16.mxu0 0
        %1763 = vmatpush1.bf16.msra.mxu0 %v1728
        %1764 = vmatprep.subr.bf16.mxu0 0
        %1765 = vmatpush1.bf16.msra.mxu0 %v1727
        %1766 = vmatprep.subr.bf16.mxu0 0
        %1767 = vmatpush2.bf16.msra.mxu0 0
        %1768 = vmatprep.subr.bf16.mxu0 0
        %1769 = vmatpush2.bf16.msra.mxu0 0
        %1770 = vmatprep.subr.bf16.mxu0 0
        %1771 = vmatpush2.bf16.msra.mxu0 0
        %1772 = vmatprep.subr.bf16.mxu0 0
        %1773 = vmatpush2.bf16.msra.mxu0 0
        %1774 = vmatprep.subr.bf16.mxu0 0
        %1775 = vmatpush2.bf16.msra.mxu0 0
        %1776 = vmatprep.subr.bf16.mxu0 0
        %1777 = vmatpush2.bf16.msra.mxu0 0
        %1778 = vmatprep.subr.bf16.mxu0 0
        %1779 = vmatpush2.bf16.msra.mxu0 0
        %1780 = vmatprep.subr.bf16.mxu0 0
        %1781 = vmatpush2.bf16.msra.mxu0 0
        %1782 = vmatprep.mubr.bf16.mxu0 0
        %1783 = vmatmul.mubr.bf16.gmra.mxu0 %v1733
        %v1784 = vpop.f32.mrf.mxu0
        %v1785 = vadd.f32 %v1717, %v1784
        %v1786 = vpop.f32.mrf.mxu0
        %v1787 = vpop.f32.mrf.mxu0
        %v1788 = vadd.f32 %v1717, %v1787
        %v1789 = vpop.f32.mrf.mxu0
        %1790 = vmatprep.mubr.bf16.mxu0 0
        %1791 = vmatmul.mubr.bf16.gmra.mxu0 %v1736
        %v1792 = vpop.f32.mrf.mxu0
        %v1793 = vadd.f32 %v1717, %v1792
        %v1794 = vpop.f32.mrf.mxu0
        %v1795 = vpop.f32.mrf.mxu0
        %v1796 = vadd.f32 %v1717, %v1795
        %v1797 = vpop.f32.mrf.mxu0
        %1798 = vmatprep.mubr.bf16.mxu0 0
        %1799 = vmatmul.mubr.bf16.gmra.mxu0 %v1739
        %v1800 = vpop.f32.mrf.mxu0
        %v1801 = vadd.f32 %v1717, %v1800
        %v1802 = vpop.f32.mrf.mxu0
        %v1803 = vpop.f32.mrf.mxu0
        %v1804 = vadd.f32 %v1717, %v1803
        %v1805 = vpop.f32.mrf.mxu0
        %1806 = vmatprep.mubr.bf16.mxu0 0
        %1807 = vmatmul.mubr.bf16.gmra.mxu0 %v1742
        %v1808 = vpop.f32.mrf.mxu0
        %v1809 = vadd.f32 %v1717, %v1808
        %v1810 = vpop.f32.mrf.mxu0
        %v1811 = vpop.f32.mrf.mxu0
        %v1812 = vadd.f32 %v1717, %v1811
        %v1813 = vpop.f32.mrf.mxu0
        %1814 = vmatprep.mubr.bf16.mxu0 0
        %1815 = vmatmul.mubr.bf16.gmra.mxu0 %v1745
        %v1816 = vpop.f32.mrf.mxu0
        %v1817 = vadd.f32 %v1717, %v1816
        %v1818 = vpop.f32.mrf.mxu0
        %v1819 = vpop.f32.mrf.mxu0
        %v1820 = vadd.f32 %v1717, %v1819
        %v1821 = vpop.f32.mrf.mxu0
        %1822 = vmatprep.mubr.bf16.mxu0 0
        %1823 = vmatmul.mubr.bf16.gmra.mxu0 %v1748
        %v1824 = vpop.f32.mrf.mxu0
        %v1825 = vadd.f32 %v1717, %v1824
        %v1826 = vpop.f32.mrf.mxu0
        %v1827 = vpop.f32.mrf.mxu0
        %v1828 = vpop.f32.mrf.mxu0
        %1829 = vdwg.mxu0
        %v1830 = vmax.f32 %v1785, 0.0
        %v1831 = vmax.f32 %v1788, 0.0
        %v1832 = vmax.f32 %v1793, 0.0
        %v1833 = vmax.f32 %v1796, 0.0
        %v1834 = vmax.f32 %v1801, 0.0
        %v1835 = vmax.f32 %v1804, 0.0
        %v1836 = vmax.f32 %v1809, 0.0
        %v1837 = vmax.f32 %v1812, 0.0
        %v1838 = vmax.f32 %v1817, 0.0
        %v1839 = vmax.f32 %v1820, 0.0
        %v1840 = vmax.f32 %v1825, 0.0
        %v1852 = vcombine.high %v1830, %v1830
        %v1854 = vunpack.c.l.s4 1966171168
        %v1855 = vunpack.c.0.s8 %v1854
        %v1856 = vlaneseq
        %v1857 = vshrl.u32 %v1856, 7
        %v1858 = vsub.s32 %v1855, %v1857
        %v1859 = vrot.slane %v1830, %v1858
        %v1861 = vunpack.c.l.s4 1966171168
        %v1862 = vunpack.c.0.s8 %v1861
        %v1863 = vlaneseq
        %v1864 = vshrl.u32 %v1863, 7
        %v1865 = vsub.s32 %v1862, %v1864
        %v1866 = vrot.slane %v1852, %v1865
        %v1867 = vcombine.high %v1859, %v1859
        %v1868 = vcombine.high %v1866, %v1866
        %v1870 = vunpack.c.l.s4 1966171168
        %v1871 = vunpack.c.0.s8 %v1870
        %v1872 = vlaneseq
        %v1873 = vshrl.u32 %v1872, 7
        %v1874 = vsub.s32 %v1871, %v1873
        %v1875 = vrot.slane %v1859, %v1874
        %v1877 = vunpack.c.l.s4 1966171168
        %v1878 = vunpack.c.0.s8 %v1877
        %v1879 = vlaneseq
        %v1880 = vshrl.u32 %v1879, 7
        %v1881 = vsub.s32 %v1878, %v1880
        %v1882 = vrot.slane %v1866, %v1881
        %v1884 = vunpack.c.l.s4 1966171168
        %v1885 = vunpack.c.0.s8 %v1884
        %v1886 = vlaneseq
        %v1887 = vshrl.u32 %v1886, 7
        %v1888 = vsub.s32 %v1885, %v1887
        %v1889 = vrot.slane %v1867, %v1888
        %v1891 = vunpack.c.l.s4 1966171168
        %v1892 = vunpack.c.0.s8 %v1891
        %v1893 = vlaneseq
        %v1894 = vshrl.u32 %v1893, 7
        %v1895 = vsub.s32 %v1892, %v1894
        %v1896 = vrot.slane %v1868, %v1895
        %v1897 = vcombine.high %v1875, %v1875
        %v1898 = vcombine.high %v1882, %v1882
        %v1899 = vcombine.high %v1889, %v1889
        %v1900 = vcombine.high %v1896, %v1896
        %v1901 = vcombine.high %v1831, %v1831
        %v1903 = vunpack.c.l.s4 1966171168
        %v1904 = vunpack.c.0.s8 %v1903
        %v1905 = vlaneseq
        %v1906 = vshrl.u32 %v1905, 7
        %v1907 = vsub.s32 %v1904, %v1906
        %v1908 = vrot.slane %v1831, %v1907
        %v1910 = vunpack.c.l.s4 1966171168
        %v1911 = vunpack.c.0.s8 %v1910
        %v1912 = vlaneseq
        %v1913 = vshrl.u32 %v1912, 7
        %v1914 = vsub.s32 %v1911, %v1913
        %v1915 = vrot.slane %v1901, %v1914
        %v1916 = vcombine.high %v1908, %v1908
        %v1917 = vcombine.high %v1915, %v1915
        %v1919 = vunpack.c.l.s4 1966171168
        %v1920 = vunpack.c.0.s8 %v1919
        %v1921 = vlaneseq
        %v1922 = vshrl.u32 %v1921, 7
        %v1923 = vsub.s32 %v1920, %v1922
        %v1924 = vrot.slane %v1908, %v1923
        %v1926 = vunpack.c.l.s4 1966171168
        %v1927 = vunpack.c.0.s8 %v1926
        %v1928 = vlaneseq
        %v1929 = vshrl.u32 %v1928, 7
        %v1930 = vsub.s32 %v1927, %v1929
        %v1931 = vrot.slane %v1915, %v1930
        %v1933 = vunpack.c.l.s4 1966171168
        %v1934 = vunpack.c.0.s8 %v1933
        %v1935 = vlaneseq
        %v1936 = vshrl.u32 %v1935, 7
        %v1937 = vsub.s32 %v1934, %v1936
        %v1938 = vrot.slane %v1916, %v1937
        %v1940 = vunpack.c.l.s4 1966171168
        %v1941 = vunpack.c.0.s8 %v1940
        %v1942 = vlaneseq
        %v1943 = vshrl.u32 %v1942, 7
        %v1944 = vsub.s32 %v1941, %v1943
        %v1945 = vrot.slane %v1917, %v1944
        %v1946 = vcombine.high %v1924, %v1924
        %v1947 = vcombine.high %v1931, %v1931
        %v1948 = vcombine.high %v1938, %v1938
        %v1949 = vcombine.high %v1945, %v1945
        %v1950 = vcombine.high %v1832, %v1832
        %v1952 = vunpack.c.l.s4 1966171168
        %v1953 = vunpack.c.0.s8 %v1952
        %v1954 = vlaneseq
        %v1955 = vshrl.u32 %v1954, 7
        %v1956 = vsub.s32 %v1953, %v1955
        %v1957 = vrot.slane %v1832, %v1956
        %v1959 = vunpack.c.l.s4 1966171168
        %v1960 = vunpack.c.0.s8 %v1959
        %v1961 = vlaneseq
        %v1962 = vshrl.u32 %v1961, 7
        %v1963 = vsub.s32 %v1960, %v1962
        %v1964 = vrot.slane %v1950, %v1963
        %v1965 = vcombine.high %v1957, %v1957
        %v1966 = vcombine.high %v1964, %v1964
        %v1968 = vunpack.c.l.s4 1966171168
        %v1969 = vunpack.c.0.s8 %v1968
        %v1970 = vlaneseq
        %v1971 = vshrl.u32 %v1970, 7
        %v1972 = vsub.s32 %v1969, %v1971
        %v1973 = vrot.slane %v1957, %v1972
        %v1975 = vunpack.c.l.s4 1966171168
        %v1976 = vunpack.c.0.s8 %v1975
        %v1977 = vlaneseq
        %v1978 = vshrl.u32 %v1977, 7
        %v1979 = vsub.s32 %v1976, %v1978
        %v1980 = vrot.slane %v1964, %v1979
        %v1982 = vunpack.c.l.s4 1966171168
        %v1983 = vunpack.c.0.s8 %v1982
        %v1984 = vlaneseq
        %v1985 = vshrl.u32 %v1984, 7
        %v1986 = vsub.s32 %v1983, %v1985
        %v1987 = vrot.slane %v1965, %v1986
        %v1989 = vunpack.c.l.s4 1966171168
        %v1990 = vunpack.c.0.s8 %v1989
        %v1991 = vlaneseq
        %v1992 = vshrl.u32 %v1991, 7
        %v1993 = vsub.s32 %v1990, %v1992
        %v1994 = vrot.slane %v1966, %v1993
        %v1995 = vcombine.high %v1973, %v1973
        %v1996 = vcombine.high %v1980, %v1980
        %v1997 = vcombine.high %v1987, %v1987
        %v1998 = vcombine.high %v1994, %v1994
        %v1999 = vcombine.high %v1833, %v1833
        %v2001 = vunpack.c.l.s4 1966171168
        %v2002 = vunpack.c.0.s8 %v2001
        %v2003 = vlaneseq
        %v2004 = vshrl.u32 %v2003, 7
        %v2005 = vsub.s32 %v2002, %v2004
        %v2006 = vrot.slane %v1833, %v2005
        %v2008 = vunpack.c.l.s4 1966171168
        %v2009 = vunpack.c.0.s8 %v2008
        %v2010 = vlaneseq
        %v2011 = vshrl.u32 %v2010, 7
        %v2012 = vsub.s32 %v2009, %v2011
        %v2013 = vrot.slane %v1999, %v2012
        %v2014 = vcombine.high %v2006, %v2006
        %v2015 = vcombine.high %v2013, %v2013
        %v2017 = vunpack.c.l.s4 1966171168
        %v2018 = vunpack.c.0.s8 %v2017
        %v2019 = vlaneseq
        %v2020 = vshrl.u32 %v2019, 7
        %v2021 = vsub.s32 %v2018, %v2020
        %v2022 = vrot.slane %v2006, %v2021
        %v2024 = vunpack.c.l.s4 1966171168
        %v2025 = vunpack.c.0.s8 %v2024
        %v2026 = vlaneseq
        %v2027 = vshrl.u32 %v2026, 7
        %v2028 = vsub.s32 %v2025, %v2027
        %v2029 = vrot.slane %v2013, %v2028
        %v2031 = vunpack.c.l.s4 1966171168
        %v2032 = vunpack.c.0.s8 %v2031
        %v2033 = vlaneseq
        %v2034 = vshrl.u32 %v2033, 7
        %v2035 = vsub.s32 %v2032, %v2034
        %v2036 = vrot.slane %v2014, %v2035
        %v2038 = vunpack.c.l.s4 1966171168
        %v2039 = vunpack.c.0.s8 %v2038
        %v2040 = vlaneseq
        %v2041 = vshrl.u32 %v2040, 7
        %v2042 = vsub.s32 %v2039, %v2041
        %v2043 = vrot.slane %v2015, %v2042
        %v2044 = vcombine.high %v2022, %v2022
        %v2045 = vcombine.high %v2029, %v2029
        %v2046 = vcombine.high %v2036, %v2036
        %v2047 = vcombine.high %v2043, %v2043
        %v2048 = vcombine.high %v1834, %v1834
        %v2050 = vunpack.c.l.s4 1966171168
        %v2051 = vunpack.c.0.s8 %v2050
        %v2052 = vlaneseq
        %v2053 = vshrl.u32 %v2052, 7
        %v2054 = vsub.s32 %v2051, %v2053
        %v2055 = vrot.slane %v1834, %v2054
        %v2057 = vunpack.c.l.s4 1966171168
        %v2058 = vunpack.c.0.s8 %v2057
        %v2059 = vlaneseq
        %v2060 = vshrl.u32 %v2059, 7
        %v2061 = vsub.s32 %v2058, %v2060
        %v2062 = vrot.slane %v2048, %v2061
        %v2063 = vcombine.high %v2055, %v2055
        %v2064 = vcombine.high %v2062, %v2062
        %v2066 = vunpack.c.l.s4 1966171168
        %v2067 = vunpack.c.0.s8 %v2066
        %v2068 = vlaneseq
        %v2069 = vshrl.u32 %v2068, 7
        %v2070 = vsub.s32 %v2067, %v2069
        %v2071 = vrot.slane %v2055, %v2070
        %v2073 = vunpack.c.l.s4 1966171168
        %v2074 = vunpack.c.0.s8 %v2073
        %v2075 = vlaneseq
        %v2076 = vshrl.u32 %v2075, 7
        %v2077 = vsub.s32 %v2074, %v2076
        %v2078 = vrot.slane %v2062, %v2077
        %v2080 = vunpack.c.l.s4 1966171168
        %v2081 = vunpack.c.0.s8 %v2080
        %v2082 = vlaneseq
        %v2083 = vshrl.u32 %v2082, 7
        %v2084 = vsub.s32 %v2081, %v2083
        %v2085 = vrot.slane %v2063, %v2084
        %v2087 = vunpack.c.l.s4 1966171168
        %v2088 = vunpack.c.0.s8 %v2087
        %v2089 = vlaneseq
        %v2090 = vshrl.u32 %v2089, 7
        %v2091 = vsub.s32 %v2088, %v2090
        %v2092 = vrot.slane %v2064, %v2091
        %v2093 = vcombine.high %v2071, %v2071
        %v2094 = vcombine.high %v2078, %v2078
        %v2095 = vcombine.high %v2085, %v2085
        %v2096 = vcombine.high %v2092, %v2092
        %v2097 = vcombine.high %v1835, %v1835
        %v2099 = vunpack.c.l.s4 1966171168
        %v2100 = vunpack.c.0.s8 %v2099
        %v2101 = vlaneseq
        %v2102 = vshrl.u32 %v2101, 7
        %v2103 = vsub.s32 %v2100, %v2102
        %v2104 = vrot.slane %v1835, %v2103
        %v2106 = vunpack.c.l.s4 1966171168
        %v2107 = vunpack.c.0.s8 %v2106
        %v2108 = vlaneseq
        %v2109 = vshrl.u32 %v2108, 7
        %v2110 = vsub.s32 %v2107, %v2109
        %v2111 = vrot.slane %v2097, %v2110
        %v2112 = vcombine.high %v2104, %v2104
        %v2113 = vcombine.high %v2111, %v2111
        %v2115 = vunpack.c.l.s4 1966171168
        %v2116 = vunpack.c.0.s8 %v2115
        %v2117 = vlaneseq
        %v2118 = vshrl.u32 %v2117, 7
        %v2119 = vsub.s32 %v2116, %v2118
        %v2120 = vrot.slane %v2104, %v2119
        %v2122 = vunpack.c.l.s4 1966171168
        %v2123 = vunpack.c.0.s8 %v2122
        %v2124 = vlaneseq
        %v2125 = vshrl.u32 %v2124, 7
        %v2126 = vsub.s32 %v2123, %v2125
        %v2127 = vrot.slane %v2111, %v2126
        %v2129 = vunpack.c.l.s4 1966171168
        %v2130 = vunpack.c.0.s8 %v2129
        %v2131 = vlaneseq
        %v2132 = vshrl.u32 %v2131, 7
        %v2133 = vsub.s32 %v2130, %v2132
        %v2134 = vrot.slane %v2112, %v2133
        %v2136 = vunpack.c.l.s4 1966171168
        %v2137 = vunpack.c.0.s8 %v2136
        %v2138 = vlaneseq
        %v2139 = vshrl.u32 %v2138, 7
        %v2140 = vsub.s32 %v2137, %v2139
        %v2141 = vrot.slane %v2113, %v2140
        %v2142 = vcombine.high %v2120, %v2120
        %v2143 = vcombine.high %v2127, %v2127
        %v2144 = vcombine.high %v2134, %v2134
        %v2145 = vcombine.high %v2141, %v2141
        %v2146 = vcombine.high %v1836, %v1836
        %v2148 = vunpack.c.l.s4 1966171168
        %v2149 = vunpack.c.0.s8 %v2148
        %v2150 = vlaneseq
        %v2151 = vshrl.u32 %v2150, 7
        %v2152 = vsub.s32 %v2149, %v2151
        %v2153 = vrot.slane %v1836, %v2152
        %v2155 = vunpack.c.l.s4 1966171168
        %v2156 = vunpack.c.0.s8 %v2155
        %v2157 = vlaneseq
        %v2158 = vshrl.u32 %v2157, 7
        %v2159 = vsub.s32 %v2156, %v2158
        %v2160 = vrot.slane %v2146, %v2159
        %v2161 = vcombine.high %v2153, %v2153
        %v2162 = vcombine.high %v2160, %v2160
        %v2164 = vunpack.c.l.s4 1966171168
        %v2165 = vunpack.c.0.s8 %v2164
        %v2166 = vlaneseq
        %v2167 = vshrl.u32 %v2166, 7
        %v2168 = vsub.s32 %v2165, %v2167
        %v2169 = vrot.slane %v2153, %v2168
        %v2171 = vunpack.c.l.s4 1966171168
        %v2172 = vunpack.c.0.s8 %v2171
        %v2173 = vlaneseq
        %v2174 = vshrl.u32 %v2173, 7
        %v2175 = vsub.s32 %v2172, %v2174
        %v2176 = vrot.slane %v2160, %v2175
        %v2178 = vunpack.c.l.s4 1966171168
        %v2179 = vunpack.c.0.s8 %v2178
        %v2180 = vlaneseq
        %v2181 = vshrl.u32 %v2180, 7
        %v2182 = vsub.s32 %v2179, %v2181
        %v2183 = vrot.slane %v2161, %v2182
        %v2185 = vunpack.c.l.s4 1966171168
        %v2186 = vunpack.c.0.s8 %v2185
        %v2187 = vlaneseq
        %v2188 = vshrl.u32 %v2187, 7
        %v2189 = vsub.s32 %v2186, %v2188
        %v2190 = vrot.slane %v2162, %v2189
        %v2191 = vcombine.high %v2169, %v2169
        %v2192 = vcombine.high %v2176, %v2176
        %v2193 = vcombine.high %v2183, %v2183
        %v2194 = vcombine.high %v2190, %v2190
        %v2195 = vcombine.high %v1837, %v1837
        %v2197 = vunpack.c.l.s4 1966171168
        %v2198 = vunpack.c.0.s8 %v2197
        %v2199 = vlaneseq
        %v2200 = vshrl.u32 %v2199, 7
        %v2201 = vsub.s32 %v2198, %v2200
        %v2202 = vrot.slane %v1837, %v2201
        %v2204 = vunpack.c.l.s4 1966171168
        %v2205 = vunpack.c.0.s8 %v2204
        %v2206 = vlaneseq
        %v2207 = vshrl.u32 %v2206, 7
        %v2208 = vsub.s32 %v2205, %v2207
        %v2209 = vrot.slane %v2195, %v2208
        %v2210 = vcombine.high %v2202, %v2202
        %v2211 = vcombine.high %v2209, %v2209
        %v2213 = vunpack.c.l.s4 1966171168
        %v2214 = vunpack.c.0.s8 %v2213
        %v2215 = vlaneseq
        %v2216 = vshrl.u32 %v2215, 7
        %v2217 = vsub.s32 %v2214, %v2216
        %v2218 = vrot.slane %v2202, %v2217
        %v2220 = vunpack.c.l.s4 1966171168
        %v2221 = vunpack.c.0.s8 %v2220
        %v2222 = vlaneseq
        %v2223 = vshrl.u32 %v2222, 7
        %v2224 = vsub.s32 %v2221, %v2223
        %v2225 = vrot.slane %v2209, %v2224
        %v2227 = vunpack.c.l.s4 1966171168
        %v2228 = vunpack.c.0.s8 %v2227
        %v2229 = vlaneseq
        %v2230 = vshrl.u32 %v2229, 7
        %v2231 = vsub.s32 %v2228, %v2230
        %v2232 = vrot.slane %v2210, %v2231
        %v2234 = vunpack.c.l.s4 1966171168
        %v2235 = vunpack.c.0.s8 %v2234
        %v2236 = vlaneseq
        %v2237 = vshrl.u32 %v2236, 7
        %v2238 = vsub.s32 %v2235, %v2237
        %v2239 = vrot.slane %v2211, %v2238
        %v2240 = vcombine.high %v2218, %v2218
        %v2241 = vcombine.high %v2225, %v2225
        %v2242 = vcombine.high %v2232, %v2232
        %v2243 = vcombine.high %v2239, %v2239
        %v2244 = vcombine.high %v1838, %v1838
        %v2246 = vunpack.c.l.s4 1966171168
        %v2247 = vunpack.c.0.s8 %v2246
        %v2248 = vlaneseq
        %v2249 = vshrl.u32 %v2248, 7
        %v2250 = vsub.s32 %v2247, %v2249
        %v2251 = vrot.slane %v1838, %v2250
        %v2253 = vunpack.c.l.s4 1966171168
        %v2254 = vunpack.c.0.s8 %v2253
        %v2255 = vlaneseq
        %v2256 = vshrl.u32 %v2255, 7
        %v2257 = vsub.s32 %v2254, %v2256
        %v2258 = vrot.slane %v2244, %v2257
        %v2259 = vcombine.high %v2251, %v2251
        %v2260 = vcombine.high %v2258, %v2258
        %v2262 = vunpack.c.l.s4 1966171168
        %v2263 = vunpack.c.0.s8 %v2262
        %v2264 = vlaneseq
        %v2265 = vshrl.u32 %v2264, 7
        %v2266 = vsub.s32 %v2263, %v2265
        %v2267 = vrot.slane %v2251, %v2266
        %v2269 = vunpack.c.l.s4 1966171168
        %v2270 = vunpack.c.0.s8 %v2269
        %v2271 = vlaneseq
        %v2272 = vshrl.u32 %v2271, 7
        %v2273 = vsub.s32 %v2270, %v2272
        %v2274 = vrot.slane %v2258, %v2273
        %v2276 = vunpack.c.l.s4 1966171168
        %v2277 = vunpack.c.0.s8 %v2276
        %v2278 = vlaneseq
        %v2279 = vshrl.u32 %v2278, 7
        %v2280 = vsub.s32 %v2277, %v2279
        %v2281 = vrot.slane %v2259, %v2280
        %v2283 = vunpack.c.l.s4 1966171168
        %v2284 = vunpack.c.0.s8 %v2283
        %v2285 = vlaneseq
        %v2286 = vshrl.u32 %v2285, 7
        %v2287 = vsub.s32 %v2284, %v2286
        %v2288 = vrot.slane %v2260, %v2287
        %v2289 = vcombine.high %v2267, %v2267
        %v2290 = vcombine.high %v2274, %v2274
        %v2291 = vcombine.high %v2281, %v2281
        %v2292 = vcombine.high %v2288, %v2288
        %v2293 = vcombine.high %v1839, %v1839
        %v2295 = vunpack.c.l.s4 1966171168
        %v2296 = vunpack.c.0.s8 %v2295
        %v2297 = vlaneseq
        %v2298 = vshrl.u32 %v2297, 7
        %v2299 = vsub.s32 %v2296, %v2298
        %v2300 = vrot.slane %v1839, %v2299
        %v2302 = vunpack.c.l.s4 1966171168
        %v2303 = vunpack.c.0.s8 %v2302
        %v2304 = vlaneseq
        %v2305 = vshrl.u32 %v2304, 7
        %v2306 = vsub.s32 %v2303, %v2305
        %v2307 = vrot.slane %v2293, %v2306
        %v2308 = vcombine.high %v2300, %v2300
        %v2309 = vcombine.high %v2307, %v2307
        %v2311 = vunpack.c.l.s4 1966171168
        %v2312 = vunpack.c.0.s8 %v2311
        %v2313 = vlaneseq
        %v2314 = vshrl.u32 %v2313, 7
        %v2315 = vsub.s32 %v2312, %v2314
        %v2316 = vrot.slane %v2300, %v2315
        %v2318 = vunpack.c.l.s4 1966171168
        %v2319 = vunpack.c.0.s8 %v2318
        %v2320 = vlaneseq
        %v2321 = vshrl.u32 %v2320, 7
        %v2322 = vsub.s32 %v2319, %v2321
        %v2323 = vrot.slane %v2307, %v2322
        %v2325 = vunpack.c.l.s4 1966171168
        %v2326 = vunpack.c.0.s8 %v2325
        %v2327 = vlaneseq
        %v2328 = vshrl.u32 %v2327, 7
        %v2329 = vsub.s32 %v2326, %v2328
        %v2330 = vrot.slane %v2308, %v2329
        %v2332 = vunpack.c.l.s4 1966171168
        %v2333 = vunpack.c.0.s8 %v2332
        %v2334 = vlaneseq
        %v2335 = vshrl.u32 %v2334, 7
        %v2336 = vsub.s32 %v2333, %v2335
        %v2337 = vrot.slane %v2309, %v2336
        %v2338 = vcombine.high %v2316, %v2316
        %v2339 = vcombine.high %v2323, %v2323
        %v2340 = vcombine.high %v2330, %v2330
        %v2341 = vcombine.high %v2337, %v2337
        %v2343 = vunpack.c.l.s4 1966171168
        %v2344 = vunpack.c.0.s8 %v2343
        %v2345 = vlaneseq
        %v2346 = vshrl.u32 %v2345, 7
        %v2347 = vsub.s32 %v2344, %v2346
        %v2348 = vrot.slane %v1840, %v2347
        %v2350 = vunpack.c.l.s4 1966171168
        %v2351 = vunpack.c.0.s8 %v2350
        %v2352 = vlaneseq
        %v2353 = vshrl.u32 %v2352, 7
        %v2354 = vsub.s32 %v2351, %v2353
        %v2355 = vrot.slane %v2348, %v2354
        %vm2356 = vcmp.ne.s32.totalorder %v528, 0
        %vm2357 = vcmp.ne.s32.totalorder %v529, 0
        %vm2358 = vmand 0, %vm2356
        %vm2359 = vmand 0, %vm2357
        %vm2360 = vmand 1, %vm2356
        %vm2361 = vmand 1, %vm2357
        %v2362 = vsel %vm2358, 1, 0
        %v2363 = vsel %vm2359, 1, 0
        %v2364 = vsel %vm2360, 1, 0
        %v2365 = vsel %vm2361, 1, 0
        %vm2366 = vcmp.eq.s32.totalorder %v2362, 1
        %vm2367 = vcmp.eq.s32.totalorder %v2363, 1
        %vm2368 = vcmp.eq.s32.totalorder %v2364, 1
        %vm2369 = vcmp.eq.s32.totalorder %v2365, 1
        %v2370 = vcombine.low %v1875, %v1889
        %v2371 = vcombine.low %v1897, %v1899
        %v2372 = vcombine.low %v1882, %v1896
        %v2373 = vcombine.low %v1898, %v1900
        %v2375 = vunpack.c.l.s4 1966171168
        %v2376 = vunpack.c.0.s8 %v2375
        %v2377 = vlaneseq
        %v2378 = vshrl.u32 %v2377, 7
        %v2379 = vsub.s32 %v2376, %v2378
        %v2380 = vrot.slane %v2370, %v2379
        %v2382 = vunpack.c.l.s4 1966171168
        %v2383 = vunpack.c.0.s8 %v2382
        %v2384 = vlaneseq
        %v2385 = vshrl.u32 %v2384, 7
        %v2386 = vsub.s32 %v2383, %v2385
        %v2387 = vrot.slane %v2371, %v2386
        %v2389 = vunpack.c.l.s4 1966171168
        %v2390 = vunpack.c.0.s8 %v2389
        %v2391 = vlaneseq
        %v2392 = vshrl.u32 %v2391, 7
        %v2393 = vsub.s32 %v2390, %v2392
        %v2394 = vrot.slane %v2372, %v2393
        %v2396 = vunpack.c.l.s4 1966171168
        %v2397 = vunpack.c.0.s8 %v2396
        %v2398 = vlaneseq
        %v2399 = vshrl.u32 %v2398, 7
        %v2400 = vsub.s32 %v2397, %v2399
        %v2401 = vrot.slane %v2373, %v2400
        %v2402 = vcombine.low %v2380, %v2387
        %v2403 = vcombine.low %v2394, %v2401
        %v2405 = vunpack.c.l.s4 1966171168
        %v2406 = vunpack.c.0.s8 %v2405
        %v2407 = vlaneseq
        %v2408 = vshrl.u32 %v2407, 7
        %v2409 = vsub.s32 %v2406, %v2408
        %v2410 = vrot.slane %v2402, %v2409
        %v2412 = vunpack.c.l.s4 1966171168
        %v2413 = vunpack.c.0.s8 %v2412
        %v2414 = vlaneseq
        %v2415 = vshrl.u32 %v2414, 7
        %v2416 = vsub.s32 %v2413, %v2415
        %v2417 = vrot.slane %v2403, %v2416
        %v2418 = vcombine.low %v2410, %v2417
        %v2420 = vunpack.c.l.s4 1966171168
        %v2421 = vunpack.c.0.s8 %v2420
        %v2422 = vlaneseq
        %v2423 = vshrl.u32 %v2422, 7
        %v2424 = vsub.s32 %v2421, %v2423
        %v2425 = vrot.slane %v1924, %v2424
        %v2427 = vunpack.c.l.s4 1966171168
        %v2428 = vunpack.c.0.s8 %v2427
        %v2429 = vlaneseq
        %v2430 = vshrl.u32 %v2429, 7
        %v2431 = vsub.s32 %v2428, %v2430
        %v2432 = vrot.slane %v2425, %v2431
        %v2433 = vcombine.low %v1938, %v1946
        %v2434 = vcombine.low %v1948, %v1931
        %v2435 = vcombine.low %v1945, %v1947
        %v2436 = vcombine.low %v1949, %v1973
        %v2438 = vunpack.c.l.s4 1966171168
        %v2439 = vunpack.c.0.s8 %v2438
        %v2440 = vlaneseq
        %v2441 = vshrl.u32 %v2440, 7
        %v2442 = vsub.s32 %v2439, %v2441
        %v2443 = vrot.slane %v2433, %v2442
        %v2445 = vunpack.c.l.s4 1966171168
        %v2446 = vunpack.c.0.s8 %v2445
        %v2447 = vlaneseq
        %v2448 = vshrl.u32 %v2447, 7
        %v2449 = vsub.s32 %v2446, %v2448
        %v2450 = vrot.slane %v2434, %v2449
        %v2452 = vunpack.c.l.s4 1966171168
        %v2453 = vunpack.c.0.s8 %v2452
        %v2454 = vlaneseq
        %v2455 = vshrl.u32 %v2454, 7
        %v2456 = vsub.s32 %v2453, %v2455
        %v2457 = vrot.slane %v2435, %v2456
        %v2459 = vunpack.c.l.s4 1966171168
        %v2460 = vunpack.c.0.s8 %v2459
        %v2461 = vlaneseq
        %v2462 = vshrl.u32 %v2461, 7
        %v2463 = vsub.s32 %v2460, %v2462
        %v2464 = vrot.slane %v2436, %v2463
        %v2465 = vcombine.low %v2443, %v2450
        %v2466 = vcombine.low %v2457, %v2464
        %v2468 = vunpack.c.l.s4 1966171168
        %v2469 = vunpack.c.0.s8 %v2468
        %v2470 = vlaneseq
        %v2471 = vshrl.u32 %v2470, 7
        %v2472 = vsub.s32 %v2469, %v2471
        %v2473 = vrot.slane %v2465, %v2472
        %v2475 = vunpack.c.l.s4 1966171168
        %v2476 = vunpack.c.0.s8 %v2475
        %v2477 = vlaneseq
        %v2478 = vshrl.u32 %v2477, 7
        %v2479 = vsub.s32 %v2476, %v2478
        %v2480 = vrot.slane %v2466, %v2479
        %v2481 = vcombine.low %v2473, %v2480
        %v2483 = vunpack.c.l.s4 1966171168
        %v2484 = vunpack.c.0.s8 %v2483
        %v2485 = vlaneseq
        %v2486 = vshrl.u32 %v2485, 7
        %v2487 = vsub.s32 %v2484, %v2486
        %v2488 = vrot.slane %v1987, %v2487
        %v2490 = vunpack.c.l.s4 1966171168
        %v2491 = vunpack.c.0.s8 %v2490
        %v2492 = vlaneseq
        %v2493 = vshrl.u32 %v2492, 7
        %v2494 = vsub.s32 %v2491, %v2493
        %v2495 = vrot.slane %v2488, %v2494
        %v2496 = vcombine.low %v1995, %v1997
        %v2497 = vcombine.low %v1980, %v1994
        %v2498 = vcombine.low %v1996, %v1998
        %v2499 = vcombine.low %v2022, %v2036
        %v2501 = vunpack.c.l.s4 1966171168
        %v2502 = vunpack.c.0.s8 %v2501
        %v2503 = vlaneseq
        %v2504 = vshrl.u32 %v2503, 7
        %v2505 = vsub.s32 %v2502, %v2504
        %v2506 = vrot.slane %v2496, %v2505
        %v2508 = vunpack.c.l.s4 1966171168
        %v2509 = vunpack.c.0.s8 %v2508
        %v2510 = vlaneseq
        %v2511 = vshrl.u32 %v2510, 7
        %v2512 = vsub.s32 %v2509, %v2511
        %v2513 = vrot.slane %v2497, %v2512
        %v2515 = vunpack.c.l.s4 1966171168
        %v2516 = vunpack.c.0.s8 %v2515
        %v2517 = vlaneseq
        %v2518 = vshrl.u32 %v2517, 7
        %v2519 = vsub.s32 %v2516, %v2518
        %v2520 = vrot.slane %v2498, %v2519
        %v2522 = vunpack.c.l.s4 1966171168
        %v2523 = vunpack.c.0.s8 %v2522
        %v2524 = vlaneseq
        %v2525 = vshrl.u32 %v2524, 7
        %v2526 = vsub.s32 %v2523, %v2525
        %v2527 = vrot.slane %v2499, %v2526
        %v2528 = vcombine.low %v2506, %v2513
        %v2529 = vcombine.low %v2520, %v2527
        %v2531 = vunpack.c.l.s4 1966171168
        %v2532 = vunpack.c.0.s8 %v2531
        %v2533 = vlaneseq
        %v2534 = vshrl.u32 %v2533, 7
        %v2535 = vsub.s32 %v2532, %v2534
        %v2536 = vrot.slane %v2528, %v2535
        %v2538 = vunpack.c.l.s4 1966171168
        %v2539 = vunpack.c.0.s8 %v2538
        %v2540 = vlaneseq
        %v2541 = vshrl.u32 %v2540, 7
        %v2542 = vsub.s32 %v2539, %v2541
        %v2543 = vrot.slane %v2529, %v2542
        %v2544 = vcombine.low %v2536, %v2543
        %v2546 = vunpack.c.l.s4 1966171168
        %v2547 = vunpack.c.0.s8 %v2546
        %v2548 = vlaneseq
        %v2549 = vshrl.u32 %v2548, 7
        %v2550 = vsub.s32 %v2547, %v2549
        %v2551 = vrot.slane %v2044, %v2550
        %v2553 = vunpack.c.l.s4 1966171168
        %v2554 = vunpack.c.0.s8 %v2553
        %v2555 = vlaneseq
        %v2556 = vshrl.u32 %v2555, 7
        %v2557 = vsub.s32 %v2554, %v2556
        %v2558 = vrot.slane %v2551, %v2557
        %v2559 = vcombine.low %v2046, %v2029
        %v2560 = vcombine.low %v2043, %v2045
        %v2561 = vcombine.low %v2047, %v2071
        %v2562 = vcombine.low %v2085, %v2093
        %v2564 = vunpack.c.l.s4 1966171168
        %v2565 = vunpack.c.0.s8 %v2564
        %v2566 = vlaneseq
        %v2567 = vshrl.u32 %v2566, 7
        %v2568 = vsub.s32 %v2565, %v2567
        %v2569 = vrot.slane %v2559, %v2568
        %v2571 = vunpack.c.l.s4 1966171168
        %v2572 = vunpack.c.0.s8 %v2571
        %v2573 = vlaneseq
        %v2574 = vshrl.u32 %v2573, 7
        %v2575 = vsub.s32 %v2572, %v2574
        %v2576 = vrot.slane %v2560, %v2575
        %v2578 = vunpack.c.l.s4 1966171168
        %v2579 = vunpack.c.0.s8 %v2578
        %v2580 = vlaneseq
        %v2581 = vshrl.u32 %v2580, 7
        %v2582 = vsub.s32 %v2579, %v2581
        %v2583 = vrot.slane %v2561, %v2582
        %v2585 = vunpack.c.l.s4 1966171168
        %v2586 = vunpack.c.0.s8 %v2585
        %v2587 = vlaneseq
        %v2588 = vshrl.u32 %v2587, 7
        %v2589 = vsub.s32 %v2586, %v2588
        %v2590 = vrot.slane %v2562, %v2589
        %v2591 = vcombine.low %v2569, %v2576
        %v2592 = vcombine.low %v2583, %v2590
        %v2594 = vunpack.c.l.s4 1966171168
        %v2595 = vunpack.c.0.s8 %v2594
        %v2596 = vlaneseq
        %v2597 = vshrl.u32 %v2596, 7
        %v2598 = vsub.s32 %v2595, %v2597
        %v2599 = vrot.slane %v2591, %v2598
        %v2601 = vunpack.c.l.s4 1966171168
        %v2602 = vunpack.c.0.s8 %v2601
        %v2603 = vlaneseq
        %v2604 = vshrl.u32 %v2603, 7
        %v2605 = vsub.s32 %v2602, %v2604
        %v2606 = vrot.slane %v2592, %v2605
        %v2607 = vcombine.low %v2599, %v2606
        %v2609 = vunpack.c.l.s4 1966171168
        %v2610 = vunpack.c.0.s8 %v2609
        %v2611 = vlaneseq
        %v2612 = vshrl.u32 %v2611, 7
        %v2613 = vsub.s32 %v2610, %v2612
        %v2614 = vrot.slane %v2095, %v2613
        %v2616 = vunpack.c.l.s4 1966171168
        %v2617 = vunpack.c.0.s8 %v2616
        %v2618 = vlaneseq
        %v2619 = vshrl.u32 %v2618, 7
        %v2620 = vsub.s32 %v2617, %v2619
        %v2621 = vrot.slane %v2614, %v2620
        %v2622 = vcombine.low %v2078, %v2092
        %v2623 = vcombine.low %v2094, %v2096
        %v2624 = vcombine.low %v2120, %v2134
        %v2625 = vcombine.low %v2142, %v2144
        %v2627 = vunpack.c.l.s4 1966171168
        %v2628 = vunpack.c.0.s8 %v2627
        %v2629 = vlaneseq
        %v2630 = vshrl.u32 %v2629, 7
        %v2631 = vsub.s32 %v2628, %v2630
        %v2632 = vrot.slane %v2622, %v2631
        %v2634 = vunpack.c.l.s4 1966171168
        %v2635 = vunpack.c.0.s8 %v2634
        %v2636 = vlaneseq
        %v2637 = vshrl.u32 %v2636, 7
        %v2638 = vsub.s32 %v2635, %v2637
        %v2639 = vrot.slane %v2623, %v2638
        %v2641 = vunpack.c.l.s4 1966171168
        %v2642 = vunpack.c.0.s8 %v2641
        %v2643 = vlaneseq
        %v2644 = vshrl.u32 %v2643, 7
        %v2645 = vsub.s32 %v2642, %v2644
        %v2646 = vrot.slane %v2624, %v2645
        %v2648 = vunpack.c.l.s4 1966171168
        %v2649 = vunpack.c.0.s8 %v2648
        %v2650 = vlaneseq
        %v2651 = vshrl.u32 %v2650, 7
        %v2652 = vsub.s32 %v2649, %v2651
        %v2653 = vrot.slane %v2625, %v2652
        %v2654 = vcombine.low %v2632, %v2639
        %v2655 = vcombine.low %v2646, %v2653
        %v2657 = vunpack.c.l.s4 1966171168
        %v2658 = vunpack.c.0.s8 %v2657
        %v2659 = vlaneseq
        %v2660 = vshrl.u32 %v2659, 7
        %v2661 = vsub.s32 %v2658, %v2660
        %v2662 = vrot.slane %v2654, %v2661
        %v2664 = vunpack.c.l.s4 1966171168
        %v2665 = vunpack.c.0.s8 %v2664
        %v2666 = vlaneseq
        %v2667 = vshrl.u32 %v2666, 7
        %v2668 = vsub.s32 %v2665, %v2667
        %v2669 = vrot.slane %v2655, %v2668
        %v2670 = vcombine.low %v2662, %v2669
        %v2672 = vunpack.c.l.s4 1966171168
        %v2673 = vunpack.c.0.s8 %v2672
        %v2674 = vlaneseq
        %v2675 = vshrl.u32 %v2674, 7
        %v2676 = vsub.s32 %v2673, %v2675
        %v2677 = vrot.slane %v2127, %v2676
        %v2679 = vunpack.c.l.s4 1966171168
        %v2680 = vunpack.c.0.s8 %v2679
        %v2681 = vlaneseq
        %v2682 = vshrl.u32 %v2681, 7
        %v2683 = vsub.s32 %v2680, %v2682
        %v2684 = vrot.slane %v2677, %v2683
        %v2685 = vcombine.low %v2141, %v2143
        %v2686 = vcombine.low %v2145, %v2169
        %v2687 = vcombine.low %v2183, %v2191
        %v2688 = vcombine.low %v2193, %v2176
        %v2690 = vunpack.c.l.s4 1966171168
        %v2691 = vunpack.c.0.s8 %v2690
        %v2692 = vlaneseq
        %v2693 = vshrl.u32 %v2692, 7
        %v2694 = vsub.s32 %v2691, %v2693
        %v2695 = vrot.slane %v2685, %v2694
        %v2697 = vunpack.c.l.s4 1966171168
        %v2698 = vunpack.c.0.s8 %v2697
        %v2699 = vlaneseq
        %v2700 = vshrl.u32 %v2699, 7
        %v2701 = vsub.s32 %v2698, %v2700
        %v2702 = vrot.slane %v2686, %v2701
        %v2704 = vunpack.c.l.s4 1966171168
        %v2705 = vunpack.c.0.s8 %v2704
        %v2706 = vlaneseq
        %v2707 = vshrl.u32 %v2706, 7
        %v2708 = vsub.s32 %v2705, %v2707
        %v2709 = vrot.slane %v2687, %v2708
        %v2711 = vunpack.c.l.s4 1966171168
        %v2712 = vunpack.c.0.s8 %v2711
        %v2713 = vlaneseq
        %v2714 = vshrl.u32 %v2713, 7
        %v2715 = vsub.s32 %v2712, %v2714
        %v2716 = vrot.slane %v2688, %v2715
        %v2717 = vcombine.low %v2695, %v2702
        %v2718 = vcombine.low %v2709, %v2716
        %v2720 = vunpack.c.l.s4 1966171168
        %v2721 = vunpack.c.0.s8 %v2720
        %v2722 = vlaneseq
        %v2723 = vshrl.u32 %v2722, 7
        %v2724 = vsub.s32 %v2721, %v2723
        %v2725 = vrot.slane %v2717, %v2724
        %v2727 = vunpack.c.l.s4 1966171168
        %v2728 = vunpack.c.0.s8 %v2727
        %v2729 = vlaneseq
        %v2730 = vshrl.u32 %v2729, 7
        %v2731 = vsub.s32 %v2728, %v2730
        %v2732 = vrot.slane %v2718, %v2731
        %v2733 = vcombine.low %v2725, %v2732
        %v2735 = vunpack.c.l.s4 1966171168
        %v2736 = vunpack.c.0.s8 %v2735
        %v2737 = vlaneseq
        %v2738 = vshrl.u32 %v2737, 7
        %v2739 = vsub.s32 %v2736, %v2738
        %v2740 = vrot.slane %v2190, %v2739
        %v2742 = vunpack.c.l.s4 1966171168
        %v2743 = vunpack.c.0.s8 %v2742
        %v2744 = vlaneseq
        %v2745 = vshrl.u32 %v2744, 7
        %v2746 = vsub.s32 %v2743, %v2745
        %v2747 = vrot.slane %v2740, %v2746
        %v2748 = vcombine.low %v2192, %v2194
        %v2749 = vcombine.low %v2218, %v2232
        %v2750 = vcombine.low %v2240, %v2242
        %v2751 = vcombine.low %v2225, %v2239
        %v2753 = vunpack.c.l.s4 1966171168
        %v2754 = vunpack.c.0.s8 %v2753
        %v2755 = vlaneseq
        %v2756 = vshrl.u32 %v2755, 7
        %v2757 = vsub.s32 %v2754, %v2756
        %v2758 = vrot.slane %v2748, %v2757
        %v2760 = vunpack.c.l.s4 1966171168
        %v2761 = vunpack.c.0.s8 %v2760
        %v2762 = vlaneseq
        %v2763 = vshrl.u32 %v2762, 7
        %v2764 = vsub.s32 %v2761, %v2763
        %v2765 = vrot.slane %v2749, %v2764
        %v2767 = vunpack.c.l.s4 1966171168
        %v2768 = vunpack.c.0.s8 %v2767
        %v2769 = vlaneseq
        %v2770 = vshrl.u32 %v2769, 7
        %v2771 = vsub.s32 %v2768, %v2770
        %v2772 = vrot.slane %v2750, %v2771
        %v2774 = vunpack.c.l.s4 1966171168
        %v2775 = vunpack.c.0.s8 %v2774
        %v2776 = vlaneseq
        %v2777 = vshrl.u32 %v2776, 7
        %v2778 = vsub.s32 %v2775, %v2777
        %v2779 = vrot.slane %v2751, %v2778
        %v2780 = vcombine.low %v2758, %v2765
        %v2781 = vcombine.low %v2772, %v2779
        %v2783 = vunpack.c.l.s4 1966171168
        %v2784 = vunpack.c.0.s8 %v2783
        %v2785 = vlaneseq
        %v2786 = vshrl.u32 %v2785, 7
        %v2787 = vsub.s32 %v2784, %v2786
        %v2788 = vrot.slane %v2780, %v2787
        %v2790 = vunpack.c.l.s4 1966171168
        %v2791 = vunpack.c.0.s8 %v2790
        %v2792 = vlaneseq
        %v2793 = vshrl.u32 %v2792, 7
        %v2794 = vsub.s32 %v2791, %v2793
        %v2795 = vrot.slane %v2781, %v2794
        %v2796 = vcombine.low %v2788, %v2795
        %v2798 = vunpack.c.l.s4 1966171168
        %v2799 = vunpack.c.0.s8 %v2798
        %v2800 = vlaneseq
        %v2801 = vshrl.u32 %v2800, 7
        %v2802 = vsub.s32 %v2799, %v2801
        %v2803 = vrot.slane %v2241, %v2802
        %v2805 = vunpack.c.l.s4 1966171168
        %v2806 = vunpack.c.0.s8 %v2805
        %v2807 = vlaneseq
        %v2808 = vshrl.u32 %v2807, 7
        %v2809 = vsub.s32 %v2806, %v2808
        %v2810 = vrot.slane %v2803, %v2809
        %v2811 = vcombine.low %v2243, %v2267
        %v2812 = vcombine.low %v2281, %v2289
        %v2813 = vcombine.low %v2291, %v2274
        %v2814 = vcombine.low %v2288, %v2290
        %v2816 = vunpack.c.l.s4 1966171168
        %v2817 = vunpack.c.0.s8 %v2816
        %v2818 = vlaneseq
        %v2819 = vshrl.u32 %v2818, 7
        %v2820 = vsub.s32 %v2817, %v2819
        %v2821 = vrot.slane %v2811, %v2820
        %v2823 = vunpack.c.l.s4 1966171168
        %v2824 = vunpack.c.0.s8 %v2823
        %v2825 = vlaneseq
        %v2826 = vshrl.u32 %v2825, 7
        %v2827 = vsub.s32 %v2824, %v2826
        %v2828 = vrot.slane %v2812, %v2827
        %v2830 = vunpack.c.l.s4 1966171168
        %v2831 = vunpack.c.0.s8 %v2830
        %v2832 = vlaneseq
        %v2833 = vshrl.u32 %v2832, 7
        %v2834 = vsub.s32 %v2831, %v2833
        %v2835 = vrot.slane %v2813, %v2834
        %v2837 = vunpack.c.l.s4 1966171168
        %v2838 = vunpack.c.0.s8 %v2837
        %v2839 = vlaneseq
        %v2840 = vshrl.u32 %v2839, 7
        %v2841 = vsub.s32 %v2838, %v2840
        %v2842 = vrot.slane %v2814, %v2841
        %v2843 = vcombine.low %v2821, %v2828
        %v2844 = vcombine.low %v2835, %v2842
        %v2846 = vunpack.c.l.s4 1966171168
        %v2847 = vunpack.c.0.s8 %v2846
        %v2848 = vlaneseq
        %v2849 = vshrl.u32 %v2848, 7
        %v2850 = vsub.s32 %v2847, %v2849
        %v2851 = vrot.slane %v2843, %v2850
        %v2853 = vunpack.c.l.s4 1966171168
        %v2854 = vunpack.c.0.s8 %v2853
        %v2855 = vlaneseq
        %v2856 = vshrl.u32 %v2855, 7
        %v2857 = vsub.s32 %v2854, %v2856
        %v2858 = vrot.slane %v2844, %v2857
        %v2859 = vcombine.low %v2851, %v2858
        %v2861 = vunpack.c.l.s4 1966171168
        %v2862 = vunpack.c.0.s8 %v2861
        %v2863 = vlaneseq
        %v2864 = vshrl.u32 %v2863, 7
        %v2865 = vsub.s32 %v2862, %v2864
        %v2866 = vrot.slane %v2292, %v2865
        %v2868 = vunpack.c.l.s4 1966171168
        %v2869 = vunpack.c.0.s8 %v2868
        %v2870 = vlaneseq
        %v2871 = vshrl.u32 %v2870, 7
        %v2872 = vsub.s32 %v2869, %v2871
        %v2873 = vrot.slane %v2866, %v2872
        %v2874 = vcombine.low %v2316, %v2330
        %v2875 = vcombine.low %v2338, %v2340
        %v2876 = vcombine.low %v2323, %v2337
        %v2877 = vcombine.low %v2339, %v2341
        %v2879 = vunpack.c.l.s4 1966171168
        %v2880 = vunpack.c.0.s8 %v2879
        %v2881 = vlaneseq
        %v2882 = vshrl.u32 %v2881, 7
        %v2883 = vsub.s32 %v2880, %v2882
        %v2884 = vrot.slane %v2874, %v2883
        %v2886 = vunpack.c.l.s4 1966171168
        %v2887 = vunpack.c.0.s8 %v2886
        %v2888 = vlaneseq
        %v2889 = vshrl.u32 %v2888, 7
        %v2890 = vsub.s32 %v2887, %v2889
        %v2891 = vrot.slane %v2875, %v2890
        %v2893 = vunpack.c.l.s4 1966171168
        %v2894 = vunpack.c.0.s8 %v2893
        %v2895 = vlaneseq
        %v2896 = vshrl.u32 %v2895, 7
        %v2897 = vsub.s32 %v2894, %v2896
        %v2898 = vrot.slane %v2876, %v2897
        %v2900 = vunpack.c.l.s4 1966171168
        %v2901 = vunpack.c.0.s8 %v2900
        %v2902 = vlaneseq
        %v2903 = vshrl.u32 %v2902, 7
        %v2904 = vsub.s32 %v2901, %v2903
        %v2905 = vrot.slane %v2877, %v2904
        %v2906 = vcombine.low %v2884, %v2891
        %v2907 = vcombine.low %v2898, %v2905
        %v2909 = vunpack.c.l.s4 1966171168
        %v2910 = vunpack.c.0.s8 %v2909
        %v2911 = vlaneseq
        %v2912 = vshrl.u32 %v2911, 7
        %v2913 = vsub.s32 %v2910, %v2912
        %v2914 = vrot.slane %v2906, %v2913
        %v2916 = vunpack.c.l.s4 1966171168
        %v2917 = vunpack.c.0.s8 %v2916
        %v2918 = vlaneseq
        %v2919 = vshrl.u32 %v2918, 7
        %v2920 = vsub.s32 %v2917, %v2919
        %v2921 = vrot.slane %v2907, %v2920
        %v2922 = vcombine.low %v2914, %v2921
        %v2924 = vunpack.c.l.s4 1966171168
        %v2925 = vunpack.c.0.s8 %v2924
        %v2926 = vlaneseq
        %v2927 = vshrl.u32 %v2926, 7
        %v2928 = vsub.s32 %v2925, %v2927
        %v2929 = vrot.slane %v2355, %v2928
        %v2931 = vunpack.c.l.s4 1966171168
        %v2932 = vunpack.c.0.s8 %v2931
        %v2933 = vlaneseq
        %v2934 = vshrl.u32 %v2933, 7
        %v2935 = vsub.s32 %v2932, %v2934
        %v2936 = vrot.slane %v2929, %v2935
        %v2955 = vsel %vm2366, %v2418, 0.0
        %v2956 = vsel %vm2367, %v2432, 0.0
        %v2957 = vsel %vm2368, %v2481, 0.0
        %v2958 = vsel %vm2369, %v2495, 0.0
        %v2959 = vsel %vm2368, %v2544, 0.0
        %v2960 = vsel %vm2369, %v2558, 0.0
        %v2961 = vsel %vm2368, %v2607, 0.0
        %v2962 = vsel %vm2369, %v2621, 0.0
        %v2963 = vsel %vm2368, %v2670, 0.0
        %v2964 = vsel %vm2369, %v2684, 0.0
        %v2965 = vsel %vm2368, %v2733, 0.0
        %v2966 = vsel %vm2369, %v2747, 0.0
        %v2967 = vsel %vm2368, %v2796, 0.0
        %v2968 = vsel %vm2369, %v2810, 0.0
        %v2969 = vsel %vm2368, %v2859, 0.0
        %v2970 = vsel %vm2369, %v2873, 0.0
        %v2971 = vsel %vm2368, %v2922, 0.0
        %v2972 = vsel %vm2369, %v2936, 0.0
        %2973 = vst.msk [vmem:[#allocation2] sm:$0xff] %vm1731, %v2955
        %vm2974 = vcmask 253952
        %2975 = vst.msk [vmem:[#allocation2 + $0x8] sm:$0x1] %vm2974, %v2956
        %2976 = vst.msk [vmem:[#allocation2 + $0x10] sm:$0xff] %vm1731, %v2957
        %2977 = vst.msk [vmem:[#allocation2 + $0x18] sm:$0x1] %vm2974, %v2958
        %2978 = vst.msk [vmem:[#allocation2 + $0x20] sm:$0xff] %vm1731, %v2959
        %2979 = vst.msk [vmem:[#allocation2 + $0x28] sm:$0x1] %vm2974, %v2960
        %2980 = vst.msk [vmem:[#allocation2 + $0x30] sm:$0xff] %vm1731, %v2961
        %2981 = vst.msk [vmem:[#allocation2 + $0x38] sm:$0x1] %vm2974, %v2962
        %2982 = vst.msk [vmem:[#allocation2 + $0x40] sm:$0xff] %vm1731, %v2963
        %2983 = vst.msk [vmem:[#allocation2 + $0x48] sm:$0x1] %vm2974, %v2964
        %2984 = vst.msk [vmem:[#allocation2 + $0x50] sm:$0xff] %vm1731, %v2965
        %2985 = vst.msk [vmem:[#allocation2 + $0x58] sm:$0x1] %vm2974, %v2966
        %2986 = vst.msk [vmem:[#allocation2 + $0x60] sm:$0xff] %vm1731, %v2967
        %2987 = vst.msk [vmem:[#allocation2 + $0x68] sm:$0x1] %vm2974, %v2968
        %2988 = vst.msk [vmem:[#allocation2 + $0x70] sm:$0xff] %vm1731, %v2969
        %2989 = vst.msk [vmem:[#allocation2 + $0x78] sm:$0x1] %vm2974, %v2970
        %2990 = vst.msk [vmem:[#allocation2 + $0x80] sm:$0xff] %vm1731, %v2971
        %2991 = vst.msk [vmem:[#allocation2 + $0x88] sm:$0x1] %vm2974, %v2972
        %v3010 = vcombine.high %v548, %v548
        %v3012 = vunpack.c.l.s4 1966171168
        %v3013 = vunpack.c.0.s8 %v3012
        %v3014 = vlaneseq
        %v3015 = vshrl.u32 %v3014, 7
        %v3016 = vsub.s32 %v3013, %v3015
        %v3017 = vrot.slane %v548, %v3016
        %v3019 = vunpack.c.l.s4 1966171168
        %v3020 = vunpack.c.0.s8 %v3019
        %v3021 = vlaneseq
        %v3022 = vshrl.u32 %v3021, 7
        %v3023 = vsub.s32 %v3020, %v3022
        %v3024 = vrot.slane %v3010, %v3023
        %v3025 = vcombine.high %v3017, %v3017
        %v3026 = vcombine.high %v3024, %v3024
        %v3028 = vunpack.c.l.s4 1966171168
        %v3029 = vunpack.c.0.s8 %v3028
        %v3030 = vlaneseq
        %v3031 = vshrl.u32 %v3030, 7
        %v3032 = vsub.s32 %v3029, %v3031
        %v3033 = vrot.slane %v3017, %v3032
        %v3035 = vunpack.c.l.s4 1966171168
        %v3036 = vunpack.c.0.s8 %v3035
        %v3037 = vlaneseq
        %v3038 = vshrl.u32 %v3037, 7
        %v3039 = vsub.s32 %v3036, %v3038
        %v3040 = vrot.slane %v3024, %v3039
        %v3042 = vunpack.c.l.s4 1966171168
        %v3043 = vunpack.c.0.s8 %v3042
        %v3044 = vlaneseq
        %v3045 = vshrl.u32 %v3044, 7
        %v3046 = vsub.s32 %v3043, %v3045
        %v3047 = vrot.slane %v3025, %v3046
        %v3049 = vunpack.c.l.s4 1966171168
        %v3050 = vunpack.c.0.s8 %v3049
        %v3051 = vlaneseq
        %v3052 = vshrl.u32 %v3051, 7
        %v3053 = vsub.s32 %v3050, %v3052
        %v3054 = vrot.slane %v3026, %v3053
        %v3055 = vcombine.high %v3033, %v3033
        %v3056 = vcombine.high %v3040, %v3040
        %v3057 = vcombine.high %v3047, %v3047
        %v3058 = vcombine.high %v3054, %v3054
        %v3060 = vunpack.c.l.s4 1966171168
        %v3061 = vunpack.c.0.s8 %v3060
        %v3062 = vlaneseq
        %v3063 = vshrl.u32 %v3062, 7
        %v3064 = vsub.s32 %v3061, %v3063
        %v3065 = vrot.slane %v549, %v3064
        %v3067 = vunpack.c.l.s4 1966171168
        %v3068 = vunpack.c.0.s8 %v3067
        %v3069 = vlaneseq
        %v3070 = vshrl.u32 %v3069, 7
        %v3071 = vsub.s32 %v3068, %v3070
        %v3072 = vrot.slane %v3065, %v3071
        %v3073 = vcombine.high %v550, %v550
        %v3075 = vunpack.c.l.s4 1966171168
        %v3076 = vunpack.c.0.s8 %v3075
        %v3077 = vlaneseq
        %v3078 = vshrl.u32 %v3077, 7
        %v3079 = vsub.s32 %v3076, %v3078
        %v3080 = vrot.slane %v550, %v3079
        %v3082 = vunpack.c.l.s4 1966171168
        %v3083 = vunpack.c.0.s8 %v3082
        %v3084 = vlaneseq
        %v3085 = vshrl.u32 %v3084, 7
        %v3086 = vsub.s32 %v3083, %v3085
        %v3087 = vrot.slane %v3073, %v3086
        %v3088 = vcombine.high %v3080, %v3080
        %v3089 = vcombine.high %v3087, %v3087
        %v3091 = vunpack.c.l.s4 1966171168
        %v3092 = vunpack.c.0.s8 %v3091
        %v3093 = vlaneseq
        %v3094 = vshrl.u32 %v3093, 7
        %v3095 = vsub.s32 %v3092, %v3094
        %v3096 = vrot.slane %v3080, %v3095
        %v3098 = vunpack.c.l.s4 1966171168
        %v3099 = vunpack.c.0.s8 %v3098
        %v3100 = vlaneseq
        %v3101 = vshrl.u32 %v3100, 7
        %v3102 = vsub.s32 %v3099, %v3101
        %v3103 = vrot.slane %v3087, %v3102
        %v3105 = vunpack.c.l.s4 1966171168
        %v3106 = vunpack.c.0.s8 %v3105
        %v3107 = vlaneseq
        %v3108 = vshrl.u32 %v3107, 7
        %v3109 = vsub.s32 %v3106, %v3108
        %v3110 = vrot.slane %v3088, %v3109
        %v3112 = vunpack.c.l.s4 1966171168
        %v3113 = vunpack.c.0.s8 %v3112
        %v3114 = vlaneseq
        %v3115 = vshrl.u32 %v3114, 7
        %v3116 = vsub.s32 %v3113, %v3115
        %v3117 = vrot.slane %v3089, %v3116
        %v3118 = vcombine.high %v3096, %v3096
        %v3119 = vcombine.high %v3103, %v3103
        %v3120 = vcombine.high %v3110, %v3110
        %v3121 = vcombine.high %v3117, %v3117
        %v3123 = vunpack.c.l.s4 1966171168
        %v3124 = vunpack.c.0.s8 %v3123
        %v3125 = vlaneseq
        %v3126 = vshrl.u32 %v3125, 7
        %v3127 = vsub.s32 %v3124, %v3126
        %v3128 = vrot.slane %v551, %v3127
        %v3130 = vunpack.c.l.s4 1966171168
        %v3131 = vunpack.c.0.s8 %v3130
        %v3132 = vlaneseq
        %v3133 = vshrl.u32 %v3132, 7
        %v3134 = vsub.s32 %v3131, %v3133
        %v3135 = vrot.slane %v3128, %v3134
        %v3136 = vcombine.high %v552, %v552
        %v3138 = vunpack.c.l.s4 1966171168
        %v3139 = vunpack.c.0.s8 %v3138
        %v3140 = vlaneseq
        %v3141 = vshrl.u32 %v3140, 7
        %v3142 = vsub.s32 %v3139, %v3141
        %v3143 = vrot.slane %v552, %v3142
        %v3145 = vunpack.c.l.s4 1966171168
        %v3146 = vunpack.c.0.s8 %v3145
        %v3147 = vlaneseq
        %v3148 = vshrl.u32 %v3147, 7
        %v3149 = vsub.s32 %v3146, %v3148
        %v3150 = vrot.slane %v3136, %v3149
        %v3151 = vcombine.high %v3143, %v3143
        %v3152 = vcombine.high %v3150, %v3150
        %v3154 = vunpack.c.l.s4 1966171168
        %v3155 = vunpack.c.0.s8 %v3154
        %v3156 = vlaneseq
        %v3157 = vshrl.u32 %v3156, 7
        %v3158 = vsub.s32 %v3155, %v3157
        %v3159 = vrot.slane %v3143, %v3158
        %v3161 = vunpack.c.l.s4 1966171168
        %v3162 = vunpack.c.0.s8 %v3161
        %v3163 = vlaneseq
        %v3164 = vshrl.u32 %v3163, 7
        %v3165 = vsub.s32 %v3162, %v3164
        %v3166 = vrot.slane %v3150, %v3165
        %v3168 = vunpack.c.l.s4 1966171168
        %v3169 = vunpack.c.0.s8 %v3168
        %v3170 = vlaneseq
        %v3171 = vshrl.u32 %v3170, 7
        %v3172 = vsub.s32 %v3169, %v3171
        %v3173 = vrot.slane %v3151, %v3172
        %v3175 = vunpack.c.l.s4 1966171168
        %v3176 = vunpack.c.0.s8 %v3175
        %v3177 = vlaneseq
        %v3178 = vshrl.u32 %v3177, 7
        %v3179 = vsub.s32 %v3176, %v3178
        %v3180 = vrot.slane %v3152, %v3179
        %v3181 = vcombine.high %v3159, %v3159
        %v3182 = vcombine.high %v3166, %v3166
        %v3183 = vcombine.high %v3173, %v3173
        %v3184 = vcombine.high %v3180, %v3180
        %v3186 = vunpack.c.l.s4 1966171168
        %v3187 = vunpack.c.0.s8 %v3186
        %v3188 = vlaneseq
        %v3189 = vshrl.u32 %v3188, 7
        %v3190 = vsub.s32 %v3187, %v3189
        %v3191 = vrot.slane %v553, %v3190
        %v3193 = vunpack.c.l.s4 1966171168
        %v3194 = vunpack.c.0.s8 %v3193
        %v3195 = vlaneseq
        %v3196 = vshrl.u32 %v3195, 7
        %v3197 = vsub.s32 %v3194, %v3196
        %v3198 = vrot.slane %v3191, %v3197
        %v3199 = vcombine.high %v554, %v554
        %v3201 = vunpack.c.l.s4 1966171168
        %v3202 = vunpack.c.0.s8 %v3201
        %v3203 = vlaneseq
        %v3204 = vshrl.u32 %v3203, 7
        %v3205 = vsub.s32 %v3202, %v3204
        %v3206 = vrot.slane %v554, %v3205
        %v3208 = vunpack.c.l.s4 1966171168
        %v3209 = vunpack.c.0.s8 %v3208
        %v3210 = vlaneseq
        %v3211 = vshrl.u32 %v3210, 7
        %v3212 = vsub.s32 %v3209, %v3211
        %v3213 = vrot.slane %v3199, %v3212
        %v3214 = vcombine.high %v3206, %v3206
        %v3215 = vcombine.high %v3213, %v3213
        %v3217 = vunpack.c.l.s4 1966171168
        %v3218 = vunpack.c.0.s8 %v3217
        %v3219 = vlaneseq
        %v3220 = vshrl.u32 %v3219, 7
        %v3221 = vsub.s32 %v3218, %v3220
        %v3222 = vrot.slane %v3206, %v3221
        %v3224 = vunpack.c.l.s4 1966171168
        %v3225 = vunpack.c.0.s8 %v3224
        %v3226 = vlaneseq
        %v3227 = vshrl.u32 %v3226, 7
        %v3228 = vsub.s32 %v3225, %v3227
        %v3229 = vrot.slane %v3213, %v3228
        %v3231 = vunpack.c.l.s4 1966171168
        %v3232 = vunpack.c.0.s8 %v3231
        %v3233 = vlaneseq
        %v3234 = vshrl.u32 %v3233, 7
        %v3235 = vsub.s32 %v3232, %v3234
        %v3236 = vrot.slane %v3214, %v3235
        %v3238 = vunpack.c.l.s4 1966171168
        %v3239 = vunpack.c.0.s8 %v3238
        %v3240 = vlaneseq
        %v3241 = vshrl.u32 %v3240, 7
        %v3242 = vsub.s32 %v3239, %v3241
        %v3243 = vrot.slane %v3215, %v3242
        %v3244 = vcombine.high %v3222, %v3222
        %v3245 = vcombine.high %v3229, %v3229
        %v3246 = vcombine.high %v3236, %v3236
        %v3247 = vcombine.high %v3243, %v3243
        %v3249 = vunpack.c.l.s4 1966171168
        %v3250 = vunpack.c.0.s8 %v3249
        %v3251 = vlaneseq
        %v3252 = vshrl.u32 %v3251, 7
        %v3253 = vsub.s32 %v3250, %v3252
        %v3254 = vrot.slane %v555, %v3253
        %v3256 = vunpack.c.l.s4 1966171168
        %v3257 = vunpack.c.0.s8 %v3256
        %v3258 = vlaneseq
        %v3259 = vshrl.u32 %v3258, 7
        %v3260 = vsub.s32 %v3257, %v3259
        %v3261 = vrot.slane %v3254, %v3260
        %v3262 = vcombine.high %v556, %v556
        %v3264 = vunpack.c.l.s4 1966171168
        %v3265 = vunpack.c.0.s8 %v3264
        %v3266 = vlaneseq
        %v3267 = vshrl.u32 %v3266, 7
        %v3268 = vsub.s32 %v3265, %v3267
        %v3269 = vrot.slane %v556, %v3268
        %v3271 = vunpack.c.l.s4 1966171168
        %v3272 = vunpack.c.0.s8 %v3271
        %v3273 = vlaneseq
        %v3274 = vshrl.u32 %v3273, 7
        %v3275 = vsub.s32 %v3272, %v3274
        %v3276 = vrot.slane %v3262, %v3275
        %v3277 = vcombine.high %v3269, %v3269
        %v3278 = vcombine.high %v3276, %v3276
        %v3280 = vunpack.c.l.s4 1966171168
        %v3281 = vunpack.c.0.s8 %v3280
        %v3282 = vlaneseq
        %v3283 = vshrl.u32 %v3282, 7
        %v3284 = vsub.s32 %v3281, %v3283
        %v3285 = vrot.slane %v3269, %v3284
        %v3287 = vunpack.c.l.s4 1966171168
        %v3288 = vunpack.c.0.s8 %v3287
        %v3289 = vlaneseq
        %v3290 = vshrl.u32 %v3289, 7
        %v3291 = vsub.s32 %v3288, %v3290
        %v3292 = vrot.slane %v3276, %v3291
        %v3294 = vunpack.c.l.s4 1966171168
        %v3295 = vunpack.c.0.s8 %v3294
        %v3296 = vlaneseq
        %v3297 = vshrl.u32 %v3296, 7
        %v3298 = vsub.s32 %v3295, %v3297
        %v3299 = vrot.slane %v3277, %v3298
        %v3301 = vunpack.c.l.s4 1966171168
        %v3302 = vunpack.c.0.s8 %v3301
        %v3303 = vlaneseq
        %v3304 = vshrl.u32 %v3303, 7
        %v3305 = vsub.s32 %v3302, %v3304
        %v3306 = vrot.slane %v3278, %v3305
        %v3307 = vcombine.high %v3285, %v3285
        %v3308 = vcombine.high %v3292, %v3292
        %v3309 = vcombine.high %v3299, %v3299
        %v3310 = vcombine.high %v3306, %v3306
        %v3312 = vunpack.c.l.s4 1966171168
        %v3313 = vunpack.c.0.s8 %v3312
        %v3314 = vlaneseq
        %v3315 = vshrl.u32 %v3314, 7
        %v3316 = vsub.s32 %v3313, %v3315
        %v3317 = vrot.slane %v557, %v3316
        %v3319 = vunpack.c.l.s4 1966171168
        %v3320 = vunpack.c.0.s8 %v3319
        %v3321 = vlaneseq
        %v3322 = vshrl.u32 %v3321, 7
        %v3323 = vsub.s32 %v3320, %v3322
        %v3324 = vrot.slane %v3317, %v3323
        %v3325 = vcombine.high %v558, %v558
        %v3327 = vunpack.c.l.s4 1966171168
        %v3328 = vunpack.c.0.s8 %v3327
        %v3329 = vlaneseq
        %v3330 = vshrl.u32 %v3329, 7
        %v3331 = vsub.s32 %v3328, %v3330
        %v3332 = vrot.slane %v558, %v3331
        %v3334 = vunpack.c.l.s4 1966171168
        %v3335 = vunpack.c.0.s8 %v3334
        %v3336 = vlaneseq
        %v3337 = vshrl.u32 %v3336, 7
        %v3338 = vsub.s32 %v3335, %v3337
        %v3339 = vrot.slane %v3325, %v3338
        %v3340 = vcombine.high %v3332, %v3332
        %v3341 = vcombine.high %v3339, %v3339
        %v3343 = vunpack.c.l.s4 1966171168
        %v3344 = vunpack.c.0.s8 %v3343
        %v3345 = vlaneseq
        %v3346 = vshrl.u32 %v3345, 7
        %v3347 = vsub.s32 %v3344, %v3346
        %v3348 = vrot.slane %v3332, %v3347
        %v3350 = vunpack.c.l.s4 1966171168
        %v3351 = vunpack.c.0.s8 %v3350
        %v3352 = vlaneseq
        %v3353 = vshrl.u32 %v3352, 7
        %v3354 = vsub.s32 %v3351, %v3353
        %v3355 = vrot.slane %v3339, %v3354
        %v3357 = vunpack.c.l.s4 1966171168
        %v3358 = vunpack.c.0.s8 %v3357
        %v3359 = vlaneseq
        %v3360 = vshrl.u32 %v3359, 7
        %v3361 = vsub.s32 %v3358, %v3360
        %v3362 = vrot.slane %v3340, %v3361
        %v3364 = vunpack.c.l.s4 1966171168
        %v3365 = vunpack.c.0.s8 %v3364
        %v3366 = vlaneseq
        %v3367 = vshrl.u32 %v3366, 7
        %v3368 = vsub.s32 %v3365, %v3367
        %v3369 = vrot.slane %v3341, %v3368
        %v3370 = vcombine.high %v3348, %v3348
        %v3371 = vcombine.high %v3355, %v3355
        %v3372 = vcombine.high %v3362, %v3362
        %v3373 = vcombine.high %v3369, %v3369
        %v3375 = vunpack.c.l.s4 1966171168
        %v3376 = vunpack.c.0.s8 %v3375
        %v3377 = vlaneseq
        %v3378 = vshrl.u32 %v3377, 7
        %v3379 = vsub.s32 %v3376, %v3378
        %v3380 = vrot.slane %v559, %v3379
        %v3382 = vunpack.c.l.s4 1966171168
        %v3383 = vunpack.c.0.s8 %v3382
        %v3384 = vlaneseq
        %v3385 = vshrl.u32 %v3384, 7
        %v3386 = vsub.s32 %v3383, %v3385
        %v3387 = vrot.slane %v3380, %v3386
        %v3388 = vcombine.high %v560, %v560
        %v3390 = vunpack.c.l.s4 1966171168
        %v3391 = vunpack.c.0.s8 %v3390
        %v3392 = vlaneseq
        %v3393 = vshrl.u32 %v3392, 7
        %v3394 = vsub.s32 %v3391, %v3393
        %v3395 = vrot.slane %v560, %v3394
        %v3397 = vunpack.c.l.s4 1966171168
        %v3398 = vunpack.c.0.s8 %v3397
        %v3399 = vlaneseq
        %v3400 = vshrl.u32 %v3399, 7
        %v3401 = vsub.s32 %v3398, %v3400
        %v3402 = vrot.slane %v3388, %v3401
        %v3403 = vcombine.high %v3395, %v3395
        %v3404 = vcombine.high %v3402, %v3402
        %v3406 = vunpack.c.l.s4 1966171168
        %v3407 = vunpack.c.0.s8 %v3406
        %v3408 = vlaneseq
        %v3409 = vshrl.u32 %v3408, 7
        %v3410 = vsub.s32 %v3407, %v3409
        %v3411 = vrot.slane %v3395, %v3410
        %v3413 = vunpack.c.l.s4 1966171168
        %v3414 = vunpack.c.0.s8 %v3413
        %v3415 = vlaneseq
        %v3416 = vshrl.u32 %v3415, 7
        %v3417 = vsub.s32 %v3414, %v3416
        %v3418 = vrot.slane %v3402, %v3417
        %v3420 = vunpack.c.l.s4 1966171168
        %v3421 = vunpack.c.0.s8 %v3420
        %v3422 = vlaneseq
        %v3423 = vshrl.u32 %v3422, 7
        %v3424 = vsub.s32 %v3421, %v3423
        %v3425 = vrot.slane %v3403, %v3424
        %v3427 = vunpack.c.l.s4 1966171168
        %v3428 = vunpack.c.0.s8 %v3427
        %v3429 = vlaneseq
        %v3430 = vshrl.u32 %v3429, 7
        %v3431 = vsub.s32 %v3428, %v3430
        %v3432 = vrot.slane %v3404, %v3431
        %v3433 = vcombine.high %v3411, %v3411
        %v3434 = vcombine.high %v3418, %v3418
        %v3435 = vcombine.high %v3425, %v3425
        %v3436 = vcombine.high %v3432, %v3432
        %v3438 = vunpack.c.l.s4 1966171168
        %v3439 = vunpack.c.0.s8 %v3438
        %v3440 = vlaneseq
        %v3441 = vshrl.u32 %v3440, 7
        %v3442 = vsub.s32 %v3439, %v3441
        %v3443 = vrot.slane %v561, %v3442
        %v3445 = vunpack.c.l.s4 1966171168
        %v3446 = vunpack.c.0.s8 %v3445
        %v3447 = vlaneseq
        %v3448 = vshrl.u32 %v3447, 7
        %v3449 = vsub.s32 %v3446, %v3448
        %v3450 = vrot.slane %v3443, %v3449
        %v3451 = vcombine.high %v562, %v562
        %v3453 = vunpack.c.l.s4 1966171168
        %v3454 = vunpack.c.0.s8 %v3453
        %v3455 = vlaneseq
        %v3456 = vshrl.u32 %v3455, 7
        %v3457 = vsub.s32 %v3454, %v3456
        %v3458 = vrot.slane %v562, %v3457
        %v3460 = vunpack.c.l.s4 1966171168
        %v3461 = vunpack.c.0.s8 %v3460
        %v3462 = vlaneseq
        %v3463 = vshrl.u32 %v3462, 7
        %v3464 = vsub.s32 %v3461, %v3463
        %v3465 = vrot.slane %v3451, %v3464
        %v3466 = vcombine.high %v3458, %v3458
        %v3467 = vcombine.high %v3465, %v3465
        %v3469 = vunpack.c.l.s4 1966171168
        %v3470 = vunpack.c.0.s8 %v3469
        %v3471 = vlaneseq
        %v3472 = vshrl.u32 %v3471, 7
        %v3473 = vsub.s32 %v3470, %v3472
        %v3474 = vrot.slane %v3458, %v3473
        %v3476 = vunpack.c.l.s4 1966171168
        %v3477 = vunpack.c.0.s8 %v3476
        %v3478 = vlaneseq
        %v3479 = vshrl.u32 %v3478, 7
        %v3480 = vsub.s32 %v3477, %v3479
        %v3481 = vrot.slane %v3465, %v3480
        %v3483 = vunpack.c.l.s4 1966171168
        %v3484 = vunpack.c.0.s8 %v3483
        %v3485 = vlaneseq
        %v3486 = vshrl.u32 %v3485, 7
        %v3487 = vsub.s32 %v3484, %v3486
        %v3488 = vrot.slane %v3466, %v3487
        %v3490 = vunpack.c.l.s4 1966171168
        %v3491 = vunpack.c.0.s8 %v3490
        %v3492 = vlaneseq
        %v3493 = vshrl.u32 %v3492, 7
        %v3494 = vsub.s32 %v3491, %v3493
        %v3495 = vrot.slane %v3467, %v3494
        %v3496 = vcombine.high %v3474, %v3474
        %v3497 = vcombine.high %v3481, %v3481
        %v3498 = vcombine.high %v3488, %v3488
        %v3499 = vcombine.high %v3495, %v3495
        %v3501 = vunpack.c.l.s4 1966171168
        %v3502 = vunpack.c.0.s8 %v3501
        %v3503 = vlaneseq
        %v3504 = vshrl.u32 %v3503, 7
        %v3505 = vsub.s32 %v3502, %v3504
        %v3506 = vrot.slane %v563, %v3505
        %v3508 = vunpack.c.l.s4 1966171168
        %v3509 = vunpack.c.0.s8 %v3508
        %v3510 = vlaneseq
        %v3511 = vshrl.u32 %v3510, 7
        %v3512 = vsub.s32 %v3509, %v3511
        %v3513 = vrot.slane %v3506, %v3512
        %v3514 = vcombine.high %v564, %v564
        %v3516 = vunpack.c.l.s4 1966171168
        %v3517 = vunpack.c.0.s8 %v3516
        %v3518 = vlaneseq
        %v3519 = vshrl.u32 %v3518, 7
        %v3520 = vsub.s32 %v3517, %v3519
        %v3521 = vrot.slane %v564, %v3520
        %v3523 = vunpack.c.l.s4 1966171168
        %v3524 = vunpack.c.0.s8 %v3523
        %v3525 = vlaneseq
        %v3526 = vshrl.u32 %v3525, 7
        %v3527 = vsub.s32 %v3524, %v3526
        %v3528 = vrot.slane %v3514, %v3527
        %v3529 = vcombine.high %v3521, %v3521
        %v3530 = vcombine.high %v3528, %v3528
        %v3532 = vunpack.c.l.s4 1966171168
        %v3533 = vunpack.c.0.s8 %v3532
        %v3534 = vlaneseq
        %v3535 = vshrl.u32 %v3534, 7
        %v3536 = vsub.s32 %v3533, %v3535
        %v3537 = vrot.slane %v3521, %v3536
        %v3539 = vunpack.c.l.s4 1966171168
        %v3540 = vunpack.c.0.s8 %v3539
        %v3541 = vlaneseq
        %v3542 = vshrl.u32 %v3541, 7
        %v3543 = vsub.s32 %v3540, %v3542
        %v3544 = vrot.slane %v3528, %v3543
        %v3546 = vunpack.c.l.s4 1966171168
        %v3547 = vunpack.c.0.s8 %v3546
        %v3548 = vlaneseq
        %v3549 = vshrl.u32 %v3548, 7
        %v3550 = vsub.s32 %v3547, %v3549
        %v3551 = vrot.slane %v3529, %v3550
        %v3553 = vunpack.c.l.s4 1966171168
        %v3554 = vunpack.c.0.s8 %v3553
        %v3555 = vlaneseq
        %v3556 = vshrl.u32 %v3555, 7
        %v3557 = vsub.s32 %v3554, %v3556
        %v3558 = vrot.slane %v3530, %v3557
        %v3559 = vcombine.high %v3537, %v3537
        %v3560 = vcombine.high %v3544, %v3544
        %v3561 = vcombine.high %v3551, %v3551
        %v3562 = vcombine.high %v3558, %v3558
        %v3564 = vunpack.c.l.s4 1966171168
        %v3565 = vunpack.c.0.s8 %v3564
        %v3566 = vlaneseq
        %v3567 = vshrl.u32 %v3566, 7
        %v3568 = vsub.s32 %v3565, %v3567
        %v3569 = vrot.slane %v565, %v3568
        %v3571 = vunpack.c.l.s4 1966171168
        %v3572 = vunpack.c.0.s8 %v3571
        %v3573 = vlaneseq
        %v3574 = vshrl.u32 %v3573, 7
        %v3575 = vsub.s32 %v3572, %v3574
        %v3576 = vrot.slane %v3569, %v3575
        %v3577 = vcombine.low %v3033, %v3047
        %v3578 = vcombine.low %v3055, %v3057
        %v3579 = vcombine.low %v3040, %v3054
        %v3580 = vcombine.low %v3056, %v3058
        %v3582 = vunpack.c.l.s4 1966171168
        %v3583 = vunpack.c.0.s8 %v3582
        %v3584 = vlaneseq
        %v3585 = vshrl.u32 %v3584, 7
        %v3586 = vsub.s32 %v3583, %v3585
        %v3587 = vrot.slane %v3577, %v3586
        %v3589 = vunpack.c.l.s4 1966171168
        %v3590 = vunpack.c.0.s8 %v3589
        %v3591 = vlaneseq
        %v3592 = vshrl.u32 %v3591, 7
        %v3593 = vsub.s32 %v3590, %v3592
        %v3594 = vrot.slane %v3578, %v3593
        %v3596 = vunpack.c.l.s4 1966171168
        %v3597 = vunpack.c.0.s8 %v3596
        %v3598 = vlaneseq
        %v3599 = vshrl.u32 %v3598, 7
        %v3600 = vsub.s32 %v3597, %v3599
        %v3601 = vrot.slane %v3579, %v3600
        %v3603 = vunpack.c.l.s4 1966171168
        %v3604 = vunpack.c.0.s8 %v3603
        %v3605 = vlaneseq
        %v3606 = vshrl.u32 %v3605, 7
        %v3607 = vsub.s32 %v3604, %v3606
        %v3608 = vrot.slane %v3580, %v3607
        %v3609 = vcombine.low %v3587, %v3594
        %v3610 = vcombine.low %v3601, %v3608
        %v3612 = vunpack.c.l.s4 1966171168
        %v3613 = vunpack.c.0.s8 %v3612
        %v3614 = vlaneseq
        %v3615 = vshrl.u32 %v3614, 7
        %v3616 = vsub.s32 %v3613, %v3615
        %v3617 = vrot.slane %v3609, %v3616
        %v3619 = vunpack.c.l.s4 1966171168
        %v3620 = vunpack.c.0.s8 %v3619
        %v3621 = vlaneseq
        %v3622 = vshrl.u32 %v3621, 7
        %v3623 = vsub.s32 %v3620, %v3622
        %v3624 = vrot.slane %v3610, %v3623
        %v3625 = vcombine.low %v3617, %v3624
        %v3626 = vcombine.low %v3072, %v3096
        %v3627 = vcombine.low %v3110, %v3118
        %v3628 = vcombine.low %v3120, %v3103
        %v3629 = vcombine.low %v3117, %v3119
        %v3631 = vunpack.c.l.s4 1966171168
        %v3632 = vunpack.c.0.s8 %v3631
        %v3633 = vlaneseq
        %v3634 = vshrl.u32 %v3633, 7
        %v3635 = vsub.s32 %v3632, %v3634
        %v3636 = vrot.slane %v3626, %v3635
        %v3638 = vunpack.c.l.s4 1966171168
        %v3639 = vunpack.c.0.s8 %v3638
        %v3640 = vlaneseq
        %v3641 = vshrl.u32 %v3640, 7
        %v3642 = vsub.s32 %v3639, %v3641
        %v3643 = vrot.slane %v3627, %v3642
        %v3645 = vunpack.c.l.s4 1966171168
        %v3646 = vunpack.c.0.s8 %v3645
        %v3647 = vlaneseq
        %v3648 = vshrl.u32 %v3647, 7
        %v3649 = vsub.s32 %v3646, %v3648
        %v3650 = vrot.slane %v3628, %v3649
        %v3652 = vunpack.c.l.s4 1966171168
        %v3653 = vunpack.c.0.s8 %v3652
        %v3654 = vlaneseq
        %v3655 = vshrl.u32 %v3654, 7
        %v3656 = vsub.s32 %v3653, %v3655
        %v3657 = vrot.slane %v3629, %v3656
        %v3658 = vcombine.low %v3636, %v3643
        %v3659 = vcombine.low %v3650, %v3657
        %v3661 = vunpack.c.l.s4 1966171168
        %v3662 = vunpack.c.0.s8 %v3661
        %v3663 = vlaneseq
        %v3664 = vshrl.u32 %v3663, 7
        %v3665 = vsub.s32 %v3662, %v3664
        %v3666 = vrot.slane %v3658, %v3665
        %v3668 = vunpack.c.l.s4 1966171168
        %v3669 = vunpack.c.0.s8 %v3668
        %v3670 = vlaneseq
        %v3671 = vshrl.u32 %v3670, 7
        %v3672 = vsub.s32 %v3669, %v3671
        %v3673 = vrot.slane %v3659, %v3672
        %v3674 = vcombine.low %v3666, %v3673
        %v3675 = vcombine.low %v3121, %v3135
        %v3676 = vcombine.low %v3159, %v3173
        %v3677 = vcombine.low %v3181, %v3183
        %v3678 = vcombine.low %v3166, %v3180
        %v3680 = vunpack.c.l.s4 1966171168
        %v3681 = vunpack.c.0.s8 %v3680
        %v3682 = vlaneseq
        %v3683 = vshrl.u32 %v3682, 7
        %v3684 = vsub.s32 %v3681, %v3683
        %v3685 = vrot.slane %v3675, %v3684
        %v3687 = vunpack.c.l.s4 1966171168
        %v3688 = vunpack.c.0.s8 %v3687
        %v3689 = vlaneseq
        %v3690 = vshrl.u32 %v3689, 7
        %v3691 = vsub.s32 %v3688, %v3690
        %v3692 = vrot.slane %v3676, %v3691
        %v3694 = vunpack.c.l.s4 1966171168
        %v3695 = vunpack.c.0.s8 %v3694
        %v3696 = vlaneseq
        %v3697 = vshrl.u32 %v3696, 7
        %v3698 = vsub.s32 %v3695, %v3697
        %v3699 = vrot.slane %v3677, %v3698
        %v3701 = vunpack.c.l.s4 1966171168
        %v3702 = vunpack.c.0.s8 %v3701
        %v3703 = vlaneseq
        %v3704 = vshrl.u32 %v3703, 7
        %v3705 = vsub.s32 %v3702, %v3704
        %v3706 = vrot.slane %v3678, %v3705
        %v3707 = vcombine.low %v3685, %v3692
        %v3708 = vcombine.low %v3699, %v3706
        %v3710 = vunpack.c.l.s4 1966171168
        %v3711 = vunpack.c.0.s8 %v3710
        %v3712 = vlaneseq
        %v3713 = vshrl.u32 %v3712, 7
        %v3714 = vsub.s32 %v3711, %v3713
        %v3715 = vrot.slane %v3707, %v3714
        %v3717 = vunpack.c.l.s4 1966171168
        %v3718 = vunpack.c.0.s8 %v3717
        %v3719 = vlaneseq
        %v3720 = vshrl.u32 %v3719, 7
        %v3721 = vsub.s32 %v3718, %v3720
        %v3722 = vrot.slane %v3708, %v3721
        %v3723 = vcombine.low %v3715, %v3722
        %v3724 = vcombine.low %v3182, %v3184
        %v3725 = vcombine.low %v3198, %v3222
        %v3726 = vcombine.low %v3236, %v3244
        %v3727 = vcombine.low %v3246, %v3229
        %v3729 = vunpack.c.l.s4 1966171168
        %v3730 = vunpack.c.0.s8 %v3729
        %v3731 = vlaneseq
        %v3732 = vshrl.u32 %v3731, 7
        %v3733 = vsub.s32 %v3730, %v3732
        %v3734 = vrot.slane %v3724, %v3733
        %v3736 = vunpack.c.l.s4 1966171168
        %v3737 = vunpack.c.0.s8 %v3736
        %v3738 = vlaneseq
        %v3739 = vshrl.u32 %v3738, 7
        %v3740 = vsub.s32 %v3737, %v3739
        %v3741 = vrot.slane %v3725, %v3740
        %v3743 = vunpack.c.l.s4 1966171168
        %v3744 = vunpack.c.0.s8 %v3743
        %v3745 = vlaneseq
        %v3746 = vshrl.u32 %v3745, 7
        %v3747 = vsub.s32 %v3744, %v3746
        %v3748 = vrot.slane %v3726, %v3747
        %v3750 = vunpack.c.l.s4 1966171168
        %v3751 = vunpack.c.0.s8 %v3750
        %v3752 = vlaneseq
        %v3753 = vshrl.u32 %v3752, 7
        %v3754 = vsub.s32 %v3751, %v3753
        %v3755 = vrot.slane %v3727, %v3754
        %v3756 = vcombine.low %v3734, %v3741
        %v3757 = vcombine.low %v3748, %v3755
        %v3759 = vunpack.c.l.s4 1966171168
        %v3760 = vunpack.c.0.s8 %v3759
        %v3761 = vlaneseq
        %v3762 = vshrl.u32 %v3761, 7
        %v3763 = vsub.s32 %v3760, %v3762
        %v3764 = vrot.slane %v3756, %v3763
        %v3766 = vunpack.c.l.s4 1966171168
        %v3767 = vunpack.c.0.s8 %v3766
        %v3768 = vlaneseq
        %v3769 = vshrl.u32 %v3768, 7
        %v3770 = vsub.s32 %v3767, %v3769
        %v3771 = vrot.slane %v3757, %v3770
        %v3772 = vcombine.low %v3764, %v3771
        %v3773 = vcombine.low %v3243, %v3245
        %v3774 = vcombine.low %v3247, %v3261
        %v3775 = vcombine.low %v3285, %v3299
        %v3776 = vcombine.low %v3307, %v3309
        %v3778 = vunpack.c.l.s4 1966171168
        %v3779 = vunpack.c.0.s8 %v3778
        %v3780 = vlaneseq
        %v3781 = vshrl.u32 %v3780, 7
        %v3782 = vsub.s32 %v3779, %v3781
        %v3783 = vrot.slane %v3773, %v3782
        %v3785 = vunpack.c.l.s4 1966171168
        %v3786 = vunpack.c.0.s8 %v3785
        %v3787 = vlaneseq
        %v3788 = vshrl.u32 %v3787, 7
        %v3789 = vsub.s32 %v3786, %v3788
        %v3790 = vrot.slane %v3774, %v3789
        %v3792 = vunpack.c.l.s4 1966171168
        %v3793 = vunpack.c.0.s8 %v3792
        %v3794 = vlaneseq
        %v3795 = vshrl.u32 %v3794, 7
        %v3796 = vsub.s32 %v3793, %v3795
        %v3797 = vrot.slane %v3775, %v3796
        %v3799 = vunpack.c.l.s4 1966171168
        %v3800 = vunpack.c.0.s8 %v3799
        %v3801 = vlaneseq
        %v3802 = vshrl.u32 %v3801, 7
        %v3803 = vsub.s32 %v3800, %v3802
        %v3804 = vrot.slane %v3776, %v3803
        %v3805 = vcombine.low %v3783, %v3790
        %v3806 = vcombine.low %v3797, %v3804
        %v3808 = vunpack.c.l.s4 1966171168
        %v3809 = vunpack.c.0.s8 %v3808
        %v3810 = vlaneseq
        %v3811 = vshrl.u32 %v3810, 7
        %v3812 = vsub.s32 %v3809, %v3811
        %v3813 = vrot.slane %v3805, %v3812
        %v3815 = vunpack.c.l.s4 1966171168
        %v3816 = vunpack.c.0.s8 %v3815
        %v3817 = vlaneseq
        %v3818 = vshrl.u32 %v3817, 7
        %v3819 = vsub.s32 %v3816, %v3818
        %v3820 = vrot.slane %v3806, %v3819
        %v3821 = vcombine.low %v3813, %v3820
        %v3822 = vcombine.low %v3292, %v3306
        %v3823 = vcombine.low %v3308, %v3310
        %v3824 = vcombine.low %v3324, %v3348
        %v3825 = vcombine.low %v3362, %v3370
        %v3827 = vunpack.c.l.s4 1966171168
        %v3828 = vunpack.c.0.s8 %v3827
        %v3829 = vlaneseq
        %v3830 = vshrl.u32 %v3829, 7
        %v3831 = vsub.s32 %v3828, %v3830
        %v3832 = vrot.slane %v3822, %v3831
        %v3834 = vunpack.c.l.s4 1966171168
        %v3835 = vunpack.c.0.s8 %v3834
        %v3836 = vlaneseq
        %v3837 = vshrl.u32 %v3836, 7
        %v3838 = vsub.s32 %v3835, %v3837
        %v3839 = vrot.slane %v3823, %v3838
        %v3841 = vunpack.c.l.s4 1966171168
        %v3842 = vunpack.c.0.s8 %v3841
        %v3843 = vlaneseq
        %v3844 = vshrl.u32 %v3843, 7
        %v3845 = vsub.s32 %v3842, %v3844
        %v3846 = vrot.slane %v3824, %v3845
        %v3848 = vunpack.c.l.s4 1966171168
        %v3849 = vunpack.c.0.s8 %v3848
        %v3850 = vlaneseq
        %v3851 = vshrl.u32 %v3850, 7
        %v3852 = vsub.s32 %v3849, %v3851
        %v3853 = vrot.slane %v3825, %v3852
        %v3854 = vcombine.low %v3832, %v3839
        %v3855 = vcombine.low %v3846, %v3853
        %v3857 = vunpack.c.l.s4 1966171168
        %v3858 = vunpack.c.0.s8 %v3857
        %v3859 = vlaneseq
        %v3860 = vshrl.u32 %v3859, 7
        %v3861 = vsub.s32 %v3858, %v3860
        %v3862 = vrot.slane %v3854, %v3861
        %v3864 = vunpack.c.l.s4 1966171168
        %v3865 = vunpack.c.0.s8 %v3864
        %v3866 = vlaneseq
        %v3867 = vshrl.u32 %v3866, 7
        %v3868 = vsub.s32 %v3865, %v3867
        %v3869 = vrot.slane %v3855, %v3868
        %v3870 = vcombine.low %v3862, %v3869
        %v3871 = vcombine.low %v3372, %v3355
        %v3872 = vcombine.low %v3369, %v3371
        %v3873 = vcombine.low %v3373, %v3387
        %v3874 = vcombine.low %v3411, %v3425
        %v3876 = vunpack.c.l.s4 1966171168
        %v3877 = vunpack.c.0.s8 %v3876
        %v3878 = vlaneseq
        %v3879 = vshrl.u32 %v3878, 7
        %v3880 = vsub.s32 %v3877, %v3879
        %v3881 = vrot.slane %v3871, %v3880
        %v3883 = vunpack.c.l.s4 1966171168
        %v3884 = vunpack.c.0.s8 %v3883
        %v3885 = vlaneseq
        %v3886 = vshrl.u32 %v3885, 7
        %v3887 = vsub.s32 %v3884, %v3886
        %v3888 = vrot.slane %v3872, %v3887
        %v3890 = vunpack.c.l.s4 1966171168
        %v3891 = vunpack.c.0.s8 %v3890
        %v3892 = vlaneseq
        %v3893 = vshrl.u32 %v3892, 7
        %v3894 = vsub.s32 %v3891, %v3893
        %v3895 = vrot.slane %v3873, %v3894
        %v3897 = vunpack.c.l.s4 1966171168
        %v3898 = vunpack.c.0.s8 %v3897
        %v3899 = vlaneseq
        %v3900 = vshrl.u32 %v3899, 7
        %v3901 = vsub.s32 %v3898, %v3900
        %v3902 = vrot.slane %v3874, %v3901
        %v3903 = vcombine.low %v3881, %v3888
        %v3904 = vcombine.low %v3895, %v3902
        %v3906 = vunpack.c.l.s4 1966171168
        %v3907 = vunpack.c.0.s8 %v3906
        %v3908 = vlaneseq
        %v3909 = vshrl.u32 %v3908, 7
        %v3910 = vsub.s32 %v3907, %v3909
        %v3911 = vrot.slane %v3903, %v3910
        %v3913 = vunpack.c.l.s4 1966171168
        %v3914 = vunpack.c.0.s8 %v3913
        %v3915 = vlaneseq
        %v3916 = vshrl.u32 %v3915, 7
        %v3917 = vsub.s32 %v3914, %v3916
        %v3918 = vrot.slane %v3904, %v3917
        %v3919 = vcombine.low %v3911, %v3918
        %v3920 = vcombine.low %v3433, %v3435
        %v3921 = vcombine.low %v3418, %v3432
        %v3922 = vcombine.low %v3434, %v3436
        %v3923 = vcombine.low %v3450, %v3474
        %v3925 = vunpack.c.l.s4 1966171168
        %v3926 = vunpack.c.0.s8 %v3925
        %v3927 = vlaneseq
        %v3928 = vshrl.u32 %v3927, 7
        %v3929 = vsub.s32 %v3926, %v3928
        %v3930 = vrot.slane %v3920, %v3929
        %v3932 = vunpack.c.l.s4 1966171168
        %v3933 = vunpack.c.0.s8 %v3932
        %v3934 = vlaneseq
        %v3935 = vshrl.u32 %v3934, 7
        %v3936 = vsub.s32 %v3933, %v3935
        %v3937 = vrot.slane %v3921, %v3936
        %v3939 = vunpack.c.l.s4 1966171168
        %v3940 = vunpack.c.0.s8 %v3939
        %v3941 = vlaneseq
        %v3942 = vshrl.u32 %v3941, 7
        %v3943 = vsub.s32 %v3940, %v3942
        %v3944 = vrot.slane %v3922, %v3943
        %v3946 = vunpack.c.l.s4 1966171168
        %v3947 = vunpack.c.0.s8 %v3946
        %v3948 = vlaneseq
        %v3949 = vshrl.u32 %v3948, 7
        %v3950 = vsub.s32 %v3947, %v3949
        %v3951 = vrot.slane %v3923, %v3950
        %v3952 = vcombine.low %v3930, %v3937
        %v3953 = vcombine.low %v3944, %v3951
        %v3955 = vunpack.c.l.s4 1966171168
        %v3956 = vunpack.c.0.s8 %v3955
        %v3957 = vlaneseq
        %v3958 = vshrl.u32 %v3957, 7
        %v3959 = vsub.s32 %v3956, %v3958
        %v3960 = vrot.slane %v3952, %v3959
        %v3962 = vunpack.c.l.s4 1966171168
        %v3963 = vunpack.c.0.s8 %v3962
        %v3964 = vlaneseq
        %v3965 = vshrl.u32 %v3964, 7
        %v3966 = vsub.s32 %v3963, %v3965
        %v3967 = vrot.slane %v3953, %v3966
        %v3968 = vcombine.low %v3960, %v3967
        %v3969 = vcombine.low %v3488, %v3496
        %v3970 = vcombine.low %v3498, %v3481
        %v3971 = vcombine.low %v3495, %v3497
        %v3972 = vcombine.low %v3499, %v3513
        %v3974 = vunpack.c.l.s4 1966171168
        %v3975 = vunpack.c.0.s8 %v3974
        %v3976 = vlaneseq
        %v3977 = vshrl.u32 %v3976, 7
        %v3978 = vsub.s32 %v3975, %v3977
        %v3979 = vrot.slane %v3969, %v3978
        %v3981 = vunpack.c.l.s4 1966171168
        %v3982 = vunpack.c.0.s8 %v3981
        %v3983 = vlaneseq
        %v3984 = vshrl.u32 %v3983, 7
        %v3985 = vsub.s32 %v3982, %v3984
        %v3986 = vrot.slane %v3970, %v3985
        %v3988 = vunpack.c.l.s4 1966171168
        %v3989 = vunpack.c.0.s8 %v3988
        %v3990 = vlaneseq
        %v3991 = vshrl.u32 %v3990, 7
        %v3992 = vsub.s32 %v3989, %v3991
        %v3993 = vrot.slane %v3971, %v3992
        %v3995 = vunpack.c.l.s4 1966171168
        %v3996 = vunpack.c.0.s8 %v3995
        %v3997 = vlaneseq
        %v3998 = vshrl.u32 %v3997, 7
        %v3999 = vsub.s32 %v3996, %v3998
        %v4000 = vrot.slane %v3972, %v3999
        %v4001 = vcombine.low %v3979, %v3986
        %v4002 = vcombine.low %v3993, %v4000
        %v4004 = vunpack.c.l.s4 1966171168
        %v4005 = vunpack.c.0.s8 %v4004
        %v4006 = vlaneseq
        %v4007 = vshrl.u32 %v4006, 7
        %v4008 = vsub.s32 %v4005, %v4007
        %v4009 = vrot.slane %v4001, %v4008
        %v4011 = vunpack.c.l.s4 1966171168
        %v4012 = vunpack.c.0.s8 %v4011
        %v4013 = vlaneseq
        %v4014 = vshrl.u32 %v4013, 7
        %v4015 = vsub.s32 %v4012, %v4014
        %v4016 = vrot.slane %v4002, %v4015
        %v4017 = vcombine.low %v4009, %v4016
        %v4018 = vcombine.low %v3537, %v3551
        %v4019 = vcombine.low %v3559, %v3561
        %v4020 = vcombine.low %v3544, %v3558
        %v4021 = vcombine.low %v3560, %v3562
        %v4023 = vunpack.c.l.s4 1966171168
        %v4024 = vunpack.c.0.s8 %v4023
        %v4025 = vlaneseq
        %v4026 = vshrl.u32 %v4025, 7
        %v4027 = vsub.s32 %v4024, %v4026
        %v4028 = vrot.slane %v4018, %v4027
        %v4030 = vunpack.c.l.s4 1966171168
        %v4031 = vunpack.c.0.s8 %v4030
        %v4032 = vlaneseq
        %v4033 = vshrl.u32 %v4032, 7
        %v4034 = vsub.s32 %v4031, %v4033
        %v4035 = vrot.slane %v4019, %v4034
        %v4037 = vunpack.c.l.s4 1966171168
        %v4038 = vunpack.c.0.s8 %v4037
        %v4039 = vlaneseq
        %v4040 = vshrl.u32 %v4039, 7
        %v4041 = vsub.s32 %v4038, %v4040
        %v4042 = vrot.slane %v4020, %v4041
        %v4044 = vunpack.c.l.s4 1966171168
        %v4045 = vunpack.c.0.s8 %v4044
        %v4046 = vlaneseq
        %v4047 = vshrl.u32 %v4046, 7
        %v4048 = vsub.s32 %v4045, %v4047
        %v4049 = vrot.slane %v4021, %v4048
        %v4050 = vcombine.low %v4028, %v4035
        %v4051 = vcombine.low %v4042, %v4049
        %v4053 = vunpack.c.l.s4 1966171168
        %v4054 = vunpack.c.0.s8 %v4053
        %v4055 = vlaneseq
        %v4056 = vshrl.u32 %v4055, 7
        %v4057 = vsub.s32 %v4054, %v4056
        %v4058 = vrot.slane %v4050, %v4057
        %v4060 = vunpack.c.l.s4 1966171168
        %v4061 = vunpack.c.0.s8 %v4060
        %v4062 = vlaneseq
        %v4063 = vshrl.u32 %v4062, 7
        %v4064 = vsub.s32 %v4061, %v4063
        %v4065 = vrot.slane %v4051, %v4064
        %v4066 = vcombine.low %v4058, %v4065
        %v4068 = vunpack.c.l.s4 1966171168
        %v4069 = vunpack.c.0.s8 %v4068
        %v4070 = vlaneseq
        %v4071 = vshrl.u32 %v4070, 7
        %v4072 = vsub.s32 %v4069, %v4071
        %v4073 = vrot.slane %v3576, %v4072
        %v4075 = vunpack.c.l.s4 1966171168
        %v4076 = vunpack.c.0.s8 %v4075
        %v4077 = vlaneseq
        %v4078 = vshrl.u32 %v4077, 7
        %v4079 = vsub.s32 %v4076, %v4078
        %v4080 = vrot.slane %v4073, %v4079
        %v4092 = vpack.c.bf16 %v3674, %v3625
        %v4093 = vpack.c.bf16 %v3772, %v3723
        %v4094 = vpack.c.bf16 %v3870, %v3821
        %v4095 = vpack.c.bf16 %v3968, %v3919
        %v4096 = vpack.c.bf16 %v4066, %v4017
        %v4097 = vpack.c.bf16 %v4080, %v4080
        %v4098 = vld [vmem:[%s4] sm:$0xf]
        %v4099 = vld [vmem:[%s4 + $0x4] sm:$0xf]
        %v4100 = vld [vmem:[%s4 + $0x8] sm:$0xf]
        %v4101 = vld [vmem:[%s4 + $0xc] sm:$0xf]
        %v4102 = vld [vmem:[%s5] sm:$0x1]
        %v4104 = vlaneseq
        %v4105 = vshrl.u32 %v4104, 7
        %v4106 = vsub.s32 0, %v4105
        %v4107 = vrot.slane %v4102, %v4106
        %v4113 = vunpack.c.l.b16 %v4098
        %v4114 = vunpack.c.l.b16 %v4099
        %v4115 = vunpack.c.l.b16 %v4100
        %v4116 = vunpack.c.l.b16 %v4101
        %v4117 = vpack.c.b16 %v4114, %v4113
        %v4118 = vpack.c.b16 %v4116, %v4115
        %v4122 = vsel %vm1731, %v4092, 0
        %v4125 = vsel %vm1731, %v4093, 0
        %v4128 = vsel %vm1731, %v4094, 0
        %v4131 = vsel %vm1731, %v4095, 0
        %v4134 = vsel %vm1731, %v4096, 0
        %v4137 = vsel %vm1731, %v4097, 0
        %4139 = vmatprep.subr.bf16.mxu0 0
        %4140 = vmatpush1.bf16.msra.mxu0 0
        %4141 = vmatprep.subr.bf16.mxu0 0
        %4142 = vmatpush1.bf16.msra.mxu0 0
        %4143 = vmatprep.subr.bf16.mxu0 0
        %4144 = vmatpush1.bf16.msra.mxu0 0
        %4145 = vmatprep.subr.bf16.mxu0 0
        %4146 = vmatpush1.bf16.msra.mxu0 0
        %4147 = vmatprep.subr.bf16.mxu0 0
        %4148 = vmatpush1.bf16.msra.mxu0 0
        %4149 = vmatprep.subr.bf16.mxu0 0
        %4150 = vmatpush1.bf16.msra.mxu0 0
        %4151 = vmatprep.subr.bf16.mxu0 0
        %4152 = vmatpush1.bf16.msra.mxu0 %v4118
        %4153 = vmatprep.subr.bf16.mxu0 0
        %4154 = vmatpush1.bf16.msra.mxu0 %v4117
        %4155 = vmatprep.subr.bf16.mxu0 0
        %4156 = vmatpush2.bf16.msra.mxu0 0
        %4157 = vmatprep.subr.bf16.mxu0 0
        %4158 = vmatpush2.bf16.msra.mxu0 0
        %4159 = vmatprep.subr.bf16.mxu0 0
        %4160 = vmatpush2.bf16.msra.mxu0 0
        %4161 = vmatprep.subr.bf16.mxu0 0
        %4162 = vmatpush2.bf16.msra.mxu0 0
        %4163 = vmatprep.subr.bf16.mxu0 0
        %4164 = vmatpush2.bf16.msra.mxu0 0
        %4165 = vmatprep.subr.bf16.mxu0 0
        %4166 = vmatpush2.bf16.msra.mxu0 0
        %4167 = vmatprep.subr.bf16.mxu0 0
        %4168 = vmatpush2.bf16.msra.mxu0 0
        %4169 = vmatprep.subr.bf16.mxu0 0
        %4170 = vmatpush2.bf16.msra.mxu0 0
        %4171 = vmatprep.mubr.bf16.mxu0 0
        %4172 = vmatmul.mubr.bf16.gmra.mxu0 %v4122
        %v4173 = vpop.f32.mrf.mxu0
        %v4174 = vadd.f32 %v4107, %v4173
        %v4175 = vpop.f32.mrf.mxu0
        %v4176 = vpop.f32.mrf.mxu0
        %v4177 = vadd.f32 %v4107, %v4176
        %v4178 = vpop.f32.mrf.mxu0
        %4179 = vmatprep.mubr.bf16.mxu0 0
        %4180 = vmatmul.mubr.bf16.gmra.mxu0 %v4125
        %v4181 = vpop.f32.mrf.mxu0
        %v4182 = vadd.f32 %v4107, %v4181
        %v4183 = vpop.f32.mrf.mxu0
        %v4184 = vpop.f32.mrf.mxu0
        %v4185 = vadd.f32 %v4107, %v4184
        %v4186 = vpop.f32.mrf.mxu0
        %4187 = vmatprep.mubr.bf16.mxu0 0
        %4188 = vmatmul.mubr.bf16.gmra.mxu0 %v4128
        %v4189 = vpop.f32.mrf.mxu0
        %v4190 = vadd.f32 %v4107, %v4189
        %v4191 = vpop.f32.mrf.mxu0
        %v4192 = vpop.f32.mrf.mxu0
        %v4193 = vadd.f32 %v4107, %v4192
        %v4194 = vpop.f32.mrf.mxu0
        %4195 = vmatprep.mubr.bf16.mxu0 0
        %4196 = vmatmul.mubr.bf16.gmra.mxu0 %v4131
        %v4197 = vpop.f32.mrf.mxu0
        %v4198 = vadd.f32 %v4107, %v4197
        %v4199 = vpop.f32.mrf.mxu0
        %v4200 = vpop.f32.mrf.mxu0
        %v4201 = vadd.f32 %v4107, %v4200
        %v4202 = vpop.f32.mrf.mxu0
        %4203 = vmatprep.mubr.bf16.mxu0 0
        %4204 = vmatmul.mubr.bf16.gmra.mxu0 %v4134
        %v4205 = vpop.f32.mrf.mxu0
        %v4206 = vadd.f32 %v4107, %v4205
        %v4207 = vpop.f32.mrf.mxu0
        %v4208 = vpop.f32.mrf.mxu0
        %v4209 = vadd.f32 %v4107, %v4208
        %v4210 = vpop.f32.mrf.mxu0
        %4211 = vmatprep.mubr.bf16.mxu0 0
        %4212 = vmatmul.mubr.bf16.gmra.mxu0 %v4137
        %v4213 = vpop.f32.mrf.mxu0
        %v4214 = vadd.f32 %v4107, %v4213
        %v4215 = vpop.f32.mrf.mxu0
        %v4216 = vpop.f32.mrf.mxu0
        %v4217 = vpop.f32.mrf.mxu0
        %4218 = vdwg.mxu0
        %v4219 = vmax.f32 %v4174, 0.0
        %v4220 = vmax.f32 %v4177, 0.0
        %v4221 = vmax.f32 %v4182, 0.0
        %v4222 = vmax.f32 %v4185, 0.0
        %v4223 = vmax.f32 %v4190, 0.0
        %v4224 = vmax.f32 %v4193, 0.0
        %v4225 = vmax.f32 %v4198, 0.0
        %v4226 = vmax.f32 %v4201, 0.0
        %v4227 = vmax.f32 %v4206, 0.0
        %v4228 = vmax.f32 %v4209, 0.0
        %v4229 = vmax.f32 %v4214, 0.0
        %v4241 = vcombine.high %v4219, %v4219
        %v4243 = vunpack.c.l.s4 1966171168
        %v4244 = vunpack.c.0.s8 %v4243
        %v4245 = vlaneseq
        %v4246 = vshrl.u32 %v4245, 7
        %v4247 = vsub.s32 %v4244, %v4246
        %v4248 = vrot.slane %v4219, %v4247
        %v4250 = vunpack.c.l.s4 1966171168
        %v4251 = vunpack.c.0.s8 %v4250
        %v4252 = vlaneseq
        %v4253 = vshrl.u32 %v4252, 7
        %v4254 = vsub.s32 %v4251, %v4253
        %v4255 = vrot.slane %v4241, %v4254
        %v4256 = vcombine.high %v4248, %v4248
        %v4257 = vcombine.high %v4255, %v4255
        %v4259 = vunpack.c.l.s4 1966171168
        %v4260 = vunpack.c.0.s8 %v4259
        %v4261 = vlaneseq
        %v4262 = vshrl.u32 %v4261, 7
        %v4263 = vsub.s32 %v4260, %v4262
        %v4264 = vrot.slane %v4248, %v4263
        %v4266 = vunpack.c.l.s4 1966171168
        %v4267 = vunpack.c.0.s8 %v4266
        %v4268 = vlaneseq
        %v4269 = vshrl.u32 %v4268, 7
        %v4270 = vsub.s32 %v4267, %v4269
        %v4271 = vrot.slane %v4255, %v4270
        %v4273 = vunpack.c.l.s4 1966171168
        %v4274 = vunpack.c.0.s8 %v4273
        %v4275 = vlaneseq
        %v4276 = vshrl.u32 %v4275, 7
        %v4277 = vsub.s32 %v4274, %v4276
        %v4278 = vrot.slane %v4256, %v4277
        %v4280 = vunpack.c.l.s4 1966171168
        %v4281 = vunpack.c.0.s8 %v4280
        %v4282 = vlaneseq
        %v4283 = vshrl.u32 %v4282, 7
        %v4284 = vsub.s32 %v4281, %v4283
        %v4285 = vrot.slane %v4257, %v4284
        %v4286 = vcombine.high %v4264, %v4264
        %v4287 = vcombine.high %v4271, %v4271
        %v4288 = vcombine.high %v4278, %v4278
        %v4289 = vcombine.high %v4285, %v4285
        %v4290 = vcombine.high %v4220, %v4220
        %v4292 = vunpack.c.l.s4 1966171168
        %v4293 = vunpack.c.0.s8 %v4292
        %v4294 = vlaneseq
        %v4295 = vshrl.u32 %v4294, 7
        %v4296 = vsub.s32 %v4293, %v4295
        %v4297 = vrot.slane %v4220, %v4296
        %v4299 = vunpack.c.l.s4 1966171168
        %v4300 = vunpack.c.0.s8 %v4299
        %v4301 = vlaneseq
        %v4302 = vshrl.u32 %v4301, 7
        %v4303 = vsub.s32 %v4300, %v4302
        %v4304 = vrot.slane %v4290, %v4303
        %v4305 = vcombine.high %v4297, %v4297
        %v4306 = vcombine.high %v4304, %v4304
        %v4308 = vunpack.c.l.s4 1966171168
        %v4309 = vunpack.c.0.s8 %v4308
        %v4310 = vlaneseq
        %v4311 = vshrl.u32 %v4310, 7
        %v4312 = vsub.s32 %v4309, %v4311
        %v4313 = vrot.slane %v4297, %v4312
        %v4315 = vunpack.c.l.s4 1966171168
        %v4316 = vunpack.c.0.s8 %v4315
        %v4317 = vlaneseq
        %v4318 = vshrl.u32 %v4317, 7
        %v4319 = vsub.s32 %v4316, %v4318
        %v4320 = vrot.slane %v4304, %v4319
        %v4322 = vunpack.c.l.s4 1966171168
        %v4323 = vunpack.c.0.s8 %v4322
        %v4324 = vlaneseq
        %v4325 = vshrl.u32 %v4324, 7
        %v4326 = vsub.s32 %v4323, %v4325
        %v4327 = vrot.slane %v4305, %v4326
        %v4329 = vunpack.c.l.s4 1966171168
        %v4330 = vunpack.c.0.s8 %v4329
        %v4331 = vlaneseq
        %v4332 = vshrl.u32 %v4331, 7
        %v4333 = vsub.s32 %v4330, %v4332
        %v4334 = vrot.slane %v4306, %v4333
        %v4335 = vcombine.high %v4313, %v4313
        %v4336 = vcombine.high %v4320, %v4320
        %v4337 = vcombine.high %v4327, %v4327
        %v4338 = vcombine.high %v4334, %v4334
        %v4339 = vcombine.high %v4221, %v4221
        %v4341 = vunpack.c.l.s4 1966171168
        %v4342 = vunpack.c.0.s8 %v4341
        %v4343 = vlaneseq
        %v4344 = vshrl.u32 %v4343, 7
        %v4345 = vsub.s32 %v4342, %v4344
        %v4346 = vrot.slane %v4221, %v4345
        %v4348 = vunpack.c.l.s4 1966171168
        %v4349 = vunpack.c.0.s8 %v4348
        %v4350 = vlaneseq
        %v4351 = vshrl.u32 %v4350, 7
        %v4352 = vsub.s32 %v4349, %v4351
        %v4353 = vrot.slane %v4339, %v4352
        %v4354 = vcombine.high %v4346, %v4346
        %v4355 = vcombine.high %v4353, %v4353
        %v4357 = vunpack.c.l.s4 1966171168
        %v4358 = vunpack.c.0.s8 %v4357
        %v4359 = vlaneseq
        %v4360 = vshrl.u32 %v4359, 7
        %v4361 = vsub.s32 %v4358, %v4360
        %v4362 = vrot.slane %v4346, %v4361
        %v4364 = vunpack.c.l.s4 1966171168
        %v4365 = vunpack.c.0.s8 %v4364
        %v4366 = vlaneseq
        %v4367 = vshrl.u32 %v4366, 7
        %v4368 = vsub.s32 %v4365, %v4367
        %v4369 = vrot.slane %v4353, %v4368
        %v4371 = vunpack.c.l.s4 1966171168
        %v4372 = vunpack.c.0.s8 %v4371
        %v4373 = vlaneseq
        %v4374 = vshrl.u32 %v4373, 7
        %v4375 = vsub.s32 %v4372, %v4374
        %v4376 = vrot.slane %v4354, %v4375
        %v4378 = vunpack.c.l.s4 1966171168
        %v4379 = vunpack.c.0.s8 %v4378
        %v4380 = vlaneseq
        %v4381 = vshrl.u32 %v4380, 7
        %v4382 = vsub.s32 %v4379, %v4381
        %v4383 = vrot.slane %v4355, %v4382
        %v4384 = vcombine.high %v4362, %v4362
        %v4385 = vcombine.high %v4369, %v4369
        %v4386 = vcombine.high %v4376, %v4376
        %v4387 = vcombine.high %v4383, %v4383
        %v4388 = vcombine.high %v4222, %v4222
        %v4390 = vunpack.c.l.s4 1966171168
        %v4391 = vunpack.c.0.s8 %v4390
        %v4392 = vlaneseq
        %v4393 = vshrl.u32 %v4392, 7
        %v4394 = vsub.s32 %v4391, %v4393
        %v4395 = vrot.slane %v4222, %v4394
        %v4397 = vunpack.c.l.s4 1966171168
        %v4398 = vunpack.c.0.s8 %v4397
        %v4399 = vlaneseq
        %v4400 = vshrl.u32 %v4399, 7
        %v4401 = vsub.s32 %v4398, %v4400
        %v4402 = vrot.slane %v4388, %v4401
        %v4403 = vcombine.high %v4395, %v4395
        %v4404 = vcombine.high %v4402, %v4402
        %v4406 = vunpack.c.l.s4 1966171168
        %v4407 = vunpack.c.0.s8 %v4406
        %v4408 = vlaneseq
        %v4409 = vshrl.u32 %v4408, 7
        %v4410 = vsub.s32 %v4407, %v4409
        %v4411 = vrot.slane %v4395, %v4410
        %v4413 = vunpack.c.l.s4 1966171168
        %v4414 = vunpack.c.0.s8 %v4413
        %v4415 = vlaneseq
        %v4416 = vshrl.u32 %v4415, 7
        %v4417 = vsub.s32 %v4414, %v4416
        %v4418 = vrot.slane %v4402, %v4417
        %v4420 = vunpack.c.l.s4 1966171168
        %v4421 = vunpack.c.0.s8 %v4420
        %v4422 = vlaneseq
        %v4423 = vshrl.u32 %v4422, 7
        %v4424 = vsub.s32 %v4421, %v4423
        %v4425 = vrot.slane %v4403, %v4424
        %v4427 = vunpack.c.l.s4 1966171168
        %v4428 = vunpack.c.0.s8 %v4427
        %v4429 = vlaneseq
        %v4430 = vshrl.u32 %v4429, 7
        %v4431 = vsub.s32 %v4428, %v4430
        %v4432 = vrot.slane %v4404, %v4431
        %v4433 = vcombine.high %v4411, %v4411
        %v4434 = vcombine.high %v4418, %v4418
        %v4435 = vcombine.high %v4425, %v4425
        %v4436 = vcombine.high %v4432, %v4432
        %v4437 = vcombine.high %v4223, %v4223
        %v4439 = vunpack.c.l.s4 1966171168
        %v4440 = vunpack.c.0.s8 %v4439
        %v4441 = vlaneseq
        %v4442 = vshrl.u32 %v4441, 7
        %v4443 = vsub.s32 %v4440, %v4442
        %v4444 = vrot.slane %v4223, %v4443
        %v4446 = vunpack.c.l.s4 1966171168
        %v4447 = vunpack.c.0.s8 %v4446
        %v4448 = vlaneseq
        %v4449 = vshrl.u32 %v4448, 7
        %v4450 = vsub.s32 %v4447, %v4449
        %v4451 = vrot.slane %v4437, %v4450
        %v4452 = vcombine.high %v4444, %v4444
        %v4453 = vcombine.high %v4451, %v4451
        %v4455 = vunpack.c.l.s4 1966171168
        %v4456 = vunpack.c.0.s8 %v4455
        %v4457 = vlaneseq
        %v4458 = vshrl.u32 %v4457, 7
        %v4459 = vsub.s32 %v4456, %v4458
        %v4460 = vrot.slane %v4444, %v4459
        %v4462 = vunpack.c.l.s4 1966171168
        %v4463 = vunpack.c.0.s8 %v4462
        %v4464 = vlaneseq
        %v4465 = vshrl.u32 %v4464, 7
        %v4466 = vsub.s32 %v4463, %v4465
        %v4467 = vrot.slane %v4451, %v4466
        %v4469 = vunpack.c.l.s4 1966171168
        %v4470 = vunpack.c.0.s8 %v4469
        %v4471 = vlaneseq
        %v4472 = vshrl.u32 %v4471, 7
        %v4473 = vsub.s32 %v4470, %v4472
        %v4474 = vrot.slane %v4452, %v4473
        %v4476 = vunpack.c.l.s4 1966171168
        %v4477 = vunpack.c.0.s8 %v4476
        %v4478 = vlaneseq
        %v4479 = vshrl.u32 %v4478, 7
        %v4480 = vsub.s32 %v4477, %v4479
        %v4481 = vrot.slane %v4453, %v4480
        %v4482 = vcombine.high %v4460, %v4460
        %v4483 = vcombine.high %v4467, %v4467
        %v4484 = vcombine.high %v4474, %v4474
        %v4485 = vcombine.high %v4481, %v4481
        %v4486 = vcombine.high %v4224, %v4224
        %v4488 = vunpack.c.l.s4 1966171168
        %v4489 = vunpack.c.0.s8 %v4488
        %v4490 = vlaneseq
        %v4491 = vshrl.u32 %v4490, 7
        %v4492 = vsub.s32 %v4489, %v4491
        %v4493 = vrot.slane %v4224, %v4492
        %v4495 = vunpack.c.l.s4 1966171168
        %v4496 = vunpack.c.0.s8 %v4495
        %v4497 = vlaneseq
        %v4498 = vshrl.u32 %v4497, 7
        %v4499 = vsub.s32 %v4496, %v4498
        %v4500 = vrot.slane %v4486, %v4499
        %v4501 = vcombine.high %v4493, %v4493
        %v4502 = vcombine.high %v4500, %v4500
        %v4504 = vunpack.c.l.s4 1966171168
        %v4505 = vunpack.c.0.s8 %v4504
        %v4506 = vlaneseq
        %v4507 = vshrl.u32 %v4506, 7
        %v4508 = vsub.s32 %v4505, %v4507
        %v4509 = vrot.slane %v4493, %v4508
        %v4511 = vunpack.c.l.s4 1966171168
        %v4512 = vunpack.c.0.s8 %v4511
        %v4513 = vlaneseq
        %v4514 = vshrl.u32 %v4513, 7
        %v4515 = vsub.s32 %v4512, %v4514
        %v4516 = vrot.slane %v4500, %v4515
        %v4518 = vunpack.c.l.s4 1966171168
        %v4519 = vunpack.c.0.s8 %v4518
        %v4520 = vlaneseq
        %v4521 = vshrl.u32 %v4520, 7
        %v4522 = vsub.s32 %v4519, %v4521
        %v4523 = vrot.slane %v4501, %v4522
        %v4525 = vunpack.c.l.s4 1966171168
        %v4526 = vunpack.c.0.s8 %v4525
        %v4527 = vlaneseq
        %v4528 = vshrl.u32 %v4527, 7
        %v4529 = vsub.s32 %v4526, %v4528
        %v4530 = vrot.slane %v4502, %v4529
        %v4531 = vcombine.high %v4509, %v4509
        %v4532 = vcombine.high %v4516, %v4516
        %v4533 = vcombine.high %v4523, %v4523
        %v4534 = vcombine.high %v4530, %v4530
        %v4535 = vcombine.high %v4225, %v4225
        %v4537 = vunpack.c.l.s4 1966171168
        %v4538 = vunpack.c.0.s8 %v4537
        %v4539 = vlaneseq
        %v4540 = vshrl.u32 %v4539, 7
        %v4541 = vsub.s32 %v4538, %v4540
        %v4542 = vrot.slane %v4225, %v4541
        %v4544 = vunpack.c.l.s4 1966171168
        %v4545 = vunpack.c.0.s8 %v4544
        %v4546 = vlaneseq
        %v4547 = vshrl.u32 %v4546, 7
        %v4548 = vsub.s32 %v4545, %v4547
        %v4549 = vrot.slane %v4535, %v4548
        %v4550 = vcombine.high %v4542, %v4542
        %v4551 = vcombine.high %v4549, %v4549
        %v4553 = vunpack.c.l.s4 1966171168
        %v4554 = vunpack.c.0.s8 %v4553
        %v4555 = vlaneseq
        %v4556 = vshrl.u32 %v4555, 7
        %v4557 = vsub.s32 %v4554, %v4556
        %v4558 = vrot.slane %v4542, %v4557
        %v4560 = vunpack.c.l.s4 1966171168
        %v4561 = vunpack.c.0.s8 %v4560
        %v4562 = vlaneseq
        %v4563 = vshrl.u32 %v4562, 7
        %v4564 = vsub.s32 %v4561, %v4563
        %v4565 = vrot.slane %v4549, %v4564
        %v4567 = vunpack.c.l.s4 1966171168
        %v4568 = vunpack.c.0.s8 %v4567
        %v4569 = vlaneseq
        %v4570 = vshrl.u32 %v4569, 7
        %v4571 = vsub.s32 %v4568, %v4570
        %v4572 = vrot.slane %v4550, %v4571
        %v4574 = vunpack.c.l.s4 1966171168
        %v4575 = vunpack.c.0.s8 %v4574
        %v4576 = vlaneseq
        %v4577 = vshrl.u32 %v4576, 7
        %v4578 = vsub.s32 %v4575, %v4577
        %v4579 = vrot.slane %v4551, %v4578
        %v4580 = vcombine.high %v4558, %v4558
        %v4581 = vcombine.high %v4565, %v4565
        %v4582 = vcombine.high %v4572, %v4572
        %v4583 = vcombine.high %v4579, %v4579
        %v4584 = vcombine.high %v4226, %v4226
        %v4586 = vunpack.c.l.s4 1966171168
        %v4587 = vunpack.c.0.s8 %v4586
        %v4588 = vlaneseq
        %v4589 = vshrl.u32 %v4588, 7
        %v4590 = vsub.s32 %v4587, %v4589
        %v4591 = vrot.slane %v4226, %v4590
        %v4593 = vunpack.c.l.s4 1966171168
        %v4594 = vunpack.c.0.s8 %v4593
        %v4595 = vlaneseq
        %v4596 = vshrl.u32 %v4595, 7
        %v4597 = vsub.s32 %v4594, %v4596
        %v4598 = vrot.slane %v4584, %v4597
        %v4599 = vcombine.high %v4591, %v4591
        %v4600 = vcombine.high %v4598, %v4598
        %v4602 = vunpack.c.l.s4 1966171168
        %v4603 = vunpack.c.0.s8 %v4602
        %v4604 = vlaneseq
        %v4605 = vshrl.u32 %v4604, 7
        %v4606 = vsub.s32 %v4603, %v4605
        %v4607 = vrot.slane %v4591, %v4606
        %v4609 = vunpack.c.l.s4 1966171168
        %v4610 = vunpack.c.0.s8 %v4609
        %v4611 = vlaneseq
        %v4612 = vshrl.u32 %v4611, 7
        %v4613 = vsub.s32 %v4610, %v4612
        %v4614 = vrot.slane %v4598, %v4613
        %v4616 = vunpack.c.l.s4 1966171168
        %v4617 = vunpack.c.0.s8 %v4616
        %v4618 = vlaneseq
        %v4619 = vshrl.u32 %v4618, 7
        %v4620 = vsub.s32 %v4617, %v4619
        %v4621 = vrot.slane %v4599, %v4620
        %v4623 = vunpack.c.l.s4 1966171168
        %v4624 = vunpack.c.0.s8 %v4623
        %v4625 = vlaneseq
        %v4626 = vshrl.u32 %v4625, 7
        %v4627 = vsub.s32 %v4624, %v4626
        %v4628 = vrot.slane %v4600, %v4627
        %v4629 = vcombine.high %v4607, %v4607
        %v4630 = vcombine.high %v4614, %v4614
        %v4631 = vcombine.high %v4621, %v4621
        %v4632 = vcombine.high %v4628, %v4628
        %v4633 = vcombine.high %v4227, %v4227
        %v4635 = vunpack.c.l.s4 1966171168
        %v4636 = vunpack.c.0.s8 %v4635
        %v4637 = vlaneseq
        %v4638 = vshrl.u32 %v4637, 7
        %v4639 = vsub.s32 %v4636, %v4638
        %v4640 = vrot.slane %v4227, %v4639
        %v4642 = vunpack.c.l.s4 1966171168
        %v4643 = vunpack.c.0.s8 %v4642
        %v4644 = vlaneseq
        %v4645 = vshrl.u32 %v4644, 7
        %v4646 = vsub.s32 %v4643, %v4645
        %v4647 = vrot.slane %v4633, %v4646
        %v4648 = vcombine.high %v4640, %v4640
        %v4649 = vcombine.high %v4647, %v4647
        %v4651 = vunpack.c.l.s4 1966171168
        %v4652 = vunpack.c.0.s8 %v4651
        %v4653 = vlaneseq
        %v4654 = vshrl.u32 %v4653, 7
        %v4655 = vsub.s32 %v4652, %v4654
        %v4656 = vrot.slane %v4640, %v4655
        %v4658 = vunpack.c.l.s4 1966171168
        %v4659 = vunpack.c.0.s8 %v4658
        %v4660 = vlaneseq
        %v4661 = vshrl.u32 %v4660, 7
        %v4662 = vsub.s32 %v4659, %v4661
        %v4663 = vrot.slane %v4647, %v4662
        %v4665 = vunpack.c.l.s4 1966171168
        %v4666 = vunpack.c.0.s8 %v4665
        %v4667 = vlaneseq
        %v4668 = vshrl.u32 %v4667, 7
        %v4669 = vsub.s32 %v4666, %v4668
        %v4670 = vrot.slane %v4648, %v4669
        %v4672 = vunpack.c.l.s4 1966171168
        %v4673 = vunpack.c.0.s8 %v4672
        %v4674 = vlaneseq
        %v4675 = vshrl.u32 %v4674, 7
        %v4676 = vsub.s32 %v4673, %v4675
        %v4677 = vrot.slane %v4649, %v4676
        %v4678 = vcombine.high %v4656, %v4656
        %v4679 = vcombine.high %v4663, %v4663
        %v4680 = vcombine.high %v4670, %v4670
        %v4681 = vcombine.high %v4677, %v4677
        %v4682 = vcombine.high %v4228, %v4228
        %v4684 = vunpack.c.l.s4 1966171168
        %v4685 = vunpack.c.0.s8 %v4684
        %v4686 = vlaneseq
        %v4687 = vshrl.u32 %v4686, 7
        %v4688 = vsub.s32 %v4685, %v4687
        %v4689 = vrot.slane %v4228, %v4688
        %v4691 = vunpack.c.l.s4 1966171168
        %v4692 = vunpack.c.0.s8 %v4691
        %v4693 = vlaneseq
        %v4694 = vshrl.u32 %v4693, 7
        %v4695 = vsub.s32 %v4692, %v4694
        %v4696 = vrot.slane %v4682, %v4695
        %v4697 = vcombine.high %v4689, %v4689
        %v4698 = vcombine.high %v4696, %v4696
        %v4700 = vunpack.c.l.s4 1966171168
        %v4701 = vunpack.c.0.s8 %v4700
        %v4702 = vlaneseq
        %v4703 = vshrl.u32 %v4702, 7
        %v4704 = vsub.s32 %v4701, %v4703
        %v4705 = vrot.slane %v4689, %v4704
        %v4707 = vunpack.c.l.s4 1966171168
        %v4708 = vunpack.c.0.s8 %v4707
        %v4709 = vlaneseq
        %v4710 = vshrl.u32 %v4709, 7
        %v4711 = vsub.s32 %v4708, %v4710
        %v4712 = vrot.slane %v4696, %v4711
        %v4714 = vunpack.c.l.s4 1966171168
        %v4715 = vunpack.c.0.s8 %v4714
        %v4716 = vlaneseq
        %v4717 = vshrl.u32 %v4716, 7
        %v4718 = vsub.s32 %v4715, %v4717
        %v4719 = vrot.slane %v4697, %v4718
        %v4721 = vunpack.c.l.s4 1966171168
        %v4722 = vunpack.c.0.s8 %v4721
        %v4723 = vlaneseq
        %v4724 = vshrl.u32 %v4723, 7
        %v4725 = vsub.s32 %v4722, %v4724
        %v4726 = vrot.slane %v4698, %v4725
        %v4727 = vcombine.high %v4705, %v4705
        %v4728 = vcombine.high %v4712, %v4712
        %v4729 = vcombine.high %v4719, %v4719
        %v4730 = vcombine.high %v4726, %v4726
        %v4732 = vunpack.c.l.s4 1966171168
        %v4733 = vunpack.c.0.s8 %v4732
        %v4734 = vlaneseq
        %v4735 = vshrl.u32 %v4734, 7
        %v4736 = vsub.s32 %v4733, %v4735
        %v4737 = vrot.slane %v4229, %v4736
        %v4739 = vunpack.c.l.s4 1966171168
        %v4740 = vunpack.c.0.s8 %v4739
        %v4741 = vlaneseq
        %v4742 = vshrl.u32 %v4741, 7
        %v4743 = vsub.s32 %v4740, %v4742
        %v4744 = vrot.slane %v4737, %v4743
        %vm4745 = vcmp.ne.s32.totalorder %v528, 8
        %vm4746 = vcmp.ne.s32.totalorder %v529, 8
        %vm4747 = vmand 0, %vm4745
        %vm4748 = vmand 0, %vm4746
        %vm4749 = vmand 1, %vm4745
        %vm4750 = vmand 1, %vm4746
        %v4751 = vsel %vm4747, 1, 0
        %v4752 = vsel %vm4748, 1, 0
        %v4753 = vsel %vm4749, 1, 0
        %v4754 = vsel %vm4750, 1, 0
        %vm4755 = vcmp.eq.s32.totalorder %v4751, 1
        %vm4756 = vcmp.eq.s32.totalorder %v4752, 1
        %vm4757 = vcmp.eq.s32.totalorder %v4753, 1
        %vm4758 = vcmp.eq.s32.totalorder %v4754, 1
        %v4759 = vcombine.low %v4264, %v4278
        %v4760 = vcombine.low %v4286, %v4288
        %v4761 = vcombine.low %v4271, %v4285
        %v4762 = vcombine.low %v4287, %v4289
        %v4764 = vunpack.c.l.s4 1966171168
        %v4765 = vunpack.c.0.s8 %v4764
        %v4766 = vlaneseq
        %v4767 = vshrl.u32 %v4766, 7
        %v4768 = vsub.s32 %v4765, %v4767
        %v4769 = vrot.slane %v4759, %v4768
        %v4771 = vunpack.c.l.s4 1966171168
        %v4772 = vunpack.c.0.s8 %v4771
        %v4773 = vlaneseq
        %v4774 = vshrl.u32 %v4773, 7
        %v4775 = vsub.s32 %v4772, %v4774
        %v4776 = vrot.slane %v4760, %v4775
        %v4778 = vunpack.c.l.s4 1966171168
        %v4779 = vunpack.c.0.s8 %v4778
        %v4780 = vlaneseq
        %v4781 = vshrl.u32 %v4780, 7
        %v4782 = vsub.s32 %v4779, %v4781
        %v4783 = vrot.slane %v4761, %v4782
        %v4785 = vunpack.c.l.s4 1966171168
        %v4786 = vunpack.c.0.s8 %v4785
        %v4787 = vlaneseq
        %v4788 = vshrl.u32 %v4787, 7
        %v4789 = vsub.s32 %v4786, %v4788
        %v4790 = vrot.slane %v4762, %v4789
        %v4791 = vcombine.low %v4769, %v4776
        %v4792 = vcombine.low %v4783, %v4790
        %v4794 = vunpack.c.l.s4 1966171168
        %v4795 = vunpack.c.0.s8 %v4794
        %v4796 = vlaneseq
        %v4797 = vshrl.u32 %v4796, 7
        %v4798 = vsub.s32 %v4795, %v4797
        %v4799 = vrot.slane %v4791, %v4798
        %v4801 = vunpack.c.l.s4 1966171168
        %v4802 = vunpack.c.0.s8 %v4801
        %v4803 = vlaneseq
        %v4804 = vshrl.u32 %v4803, 7
        %v4805 = vsub.s32 %v4802, %v4804
        %v4806 = vrot.slane %v4792, %v4805
        %v4807 = vcombine.low %v4799, %v4806
        %v4809 = vunpack.c.l.s4 1966171168
        %v4810 = vunpack.c.0.s8 %v4809
        %v4811 = vlaneseq
        %v4812 = vshrl.u32 %v4811, 7
        %v4813 = vsub.s32 %v4810, %v4812
        %v4814 = vrot.slane %v4313, %v4813
        %v4816 = vunpack.c.l.s4 1966171168
        %v4817 = vunpack.c.0.s8 %v4816
        %v4818 = vlaneseq
        %v4819 = vshrl.u32 %v4818, 7
        %v4820 = vsub.s32 %v4817, %v4819
        %v4821 = vrot.slane %v4814, %v4820
        %v4822 = vcombine.low %v4327, %v4335
        %v4823 = vcombine.low %v4337, %v4320
        %v4824 = vcombine.low %v4334, %v4336
        %v4825 = vcombine.low %v4338, %v4362
        %v4827 = vunpack.c.l.s4 1966171168
        %v4828 = vunpack.c.0.s8 %v4827
        %v4829 = vlaneseq
        %v4830 = vshrl.u32 %v4829, 7
        %v4831 = vsub.s32 %v4828, %v4830
        %v4832 = vrot.slane %v4822, %v4831
        %v4834 = vunpack.c.l.s4 1966171168
        %v4835 = vunpack.c.0.s8 %v4834
        %v4836 = vlaneseq
        %v4837 = vshrl.u32 %v4836, 7
        %v4838 = vsub.s32 %v4835, %v4837
        %v4839 = vrot.slane %v4823, %v4838
        %v4841 = vunpack.c.l.s4 1966171168
        %v4842 = vunpack.c.0.s8 %v4841
        %v4843 = vlaneseq
        %v4844 = vshrl.u32 %v4843, 7
        %v4845 = vsub.s32 %v4842, %v4844
        %v4846 = vrot.slane %v4824, %v4845
        %v4848 = vunpack.c.l.s4 1966171168
        %v4849 = vunpack.c.0.s8 %v4848
        %v4850 = vlaneseq
        %v4851 = vshrl.u32 %v4850, 7
        %v4852 = vsub.s32 %v4849, %v4851
        %v4853 = vrot.slane %v4825, %v4852
        %v4854 = vcombine.low %v4832, %v4839
        %v4855 = vcombine.low %v4846, %v4853
        %v4857 = vunpack.c.l.s4 1966171168
        %v4858 = vunpack.c.0.s8 %v4857
        %v4859 = vlaneseq
        %v4860 = vshrl.u32 %v4859, 7
        %v4861 = vsub.s32 %v4858, %v4860
        %v4862 = vrot.slane %v4854, %v4861
        %v4864 = vunpack.c.l.s4 1966171168
        %v4865 = vunpack.c.0.s8 %v4864
        %v4866 = vlaneseq
        %v4867 = vshrl.u32 %v4866, 7
        %v4868 = vsub.s32 %v4865, %v4867
        %v4869 = vrot.slane %v4855, %v4868
        %v4870 = vcombine.low %v4862, %v4869
        %v4872 = vunpack.c.l.s4 1966171168
        %v4873 = vunpack.c.0.s8 %v4872
        %v4874 = vlaneseq
        %v4875 = vshrl.u32 %v4874, 7
        %v4876 = vsub.s32 %v4873, %v4875
        %v4877 = vrot.slane %v4376, %v4876
        %v4879 = vunpack.c.l.s4 1966171168
        %v4880 = vunpack.c.0.s8 %v4879
        %v4881 = vlaneseq
        %v4882 = vshrl.u32 %v4881, 7
        %v4883 = vsub.s32 %v4880, %v4882
        %v4884 = vrot.slane %v4877, %v4883
        %v4885 = vcombine.low %v4384, %v4386
        %v4886 = vcombine.low %v4369, %v4383
        %v4887 = vcombine.low %v4385, %v4387
        %v4888 = vcombine.low %v4411, %v4425
        %v4890 = vunpack.c.l.s4 1966171168
        %v4891 = vunpack.c.0.s8 %v4890
        %v4892 = vlaneseq
        %v4893 = vshrl.u32 %v4892, 7
        %v4894 = vsub.s32 %v4891, %v4893
        %v4895 = vrot.slane %v4885, %v4894
        %v4897 = vunpack.c.l.s4 1966171168
        %v4898 = vunpack.c.0.s8 %v4897
        %v4899 = vlaneseq
        %v4900 = vshrl.u32 %v4899, 7
        %v4901 = vsub.s32 %v4898, %v4900
        %v4902 = vrot.slane %v4886, %v4901
        %v4904 = vunpack.c.l.s4 1966171168
        %v4905 = vunpack.c.0.s8 %v4904
        %v4906 = vlaneseq
        %v4907 = vshrl.u32 %v4906, 7
        %v4908 = vsub.s32 %v4905, %v4907
        %v4909 = vrot.slane %v4887, %v4908
        %v4911 = vunpack.c.l.s4 1966171168
        %v4912 = vunpack.c.0.s8 %v4911
        %v4913 = vlaneseq
        %v4914 = vshrl.u32 %v4913, 7
        %v4915 = vsub.s32 %v4912, %v4914
        %v4916 = vrot.slane %v4888, %v4915
        %v4917 = vcombine.low %v4895, %v4902
        %v4918 = vcombine.low %v4909, %v4916
        %v4920 = vunpack.c.l.s4 1966171168
        %v4921 = vunpack.c.0.s8 %v4920
        %v4922 = vlaneseq
        %v4923 = vshrl.u32 %v4922, 7
        %v4924 = vsub.s32 %v4921, %v4923
        %v4925 = vrot.slane %v4917, %v4924
        %v4927 = vunpack.c.l.s4 1966171168
        %v4928 = vunpack.c.0.s8 %v4927
        %v4929 = vlaneseq
        %v4930 = vshrl.u32 %v4929, 7
        %v4931 = vsub.s32 %v4928, %v4930
        %v4932 = vrot.slane %v4918, %v4931
        %v4933 = vcombine.low %v4925, %v4932
        %v4935 = vunpack.c.l.s4 1966171168
        %v4936 = vunpack.c.0.s8 %v4935
        %v4937 = vlaneseq
        %v4938 = vshrl.u32 %v4937, 7
        %v4939 = vsub.s32 %v4936, %v4938
        %v4940 = vrot.slane %v4433, %v4939
        %v4942 = vunpack.c.l.s4 1966171168
        %v4943 = vunpack.c.0.s8 %v4942
        %v4944 = vlaneseq
        %v4945 = vshrl.u32 %v4944, 7
        %v4946 = vsub.s32 %v4943, %v4945
        %v4947 = vrot.slane %v4940, %v4946
        %v4948 = vcombine.low %v4435, %v4418
        %v4949 = vcombine.low %v4432, %v4434
        %v4950 = vcombine.low %v4436, %v4460
        %v4951 = vcombine.low %v4474, %v4482
        %v4953 = vunpack.c.l.s4 1966171168
        %v4954 = vunpack.c.0.s8 %v4953
        %v4955 = vlaneseq
        %v4956 = vshrl.u32 %v4955, 7
        %v4957 = vsub.s32 %v4954, %v4956
        %v4958 = vrot.slane %v4948, %v4957
        %v4960 = vunpack.c.l.s4 1966171168
        %v4961 = vunpack.c.0.s8 %v4960
        %v4962 = vlaneseq
        %v4963 = vshrl.u32 %v4962, 7
        %v4964 = vsub.s32 %v4961, %v4963
        %v4965 = vrot.slane %v4949, %v4964
        %v4967 = vunpack.c.l.s4 1966171168
        %v4968 = vunpack.c.0.s8 %v4967
        %v4969 = vlaneseq
        %v4970 = vshrl.u32 %v4969, 7
        %v4971 = vsub.s32 %v4968, %v4970
        %v4972 = vrot.slane %v4950, %v4971
        %v4974 = vunpack.c.l.s4 1966171168
        %v4975 = vunpack.c.0.s8 %v4974
        %v4976 = vlaneseq
        %v4977 = vshrl.u32 %v4976, 7
        %v4978 = vsub.s32 %v4975, %v4977
        %v4979 = vrot.slane %v4951, %v4978
        %v4980 = vcombine.low %v4958, %v4965
        %v4981 = vcombine.low %v4972, %v4979
        %v4983 = vunpack.c.l.s4 1966171168
        %v4984 = vunpack.c.0.s8 %v4983
        %v4985 = vlaneseq
        %v4986 = vshrl.u32 %v4985, 7
        %v4987 = vsub.s32 %v4984, %v4986
        %v4988 = vrot.slane %v4980, %v4987
        %v4990 = vunpack.c.l.s4 1966171168
        %v4991 = vunpack.c.0.s8 %v4990
        %v4992 = vlaneseq
        %v4993 = vshrl.u32 %v4992, 7
        %v4994 = vsub.s32 %v4991, %v4993
        %v4995 = vrot.slane %v4981, %v4994
        %v4996 = vcombine.low %v4988, %v4995
        %v4998 = vunpack.c.l.s4 1966171168
        %v4999 = vunpack.c.0.s8 %v4998
        %v5000 = vlaneseq
        %v5001 = vshrl.u32 %v5000, 7
        %v5002 = vsub.s32 %v4999, %v5001
        %v5003 = vrot.slane %v4484, %v5002
        %v5005 = vunpack.c.l.s4 1966171168
        %v5006 = vunpack.c.0.s8 %v5005
        %v5007 = vlaneseq
        %v5008 = vshrl.u32 %v5007, 7
        %v5009 = vsub.s32 %v5006, %v5008
        %v5010 = vrot.slane %v5003, %v5009
        %v5011 = vcombine.low %v4467, %v4481
        %v5012 = vcombine.low %v4483, %v4485
        %v5013 = vcombine.low %v4509, %v4523
        %v5014 = vcombine.low %v4531, %v4533
        %v5016 = vunpack.c.l.s4 1966171168
        %v5017 = vunpack.c.0.s8 %v5016
        %v5018 = vlaneseq
        %v5019 = vshrl.u32 %v5018, 7
        %v5020 = vsub.s32 %v5017, %v5019
        %v5021 = vrot.slane %v5011, %v5020
        %v5023 = vunpack.c.l.s4 1966171168
        %v5024 = vunpack.c.0.s8 %v5023
        %v5025 = vlaneseq
        %v5026 = vshrl.u32 %v5025, 7
        %v5027 = vsub.s32 %v5024, %v5026
        %v5028 = vrot.slane %v5012, %v5027
        %v5030 = vunpack.c.l.s4 1966171168
        %v5031 = vunpack.c.0.s8 %v5030
        %v5032 = vlaneseq
        %v5033 = vshrl.u32 %v5032, 7
        %v5034 = vsub.s32 %v5031, %v5033
        %v5035 = vrot.slane %v5013, %v5034
        %v5037 = vunpack.c.l.s4 1966171168
        %v5038 = vunpack.c.0.s8 %v5037
        %v5039 = vlaneseq
        %v5040 = vshrl.u32 %v5039, 7
        %v5041 = vsub.s32 %v5038, %v5040
        %v5042 = vrot.slane %v5014, %v5041
        %v5043 = vcombine.low %v5021, %v5028
        %v5044 = vcombine.low %v5035, %v5042
        %v5046 = vunpack.c.l.s4 1966171168
        %v5047 = vunpack.c.0.s8 %v5046
        %v5048 = vlaneseq
        %v5049 = vshrl.u32 %v5048, 7
        %v5050 = vsub.s32 %v5047, %v5049
        %v5051 = vrot.slane %v5043, %v5050
        %v5053 = vunpack.c.l.s4 1966171168
        %v5054 = vunpack.c.0.s8 %v5053
        %v5055 = vlaneseq
        %v5056 = vshrl.u32 %v5055, 7
        %v5057 = vsub.s32 %v5054, %v5056
        %v5058 = vrot.slane %v5044, %v5057
        %v5059 = vcombine.low %v5051, %v5058
        %v5061 = vunpack.c.l.s4 1966171168
        %v5062 = vunpack.c.0.s8 %v5061
        %v5063 = vlaneseq
        %v5064 = vshrl.u32 %v5063, 7
        %v5065 = vsub.s32 %v5062, %v5064
        %v5066 = vrot.slane %v4516, %v5065
        %v5068 = vunpack.c.l.s4 1966171168
        %v5069 = vunpack.c.0.s8 %v5068
        %v5070 = vlaneseq
        %v5071 = vshrl.u32 %v5070, 7
        %v5072 = vsub.s32 %v5069, %v5071
        %v5073 = vrot.slane %v5066, %v5072
        %v5074 = vcombine.low %v4530, %v4532
        %v5075 = vcombine.low %v4534, %v4558
        %v5076 = vcombine.low %v4572, %v4580
        %v5077 = vcombine.low %v4582, %v4565
        %v5079 = vunpack.c.l.s4 1966171168
        %v5080 = vunpack.c.0.s8 %v5079
        %v5081 = vlaneseq
        %v5082 = vshrl.u32 %v5081, 7
        %v5083 = vsub.s32 %v5080, %v5082
        %v5084 = vrot.slane %v5074, %v5083
        %v5086 = vunpack.c.l.s4 1966171168
        %v5087 = vunpack.c.0.s8 %v5086
        %v5088 = vlaneseq
        %v5089 = vshrl.u32 %v5088, 7
        %v5090 = vsub.s32 %v5087, %v5089
        %v5091 = vrot.slane %v5075, %v5090
        %v5093 = vunpack.c.l.s4 1966171168
        %v5094 = vunpack.c.0.s8 %v5093
        %v5095 = vlaneseq
        %v5096 = vshrl.u32 %v5095, 7
        %v5097 = vsub.s32 %v5094, %v5096
        %v5098 = vrot.slane %v5076, %v5097
        %v5100 = vunpack.c.l.s4 1966171168
        %v5101 = vunpack.c.0.s8 %v5100
        %v5102 = vlaneseq
        %v5103 = vshrl.u32 %v5102, 7
        %v5104 = vsub.s32 %v5101, %v5103
        %v5105 = vrot.slane %v5077, %v5104
        %v5106 = vcombine.low %v5084, %v5091
        %v5107 = vcombine.low %v5098, %v5105
        %v5109 = vunpack.c.l.s4 1966171168
        %v5110 = vunpack.c.0.s8 %v5109
        %v5111 = vlaneseq
        %v5112 = vshrl.u32 %v5111, 7
        %v5113 = vsub.s32 %v5110, %v5112
        %v5114 = vrot.slane %v5106, %v5113
        %v5116 = vunpack.c.l.s4 1966171168
        %v5117 = vunpack.c.0.s8 %v5116
        %v5118 = vlaneseq
        %v5119 = vshrl.u32 %v5118, 7
        %v5120 = vsub.s32 %v5117, %v5119
        %v5121 = vrot.slane %v5107, %v5120
        %v5122 = vcombine.low %v5114, %v5121
        %v5124 = vunpack.c.l.s4 1966171168
        %v5125 = vunpack.c.0.s8 %v5124
        %v5126 = vlaneseq
        %v5127 = vshrl.u32 %v5126, 7
        %v5128 = vsub.s32 %v5125, %v5127
        %v5129 = vrot.slane %v4579, %v5128
        %v5131 = vunpack.c.l.s4 1966171168
        %v5132 = vunpack.c.0.s8 %v5131
        %v5133 = vlaneseq
        %v5134 = vshrl.u32 %v5133, 7
        %v5135 = vsub.s32 %v5132, %v5134
        %v5136 = vrot.slane %v5129, %v5135
        %v5137 = vcombine.low %v4581, %v4583
        %v5138 = vcombine.low %v4607, %v4621
        %v5139 = vcombine.low %v4629, %v4631
        %v5140 = vcombine.low %v4614, %v4628
        %v5142 = vunpack.c.l.s4 1966171168
        %v5143 = vunpack.c.0.s8 %v5142
        %v5144 = vlaneseq
        %v5145 = vshrl.u32 %v5144, 7
        %v5146 = vsub.s32 %v5143, %v5145
        %v5147 = vrot.slane %v5137, %v5146
        %v5149 = vunpack.c.l.s4 1966171168
        %v5150 = vunpack.c.0.s8 %v5149
        %v5151 = vlaneseq
        %v5152 = vshrl.u32 %v5151, 7
        %v5153 = vsub.s32 %v5150, %v5152
        %v5154 = vrot.slane %v5138, %v5153
        %v5156 = vunpack.c.l.s4 1966171168
        %v5157 = vunpack.c.0.s8 %v5156
        %v5158 = vlaneseq
        %v5159 = vshrl.u32 %v5158, 7
        %v5160 = vsub.s32 %v5157, %v5159
        %v5161 = vrot.slane %v5139, %v5160
        %v5163 = vunpack.c.l.s4 1966171168
        %v5164 = vunpack.c.0.s8 %v5163
        %v5165 = vlaneseq
        %v5166 = vshrl.u32 %v5165, 7
        %v5167 = vsub.s32 %v5164, %v5166
        %v5168 = vrot.slane %v5140, %v5167
        %v5169 = vcombine.low %v5147, %v5154
        %v5170 = vcombine.low %v5161, %v5168
        %v5172 = vunpack.c.l.s4 1966171168
        %v5173 = vunpack.c.0.s8 %v5172
        %v5174 = vlaneseq
        %v5175 = vshrl.u32 %v5174, 7
        %v5176 = vsub.s32 %v5173, %v5175
        %v5177 = vrot.slane %v5169, %v5176
        %v5179 = vunpack.c.l.s4 1966171168
        %v5180 = vunpack.c.0.s8 %v5179
        %v5181 = vlaneseq
        %v5182 = vshrl.u32 %v5181, 7
        %v5183 = vsub.s32 %v5180, %v5182
        %v5184 = vrot.slane %v5170, %v5183
        %v5185 = vcombine.low %v5177, %v5184
        %v5187 = vunpack.c.l.s4 1966171168
        %v5188 = vunpack.c.0.s8 %v5187
        %v5189 = vlaneseq
        %v5190 = vshrl.u32 %v5189, 7
        %v5191 = vsub.s32 %v5188, %v5190
        %v5192 = vrot.slane %v4630, %v5191
        %v5194 = vunpack.c.l.s4 1966171168
        %v5195 = vunpack.c.0.s8 %v5194
        %v5196 = vlaneseq
        %v5197 = vshrl.u32 %v5196, 7
        %v5198 = vsub.s32 %v5195, %v5197
        %v5199 = vrot.slane %v5192, %v5198
        %v5200 = vcombine.low %v4632, %v4656
        %v5201 = vcombine.low %v4670, %v4678
        %v5202 = vcombine.low %v4680, %v4663
        %v5203 = vcombine.low %v4677, %v4679
        %v5205 = vunpack.c.l.s4 1966171168
        %v5206 = vunpack.c.0.s8 %v5205
        %v5207 = vlaneseq
        %v5208 = vshrl.u32 %v5207, 7
        %v5209 = vsub.s32 %v5206, %v5208
        %v5210 = vrot.slane %v5200, %v5209
        %v5212 = vunpack.c.l.s4 1966171168
        %v5213 = vunpack.c.0.s8 %v5212
        %v5214 = vlaneseq
        %v5215 = vshrl.u32 %v5214, 7
        %v5216 = vsub.s32 %v5213, %v5215
        %v5217 = vrot.slane %v5201, %v5216
        %v5219 = vunpack.c.l.s4 1966171168
        %v5220 = vunpack.c.0.s8 %v5219
        %v5221 = vlaneseq
        %v5222 = vshrl.u32 %v5221, 7
        %v5223 = vsub.s32 %v5220, %v5222
        %v5224 = vrot.slane %v5202, %v5223
        %v5226 = vunpack.c.l.s4 1966171168
        %v5227 = vunpack.c.0.s8 %v5226
        %v5228 = vlaneseq
        %v5229 = vshrl.u32 %v5228, 7
        %v5230 = vsub.s32 %v5227, %v5229
        %v5231 = vrot.slane %v5203, %v5230
        %v5232 = vcombine.low %v5210, %v5217
        %v5233 = vcombine.low %v5224, %v5231
        %v5235 = vunpack.c.l.s4 1966171168
        %v5236 = vunpack.c.0.s8 %v5235
        %v5237 = vlaneseq
        %v5238 = vshrl.u32 %v5237, 7
        %v5239 = vsub.s32 %v5236, %v5238
        %v5240 = vrot.slane %v5232, %v5239
        %v5242 = vunpack.c.l.s4 1966171168
        %v5243 = vunpack.c.0.s8 %v5242
        %v5244 = vlaneseq
        %v5245 = vshrl.u32 %v5244, 7
        %v5246 = vsub.s32 %v5243, %v5245
        %v5247 = vrot.slane %v5233, %v5246
        %v5248 = vcombine.low %v5240, %v5247
        %v5250 = vunpack.c.l.s4 1966171168
        %v5251 = vunpack.c.0.s8 %v5250
        %v5252 = vlaneseq
        %v5253 = vshrl.u32 %v5252, 7
        %v5254 = vsub.s32 %v5251, %v5253
        %v5255 = vrot.slane %v4681, %v5254
        %v5257 = vunpack.c.l.s4 1966171168
        %v5258 = vunpack.c.0.s8 %v5257
        %v5259 = vlaneseq
        %v5260 = vshrl.u32 %v5259, 7
        %v5261 = vsub.s32 %v5258, %v5260
        %v5262 = vrot.slane %v5255, %v5261
        %v5263 = vcombine.low %v4705, %v4719
        %v5264 = vcombine.low %v4727, %v4729
        %v5265 = vcombine.low %v4712, %v4726
        %v5266 = vcombine.low %v4728, %v4730
        %v5268 = vunpack.c.l.s4 1966171168
        %v5269 = vunpack.c.0.s8 %v5268
        %v5270 = vlaneseq
        %v5271 = vshrl.u32 %v5270, 7
        %v5272 = vsub.s32 %v5269, %v5271
        %v5273 = vrot.slane %v5263, %v5272
        %v5275 = vunpack.c.l.s4 1966171168
        %v5276 = vunpack.c.0.s8 %v5275
        %v5277 = vlaneseq
        %v5278 = vshrl.u32 %v5277, 7
        %v5279 = vsub.s32 %v5276, %v5278
        %v5280 = vrot.slane %v5264, %v5279
        %v5282 = vunpack.c.l.s4 1966171168
        %v5283 = vunpack.c.0.s8 %v5282
        %v5284 = vlaneseq
        %v5285 = vshrl.u32 %v5284, 7
        %v5286 = vsub.s32 %v5283, %v5285
        %v5287 = vrot.slane %v5265, %v5286
        %v5289 = vunpack.c.l.s4 1966171168
        %v5290 = vunpack.c.0.s8 %v5289
        %v5291 = vlaneseq
        %v5292 = vshrl.u32 %v5291, 7
        %v5293 = vsub.s32 %v5290, %v5292
        %v5294 = vrot.slane %v5266, %v5293
        %v5295 = vcombine.low %v5273, %v5280
        %v5296 = vcombine.low %v5287, %v5294
        %v5298 = vunpack.c.l.s4 1966171168
        %v5299 = vunpack.c.0.s8 %v5298
        %v5300 = vlaneseq
        %v5301 = vshrl.u32 %v5300, 7
        %v5302 = vsub.s32 %v5299, %v5301
        %v5303 = vrot.slane %v5295, %v5302
        %v5305 = vunpack.c.l.s4 1966171168
        %v5306 = vunpack.c.0.s8 %v5305
        %v5307 = vlaneseq
        %v5308 = vshrl.u32 %v5307, 7
        %v5309 = vsub.s32 %v5306, %v5308
        %v5310 = vrot.slane %v5296, %v5309
        %v5311 = vcombine.low %v5303, %v5310
        %v5313 = vunpack.c.l.s4 1966171168
        %v5314 = vunpack.c.0.s8 %v5313
        %v5315 = vlaneseq
        %v5316 = vshrl.u32 %v5315, 7
        %v5317 = vsub.s32 %v5314, %v5316
        %v5318 = vrot.slane %v4744, %v5317
        %v5320 = vunpack.c.l.s4 1966171168
        %v5321 = vunpack.c.0.s8 %v5320
        %v5322 = vlaneseq
        %v5323 = vshrl.u32 %v5322, 7
        %v5324 = vsub.s32 %v5321, %v5323
        %v5325 = vrot.slane %v5318, %v5324
        %v5344 = vsel %vm4755, %v4807, 0.0
        %v5345 = vsel %vm4756, %v4821, 0.0
        %v5346 = vsel %vm4757, %v4870, 0.0
        %v5347 = vsel %vm4758, %v4884, 0.0
        %v5348 = vsel %vm4757, %v4933, 0.0
        %v5349 = vsel %vm4758, %v4947, 0.0
        %v5350 = vsel %vm4757, %v4996, 0.0
        %v5351 = vsel %vm4758, %v5010, 0.0
        %v5352 = vsel %vm4757, %v5059, 0.0
        %v5353 = vsel %vm4758, %v5073, 0.0
        %v5354 = vsel %vm4757, %v5122, 0.0
        %v5355 = vsel %vm4758, %v5136, 0.0
        %v5356 = vsel %vm4757, %v5185, 0.0
        %v5357 = vsel %vm4758, %v5199, 0.0
        %v5358 = vsel %vm4757, %v5248, 0.0
        %v5359 = vsel %vm4758, %v5262, 0.0
        %v5360 = vsel %vm4757, %v5311, 0.0
        %v5361 = vsel %vm4758, %v5325, 0.0
        %5362 = vst.msk [vmem:[#allocation3] sm:$0xff] %vm1731, %v5344
        %5363 = vst.msk [vmem:[#allocation3 + $0x8] sm:$0x1] %vm2974, %v5345
        %5364 = vst.msk [vmem:[#allocation3 + $0x10] sm:$0xff] %vm1731, %v5346
        %5365 = vst.msk [vmem:[#allocation3 + $0x18] sm:$0x1] %vm2974, %v5347
        %5366 = vst.msk [vmem:[#allocation3 + $0x20] sm:$0xff] %vm1731, %v5348
        %5367 = vst.msk [vmem:[#allocation3 + $0x28] sm:$0x1] %vm2974, %v5349
        %5368 = vst.msk [vmem:[#allocation3 + $0x30] sm:$0xff] %vm1731, %v5350
        %5369 = vst.msk [vmem:[#allocation3 + $0x38] sm:$0x1] %vm2974, %v5351
        %5370 = vst.msk [vmem:[#allocation3 + $0x40] sm:$0xff] %vm1731, %v5352
        %5371 = vst.msk [vmem:[#allocation3 + $0x48] sm:$0x1] %vm2974, %v5353
        %5372 = vst.msk [vmem:[#allocation3 + $0x50] sm:$0xff] %vm1731, %v5354
        %5373 = vst.msk [vmem:[#allocation3 + $0x58] sm:$0x1] %vm2974, %v5355
        %5374 = vst.msk [vmem:[#allocation3 + $0x60] sm:$0xff] %vm1731, %v5356
        %5375 = vst.msk [vmem:[#allocation3 + $0x68] sm:$0x1] %vm2974, %v5357
        %5376 = vst.msk [vmem:[#allocation3 + $0x70] sm:$0xff] %vm1731, %v5358
        %5377 = vst.msk [vmem:[#allocation3 + $0x78] sm:$0x1] %vm2974, %v5359
        %5378 = vst.msk [vmem:[#allocation3 + $0x80] sm:$0xff] %vm1731, %v5360
        %5379 = vst.msk [vmem:[#allocation3 + $0x88] sm:$0x1] %vm2974, %v5361
        %v5398 = vcombine.high %v566, %v566
        %v5400 = vunpack.c.l.s4 1966171168
        %v5401 = vunpack.c.0.s8 %v5400
        %v5402 = vlaneseq
        %v5403 = vshrl.u32 %v5402, 7
        %v5404 = vsub.s32 %v5401, %v5403
        %v5405 = vrot.slane %v566, %v5404
        %v5407 = vunpack.c.l.s4 1966171168
        %v5408 = vunpack.c.0.s8 %v5407
        %v5409 = vlaneseq
        %v5410 = vshrl.u32 %v5409, 7
        %v5411 = vsub.s32 %v5408, %v5410
        %v5412 = vrot.slane %v5398, %v5411
        %v5413 = vcombine.high %v5405, %v5405
        %v5414 = vcombine.high %v5412, %v5412
        %v5416 = vunpack.c.l.s4 1966171168
        %v5417 = vunpack.c.0.s8 %v5416
        %v5418 = vlaneseq
        %v5419 = vshrl.u32 %v5418, 7
        %v5420 = vsub.s32 %v5417, %v5419
        %v5421 = vrot.slane %v5405, %v5420
        %v5423 = vunpack.c.l.s4 1966171168
        %v5424 = vunpack.c.0.s8 %v5423
        %v5425 = vlaneseq
        %v5426 = vshrl.u32 %v5425, 7
        %v5427 = vsub.s32 %v5424, %v5426
        %v5428 = vrot.slane %v5412, %v5427
        %v5430 = vunpack.c.l.s4 1966171168
        %v5431 = vunpack.c.0.s8 %v5430
        %v5432 = vlaneseq
        %v5433 = vshrl.u32 %v5432, 7
        %v5434 = vsub.s32 %v5431, %v5433
        %v5435 = vrot.slane %v5413, %v5434
        %v5437 = vunpack.c.l.s4 1966171168
        %v5438 = vunpack.c.0.s8 %v5437
        %v5439 = vlaneseq
        %v5440 = vshrl.u32 %v5439, 7
        %v5441 = vsub.s32 %v5438, %v5440
        %v5442 = vrot.slane %v5414, %v5441
        %v5443 = vcombine.high %v5421, %v5421
        %v5444 = vcombine.high %v5428, %v5428
        %v5445 = vcombine.high %v5435, %v5435
        %v5446 = vcombine.high %v5442, %v5442
        %v5448 = vunpack.c.l.s4 1966171168
        %v5449 = vunpack.c.0.s8 %v5448
        %v5450 = vlaneseq
        %v5451 = vshrl.u32 %v5450, 7
        %v5452 = vsub.s32 %v5449, %v5451
        %v5453 = vrot.slane %v567, %v5452
        %v5455 = vunpack.c.l.s4 1966171168
        %v5456 = vunpack.c.0.s8 %v5455
        %v5457 = vlaneseq
        %v5458 = vshrl.u32 %v5457, 7
        %v5459 = vsub.s32 %v5456, %v5458
        %v5460 = vrot.slane %v5453, %v5459
        %v5461 = vcombine.high %v568, %v568
        %v5463 = vunpack.c.l.s4 1966171168
        %v5464 = vunpack.c.0.s8 %v5463
        %v5465 = vlaneseq
        %v5466 = vshrl.u32 %v5465, 7
        %v5467 = vsub.s32 %v5464, %v5466
        %v5468 = vrot.slane %v568, %v5467
        %v5470 = vunpack.c.l.s4 1966171168
        %v5471 = vunpack.c.0.s8 %v5470
        %v5472 = vlaneseq
        %v5473 = vshrl.u32 %v5472, 7
        %v5474 = vsub.s32 %v5471, %v5473
        %v5475 = vrot.slane %v5461, %v5474
        %v5476 = vcombine.high %v5468, %v5468
        %v5477 = vcombine.high %v5475, %v5475
        %v5479 = vunpack.c.l.s4 1966171168
        %v5480 = vunpack.c.0.s8 %v5479
        %v5481 = vlaneseq
        %v5482 = vshrl.u32 %v5481, 7
        %v5483 = vsub.s32 %v5480, %v5482
        %v5484 = vrot.slane %v5468, %v5483
        %v5486 = vunpack.c.l.s4 1966171168
        %v5487 = vunpack.c.0.s8 %v5486
        %v5488 = vlaneseq
        %v5489 = vshrl.u32 %v5488, 7
        %v5490 = vsub.s32 %v5487, %v5489
        %v5491 = vrot.slane %v5475, %v5490
        %v5493 = vunpack.c.l.s4 1966171168
        %v5494 = vunpack.c.0.s8 %v5493
        %v5495 = vlaneseq
        %v5496 = vshrl.u32 %v5495, 7
        %v5497 = vsub.s32 %v5494, %v5496
        %v5498 = vrot.slane %v5476, %v5497
        %v5500 = vunpack.c.l.s4 1966171168
        %v5501 = vunpack.c.0.s8 %v5500
        %v5502 = vlaneseq
        %v5503 = vshrl.u32 %v5502, 7
        %v5504 = vsub.s32 %v5501, %v5503
        %v5505 = vrot.slane %v5477, %v5504
        %v5506 = vcombine.high %v5484, %v5484
        %v5507 = vcombine.high %v5491, %v5491
        %v5508 = vcombine.high %v5498, %v5498
        %v5509 = vcombine.high %v5505, %v5505
        %v5511 = vunpack.c.l.s4 1966171168
        %v5512 = vunpack.c.0.s8 %v5511
        %v5513 = vlaneseq
        %v5514 = vshrl.u32 %v5513, 7
        %v5515 = vsub.s32 %v5512, %v5514
        %v5516 = vrot.slane %v569, %v5515
        %v5518 = vunpack.c.l.s4 1966171168
        %v5519 = vunpack.c.0.s8 %v5518
        %v5520 = vlaneseq
        %v5521 = vshrl.u32 %v5520, 7
        %v5522 = vsub.s32 %v5519, %v5521
        %v5523 = vrot.slane %v5516, %v5522
        %v5524 = vcombine.high %v570, %v570
        %v5526 = vunpack.c.l.s4 1966171168
        %v5527 = vunpack.c.0.s8 %v5526
        %v5528 = vlaneseq
        %v5529 = vshrl.u32 %v5528, 7
        %v5530 = vsub.s32 %v5527, %v5529
        %v5531 = vrot.slane %v570, %v5530
        %v5533 = vunpack.c.l.s4 1966171168
        %v5534 = vunpack.c.0.s8 %v5533
        %v5535 = vlaneseq
        %v5536 = vshrl.u32 %v5535, 7
        %v5537 = vsub.s32 %v5534, %v5536
        %v5538 = vrot.slane %v5524, %v5537
        %v5539 = vcombine.high %v5531, %v5531
        %v5540 = vcombine.high %v5538, %v5538
        %v5542 = vunpack.c.l.s4 1966171168
        %v5543 = vunpack.c.0.s8 %v5542
        %v5544 = vlaneseq
        %v5545 = vshrl.u32 %v5544, 7
        %v5546 = vsub.s32 %v5543, %v5545
        %v5547 = vrot.slane %v5531, %v5546
        %v5549 = vunpack.c.l.s4 1966171168
        %v5550 = vunpack.c.0.s8 %v5549
        %v5551 = vlaneseq
        %v5552 = vshrl.u32 %v5551, 7
        %v5553 = vsub.s32 %v5550, %v5552
        %v5554 = vrot.slane %v5538, %v5553
        %v5556 = vunpack.c.l.s4 1966171168
        %v5557 = vunpack.c.0.s8 %v5556
        %v5558 = vlaneseq
        %v5559 = vshrl.u32 %v5558, 7
        %v5560 = vsub.s32 %v5557, %v5559
        %v5561 = vrot.slane %v5539, %v5560
        %v5563 = vunpack.c.l.s4 1966171168
        %v5564 = vunpack.c.0.s8 %v5563
        %v5565 = vlaneseq
        %v5566 = vshrl.u32 %v5565, 7
        %v5567 = vsub.s32 %v5564, %v5566
        %v5568 = vrot.slane %v5540, %v5567
        %v5569 = vcombine.high %v5547, %v5547
        %v5570 = vcombine.high %v5554, %v5554
        %v5571 = vcombine.high %v5561, %v5561
        %v5572 = vcombine.high %v5568, %v5568
        %v5574 = vunpack.c.l.s4 1966171168
        %v5575 = vunpack.c.0.s8 %v5574
        %v5576 = vlaneseq
        %v5577 = vshrl.u32 %v5576, 7
        %v5578 = vsub.s32 %v5575, %v5577
        %v5579 = vrot.slane %v571, %v5578
        %v5581 = vunpack.c.l.s4 1966171168
        %v5582 = vunpack.c.0.s8 %v5581
        %v5583 = vlaneseq
        %v5584 = vshrl.u32 %v5583, 7
        %v5585 = vsub.s32 %v5582, %v5584
        %v5586 = vrot.slane %v5579, %v5585
        %v5587 = vcombine.high %v572, %v572
        %v5589 = vunpack.c.l.s4 1966171168
        %v5590 = vunpack.c.0.s8 %v5589
        %v5591 = vlaneseq
        %v5592 = vshrl.u32 %v5591, 7
        %v5593 = vsub.s32 %v5590, %v5592
        %v5594 = vrot.slane %v572, %v5593
        %v5596 = vunpack.c.l.s4 1966171168
        %v5597 = vunpack.c.0.s8 %v5596
        %v5598 = vlaneseq
        %v5599 = vshrl.u32 %v5598, 7
        %v5600 = vsub.s32 %v5597, %v5599
        %v5601 = vrot.slane %v5587, %v5600
        %v5602 = vcombine.high %v5594, %v5594
        %v5603 = vcombine.high %v5601, %v5601
        %v5605 = vunpack.c.l.s4 1966171168
        %v5606 = vunpack.c.0.s8 %v5605
        %v5607 = vlaneseq
        %v5608 = vshrl.u32 %v5607, 7
        %v5609 = vsub.s32 %v5606, %v5608
        %v5610 = vrot.slane %v5594, %v5609
        %v5612 = vunpack.c.l.s4 1966171168
        %v5613 = vunpack.c.0.s8 %v5612
        %v5614 = vlaneseq
        %v5615 = vshrl.u32 %v5614, 7
        %v5616 = vsub.s32 %v5613, %v5615
        %v5617 = vrot.slane %v5601, %v5616
        %v5619 = vunpack.c.l.s4 1966171168
        %v5620 = vunpack.c.0.s8 %v5619
        %v5621 = vlaneseq
        %v5622 = vshrl.u32 %v5621, 7
        %v5623 = vsub.s32 %v5620, %v5622
        %v5624 = vrot.slane %v5602, %v5623
        %v5626 = vunpack.c.l.s4 1966171168
        %v5627 = vunpack.c.0.s8 %v5626
        %v5628 = vlaneseq
        %v5629 = vshrl.u32 %v5628, 7
        %v5630 = vsub.s32 %v5627, %v5629
        %v5631 = vrot.slane %v5603, %v5630
        %v5632 = vcombine.high %v5610, %v5610
        %v5633 = vcombine.high %v5617, %v5617
        %v5634 = vcombine.high %v5624, %v5624
        %v5635 = vcombine.high %v5631, %v5631
        %v5637 = vunpack.c.l.s4 1966171168
        %v5638 = vunpack.c.0.s8 %v5637
        %v5639 = vlaneseq
        %v5640 = vshrl.u32 %v5639, 7
        %v5641 = vsub.s32 %v5638, %v5640
        %v5642 = vrot.slane %v573, %v5641
        %v5644 = vunpack.c.l.s4 1966171168
        %v5645 = vunpack.c.0.s8 %v5644
        %v5646 = vlaneseq
        %v5647 = vshrl.u32 %v5646, 7
        %v5648 = vsub.s32 %v5645, %v5647
        %v5649 = vrot.slane %v5642, %v5648
        %v5650 = vcombine.high %v574, %v574
        %v5652 = vunpack.c.l.s4 1966171168
        %v5653 = vunpack.c.0.s8 %v5652
        %v5654 = vlaneseq
        %v5655 = vshrl.u32 %v5654, 7
        %v5656 = vsub.s32 %v5653, %v5655
        %v5657 = vrot.slane %v574, %v5656
        %v5659 = vunpack.c.l.s4 1966171168
        %v5660 = vunpack.c.0.s8 %v5659
        %v5661 = vlaneseq
        %v5662 = vshrl.u32 %v5661, 7
        %v5663 = vsub.s32 %v5660, %v5662
        %v5664 = vrot.slane %v5650, %v5663
        %v5665 = vcombine.high %v5657, %v5657
        %v5666 = vcombine.high %v5664, %v5664
        %v5668 = vunpack.c.l.s4 1966171168
        %v5669 = vunpack.c.0.s8 %v5668
        %v5670 = vlaneseq
        %v5671 = vshrl.u32 %v5670, 7
        %v5672 = vsub.s32 %v5669, %v5671
        %v5673 = vrot.slane %v5657, %v5672
        %v5675 = vunpack.c.l.s4 1966171168
        %v5676 = vunpack.c.0.s8 %v5675
        %v5677 = vlaneseq
        %v5678 = vshrl.u32 %v5677, 7
        %v5679 = vsub.s32 %v5676, %v5678
        %v5680 = vrot.slane %v5664, %v5679
        %v5682 = vunpack.c.l.s4 1966171168
        %v5683 = vunpack.c.0.s8 %v5682
        %v5684 = vlaneseq
        %v5685 = vshrl.u32 %v5684, 7
        %v5686 = vsub.s32 %v5683, %v5685
        %v5687 = vrot.slane %v5665, %v5686
        %v5689 = vunpack.c.l.s4 1966171168
        %v5690 = vunpack.c.0.s8 %v5689
        %v5691 = vlaneseq
        %v5692 = vshrl.u32 %v5691, 7
        %v5693 = vsub.s32 %v5690, %v5692
        %v5694 = vrot.slane %v5666, %v5693
        %v5695 = vcombine.high %v5673, %v5673
        %v5696 = vcombine.high %v5680, %v5680
        %v5697 = vcombine.high %v5687, %v5687
        %v5698 = vcombine.high %v5694, %v5694
        %v5700 = vunpack.c.l.s4 1966171168
        %v5701 = vunpack.c.0.s8 %v5700
        %v5702 = vlaneseq
        %v5703 = vshrl.u32 %v5702, 7
        %v5704 = vsub.s32 %v5701, %v5703
        %v5705 = vrot.slane %v575, %v5704
        %v5707 = vunpack.c.l.s4 1966171168
        %v5708 = vunpack.c.0.s8 %v5707
        %v5709 = vlaneseq
        %v5710 = vshrl.u32 %v5709, 7
        %v5711 = vsub.s32 %v5708, %v5710
        %v5712 = vrot.slane %v5705, %v5711
        %v5713 = vcombine.high %v576, %v576
        %v5715 = vunpack.c.l.s4 1966171168
        %v5716 = vunpack.c.0.s8 %v5715
        %v5717 = vlaneseq
        %v5718 = vshrl.u32 %v5717, 7
        %v5719 = vsub.s32 %v5716, %v5718
        %v5720 = vrot.slane %v576, %v5719
        %v5722 = vunpack.c.l.s4 1966171168
        %v5723 = vunpack.c.0.s8 %v5722
        %v5724 = vlaneseq
        %v5725 = vshrl.u32 %v5724, 7
        %v5726 = vsub.s32 %v5723, %v5725
        %v5727 = vrot.slane %v5713, %v5726
        %v5728 = vcombine.high %v5720, %v5720
        %v5729 = vcombine.high %v5727, %v5727
        %v5731 = vunpack.c.l.s4 1966171168
        %v5732 = vunpack.c.0.s8 %v5731
        %v5733 = vlaneseq
        %v5734 = vshrl.u32 %v5733, 7
        %v5735 = vsub.s32 %v5732, %v5734
        %v5736 = vrot.slane %v5720, %v5735
        %v5738 = vunpack.c.l.s4 1966171168
        %v5739 = vunpack.c.0.s8 %v5738
        %v5740 = vlaneseq
        %v5741 = vshrl.u32 %v5740, 7
        %v5742 = vsub.s32 %v5739, %v5741
        %v5743 = vrot.slane %v5727, %v5742
        %v5745 = vunpack.c.l.s4 1966171168
        %v5746 = vunpack.c.0.s8 %v5745
        %v5747 = vlaneseq
        %v5748 = vshrl.u32 %v5747, 7
        %v5749 = vsub.s32 %v5746, %v5748
        %v5750 = vrot.slane %v5728, %v5749
        %v5752 = vunpack.c.l.s4 1966171168
        %v5753 = vunpack.c.0.s8 %v5752
        %v5754 = vlaneseq
        %v5755 = vshrl.u32 %v5754, 7
        %v5756 = vsub.s32 %v5753, %v5755
        %v5757 = vrot.slane %v5729, %v5756
        %v5758 = vcombine.high %v5736, %v5736
        %v5759 = vcombine.high %v5743, %v5743
        %v5760 = vcombine.high %v5750, %v5750
        %v5761 = vcombine.high %v5757, %v5757
        %v5763 = vunpack.c.l.s4 1966171168
        %v5764 = vunpack.c.0.s8 %v5763
        %v5765 = vlaneseq
        %v5766 = vshrl.u32 %v5765, 7
        %v5767 = vsub.s32 %v5764, %v5766
        %v5768 = vrot.slane %v577, %v5767
        %v5770 = vunpack.c.l.s4 1966171168
        %v5771 = vunpack.c.0.s8 %v5770
        %v5772 = vlaneseq
        %v5773 = vshrl.u32 %v5772, 7
        %v5774 = vsub.s32 %v5771, %v5773
        %v5775 = vrot.slane %v5768, %v5774
        %v5776 = vcombine.high %v578, %v578
        %v5778 = vunpack.c.l.s4 1966171168
        %v5779 = vunpack.c.0.s8 %v5778
        %v5780 = vlaneseq
        %v5781 = vshrl.u32 %v5780, 7
        %v5782 = vsub.s32 %v5779, %v5781
        %v5783 = vrot.slane %v578, %v5782
        %v5785 = vunpack.c.l.s4 1966171168
        %v5786 = vunpack.c.0.s8 %v5785
        %v5787 = vlaneseq
        %v5788 = vshrl.u32 %v5787, 7
        %v5789 = vsub.s32 %v5786, %v5788
        %v5790 = vrot.slane %v5776, %v5789
        %v5791 = vcombine.high %v5783, %v5783
        %v5792 = vcombine.high %v5790, %v5790
        %v5794 = vunpack.c.l.s4 1966171168
        %v5795 = vunpack.c.0.s8 %v5794
        %v5796 = vlaneseq
        %v5797 = vshrl.u32 %v5796, 7
        %v5798 = vsub.s32 %v5795, %v5797
        %v5799 = vrot.slane %v5783, %v5798
        %v5801 = vunpack.c.l.s4 1966171168
        %v5802 = vunpack.c.0.s8 %v5801
        %v5803 = vlaneseq
        %v5804 = vshrl.u32 %v5803, 7
        %v5805 = vsub.s32 %v5802, %v5804
        %v5806 = vrot.slane %v5790, %v5805
        %v5808 = vunpack.c.l.s4 1966171168
        %v5809 = vunpack.c.0.s8 %v5808
        %v5810 = vlaneseq
        %v5811 = vshrl.u32 %v5810, 7
        %v5812 = vsub.s32 %v5809, %v5811
        %v5813 = vrot.slane %v5791, %v5812
        %v5815 = vunpack.c.l.s4 1966171168
        %v5816 = vunpack.c.0.s8 %v5815
        %v5817 = vlaneseq
        %v5818 = vshrl.u32 %v5817, 7
        %v5819 = vsub.s32 %v5816, %v5818
        %v5820 = vrot.slane %v5792, %v5819
        %v5821 = vcombine.high %v5799, %v5799
        %v5822 = vcombine.high %v5806, %v5806
        %v5823 = vcombine.high %v5813, %v5813
        %v5824 = vcombine.high %v5820, %v5820
        %v5826 = vunpack.c.l.s4 1966171168
        %v5827 = vunpack.c.0.s8 %v5826
        %v5828 = vlaneseq
        %v5829 = vshrl.u32 %v5828, 7
        %v5830 = vsub.s32 %v5827, %v5829
        %v5831 = vrot.slane %v579, %v5830
        %v5833 = vunpack.c.l.s4 1966171168
        %v5834 = vunpack.c.0.s8 %v5833
        %v5835 = vlaneseq
        %v5836 = vshrl.u32 %v5835, 7
        %v5837 = vsub.s32 %v5834, %v5836
        %v5838 = vrot.slane %v5831, %v5837
        %v5839 = vcombine.high %v580, %v580
        %v5841 = vunpack.c.l.s4 1966171168
        %v5842 = vunpack.c.0.s8 %v5841
        %v5843 = vlaneseq
        %v5844 = vshrl.u32 %v5843, 7
        %v5845 = vsub.s32 %v5842, %v5844
        %v5846 = vrot.slane %v580, %v5845
        %v5848 = vunpack.c.l.s4 1966171168
        %v5849 = vunpack.c.0.s8 %v5848
        %v5850 = vlaneseq
        %v5851 = vshrl.u32 %v5850, 7
        %v5852 = vsub.s32 %v5849, %v5851
        %v5853 = vrot.slane %v5839, %v5852
        %v5854 = vcombine.high %v5846, %v5846
        %v5855 = vcombine.high %v5853, %v5853
        %v5857 = vunpack.c.l.s4 1966171168
        %v5858 = vunpack.c.0.s8 %v5857
        %v5859 = vlaneseq
        %v5860 = vshrl.u32 %v5859, 7
        %v5861 = vsub.s32 %v5858, %v5860
        %v5862 = vrot.slane %v5846, %v5861
        %v5864 = vunpack.c.l.s4 1966171168
        %v5865 = vunpack.c.0.s8 %v5864
        %v5866 = vlaneseq
        %v5867 = vshrl.u32 %v5866, 7
        %v5868 = vsub.s32 %v5865, %v5867
        %v5869 = vrot.slane %v5853, %v5868
        %v5871 = vunpack.c.l.s4 1966171168
        %v5872 = vunpack.c.0.s8 %v5871
        %v5873 = vlaneseq
        %v5874 = vshrl.u32 %v5873, 7
        %v5875 = vsub.s32 %v5872, %v5874
        %v5876 = vrot.slane %v5854, %v5875
        %v5878 = vunpack.c.l.s4 1966171168
        %v5879 = vunpack.c.0.s8 %v5878
        %v5880 = vlaneseq
        %v5881 = vshrl.u32 %v5880, 7
        %v5882 = vsub.s32 %v5879, %v5881
        %v5883 = vrot.slane %v5855, %v5882
        %v5884 = vcombine.high %v5862, %v5862
        %v5885 = vcombine.high %v5869, %v5869
        %v5886 = vcombine.high %v5876, %v5876
        %v5887 = vcombine.high %v5883, %v5883
        %v5889 = vunpack.c.l.s4 1966171168
        %v5890 = vunpack.c.0.s8 %v5889
        %v5891 = vlaneseq
        %v5892 = vshrl.u32 %v5891, 7
        %v5893 = vsub.s32 %v5890, %v5892
        %v5894 = vrot.slane %v581, %v5893
        %v5896 = vunpack.c.l.s4 1966171168
        %v5897 = vunpack.c.0.s8 %v5896
        %v5898 = vlaneseq
        %v5899 = vshrl.u32 %v5898, 7
        %v5900 = vsub.s32 %v5897, %v5899
        %v5901 = vrot.slane %v5894, %v5900
        %v5902 = vcombine.high %v582, %v582
        %v5904 = vunpack.c.l.s4 1966171168
        %v5905 = vunpack.c.0.s8 %v5904
        %v5906 = vlaneseq
        %v5907 = vshrl.u32 %v5906, 7
        %v5908 = vsub.s32 %v5905, %v5907
        %v5909 = vrot.slane %v582, %v5908
        %v5911 = vunpack.c.l.s4 1966171168
        %v5912 = vunpack.c.0.s8 %v5911
        %v5913 = vlaneseq
        %v5914 = vshrl.u32 %v5913, 7
        %v5915 = vsub.s32 %v5912, %v5914
        %v5916 = vrot.slane %v5902, %v5915
        %v5917 = vcombine.high %v5909, %v5909
        %v5918 = vcombine.high %v5916, %v5916
        %v5920 = vunpack.c.l.s4 1966171168
        %v5921 = vunpack.c.0.s8 %v5920
        %v5922 = vlaneseq
        %v5923 = vshrl.u32 %v5922, 7
        %v5924 = vsub.s32 %v5921, %v5923
        %v5925 = vrot.slane %v5909, %v5924
        %v5927 = vunpack.c.l.s4 1966171168
        %v5928 = vunpack.c.0.s8 %v5927
        %v5929 = vlaneseq
        %v5930 = vshrl.u32 %v5929, 7
        %v5931 = vsub.s32 %v5928, %v5930
        %v5932 = vrot.slane %v5916, %v5931
        %v5934 = vunpack.c.l.s4 1966171168
        %v5935 = vunpack.c.0.s8 %v5934
        %v5936 = vlaneseq
        %v5937 = vshrl.u32 %v5936, 7
        %v5938 = vsub.s32 %v5935, %v5937
        %v5939 = vrot.slane %v5917, %v5938
        %v5941 = vunpack.c.l.s4 1966171168
        %v5942 = vunpack.c.0.s8 %v5941
        %v5943 = vlaneseq
        %v5944 = vshrl.u32 %v5943, 7
        %v5945 = vsub.s32 %v5942, %v5944
        %v5946 = vrot.slane %v5918, %v5945
        %v5947 = vcombine.high %v5925, %v5925
        %v5948 = vcombine.high %v5932, %v5932
        %v5949 = vcombine.high %v5939, %v5939
        %v5950 = vcombine.high %v5946, %v5946
        %v5952 = vunpack.c.l.s4 1966171168
        %v5953 = vunpack.c.0.s8 %v5952
        %v5954 = vlaneseq
        %v5955 = vshrl.u32 %v5954, 7
        %v5956 = vsub.s32 %v5953, %v5955
        %v5957 = vrot.slane %v583, %v5956
        %v5959 = vunpack.c.l.s4 1966171168
        %v5960 = vunpack.c.0.s8 %v5959
        %v5961 = vlaneseq
        %v5962 = vshrl.u32 %v5961, 7
        %v5963 = vsub.s32 %v5960, %v5962
        %v5964 = vrot.slane %v5957, %v5963
        %v5965 = vcombine.low %v5421, %v5435
        %v5966 = vcombine.low %v5443, %v5445
        %v5967 = vcombine.low %v5428, %v5442
        %v5968 = vcombine.low %v5444, %v5446
        %v5970 = vunpack.c.l.s4 1966171168
        %v5971 = vunpack.c.0.s8 %v5970
        %v5972 = vlaneseq
        %v5973 = vshrl.u32 %v5972, 7
        %v5974 = vsub.s32 %v5971, %v5973
        %v5975 = vrot.slane %v5965, %v5974
        %v5977 = vunpack.c.l.s4 1966171168
        %v5978 = vunpack.c.0.s8 %v5977
        %v5979 = vlaneseq
        %v5980 = vshrl.u32 %v5979, 7
        %v5981 = vsub.s32 %v5978, %v5980
        %v5982 = vrot.slane %v5966, %v5981
        %v5984 = vunpack.c.l.s4 1966171168
        %v5985 = vunpack.c.0.s8 %v5984
        %v5986 = vlaneseq
        %v5987 = vshrl.u32 %v5986, 7
        %v5988 = vsub.s32 %v5985, %v5987
        %v5989 = vrot.slane %v5967, %v5988
        %v5991 = vunpack.c.l.s4 1966171168
        %v5992 = vunpack.c.0.s8 %v5991
        %v5993 = vlaneseq
        %v5994 = vshrl.u32 %v5993, 7
        %v5995 = vsub.s32 %v5992, %v5994
        %v5996 = vrot.slane %v5968, %v5995
        %v5997 = vcombine.low %v5975, %v5982
        %v5998 = vcombine.low %v5989, %v5996
        %v6000 = vunpack.c.l.s4 1966171168
        %v6001 = vunpack.c.0.s8 %v6000
        %v6002 = vlaneseq
        %v6003 = vshrl.u32 %v6002, 7
        %v6004 = vsub.s32 %v6001, %v6003
        %v6005 = vrot.slane %v5997, %v6004
        %v6007 = vunpack.c.l.s4 1966171168
        %v6008 = vunpack.c.0.s8 %v6007
        %v6009 = vlaneseq
        %v6010 = vshrl.u32 %v6009, 7
        %v6011 = vsub.s32 %v6008, %v6010
        %v6012 = vrot.slane %v5998, %v6011
        %v6013 = vcombine.low %v6005, %v6012
        %v6014 = vcombine.low %v5460, %v5484
        %v6015 = vcombine.low %v5498, %v5506
        %v6016 = vcombine.low %v5508, %v5491
        %v6017 = vcombine.low %v5505, %v5507
        %v6019 = vunpack.c.l.s4 1966171168
        %v6020 = vunpack.c.0.s8 %v6019
        %v6021 = vlaneseq
        %v6022 = vshrl.u32 %v6021, 7
        %v6023 = vsub.s32 %v6020, %v6022
        %v6024 = vrot.slane %v6014, %v6023
        %v6026 = vunpack.c.l.s4 1966171168
        %v6027 = vunpack.c.0.s8 %v6026
        %v6028 = vlaneseq
        %v6029 = vshrl.u32 %v6028, 7
        %v6030 = vsub.s32 %v6027, %v6029
        %v6031 = vrot.slane %v6015, %v6030
        %v6033 = vunpack.c.l.s4 1966171168
        %v6034 = vunpack.c.0.s8 %v6033
        %v6035 = vlaneseq
        %v6036 = vshrl.u32 %v6035, 7
        %v6037 = vsub.s32 %v6034, %v6036
        %v6038 = vrot.slane %v6016, %v6037
        %v6040 = vunpack.c.l.s4 1966171168
        %v6041 = vunpack.c.0.s8 %v6040
        %v6042 = vlaneseq
        %v6043 = vshrl.u32 %v6042, 7
        %v6044 = vsub.s32 %v6041, %v6043
        %v6045 = vrot.slane %v6017, %v6044
        %v6046 = vcombine.low %v6024, %v6031
        %v6047 = vcombine.low %v6038, %v6045
        %v6049 = vunpack.c.l.s4 1966171168
        %v6050 = vunpack.c.0.s8 %v6049
        %v6051 = vlaneseq
        %v6052 = vshrl.u32 %v6051, 7
        %v6053 = vsub.s32 %v6050, %v6052
        %v6054 = vrot.slane %v6046, %v6053
        %v6056 = vunpack.c.l.s4 1966171168
        %v6057 = vunpack.c.0.s8 %v6056
        %v6058 = vlaneseq
        %v6059 = vshrl.u32 %v6058, 7
        %v6060 = vsub.s32 %v6057, %v6059
        %v6061 = vrot.slane %v6047, %v6060
        %v6062 = vcombine.low %v6054, %v6061
        %v6063 = vcombine.low %v5509, %v5523
        %v6064 = vcombine.low %v5547, %v5561
        %v6065 = vcombine.low %v5569, %v5571
        %v6066 = vcombine.low %v5554, %v5568
        %v6068 = vunpack.c.l.s4 1966171168
        %v6069 = vunpack.c.0.s8 %v6068
        %v6070 = vlaneseq
        %v6071 = vshrl.u32 %v6070, 7
        %v6072 = vsub.s32 %v6069, %v6071
        %v6073 = vrot.slane %v6063, %v6072
        %v6075 = vunpack.c.l.s4 1966171168
        %v6076 = vunpack.c.0.s8 %v6075
        %v6077 = vlaneseq
        %v6078 = vshrl.u32 %v6077, 7
        %v6079 = vsub.s32 %v6076, %v6078
        %v6080 = vrot.slane %v6064, %v6079
        %v6082 = vunpack.c.l.s4 1966171168
        %v6083 = vunpack.c.0.s8 %v6082
        %v6084 = vlaneseq
        %v6085 = vshrl.u32 %v6084, 7
        %v6086 = vsub.s32 %v6083, %v6085
        %v6087 = vrot.slane %v6065, %v6086
        %v6089 = vunpack.c.l.s4 1966171168
        %v6090 = vunpack.c.0.s8 %v6089
        %v6091 = vlaneseq
        %v6092 = vshrl.u32 %v6091, 7
        %v6093 = vsub.s32 %v6090, %v6092
        %v6094 = vrot.slane %v6066, %v6093
        %v6095 = vcombine.low %v6073, %v6080
        %v6096 = vcombine.low %v6087, %v6094
        %v6098 = vunpack.c.l.s4 1966171168
        %v6099 = vunpack.c.0.s8 %v6098
        %v6100 = vlaneseq
        %v6101 = vshrl.u32 %v6100, 7
        %v6102 = vsub.s32 %v6099, %v6101
        %v6103 = vrot.slane %v6095, %v6102
        %v6105 = vunpack.c.l.s4 1966171168
        %v6106 = vunpack.c.0.s8 %v6105
        %v6107 = vlaneseq
        %v6108 = vshrl.u32 %v6107, 7
        %v6109 = vsub.s32 %v6106, %v6108
        %v6110 = vrot.slane %v6096, %v6109
        %v6111 = vcombine.low %v6103, %v6110
        %v6112 = vcombine.low %v5570, %v5572
        %v6113 = vcombine.low %v5586, %v5610
        %v6114 = vcombine.low %v5624, %v5632
        %v6115 = vcombine.low %v5634, %v5617
        %v6117 = vunpack.c.l.s4 1966171168
        %v6118 = vunpack.c.0.s8 %v6117
        %v6119 = vlaneseq
        %v6120 = vshrl.u32 %v6119, 7
        %v6121 = vsub.s32 %v6118, %v6120
        %v6122 = vrot.slane %v6112, %v6121
        %v6124 = vunpack.c.l.s4 1966171168
        %v6125 = vunpack.c.0.s8 %v6124
        %v6126 = vlaneseq
        %v6127 = vshrl.u32 %v6126, 7
        %v6128 = vsub.s32 %v6125, %v6127
        %v6129 = vrot.slane %v6113, %v6128
        %v6131 = vunpack.c.l.s4 1966171168
        %v6132 = vunpack.c.0.s8 %v6131
        %v6133 = vlaneseq
        %v6134 = vshrl.u32 %v6133, 7
        %v6135 = vsub.s32 %v6132, %v6134
        %v6136 = vrot.slane %v6114, %v6135
        %v6138 = vunpack.c.l.s4 1966171168
        %v6139 = vunpack.c.0.s8 %v6138
        %v6140 = vlaneseq
        %v6141 = vshrl.u32 %v6140, 7
        %v6142 = vsub.s32 %v6139, %v6141
        %v6143 = vrot.slane %v6115, %v6142
        %v6144 = vcombine.low %v6122, %v6129
        %v6145 = vcombine.low %v6136, %v6143
        %v6147 = vunpack.c.l.s4 1966171168
        %v6148 = vunpack.c.0.s8 %v6147
        %v6149 = vlaneseq
        %v6150 = vshrl.u32 %v6149, 7
        %v6151 = vsub.s32 %v6148, %v6150
        %v6152 = vrot.slane %v6144, %v6151
        %v6154 = vunpack.c.l.s4 1966171168
        %v6155 = vunpack.c.0.s8 %v6154
        %v6156 = vlaneseq
        %v6157 = vshrl.u32 %v6156, 7
        %v6158 = vsub.s32 %v6155, %v6157
        %v6159 = vrot.slane %v6145, %v6158
        %v6160 = vcombine.low %v6152, %v6159
        %v6161 = vcombine.low %v5631, %v5633
        %v6162 = vcombine.low %v5635, %v5649
        %v6163 = vcombine.low %v5673, %v5687
        %v6164 = vcombine.low %v5695, %v5697
        %v6166 = vunpack.c.l.s4 1966171168
        %v6167 = vunpack.c.0.s8 %v6166
        %v6168 = vlaneseq
        %v6169 = vshrl.u32 %v6168, 7
        %v6170 = vsub.s32 %v6167, %v6169
        %v6171 = vrot.slane %v6161, %v6170
        %v6173 = vunpack.c.l.s4 1966171168
        %v6174 = vunpack.c.0.s8 %v6173
        %v6175 = vlaneseq
        %v6176 = vshrl.u32 %v6175, 7
        %v6177 = vsub.s32 %v6174, %v6176
        %v6178 = vrot.slane %v6162, %v6177
        %v6180 = vunpack.c.l.s4 1966171168
        %v6181 = vunpack.c.0.s8 %v6180
        %v6182 = vlaneseq
        %v6183 = vshrl.u32 %v6182, 7
        %v6184 = vsub.s32 %v6181, %v6183
        %v6185 = vrot.slane %v6163, %v6184
        %v6187 = vunpack.c.l.s4 1966171168
        %v6188 = vunpack.c.0.s8 %v6187
        %v6189 = vlaneseq
        %v6190 = vshrl.u32 %v6189, 7
        %v6191 = vsub.s32 %v6188, %v6190
        %v6192 = vrot.slane %v6164, %v6191
        %v6193 = vcombine.low %v6171, %v6178
        %v6194 = vcombine.low %v6185, %v6192
        %v6196 = vunpack.c.l.s4 1966171168
        %v6197 = vunpack.c.0.s8 %v6196
        %v6198 = vlaneseq
        %v6199 = vshrl.u32 %v6198, 7
        %v6200 = vsub.s32 %v6197, %v6199
        %v6201 = vrot.slane %v6193, %v6200
        %v6203 = vunpack.c.l.s4 1966171168
        %v6204 = vunpack.c.0.s8 %v6203
        %v6205 = vlaneseq
        %v6206 = vshrl.u32 %v6205, 7
        %v6207 = vsub.s32 %v6204, %v6206
        %v6208 = vrot.slane %v6194, %v6207
        %v6209 = vcombine.low %v6201, %v6208
        %v6210 = vcombine.low %v5680, %v5694
        %v6211 = vcombine.low %v5696, %v5698
        %v6212 = vcombine.low %v5712, %v5736
        %v6213 = vcombine.low %v5750, %v5758
        %v6215 = vunpack.c.l.s4 1966171168
        %v6216 = vunpack.c.0.s8 %v6215
        %v6217 = vlaneseq
        %v6218 = vshrl.u32 %v6217, 7
        %v6219 = vsub.s32 %v6216, %v6218
        %v6220 = vrot.slane %v6210, %v6219
        %v6222 = vunpack.c.l.s4 1966171168
        %v6223 = vunpack.c.0.s8 %v6222
        %v6224 = vlaneseq
        %v6225 = vshrl.u32 %v6224, 7
        %v6226 = vsub.s32 %v6223, %v6225
        %v6227 = vrot.slane %v6211, %v6226
        %v6229 = vunpack.c.l.s4 1966171168
        %v6230 = vunpack.c.0.s8 %v6229
        %v6231 = vlaneseq
        %v6232 = vshrl.u32 %v6231, 7
        %v6233 = vsub.s32 %v6230, %v6232
        %v6234 = vrot.slane %v6212, %v6233
        %v6236 = vunpack.c.l.s4 1966171168
        %v6237 = vunpack.c.0.s8 %v6236
        %v6238 = vlaneseq
        %v6239 = vshrl.u32 %v6238, 7
        %v6240 = vsub.s32 %v6237, %v6239
        %v6241 = vrot.slane %v6213, %v6240
        %v6242 = vcombine.low %v6220, %v6227
        %v6243 = vcombine.low %v6234, %v6241
        %v6245 = vunpack.c.l.s4 1966171168
        %v6246 = vunpack.c.0.s8 %v6245
        %v6247 = vlaneseq
        %v6248 = vshrl.u32 %v6247, 7
        %v6249 = vsub.s32 %v6246, %v6248
        %v6250 = vrot.slane %v6242, %v6249
        %v6252 = vunpack.c.l.s4 1966171168
        %v6253 = vunpack.c.0.s8 %v6252
        %v6254 = vlaneseq
        %v6255 = vshrl.u32 %v6254, 7
        %v6256 = vsub.s32 %v6253, %v6255
        %v6257 = vrot.slane %v6243, %v6256
        %v6258 = vcombine.low %v6250, %v6257
        %v6259 = vcombine.low %v5760, %v5743
        %v6260 = vcombine.low %v5757, %v5759
        %v6261 = vcombine.low %v5761, %v5775
        %v6262 = vcombine.low %v5799, %v5813
        %v6264 = vunpack.c.l.s4 1966171168
        %v6265 = vunpack.c.0.s8 %v6264
        %v6266 = vlaneseq
        %v6267 = vshrl.u32 %v6266, 7
        %v6268 = vsub.s32 %v6265, %v6267
        %v6269 = vrot.slane %v6259, %v6268
        %v6271 = vunpack.c.l.s4 1966171168
        %v6272 = vunpack.c.0.s8 %v6271
        %v6273 = vlaneseq
        %v6274 = vshrl.u32 %v6273, 7
        %v6275 = vsub.s32 %v6272, %v6274
        %v6276 = vrot.slane %v6260, %v6275
        %v6278 = vunpack.c.l.s4 1966171168
        %v6279 = vunpack.c.0.s8 %v6278
        %v6280 = vlaneseq
        %v6281 = vshrl.u32 %v6280, 7
        %v6282 = vsub.s32 %v6279, %v6281
        %v6283 = vrot.slane %v6261, %v6282
        %v6285 = vunpack.c.l.s4 1966171168
        %v6286 = vunpack.c.0.s8 %v6285
        %v6287 = vlaneseq
        %v6288 = vshrl.u32 %v6287, 7
        %v6289 = vsub.s32 %v6286, %v6288
        %v6290 = vrot.slane %v6262, %v6289
        %v6291 = vcombine.low %v6269, %v6276
        %v6292 = vcombine.low %v6283, %v6290
        %v6294 = vunpack.c.l.s4 1966171168
        %v6295 = vunpack.c.0.s8 %v6294
        %v6296 = vlaneseq
        %v6297 = vshrl.u32 %v6296, 7
        %v6298 = vsub.s32 %v6295, %v6297
        %v6299 = vrot.slane %v6291, %v6298
        %v6301 = vunpack.c.l.s4 1966171168
        %v6302 = vunpack.c.0.s8 %v6301
        %v6303 = vlaneseq
        %v6304 = vshrl.u32 %v6303, 7
        %v6305 = vsub.s32 %v6302, %v6304
        %v6306 = vrot.slane %v6292, %v6305
        %v6307 = vcombine.low %v6299, %v6306
        %v6308 = vcombine.low %v5821, %v5823
        %v6309 = vcombine.low %v5806, %v5820
        %v6310 = vcombine.low %v5822, %v5824
        %v6311 = vcombine.low %v5838, %v5862
        %v6313 = vunpack.c.l.s4 1966171168
        %v6314 = vunpack.c.0.s8 %v6313
        %v6315 = vlaneseq
        %v6316 = vshrl.u32 %v6315, 7
        %v6317 = vsub.s32 %v6314, %v6316
        %v6318 = vrot.slane %v6308, %v6317
        %v6320 = vunpack.c.l.s4 1966171168
        %v6321 = vunpack.c.0.s8 %v6320
        %v6322 = vlaneseq
        %v6323 = vshrl.u32 %v6322, 7
        %v6324 = vsub.s32 %v6321, %v6323
        %v6325 = vrot.slane %v6309, %v6324
        %v6327 = vunpack.c.l.s4 1966171168
        %v6328 = vunpack.c.0.s8 %v6327
        %v6329 = vlaneseq
        %v6330 = vshrl.u32 %v6329, 7
        %v6331 = vsub.s32 %v6328, %v6330
        %v6332 = vrot.slane %v6310, %v6331
        %v6334 = vunpack.c.l.s4 1966171168
        %v6335 = vunpack.c.0.s8 %v6334
        %v6336 = vlaneseq
        %v6337 = vshrl.u32 %v6336, 7
        %v6338 = vsub.s32 %v6335, %v6337
        %v6339 = vrot.slane %v6311, %v6338
        %v6340 = vcombine.low %v6318, %v6325
        %v6341 = vcombine.low %v6332, %v6339
        %v6343 = vunpack.c.l.s4 1966171168
        %v6344 = vunpack.c.0.s8 %v6343
        %v6345 = vlaneseq
        %v6346 = vshrl.u32 %v6345, 7
        %v6347 = vsub.s32 %v6344, %v6346
        %v6348 = vrot.slane %v6340, %v6347
        %v6350 = vunpack.c.l.s4 1966171168
        %v6351 = vunpack.c.0.s8 %v6350
        %v6352 = vlaneseq
        %v6353 = vshrl.u32 %v6352, 7
        %v6354 = vsub.s32 %v6351, %v6353
        %v6355 = vrot.slane %v6341, %v6354
        %v6356 = vcombine.low %v6348, %v6355
        %v6357 = vcombine.low %v5876, %v5884
        %v6358 = vcombine.low %v5886, %v5869
        %v6359 = vcombine.low %v5883, %v5885
        %v6360 = vcombine.low %v5887, %v5901
        %v6362 = vunpack.c.l.s4 1966171168
        %v6363 = vunpack.c.0.s8 %v6362
        %v6364 = vlaneseq
        %v6365 = vshrl.u32 %v6364, 7
        %v6366 = vsub.s32 %v6363, %v6365
        %v6367 = vrot.slane %v6357, %v6366
        %v6369 = vunpack.c.l.s4 1966171168
        %v6370 = vunpack.c.0.s8 %v6369
        %v6371 = vlaneseq
        %v6372 = vshrl.u32 %v6371, 7
        %v6373 = vsub.s32 %v6370, %v6372
        %v6374 = vrot.slane %v6358, %v6373
        %v6376 = vunpack.c.l.s4 1966171168
        %v6377 = vunpack.c.0.s8 %v6376
        %v6378 = vlaneseq
        %v6379 = vshrl.u32 %v6378, 7
        %v6380 = vsub.s32 %v6377, %v6379
        %v6381 = vrot.slane %v6359, %v6380
        %v6383 = vunpack.c.l.s4 1966171168
        %v6384 = vunpack.c.0.s8 %v6383
        %v6385 = vlaneseq
        %v6386 = vshrl.u32 %v6385, 7
        %v6387 = vsub.s32 %v6384, %v6386
        %v6388 = vrot.slane %v6360, %v6387
        %v6389 = vcombine.low %v6367, %v6374
        %v6390 = vcombine.low %v6381, %v6388
        %v6392 = vunpack.c.l.s4 1966171168
        %v6393 = vunpack.c.0.s8 %v6392
        %v6394 = vlaneseq
        %v6395 = vshrl.u32 %v6394, 7
        %v6396 = vsub.s32 %v6393, %v6395
        %v6397 = vrot.slane %v6389, %v6396
        %v6399 = vunpack.c.l.s4 1966171168
        %v6400 = vunpack.c.0.s8 %v6399
        %v6401 = vlaneseq
        %v6402 = vshrl.u32 %v6401, 7
        %v6403 = vsub.s32 %v6400, %v6402
        %v6404 = vrot.slane %v6390, %v6403
        %v6405 = vcombine.low %v6397, %v6404
        %v6406 = vcombine.low %v5925, %v5939
        %v6407 = vcombine.low %v5947, %v5949
        %v6408 = vcombine.low %v5932, %v5946
        %v6409 = vcombine.low %v5948, %v5950
        %v6411 = vunpack.c.l.s4 1966171168
        %v6412 = vunpack.c.0.s8 %v6411
        %v6413 = vlaneseq
        %v6414 = vshrl.u32 %v6413, 7
        %v6415 = vsub.s32 %v6412, %v6414
        %v6416 = vrot.slane %v6406, %v6415
        %v6418 = vunpack.c.l.s4 1966171168
        %v6419 = vunpack.c.0.s8 %v6418
        %v6420 = vlaneseq
        %v6421 = vshrl.u32 %v6420, 7
        %v6422 = vsub.s32 %v6419, %v6421
        %v6423 = vrot.slane %v6407, %v6422
        %v6425 = vunpack.c.l.s4 1966171168
        %v6426 = vunpack.c.0.s8 %v6425
        %v6427 = vlaneseq
        %v6428 = vshrl.u32 %v6427, 7
        %v6429 = vsub.s32 %v6426, %v6428
        %v6430 = vrot.slane %v6408, %v6429
        %v6432 = vunpack.c.l.s4 1966171168
        %v6433 = vunpack.c.0.s8 %v6432
        %v6434 = vlaneseq
        %v6435 = vshrl.u32 %v6434, 7
        %v6436 = vsub.s32 %v6433, %v6435
        %v6437 = vrot.slane %v6409, %v6436
        %v6438 = vcombine.low %v6416, %v6423
        %v6439 = vcombine.low %v6430, %v6437
        %v6441 = vunpack.c.l.s4 1966171168
        %v6442 = vunpack.c.0.s8 %v6441
        %v6443 = vlaneseq
        %v6444 = vshrl.u32 %v6443, 7
        %v6445 = vsub.s32 %v6442, %v6444
        %v6446 = vrot.slane %v6438, %v6445
        %v6448 = vunpack.c.l.s4 1966171168
        %v6449 = vunpack.c.0.s8 %v6448
        %v6450 = vlaneseq
        %v6451 = vshrl.u32 %v6450, 7
        %v6452 = vsub.s32 %v6449, %v6451
        %v6453 = vrot.slane %v6439, %v6452
        %v6454 = vcombine.low %v6446, %v6453
        %v6456 = vunpack.c.l.s4 1966171168
        %v6457 = vunpack.c.0.s8 %v6456
        %v6458 = vlaneseq
        %v6459 = vshrl.u32 %v6458, 7
        %v6460 = vsub.s32 %v6457, %v6459
        %v6461 = vrot.slane %v5964, %v6460
        %v6463 = vunpack.c.l.s4 1966171168
        %v6464 = vunpack.c.0.s8 %v6463
        %v6465 = vlaneseq
        %v6466 = vshrl.u32 %v6465, 7
        %v6467 = vsub.s32 %v6464, %v6466
        %v6468 = vrot.slane %v6461, %v6467
        %v6480 = vpack.c.bf16 %v6062, %v6013
        %v6481 = vpack.c.bf16 %v6160, %v6111
        %v6482 = vpack.c.bf16 %v6258, %v6209
        %v6483 = vpack.c.bf16 %v6356, %v6307
        %v6484 = vpack.c.bf16 %v6454, %v6405
        %v6485 = vpack.c.bf16 %v6468, %v6468
        %v6486 = vld [vmem:[%s4] sm:$0xf]
        %v6487 = vld [vmem:[%s4 + $0x4] sm:$0xf]
        %v6488 = vld [vmem:[%s4 + $0x8] sm:$0xf]
        %v6489 = vld [vmem:[%s4 + $0xc] sm:$0xf]
        %v6490 = vld [vmem:[%s5] sm:$0x1]
        %v6492 = vlaneseq
        %v6493 = vshrl.u32 %v6492, 7
        %v6494 = vsub.s32 0, %v6493
        %v6495 = vrot.slane %v6490, %v6494
        %v6501 = vunpack.c.l.b16 %v6486
        %v6502 = vunpack.c.l.b16 %v6487
        %v6503 = vunpack.c.l.b16 %v6488
        %v6504 = vunpack.c.l.b16 %v6489
        %v6505 = vpack.c.b16 %v6502, %v6501
        %v6506 = vpack.c.b16 %v6504, %v6503
        %v6510 = vsel %vm1731, %v6480, 0
        %v6513 = vsel %vm1731, %v6481, 0
        %v6516 = vsel %vm1731, %v6482, 0
        %v6519 = vsel %vm1731, %v6483, 0
        %v6522 = vsel %vm1731, %v6484, 0
        %v6525 = vsel %vm1731, %v6485, 0
        %6527 = vmatprep.subr.bf16.mxu0 0
        %6528 = vmatpush1.bf16.msra.mxu0 0
        %6529 = vmatprep.subr.bf16.mxu0 0
        %6530 = vmatpush1.bf16.msra.mxu0 0
        %6531 = vmatprep.subr.bf16.mxu0 0
        %6532 = vmatpush1.bf16.msra.mxu0 0
        %6533 = vmatprep.subr.bf16.mxu0 0
        %6534 = vmatpush1.bf16.msra.mxu0 0
        %6535 = vmatprep.subr.bf16.mxu0 0
        %6536 = vmatpush1.bf16.msra.mxu0 0
        %6537 = vmatprep.subr.bf16.mxu0 0
        %6538 = vmatpush1.bf16.msra.mxu0 0
        %6539 = vmatprep.subr.bf16.mxu0 0
        %6540 = vmatpush1.bf16.msra.mxu0 %v6506
        %6541 = vmatprep.subr.bf16.mxu0 0
        %6542 = vmatpush1.bf16.msra.mxu0 %v6505
        %6543 = vmatprep.subr.bf16.mxu0 0
        %6544 = vmatpush2.bf16.msra.mxu0 0
        %6545 = vmatprep.subr.bf16.mxu0 0
        %6546 = vmatpush2.bf16.msra.mxu0 0
        %6547 = vmatprep.subr.bf16.mxu0 0
        %6548 = vmatpush2.bf16.msra.mxu0 0
        %6549 = vmatprep.subr.bf16.mxu0 0
        %6550 = vmatpush2.bf16.msra.mxu0 0
        %6551 = vmatprep.subr.bf16.mxu0 0
        %6552 = vmatpush2.bf16.msra.mxu0 0
        %6553 = vmatprep.subr.bf16.mxu0 0
        %6554 = vmatpush2.bf16.msra.mxu0 0
        %6555 = vmatprep.subr.bf16.mxu0 0
        %6556 = vmatpush2.bf16.msra.mxu0 0
        %6557 = vmatprep.subr.bf16.mxu0 0
        %6558 = vmatpush2.bf16.msra.mxu0 0
        %6559 = vmatprep.mubr.bf16.mxu0 0
        %6560 = vmatmul.mubr.bf16.gmra.mxu0 %v6510
        %v6561 = vpop.f32.mrf.mxu0
        %v6562 = vadd.f32 %v6495, %v6561
        %v6563 = vpop.f32.mrf.mxu0
        %v6564 = vpop.f32.mrf.mxu0
        %v6565 = vadd.f32 %v6495, %v6564
        %v6566 = vpop.f32.mrf.mxu0
        %6567 = vmatprep.mubr.bf16.mxu0 0
        %6568 = vmatmul.mubr.bf16.gmra.mxu0 %v6513
        %v6569 = vpop.f32.mrf.mxu0
        %v6570 = vadd.f32 %v6495, %v6569
        %v6571 = vpop.f32.mrf.mxu0
        %v6572 = vpop.f32.mrf.mxu0
        %v6573 = vadd.f32 %v6495, %v6572
        %v6574 = vpop.f32.mrf.mxu0
        %6575 = vmatprep.mubr.bf16.mxu0 0
        %6576 = vmatmul.mubr.bf16.gmra.mxu0 %v6516
        %v6577 = vpop.f32.mrf.mxu0
        %v6578 = vadd.f32 %v6495, %v6577
        %v6579 = vpop.f32.mrf.mxu0
        %v6580 = vpop.f32.mrf.mxu0
        %v6581 = vadd.f32 %v6495, %v6580
        %v6582 = vpop.f32.mrf.mxu0
        %6583 = vmatprep.mubr.bf16.mxu0 0
        %6584 = vmatmul.mubr.bf16.gmra.mxu0 %v6519
        %v6585 = vpop.f32.mrf.mxu0
        %v6586 = vadd.f32 %v6495, %v6585
        %v6587 = vpop.f32.mrf.mxu0
        %v6588 = vpop.f32.mrf.mxu0
        %v6589 = vadd.f32 %v6495, %v6588
        %v6590 = vpop.f32.mrf.mxu0
        %6591 = vmatprep.mubr.bf16.mxu0 0
        %6592 = vmatmul.mubr.bf16.gmra.mxu0 %v6522
        %v6593 = vpop.f32.mrf.mxu0
        %v6594 = vadd.f32 %v6495, %v6593
        %v6595 = vpop.f32.mrf.mxu0
        %v6596 = vpop.f32.mrf.mxu0
        %v6597 = vadd.f32 %v6495, %v6596
        %v6598 = vpop.f32.mrf.mxu0
        %6599 = vmatprep.mubr.bf16.mxu0 0
        %6600 = vmatmul.mubr.bf16.gmra.mxu0 %v6525
        %v6601 = vpop.f32.mrf.mxu0
        %v6602 = vadd.f32 %v6495, %v6601
        %v6603 = vpop.f32.mrf.mxu0
        %v6604 = vpop.f32.mrf.mxu0
        %v6605 = vpop.f32.mrf.mxu0
        %6606 = vdwg.mxu0
        %v6607 = vmax.f32 %v6562, 0.0
        %v6608 = vmax.f32 %v6565, 0.0
        %v6609 = vmax.f32 %v6570, 0.0
        %v6610 = vmax.f32 %v6573, 0.0
        %v6611 = vmax.f32 %v6578, 0.0
        %v6612 = vmax.f32 %v6581, 0.0
        %v6613 = vmax.f32 %v6586, 0.0
        %v6614 = vmax.f32 %v6589, 0.0
        %v6615 = vmax.f32 %v6594, 0.0
        %v6616 = vmax.f32 %v6597, 0.0
        %v6617 = vmax.f32 %v6602, 0.0
        %v6629 = vcombine.high %v6607, %v6607
        %v6631 = vunpack.c.l.s4 1966171168
        %v6632 = vunpack.c.0.s8 %v6631
        %v6633 = vlaneseq
        %v6634 = vshrl.u32 %v6633, 7
        %v6635 = vsub.s32 %v6632, %v6634
        %v6636 = vrot.slane %v6607, %v6635
        %v6638 = vunpack.c.l.s4 1966171168
        %v6639 = vunpack.c.0.s8 %v6638
        %v6640 = vlaneseq
        %v6641 = vshrl.u32 %v6640, 7
        %v6642 = vsub.s32 %v6639, %v6641
        %v6643 = vrot.slane %v6629, %v6642
        %v6644 = vcombine.high %v6636, %v6636
        %v6645 = vcombine.high %v6643, %v6643
        %v6647 = vunpack.c.l.s4 1966171168
        %v6648 = vunpack.c.0.s8 %v6647
        %v6649 = vlaneseq
        %v6650 = vshrl.u32 %v6649, 7
        %v6651 = vsub.s32 %v6648, %v6650
        %v6652 = vrot.slane %v6636, %v6651
        %v6654 = vunpack.c.l.s4 1966171168
        %v6655 = vunpack.c.0.s8 %v6654
        %v6656 = vlaneseq
        %v6657 = vshrl.u32 %v6656, 7
        %v6658 = vsub.s32 %v6655, %v6657
        %v6659 = vrot.slane %v6643, %v6658
        %v6661 = vunpack.c.l.s4 1966171168
        %v6662 = vunpack.c.0.s8 %v6661
        %v6663 = vlaneseq
        %v6664 = vshrl.u32 %v6663, 7
        %v6665 = vsub.s32 %v6662, %v6664
        %v6666 = vrot.slane %v6644, %v6665
        %v6668 = vunpack.c.l.s4 1966171168
        %v6669 = vunpack.c.0.s8 %v6668
        %v6670 = vlaneseq
        %v6671 = vshrl.u32 %v6670, 7
        %v6672 = vsub.s32 %v6669, %v6671
        %v6673 = vrot.slane %v6645, %v6672
        %v6674 = vcombine.high %v6652, %v6652
        %v6675 = vcombine.high %v6659, %v6659
        %v6676 = vcombine.high %v6666, %v6666
        %v6677 = vcombine.high %v6673, %v6673
        %v6678 = vcombine.high %v6608, %v6608
        %v6680 = vunpack.c.l.s4 1966171168
        %v6681 = vunpack.c.0.s8 %v6680
        %v6682 = vlaneseq
        %v6683 = vshrl.u32 %v6682, 7
        %v6684 = vsub.s32 %v6681, %v6683
        %v6685 = vrot.slane %v6608, %v6684
        %v6687 = vunpack.c.l.s4 1966171168
        %v6688 = vunpack.c.0.s8 %v6687
        %v6689 = vlaneseq
        %v6690 = vshrl.u32 %v6689, 7
        %v6691 = vsub.s32 %v6688, %v6690
        %v6692 = vrot.slane %v6678, %v6691
        %v6693 = vcombine.high %v6685, %v6685
        %v6694 = vcombine.high %v6692, %v6692
        %v6696 = vunpack.c.l.s4 1966171168
        %v6697 = vunpack.c.0.s8 %v6696
        %v6698 = vlaneseq
        %v6699 = vshrl.u32 %v6698, 7
        %v6700 = vsub.s32 %v6697, %v6699
        %v6701 = vrot.slane %v6685, %v6700
        %v6703 = vunpack.c.l.s4 1966171168
        %v6704 = vunpack.c.0.s8 %v6703
        %v6705 = vlaneseq
        %v6706 = vshrl.u32 %v6705, 7
        %v6707 = vsub.s32 %v6704, %v6706
        %v6708 = vrot.slane %v6692, %v6707
        %v6710 = vunpack.c.l.s4 1966171168
        %v6711 = vunpack.c.0.s8 %v6710
        %v6712 = vlaneseq
        %v6713 = vshrl.u32 %v6712, 7
        %v6714 = vsub.s32 %v6711, %v6713
        %v6715 = vrot.slane %v6693, %v6714
        %v6717 = vunpack.c.l.s4 1966171168
        %v6718 = vunpack.c.0.s8 %v6717
        %v6719 = vlaneseq
        %v6720 = vshrl.u32 %v6719, 7
        %v6721 = vsub.s32 %v6718, %v6720
        %v6722 = vrot.slane %v6694, %v6721
        %v6723 = vcombine.high %v6701, %v6701
        %v6724 = vcombine.high %v6708, %v6708
        %v6725 = vcombine.high %v6715, %v6715
        %v6726 = vcombine.high %v6722, %v6722
        %v6727 = vcombine.high %v6609, %v6609
        %v6729 = vunpack.c.l.s4 1966171168
        %v6730 = vunpack.c.0.s8 %v6729
        %v6731 = vlaneseq
        %v6732 = vshrl.u32 %v6731, 7
        %v6733 = vsub.s32 %v6730, %v6732
        %v6734 = vrot.slane %v6609, %v6733
        %v6736 = vunpack.c.l.s4 1966171168
        %v6737 = vunpack.c.0.s8 %v6736
        %v6738 = vlaneseq
        %v6739 = vshrl.u32 %v6738, 7
        %v6740 = vsub.s32 %v6737, %v6739
        %v6741 = vrot.slane %v6727, %v6740
        %v6742 = vcombine.high %v6734, %v6734
        %v6743 = vcombine.high %v6741, %v6741
        %v6745 = vunpack.c.l.s4 1966171168
        %v6746 = vunpack.c.0.s8 %v6745
        %v6747 = vlaneseq
        %v6748 = vshrl.u32 %v6747, 7
        %v6749 = vsub.s32 %v6746, %v6748
        %v6750 = vrot.slane %v6734, %v6749
        %v6752 = vunpack.c.l.s4 1966171168
        %v6753 = vunpack.c.0.s8 %v6752
        %v6754 = vlaneseq
        %v6755 = vshrl.u32 %v6754, 7
        %v6756 = vsub.s32 %v6753, %v6755
        %v6757 = vrot.slane %v6741, %v6756
        %v6759 = vunpack.c.l.s4 1966171168
        %v6760 = vunpack.c.0.s8 %v6759
        %v6761 = vlaneseq
        %v6762 = vshrl.u32 %v6761, 7
        %v6763 = vsub.s32 %v6760, %v6762
        %v6764 = vrot.slane %v6742, %v6763
        %v6766 = vunpack.c.l.s4 1966171168
        %v6767 = vunpack.c.0.s8 %v6766
        %v6768 = vlaneseq
        %v6769 = vshrl.u32 %v6768, 7
        %v6770 = vsub.s32 %v6767, %v6769
        %v6771 = vrot.slane %v6743, %v6770
        %v6772 = vcombine.high %v6750, %v6750
        %v6773 = vcombine.high %v6757, %v6757
        %v6774 = vcombine.high %v6764, %v6764
        %v6775 = vcombine.high %v6771, %v6771
        %v6776 = vcombine.high %v6610, %v6610
        %v6778 = vunpack.c.l.s4 1966171168
        %v6779 = vunpack.c.0.s8 %v6778
        %v6780 = vlaneseq
        %v6781 = vshrl.u32 %v6780, 7
        %v6782 = vsub.s32 %v6779, %v6781
        %v6783 = vrot.slane %v6610, %v6782
        %v6785 = vunpack.c.l.s4 1966171168
        %v6786 = vunpack.c.0.s8 %v6785
        %v6787 = vlaneseq
        %v6788 = vshrl.u32 %v6787, 7
        %v6789 = vsub.s32 %v6786, %v6788
        %v6790 = vrot.slane %v6776, %v6789
        %v6791 = vcombine.high %v6783, %v6783
        %v6792 = vcombine.high %v6790, %v6790
        %v6794 = vunpack.c.l.s4 1966171168
        %v6795 = vunpack.c.0.s8 %v6794
        %v6796 = vlaneseq
        %v6797 = vshrl.u32 %v6796, 7
        %v6798 = vsub.s32 %v6795, %v6797
        %v6799 = vrot.slane %v6783, %v6798
        %v6801 = vunpack.c.l.s4 1966171168
        %v6802 = vunpack.c.0.s8 %v6801
        %v6803 = vlaneseq
        %v6804 = vshrl.u32 %v6803, 7
        %v6805 = vsub.s32 %v6802, %v6804
        %v6806 = vrot.slane %v6790, %v6805
        %v6808 = vunpack.c.l.s4 1966171168
        %v6809 = vunpack.c.0.s8 %v6808
        %v6810 = vlaneseq
        %v6811 = vshrl.u32 %v6810, 7
        %v6812 = vsub.s32 %v6809, %v6811
        %v6813 = vrot.slane %v6791, %v6812
        %v6815 = vunpack.c.l.s4 1966171168
        %v6816 = vunpack.c.0.s8 %v6815
        %v6817 = vlaneseq
        %v6818 = vshrl.u32 %v6817, 7
        %v6819 = vsub.s32 %v6816, %v6818
        %v6820 = vrot.slane %v6792, %v6819
        %v6821 = vcombine.high %v6799, %v6799
        %v6822 = vcombine.high %v6806, %v6806
        %v6823 = vcombine.high %v6813, %v6813
        %v6824 = vcombine.high %v6820, %v6820
        %v6825 = vcombine.high %v6611, %v6611
        %v6827 = vunpack.c.l.s4 1966171168
        %v6828 = vunpack.c.0.s8 %v6827
        %v6829 = vlaneseq
        %v6830 = vshrl.u32 %v6829, 7
        %v6831 = vsub.s32 %v6828, %v6830
        %v6832 = vrot.slane %v6611, %v6831
        %v6834 = vunpack.c.l.s4 1966171168
        %v6835 = vunpack.c.0.s8 %v6834
        %v6836 = vlaneseq
        %v6837 = vshrl.u32 %v6836, 7
        %v6838 = vsub.s32 %v6835, %v6837
        %v6839 = vrot.slane %v6825, %v6838
        %v6840 = vcombine.high %v6832, %v6832
        %v6841 = vcombine.high %v6839, %v6839
        %v6843 = vunpack.c.l.s4 1966171168
        %v6844 = vunpack.c.0.s8 %v6843
        %v6845 = vlaneseq
        %v6846 = vshrl.u32 %v6845, 7
        %v6847 = vsub.s32 %v6844, %v6846
        %v6848 = vrot.slane %v6832, %v6847
        %v6850 = vunpack.c.l.s4 1966171168
        %v6851 = vunpack.c.0.s8 %v6850
        %v6852 = vlaneseq
        %v6853 = vshrl.u32 %v6852, 7
        %v6854 = vsub.s32 %v6851, %v6853
        %v6855 = vrot.slane %v6839, %v6854
        %v6857 = vunpack.c.l.s4 1966171168
        %v6858 = vunpack.c.0.s8 %v6857
        %v6859 = vlaneseq
        %v6860 = vshrl.u32 %v6859, 7
        %v6861 = vsub.s32 %v6858, %v6860
        %v6862 = vrot.slane %v6840, %v6861
        %v6864 = vunpack.c.l.s4 1966171168
        %v6865 = vunpack.c.0.s8 %v6864
        %v6866 = vlaneseq
        %v6867 = vshrl.u32 %v6866, 7
        %v6868 = vsub.s32 %v6865, %v6867
        %v6869 = vrot.slane %v6841, %v6868
        %v6870 = vcombine.high %v6848, %v6848
        %v6871 = vcombine.high %v6855, %v6855
        %v6872 = vcombine.high %v6862, %v6862
        %v6873 = vcombine.high %v6869, %v6869
        %v6874 = vcombine.high %v6612, %v6612
        %v6876 = vunpack.c.l.s4 1966171168
        %v6877 = vunpack.c.0.s8 %v6876
        %v6878 = vlaneseq
        %v6879 = vshrl.u32 %v6878, 7
        %v6880 = vsub.s32 %v6877, %v6879
        %v6881 = vrot.slane %v6612, %v6880
        %v6883 = vunpack.c.l.s4 1966171168
        %v6884 = vunpack.c.0.s8 %v6883
        %v6885 = vlaneseq
        %v6886 = vshrl.u32 %v6885, 7
        %v6887 = vsub.s32 %v6884, %v6886
        %v6888 = vrot.slane %v6874, %v6887
        %v6889 = vcombine.high %v6881, %v6881
        %v6890 = vcombine.high %v6888, %v6888
        %v6892 = vunpack.c.l.s4 1966171168
        %v6893 = vunpack.c.0.s8 %v6892
        %v6894 = vlaneseq
        %v6895 = vshrl.u32 %v6894, 7
        %v6896 = vsub.s32 %v6893, %v6895
        %v6897 = vrot.slane %v6881, %v6896
        %v6899 = vunpack.c.l.s4 1966171168
        %v6900 = vunpack.c.0.s8 %v6899
        %v6901 = vlaneseq
        %v6902 = vshrl.u32 %v6901, 7
        %v6903 = vsub.s32 %v6900, %v6902
        %v6904 = vrot.slane %v6888, %v6903
        %v6906 = vunpack.c.l.s4 1966171168
        %v6907 = vunpack.c.0.s8 %v6906
        %v6908 = vlaneseq
        %v6909 = vshrl.u32 %v6908, 7
        %v6910 = vsub.s32 %v6907, %v6909
        %v6911 = vrot.slane %v6889, %v6910
        %v6913 = vunpack.c.l.s4 1966171168
        %v6914 = vunpack.c.0.s8 %v6913
        %v6915 = vlaneseq
        %v6916 = vshrl.u32 %v6915, 7
        %v6917 = vsub.s32 %v6914, %v6916
        %v6918 = vrot.slane %v6890, %v6917
        %v6919 = vcombine.high %v6897, %v6897
        %v6920 = vcombine.high %v6904, %v6904
        %v6921 = vcombine.high %v6911, %v6911
        %v6922 = vcombine.high %v6918, %v6918
        %v6923 = vcombine.high %v6613, %v6613
        %v6925 = vunpack.c.l.s4 1966171168
        %v6926 = vunpack.c.0.s8 %v6925
        %v6927 = vlaneseq
        %v6928 = vshrl.u32 %v6927, 7
        %v6929 = vsub.s32 %v6926, %v6928
        %v6930 = vrot.slane %v6613, %v6929
        %v6932 = vunpack.c.l.s4 1966171168
        %v6933 = vunpack.c.0.s8 %v6932
        %v6934 = vlaneseq
        %v6935 = vshrl.u32 %v6934, 7
        %v6936 = vsub.s32 %v6933, %v6935
        %v6937 = vrot.slane %v6923, %v6936
        %v6938 = vcombine.high %v6930, %v6930
        %v6939 = vcombine.high %v6937, %v6937
        %v6941 = vunpack.c.l.s4 1966171168
        %v6942 = vunpack.c.0.s8 %v6941
        %v6943 = vlaneseq
        %v6944 = vshrl.u32 %v6943, 7
        %v6945 = vsub.s32 %v6942, %v6944
        %v6946 = vrot.slane %v6930, %v6945
        %v6948 = vunpack.c.l.s4 1966171168
        %v6949 = vunpack.c.0.s8 %v6948
        %v6950 = vlaneseq
        %v6951 = vshrl.u32 %v6950, 7
        %v6952 = vsub.s32 %v6949, %v6951
        %v6953 = vrot.slane %v6937, %v6952
        %v6955 = vunpack.c.l.s4 1966171168
        %v6956 = vunpack.c.0.s8 %v6955
        %v6957 = vlaneseq
        %v6958 = vshrl.u32 %v6957, 7
        %v6959 = vsub.s32 %v6956, %v6958
        %v6960 = vrot.slane %v6938, %v6959
        %v6962 = vunpack.c.l.s4 1966171168
        %v6963 = vunpack.c.0.s8 %v6962
        %v6964 = vlaneseq
        %v6965 = vshrl.u32 %v6964, 7
        %v6966 = vsub.s32 %v6963, %v6965
        %v6967 = vrot.slane %v6939, %v6966
        %v6968 = vcombine.high %v6946, %v6946
        %v6969 = vcombine.high %v6953, %v6953
        %v6970 = vcombine.high %v6960, %v6960
        %v6971 = vcombine.high %v6967, %v6967
        %v6972 = vcombine.high %v6614, %v6614
        %v6974 = vunpack.c.l.s4 1966171168
        %v6975 = vunpack.c.0.s8 %v6974
        %v6976 = vlaneseq
        %v6977 = vshrl.u32 %v6976, 7
        %v6978 = vsub.s32 %v6975, %v6977
        %v6979 = vrot.slane %v6614, %v6978
        %v6981 = vunpack.c.l.s4 1966171168
        %v6982 = vunpack.c.0.s8 %v6981
        %v6983 = vlaneseq
        %v6984 = vshrl.u32 %v6983, 7
        %v6985 = vsub.s32 %v6982, %v6984
        %v6986 = vrot.slane %v6972, %v6985
        %v6987 = vcombine.high %v6979, %v6979
        %v6988 = vcombine.high %v6986, %v6986
        %v6990 = vunpack.c.l.s4 1966171168
        %v6991 = vunpack.c.0.s8 %v6990
        %v6992 = vlaneseq
        %v6993 = vshrl.u32 %v6992, 7
        %v6994 = vsub.s32 %v6991, %v6993
        %v6995 = vrot.slane %v6979, %v6994
        %v6997 = vunpack.c.l.s4 1966171168
        %v6998 = vunpack.c.0.s8 %v6997
        %v6999 = vlaneseq
        %v7000 = vshrl.u32 %v6999, 7
        %v7001 = vsub.s32 %v6998, %v7000
        %v7002 = vrot.slane %v6986, %v7001
        %v7004 = vunpack.c.l.s4 1966171168
        %v7005 = vunpack.c.0.s8 %v7004
        %v7006 = vlaneseq
        %v7007 = vshrl.u32 %v7006, 7
        %v7008 = vsub.s32 %v7005, %v7007
        %v7009 = vrot.slane %v6987, %v7008
        %v7011 = vunpack.c.l.s4 1966171168
        %v7012 = vunpack.c.0.s8 %v7011
        %v7013 = vlaneseq
        %v7014 = vshrl.u32 %v7013, 7
        %v7015 = vsub.s32 %v7012, %v7014
        %v7016 = vrot.slane %v6988, %v7015
        %v7017 = vcombine.high %v6995, %v6995
        %v7018 = vcombine.high %v7002, %v7002
        %v7019 = vcombine.high %v7009, %v7009
        %v7020 = vcombine.high %v7016, %v7016
        %v7021 = vcombine.high %v6615, %v6615
        %v7023 = vunpack.c.l.s4 1966171168
        %v7024 = vunpack.c.0.s8 %v7023
        %v7025 = vlaneseq
        %v7026 = vshrl.u32 %v7025, 7
        %v7027 = vsub.s32 %v7024, %v7026
        %v7028 = vrot.slane %v6615, %v7027
        %v7030 = vunpack.c.l.s4 1966171168
        %v7031 = vunpack.c.0.s8 %v7030
        %v7032 = vlaneseq
        %v7033 = vshrl.u32 %v7032, 7
        %v7034 = vsub.s32 %v7031, %v7033
        %v7035 = vrot.slane %v7021, %v7034
        %v7036 = vcombine.high %v7028, %v7028
        %v7037 = vcombine.high %v7035, %v7035
        %v7039 = vunpack.c.l.s4 1966171168
        %v7040 = vunpack.c.0.s8 %v7039
        %v7041 = vlaneseq
        %v7042 = vshrl.u32 %v7041, 7
        %v7043 = vsub.s32 %v7040, %v7042
        %v7044 = vrot.slane %v7028, %v7043
        %v7046 = vunpack.c.l.s4 1966171168
        %v7047 = vunpack.c.0.s8 %v7046
        %v7048 = vlaneseq
        %v7049 = vshrl.u32 %v7048, 7
        %v7050 = vsub.s32 %v7047, %v7049
        %v7051 = vrot.slane %v7035, %v7050
        %v7053 = vunpack.c.l.s4 1966171168
        %v7054 = vunpack.c.0.s8 %v7053
        %v7055 = vlaneseq
        %v7056 = vshrl.u32 %v7055, 7
        %v7057 = vsub.s32 %v7054, %v7056
        %v7058 = vrot.slane %v7036, %v7057
        %v7060 = vunpack.c.l.s4 1966171168
        %v7061 = vunpack.c.0.s8 %v7060
        %v7062 = vlaneseq
        %v7063 = vshrl.u32 %v7062, 7
        %v7064 = vsub.s32 %v7061, %v7063
        %v7065 = vrot.slane %v7037, %v7064
        %v7066 = vcombine.high %v7044, %v7044
        %v7067 = vcombine.high %v7051, %v7051
        %v7068 = vcombine.high %v7058, %v7058
        %v7069 = vcombine.high %v7065, %v7065
        %v7070 = vcombine.high %v6616, %v6616
        %v7072 = vunpack.c.l.s4 1966171168
        %v7073 = vunpack.c.0.s8 %v7072
        %v7074 = vlaneseq
        %v7075 = vshrl.u32 %v7074, 7
        %v7076 = vsub.s32 %v7073, %v7075
        %v7077 = vrot.slane %v6616, %v7076
        %v7079 = vunpack.c.l.s4 1966171168
        %v7080 = vunpack.c.0.s8 %v7079
        %v7081 = vlaneseq
        %v7082 = vshrl.u32 %v7081, 7
        %v7083 = vsub.s32 %v7080, %v7082
        %v7084 = vrot.slane %v7070, %v7083
        %v7085 = vcombine.high %v7077, %v7077
        %v7086 = vcombine.high %v7084, %v7084
        %v7088 = vunpack.c.l.s4 1966171168
        %v7089 = vunpack.c.0.s8 %v7088
        %v7090 = vlaneseq
        %v7091 = vshrl.u32 %v7090, 7
        %v7092 = vsub.s32 %v7089, %v7091
        %v7093 = vrot.slane %v7077, %v7092
        %v7095 = vunpack.c.l.s4 1966171168
        %v7096 = vunpack.c.0.s8 %v7095
        %v7097 = vlaneseq
        %v7098 = vshrl.u32 %v7097, 7
        %v7099 = vsub.s32 %v7096, %v7098
        %v7100 = vrot.slane %v7084, %v7099
        %v7102 = vunpack.c.l.s4 1966171168
        %v7103 = vunpack.c.0.s8 %v7102
        %v7104 = vlaneseq
        %v7105 = vshrl.u32 %v7104, 7
        %v7106 = vsub.s32 %v7103, %v7105
        %v7107 = vrot.slane %v7085, %v7106
        %v7109 = vunpack.c.l.s4 1966171168
        %v7110 = vunpack.c.0.s8 %v7109
        %v7111 = vlaneseq
        %v7112 = vshrl.u32 %v7111, 7
        %v7113 = vsub.s32 %v7110, %v7112
        %v7114 = vrot.slane %v7086, %v7113
        %v7115 = vcombine.high %v7093, %v7093
        %v7116 = vcombine.high %v7100, %v7100
        %v7117 = vcombine.high %v7107, %v7107
        %v7118 = vcombine.high %v7114, %v7114
        %v7120 = vunpack.c.l.s4 1966171168
        %v7121 = vunpack.c.0.s8 %v7120
        %v7122 = vlaneseq
        %v7123 = vshrl.u32 %v7122, 7
        %v7124 = vsub.s32 %v7121, %v7123
        %v7125 = vrot.slane %v6617, %v7124
        %v7127 = vunpack.c.l.s4 1966171168
        %v7128 = vunpack.c.0.s8 %v7127
        %v7129 = vlaneseq
        %v7130 = vshrl.u32 %v7129, 7
        %v7131 = vsub.s32 %v7128, %v7130
        %v7132 = vrot.slane %v7125, %v7131
        %v7133 = vcombine.low %v6652, %v6666
        %v7134 = vcombine.low %v6674, %v6676
        %v7135 = vcombine.low %v6659, %v6673
        %v7136 = vcombine.low %v6675, %v6677
        %v7138 = vunpack.c.l.s4 1966171168
        %v7139 = vunpack.c.0.s8 %v7138
        %v7140 = vlaneseq
        %v7141 = vshrl.u32 %v7140, 7
        %v7142 = vsub.s32 %v7139, %v7141
        %v7143 = vrot.slane %v7133, %v7142
        %v7145 = vunpack.c.l.s4 1966171168
        %v7146 = vunpack.c.0.s8 %v7145
        %v7147 = vlaneseq
        %v7148 = vshrl.u32 %v7147, 7
        %v7149 = vsub.s32 %v7146, %v7148
        %v7150 = vrot.slane %v7134, %v7149
        %v7152 = vunpack.c.l.s4 1966171168
        %v7153 = vunpack.c.0.s8 %v7152
        %v7154 = vlaneseq
        %v7155 = vshrl.u32 %v7154, 7
        %v7156 = vsub.s32 %v7153, %v7155
        %v7157 = vrot.slane %v7135, %v7156
        %v7159 = vunpack.c.l.s4 1966171168
        %v7160 = vunpack.c.0.s8 %v7159
        %v7161 = vlaneseq
        %v7162 = vshrl.u32 %v7161, 7
        %v7163 = vsub.s32 %v7160, %v7162
        %v7164 = vrot.slane %v7136, %v7163
        %v7165 = vcombine.low %v7143, %v7150
        %v7166 = vcombine.low %v7157, %v7164
        %v7168 = vunpack.c.l.s4 1966171168
        %v7169 = vunpack.c.0.s8 %v7168
        %v7170 = vlaneseq
        %v7171 = vshrl.u32 %v7170, 7
        %v7172 = vsub.s32 %v7169, %v7171
        %v7173 = vrot.slane %v7165, %v7172
        %v7175 = vunpack.c.l.s4 1966171168
        %v7176 = vunpack.c.0.s8 %v7175
        %v7177 = vlaneseq
        %v7178 = vshrl.u32 %v7177, 7
        %v7179 = vsub.s32 %v7176, %v7178
        %v7180 = vrot.slane %v7166, %v7179
        %v7181 = vcombine.low %v7173, %v7180
        %v7183 = vunpack.c.l.s4 1966171168
        %v7184 = vunpack.c.0.s8 %v7183
        %v7185 = vlaneseq
        %v7186 = vshrl.u32 %v7185, 7
        %v7187 = vsub.s32 %v7184, %v7186
        %v7188 = vrot.slane %v6701, %v7187
        %v7190 = vunpack.c.l.s4 1966171168
        %v7191 = vunpack.c.0.s8 %v7190
        %v7192 = vlaneseq
        %v7193 = vshrl.u32 %v7192, 7
        %v7194 = vsub.s32 %v7191, %v7193
        %v7195 = vrot.slane %v7188, %v7194
        %v7196 = vcombine.low %v6715, %v6723
        %v7197 = vcombine.low %v6725, %v6708
        %v7198 = vcombine.low %v6722, %v6724
        %v7199 = vcombine.low %v6726, %v6750
        %v7201 = vunpack.c.l.s4 1966171168
        %v7202 = vunpack.c.0.s8 %v7201
        %v7203 = vlaneseq
        %v7204 = vshrl.u32 %v7203, 7
        %v7205 = vsub.s32 %v7202, %v7204
        %v7206 = vrot.slane %v7196, %v7205
        %v7208 = vunpack.c.l.s4 1966171168
        %v7209 = vunpack.c.0.s8 %v7208
        %v7210 = vlaneseq
        %v7211 = vshrl.u32 %v7210, 7
        %v7212 = vsub.s32 %v7209, %v7211
        %v7213 = vrot.slane %v7197, %v7212
        %v7215 = vunpack.c.l.s4 1966171168
        %v7216 = vunpack.c.0.s8 %v7215
        %v7217 = vlaneseq
        %v7218 = vshrl.u32 %v7217, 7
        %v7219 = vsub.s32 %v7216, %v7218
        %v7220 = vrot.slane %v7198, %v7219
        %v7222 = vunpack.c.l.s4 1966171168
        %v7223 = vunpack.c.0.s8 %v7222
        %v7224 = vlaneseq
        %v7225 = vshrl.u32 %v7224, 7
        %v7226 = vsub.s32 %v7223, %v7225
        %v7227 = vrot.slane %v7199, %v7226
        %v7228 = vcombine.low %v7206, %v7213
        %v7229 = vcombine.low %v7220, %v7227
        %v7231 = vunpack.c.l.s4 1966171168
        %v7232 = vunpack.c.0.s8 %v7231
        %v7233 = vlaneseq
        %v7234 = vshrl.u32 %v7233, 7
        %v7235 = vsub.s32 %v7232, %v7234
        %v7236 = vrot.slane %v7228, %v7235
        %v7238 = vunpack.c.l.s4 1966171168
        %v7239 = vunpack.c.0.s8 %v7238
        %v7240 = vlaneseq
        %v7241 = vshrl.u32 %v7240, 7
        %v7242 = vsub.s32 %v7239, %v7241
        %v7243 = vrot.slane %v7229, %v7242
        %v7244 = vcombine.low %v7236, %v7243
        %v7246 = vunpack.c.l.s4 1966171168
        %v7247 = vunpack.c.0.s8 %v7246
        %v7248 = vlaneseq
        %v7249 = vshrl.u32 %v7248, 7
        %v7250 = vsub.s32 %v7247, %v7249
        %v7251 = vrot.slane %v6764, %v7250
        %v7253 = vunpack.c.l.s4 1966171168
        %v7254 = vunpack.c.0.s8 %v7253
        %v7255 = vlaneseq
        %v7256 = vshrl.u32 %v7255, 7
        %v7257 = vsub.s32 %v7254, %v7256
        %v7258 = vrot.slane %v7251, %v7257
        %v7259 = vcombine.low %v6772, %v6774
        %v7260 = vcombine.low %v6757, %v6771
        %v7261 = vcombine.low %v6773, %v6775
        %v7262 = vcombine.low %v6799, %v6813
        %v7264 = vunpack.c.l.s4 1966171168
        %v7265 = vunpack.c.0.s8 %v7264
        %v7266 = vlaneseq
        %v7267 = vshrl.u32 %v7266, 7
        %v7268 = vsub.s32 %v7265, %v7267
        %v7269 = vrot.slane %v7259, %v7268
        %v7271 = vunpack.c.l.s4 1966171168
        %v7272 = vunpack.c.0.s8 %v7271
        %v7273 = vlaneseq
        %v7274 = vshrl.u32 %v7273, 7
        %v7275 = vsub.s32 %v7272, %v7274
        %v7276 = vrot.slane %v7260, %v7275
        %v7278 = vunpack.c.l.s4 1966171168
        %v7279 = vunpack.c.0.s8 %v7278
        %v7280 = vlaneseq
        %v7281 = vshrl.u32 %v7280, 7
        %v7282 = vsub.s32 %v7279, %v7281
        %v7283 = vrot.slane %v7261, %v7282
        %v7285 = vunpack.c.l.s4 1966171168
        %v7286 = vunpack.c.0.s8 %v7285
        %v7287 = vlaneseq
        %v7288 = vshrl.u32 %v7287, 7
        %v7289 = vsub.s32 %v7286, %v7288
        %v7290 = vrot.slane %v7262, %v7289
        %v7291 = vcombine.low %v7269, %v7276
        %v7292 = vcombine.low %v7283, %v7290
        %v7294 = vunpack.c.l.s4 1966171168
        %v7295 = vunpack.c.0.s8 %v7294
        %v7296 = vlaneseq
        %v7297 = vshrl.u32 %v7296, 7
        %v7298 = vsub.s32 %v7295, %v7297
        %v7299 = vrot.slane %v7291, %v7298
        %v7301 = vunpack.c.l.s4 1966171168
        %v7302 = vunpack.c.0.s8 %v7301
        %v7303 = vlaneseq
        %v7304 = vshrl.u32 %v7303, 7
        %v7305 = vsub.s32 %v7302, %v7304
        %v7306 = vrot.slane %v7292, %v7305
        %v7307 = vcombine.low %v7299, %v7306
        %v7309 = vunpack.c.l.s4 1966171168
        %v7310 = vunpack.c.0.s8 %v7309
        %v7311 = vlaneseq
        %v7312 = vshrl.u32 %v7311, 7
        %v7313 = vsub.s32 %v7310, %v7312
        %v7314 = vrot.slane %v6821, %v7313
        %v7316 = vunpack.c.l.s4 1966171168
        %v7317 = vunpack.c.0.s8 %v7316
        %v7318 = vlaneseq
        %v7319 = vshrl.u32 %v7318, 7
        %v7320 = vsub.s32 %v7317, %v7319
        %v7321 = vrot.slane %v7314, %v7320
        %v7322 = vcombine.low %v6823, %v6806
        %v7323 = vcombine.low %v6820, %v6822
        %v7324 = vcombine.low %v6824, %v6848
        %v7325 = vcombine.low %v6862, %v6870
        %v7327 = vunpack.c.l.s4 1966171168
        %v7328 = vunpack.c.0.s8 %v7327
        %v7329 = vlaneseq
        %v7330 = vshrl.u32 %v7329, 7
        %v7331 = vsub.s32 %v7328, %v7330
        %v7332 = vrot.slane %v7322, %v7331
        %v7334 = vunpack.c.l.s4 1966171168
        %v7335 = vunpack.c.0.s8 %v7334
        %v7336 = vlaneseq
        %v7337 = vshrl.u32 %v7336, 7
        %v7338 = vsub.s32 %v7335, %v7337
        %v7339 = vrot.slane %v7323, %v7338
        %v7341 = vunpack.c.l.s4 1966171168
        %v7342 = vunpack.c.0.s8 %v7341
        %v7343 = vlaneseq
        %v7344 = vshrl.u32 %v7343, 7
        %v7345 = vsub.s32 %v7342, %v7344
        %v7346 = vrot.slane %v7324, %v7345
        %v7348 = vunpack.c.l.s4 1966171168
        %v7349 = vunpack.c.0.s8 %v7348
        %v7350 = vlaneseq
        %v7351 = vshrl.u32 %v7350, 7
        %v7352 = vsub.s32 %v7349, %v7351
        %v7353 = vrot.slane %v7325, %v7352
        %v7354 = vcombine.low %v7332, %v7339
        %v7355 = vcombine.low %v7346, %v7353
        %v7357 = vunpack.c.l.s4 1966171168
        %v7358 = vunpack.c.0.s8 %v7357
        %v7359 = vlaneseq
        %v7360 = vshrl.u32 %v7359, 7
        %v7361 = vsub.s32 %v7358, %v7360
        %v7362 = vrot.slane %v7354, %v7361
        %v7364 = vunpack.c.l.s4 1966171168
        %v7365 = vunpack.c.0.s8 %v7364
        %v7366 = vlaneseq
        %v7367 = vshrl.u32 %v7366, 7
        %v7368 = vsub.s32 %v7365, %v7367
        %v7369 = vrot.slane %v7355, %v7368
        %v7370 = vcombine.low %v7362, %v7369
        %v7372 = vunpack.c.l.s4 1966171168
        %v7373 = vunpack.c.0.s8 %v7372
        %v7374 = vlaneseq
        %v7375 = vshrl.u32 %v7374, 7
        %v7376 = vsub.s32 %v7373, %v7375
        %v7377 = vrot.slane %v6872, %v7376
        %v7379 = vunpack.c.l.s4 1966171168
        %v7380 = vunpack.c.0.s8 %v7379
        %v7381 = vlaneseq
        %v7382 = vshrl.u32 %v7381, 7
        %v7383 = vsub.s32 %v7380, %v7382
        %v7384 = vrot.slane %v7377, %v7383
        %v7385 = vcombine.low %v6855, %v6869
        %v7386 = vcombine.low %v6871, %v6873
        %v7387 = vcombine.low %v6897, %v6911
        %v7388 = vcombine.low %v6919, %v6921
        %v7390 = vunpack.c.l.s4 1966171168
        %v7391 = vunpack.c.0.s8 %v7390
        %v7392 = vlaneseq
        %v7393 = vshrl.u32 %v7392, 7
        %v7394 = vsub.s32 %v7391, %v7393
        %v7395 = vrot.slane %v7385, %v7394
        %v7397 = vunpack.c.l.s4 1966171168
        %v7398 = vunpack.c.0.s8 %v7397
        %v7399 = vlaneseq
        %v7400 = vshrl.u32 %v7399, 7
        %v7401 = vsub.s32 %v7398, %v7400
        %v7402 = vrot.slane %v7386, %v7401
        %v7404 = vunpack.c.l.s4 1966171168
        %v7405 = vunpack.c.0.s8 %v7404
        %v7406 = vlaneseq
        %v7407 = vshrl.u32 %v7406, 7
        %v7408 = vsub.s32 %v7405, %v7407
        %v7409 = vrot.slane %v7387, %v7408
        %v7411 = vunpack.c.l.s4 1966171168
        %v7412 = vunpack.c.0.s8 %v7411
        %v7413 = vlaneseq
        %v7414 = vshrl.u32 %v7413, 7
        %v7415 = vsub.s32 %v7412, %v7414
        %v7416 = vrot.slane %v7388, %v7415
        %v7417 = vcombine.low %v7395, %v7402
        %v7418 = vcombine.low %v7409, %v7416
        %v7420 = vunpack.c.l.s4 1966171168
        %v7421 = vunpack.c.0.s8 %v7420
        %v7422 = vlaneseq
        %v7423 = vshrl.u32 %v7422, 7
        %v7424 = vsub.s32 %v7421, %v7423
        %v7425 = vrot.slane %v7417, %v7424
        %v7427 = vunpack.c.l.s4 1966171168
        %v7428 = vunpack.c.0.s8 %v7427
        %v7429 = vlaneseq
        %v7430 = vshrl.u32 %v7429, 7
        %v7431 = vsub.s32 %v7428, %v7430
        %v7432 = vrot.slane %v7418, %v7431
        %v7433 = vcombine.low %v7425, %v7432
        %v7435 = vunpack.c.l.s4 1966171168
        %v7436 = vunpack.c.0.s8 %v7435
        %v7437 = vlaneseq
        %v7438 = vshrl.u32 %v7437, 7
        %v7439 = vsub.s32 %v7436, %v7438
        %v7440 = vrot.slane %v6904, %v7439
        %v7442 = vunpack.c.l.s4 1966171168
        %v7443 = vunpack.c.0.s8 %v7442
        %v7444 = vlaneseq
        %v7445 = vshrl.u32 %v7444, 7
        %v7446 = vsub.s32 %v7443, %v7445
        %v7447 = vrot.slane %v7440, %v7446
        %v7448 = vcombine.low %v6918, %v6920
        %v7449 = vcombine.low %v6922, %v6946
        %v7450 = vcombine.low %v6960, %v6968
        %v7451 = vcombine.low %v6970, %v6953
        %v7453 = vunpack.c.l.s4 1966171168
        %v7454 = vunpack.c.0.s8 %v7453
        %v7455 = vlaneseq
        %v7456 = vshrl.u32 %v7455, 7
        %v7457 = vsub.s32 %v7454, %v7456
        %v7458 = vrot.slane %v7448, %v7457
        %v7460 = vunpack.c.l.s4 1966171168
        %v7461 = vunpack.c.0.s8 %v7460
        %v7462 = vlaneseq
        %v7463 = vshrl.u32 %v7462, 7
        %v7464 = vsub.s32 %v7461, %v7463
        %v7465 = vrot.slane %v7449, %v7464
        %v7467 = vunpack.c.l.s4 1966171168
        %v7468 = vunpack.c.0.s8 %v7467
        %v7469 = vlaneseq
        %v7470 = vshrl.u32 %v7469, 7
        %v7471 = vsub.s32 %v7468, %v7470
        %v7472 = vrot.slane %v7450, %v7471
        %v7474 = vunpack.c.l.s4 1966171168
        %v7475 = vunpack.c.0.s8 %v7474
        %v7476 = vlaneseq
        %v7477 = vshrl.u32 %v7476, 7
        %v7478 = vsub.s32 %v7475, %v7477
        %v7479 = vrot.slane %v7451, %v7478
        %v7480 = vcombine.low %v7458, %v7465
        %v7481 = vcombine.low %v7472, %v7479
        %v7483 = vunpack.c.l.s4 1966171168
        %v7484 = vunpack.c.0.s8 %v7483
        %v7485 = vlaneseq
        %v7486 = vshrl.u32 %v7485, 7
        %v7487 = vsub.s32 %v7484, %v7486
        %v7488 = vrot.slane %v7480, %v7487
        %v7490 = vunpack.c.l.s4 1966171168
        %v7491 = vunpack.c.0.s8 %v7490
        %v7492 = vlaneseq
        %v7493 = vshrl.u32 %v7492, 7
        %v7494 = vsub.s32 %v7491, %v7493
        %v7495 = vrot.slane %v7481, %v7494
        %v7496 = vcombine.low %v7488, %v7495
        %v7498 = vunpack.c.l.s4 1966171168
        %v7499 = vunpack.c.0.s8 %v7498
        %v7500 = vlaneseq
        %v7501 = vshrl.u32 %v7500, 7
        %v7502 = vsub.s32 %v7499, %v7501
        %v7503 = vrot.slane %v6967, %v7502
        %v7505 = vunpack.c.l.s4 1966171168
        %v7506 = vunpack.c.0.s8 %v7505
        %v7507 = vlaneseq
        %v7508 = vshrl.u32 %v7507, 7
        %v7509 = vsub.s32 %v7506, %v7508
        %v7510 = vrot.slane %v7503, %v7509
        %v7511 = vcombine.low %v6969, %v6971
        %v7512 = vcombine.low %v6995, %v7009
        %v7513 = vcombine.low %v7017, %v7019
        %v7514 = vcombine.low %v7002, %v7016
        %v7516 = vunpack.c.l.s4 1966171168
        %v7517 = vunpack.c.0.s8 %v7516
        %v7518 = vlaneseq
        %v7519 = vshrl.u32 %v7518, 7
        %v7520 = vsub.s32 %v7517, %v7519
        %v7521 = vrot.slane %v7511, %v7520
        %v7523 = vunpack.c.l.s4 1966171168
        %v7524 = vunpack.c.0.s8 %v7523
        %v7525 = vlaneseq
        %v7526 = vshrl.u32 %v7525, 7
        %v7527 = vsub.s32 %v7524, %v7526
        %v7528 = vrot.slane %v7512, %v7527
        %v7530 = vunpack.c.l.s4 1966171168
        %v7531 = vunpack.c.0.s8 %v7530
        %v7532 = vlaneseq
        %v7533 = vshrl.u32 %v7532, 7
        %v7534 = vsub.s32 %v7531, %v7533
        %v7535 = vrot.slane %v7513, %v7534
        %v7537 = vunpack.c.l.s4 1966171168
        %v7538 = vunpack.c.0.s8 %v7537
        %v7539 = vlaneseq
        %v7540 = vshrl.u32 %v7539, 7
        %v7541 = vsub.s32 %v7538, %v7540
        %v7542 = vrot.slane %v7514, %v7541
        %v7543 = vcombine.low %v7521, %v7528
        %v7544 = vcombine.low %v7535, %v7542
        %v7546 = vunpack.c.l.s4 1966171168
        %v7547 = vunpack.c.0.s8 %v7546
        %v7548 = vlaneseq
        %v7549 = vshrl.u32 %v7548, 7
        %v7550 = vsub.s32 %v7547, %v7549
        %v7551 = vrot.slane %v7543, %v7550
        %v7553 = vunpack.c.l.s4 1966171168
        %v7554 = vunpack.c.0.s8 %v7553
        %v7555 = vlaneseq
        %v7556 = vshrl.u32 %v7555, 7
        %v7557 = vsub.s32 %v7554, %v7556
        %v7558 = vrot.slane %v7544, %v7557
        %v7559 = vcombine.low %v7551, %v7558
        %v7561 = vunpack.c.l.s4 1966171168
        %v7562 = vunpack.c.0.s8 %v7561
        %v7563 = vlaneseq
        %v7564 = vshrl.u32 %v7563, 7
        %v7565 = vsub.s32 %v7562, %v7564
        %v7566 = vrot.slane %v7018, %v7565
        %v7568 = vunpack.c.l.s4 1966171168
        %v7569 = vunpack.c.0.s8 %v7568
        %v7570 = vlaneseq
        %v7571 = vshrl.u32 %v7570, 7
        %v7572 = vsub.s32 %v7569, %v7571
        %v7573 = vrot.slane %v7566, %v7572
        %v7574 = vcombine.low %v7020, %v7044
        %v7575 = vcombine.low %v7058, %v7066
        %v7576 = vcombine.low %v7068, %v7051
        %v7577 = vcombine.low %v7065, %v7067
        %v7579 = vunpack.c.l.s4 1966171168
        %v7580 = vunpack.c.0.s8 %v7579
        %v7581 = vlaneseq
        %v7582 = vshrl.u32 %v7581, 7
        %v7583 = vsub.s32 %v7580, %v7582
        %v7584 = vrot.slane %v7574, %v7583
        %v7586 = vunpack.c.l.s4 1966171168
        %v7587 = vunpack.c.0.s8 %v7586
        %v7588 = vlaneseq
        %v7589 = vshrl.u32 %v7588, 7
        %v7590 = vsub.s32 %v7587, %v7589
        %v7591 = vrot.slane %v7575, %v7590
        %v7593 = vunpack.c.l.s4 1966171168
        %v7594 = vunpack.c.0.s8 %v7593
        %v7595 = vlaneseq
        %v7596 = vshrl.u32 %v7595, 7
        %v7597 = vsub.s32 %v7594, %v7596
        %v7598 = vrot.slane %v7576, %v7597
        %v7600 = vunpack.c.l.s4 1966171168
        %v7601 = vunpack.c.0.s8 %v7600
        %v7602 = vlaneseq
        %v7603 = vshrl.u32 %v7602, 7
        %v7604 = vsub.s32 %v7601, %v7603
        %v7605 = vrot.slane %v7577, %v7604
        %v7606 = vcombine.low %v7584, %v7591
        %v7607 = vcombine.low %v7598, %v7605
        %v7609 = vunpack.c.l.s4 1966171168
        %v7610 = vunpack.c.0.s8 %v7609
        %v7611 = vlaneseq
        %v7612 = vshrl.u32 %v7611, 7
        %v7613 = vsub.s32 %v7610, %v7612
        %v7614 = vrot.slane %v7606, %v7613
        %v7616 = vunpack.c.l.s4 1966171168
        %v7617 = vunpack.c.0.s8 %v7616
        %v7618 = vlaneseq
        %v7619 = vshrl.u32 %v7618, 7
        %v7620 = vsub.s32 %v7617, %v7619
        %v7621 = vrot.slane %v7607, %v7620
        %v7622 = vcombine.low %v7614, %v7621
        %v7624 = vunpack.c.l.s4 1966171168
        %v7625 = vunpack.c.0.s8 %v7624
        %v7626 = vlaneseq
        %v7627 = vshrl.u32 %v7626, 7
        %v7628 = vsub.s32 %v7625, %v7627
        %v7629 = vrot.slane %v7069, %v7628
        %v7631 = vunpack.c.l.s4 1966171168
        %v7632 = vunpack.c.0.s8 %v7631
        %v7633 = vlaneseq
        %v7634 = vshrl.u32 %v7633, 7
        %v7635 = vsub.s32 %v7632, %v7634
        %v7636 = vrot.slane %v7629, %v7635
        %v7637 = vcombine.low %v7093, %v7107
        %v7638 = vcombine.low %v7115, %v7117
        %v7639 = vcombine.low %v7100, %v7114
        %v7640 = vcombine.low %v7116, %v7118
        %v7642 = vunpack.c.l.s4 1966171168
        %v7643 = vunpack.c.0.s8 %v7642
        %v7644 = vlaneseq
        %v7645 = vshrl.u32 %v7644, 7
        %v7646 = vsub.s32 %v7643, %v7645
        %v7647 = vrot.slane %v7637, %v7646
        %v7649 = vunpack.c.l.s4 1966171168
        %v7650 = vunpack.c.0.s8 %v7649
        %v7651 = vlaneseq
        %v7652 = vshrl.u32 %v7651, 7
        %v7653 = vsub.s32 %v7650, %v7652
        %v7654 = vrot.slane %v7638, %v7653
        %v7656 = vunpack.c.l.s4 1966171168
        %v7657 = vunpack.c.0.s8 %v7656
        %v7658 = vlaneseq
        %v7659 = vshrl.u32 %v7658, 7
        %v7660 = vsub.s32 %v7657, %v7659
        %v7661 = vrot.slane %v7639, %v7660
        %v7663 = vunpack.c.l.s4 1966171168
        %v7664 = vunpack.c.0.s8 %v7663
        %v7665 = vlaneseq
        %v7666 = vshrl.u32 %v7665, 7
        %v7667 = vsub.s32 %v7664, %v7666
        %v7668 = vrot.slane %v7640, %v7667
        %v7669 = vcombine.low %v7647, %v7654
        %v7670 = vcombine.low %v7661, %v7668
        %v7672 = vunpack.c.l.s4 1966171168
        %v7673 = vunpack.c.0.s8 %v7672
        %v7674 = vlaneseq
        %v7675 = vshrl.u32 %v7674, 7
        %v7676 = vsub.s32 %v7673, %v7675
        %v7677 = vrot.slane %v7669, %v7676
        %v7679 = vunpack.c.l.s4 1966171168
        %v7680 = vunpack.c.0.s8 %v7679
        %v7681 = vlaneseq
        %v7682 = vshrl.u32 %v7681, 7
        %v7683 = vsub.s32 %v7680, %v7682
        %v7684 = vrot.slane %v7670, %v7683
        %v7685 = vcombine.low %v7677, %v7684
        %v7687 = vunpack.c.l.s4 1966171168
        %v7688 = vunpack.c.0.s8 %v7687
        %v7689 = vlaneseq
        %v7690 = vshrl.u32 %v7689, 7
        %v7691 = vsub.s32 %v7688, %v7690
        %v7692 = vrot.slane %v7132, %v7691
        %v7694 = vunpack.c.l.s4 1966171168
        %v7695 = vunpack.c.0.s8 %v7694
        %v7696 = vlaneseq
        %v7697 = vshrl.u32 %v7696, 7
        %v7698 = vsub.s32 %v7695, %v7697
        %v7699 = vrot.slane %v7692, %v7698
        %v7718 = vsel %vm2368, %v7181, 0.0
        %v7719 = vsel %vm2369, %v7195, 0.0
        %v7720 = vsel %vm2368, %v7244, 0.0
        %v7721 = vsel %vm2369, %v7258, 0.0
        %v7722 = vsel %vm2368, %v7307, 0.0
        %v7723 = vsel %vm2369, %v7321, 0.0
        %v7724 = vsel %vm2368, %v7370, 0.0
        %v7725 = vsel %vm2369, %v7384, 0.0
        %v7726 = vsel %vm2368, %v7433, 0.0
        %v7727 = vsel %vm2369, %v7447, 0.0
        %v7728 = vsel %vm2368, %v7496, 0.0
        %v7729 = vsel %vm2369, %v7510, 0.0
        %v7730 = vsel %vm2368, %v7559, 0.0
        %v7731 = vsel %vm2369, %v7573, 0.0
        %v7732 = vsel %vm2368, %v7622, 0.0
        %v7733 = vsel %vm2369, %v7636, 0.0
        %v7734 = vsel %vm2366, %v7685, 0.0
        %v7735 = vsel %vm2367, %v7699, 0.0
        %7736 = vst.msk [vmem:[#allocation4] sm:$0xff] %vm1731, %v7718
        %7737 = vst.msk [vmem:[#allocation4 + $0x8] sm:$0x1] %vm2974, %v7719
        %7738 = vst.msk [vmem:[#allocation4 + $0x10] sm:$0xff] %vm1731, %v7720
        %7739 = vst.msk [vmem:[#allocation4 + $0x18] sm:$0x1] %vm2974, %v7721
        %7740 = vst.msk [vmem:[#allocation4 + $0x20] sm:$0xff] %vm1731, %v7722
        %7741 = vst.msk [vmem:[#allocation4 + $0x28] sm:$0x1] %vm2974, %v7723
        %7742 = vst.msk [vmem:[#allocation4 + $0x30] sm:$0xff] %vm1731, %v7724
        %7743 = vst.msk [vmem:[#allocation4 + $0x38] sm:$0x1] %vm2974, %v7725
        %7744 = vst.msk [vmem:[#allocation4 + $0x40] sm:$0xff] %vm1731, %v7726
        %7745 = vst.msk [vmem:[#allocation4 + $0x48] sm:$0x1] %vm2974, %v7727
        %7746 = vst.msk [vmem:[#allocation4 + $0x50] sm:$0xff] %vm1731, %v7728
        %7747 = vst.msk [vmem:[#allocation4 + $0x58] sm:$0x1] %vm2974, %v7729
        %7748 = vst.msk [vmem:[#allocation4 + $0x60] sm:$0xff] %vm1731, %v7730
        %7749 = vst.msk [vmem:[#allocation4 + $0x68] sm:$0x1] %vm2974, %v7731
        %7750 = vst.msk [vmem:[#allocation4 + $0x70] sm:$0xff] %vm1731, %v7732
        %7751 = vst.msk [vmem:[#allocation4 + $0x78] sm:$0x1] %vm2974, %v7733
        %7752 = vst.msk [vmem:[#allocation4 + $0x80] sm:$0xff] %vm1731, %v7734
        %7753 = vst.msk [vmem:[#allocation4 + $0x88] sm:$0x1] %vm2974, %v7735
        %v7772 = vcombine.high %v584, %v584
        %v7774 = vunpack.c.l.s4 1966171168
        %v7775 = vunpack.c.0.s8 %v7774
        %v7776 = vlaneseq
        %v7777 = vshrl.u32 %v7776, 7
        %v7778 = vsub.s32 %v7775, %v7777
        %v7779 = vrot.slane %v584, %v7778
        %v7781 = vunpack.c.l.s4 1966171168
        %v7782 = vunpack.c.0.s8 %v7781
        %v7783 = vlaneseq
        %v7784 = vshrl.u32 %v7783, 7
        %v7785 = vsub.s32 %v7782, %v7784
        %v7786 = vrot.slane %v7772, %v7785
        %v7787 = vcombine.high %v7779, %v7779
        %v7788 = vcombine.high %v7786, %v7786
        %v7790 = vunpack.c.l.s4 1966171168
        %v7791 = vunpack.c.0.s8 %v7790
        %v7792 = vlaneseq
        %v7793 = vshrl.u32 %v7792, 7
        %v7794 = vsub.s32 %v7791, %v7793
        %v7795 = vrot.slane %v7779, %v7794
        %v7797 = vunpack.c.l.s4 1966171168
        %v7798 = vunpack.c.0.s8 %v7797
        %v7799 = vlaneseq
        %v7800 = vshrl.u32 %v7799, 7
        %v7801 = vsub.s32 %v7798, %v7800
        %v7802 = vrot.slane %v7786, %v7801
        %v7804 = vunpack.c.l.s4 1966171168
        %v7805 = vunpack.c.0.s8 %v7804
        %v7806 = vlaneseq
        %v7807 = vshrl.u32 %v7806, 7
        %v7808 = vsub.s32 %v7805, %v7807
        %v7809 = vrot.slane %v7787, %v7808
        %v7811 = vunpack.c.l.s4 1966171168
        %v7812 = vunpack.c.0.s8 %v7811
        %v7813 = vlaneseq
        %v7814 = vshrl.u32 %v7813, 7
        %v7815 = vsub.s32 %v7812, %v7814
        %v7816 = vrot.slane %v7788, %v7815
        %v7817 = vcombine.high %v7795, %v7795
        %v7818 = vcombine.high %v7802, %v7802
        %v7819 = vcombine.high %v7809, %v7809
        %v7820 = vcombine.high %v7816, %v7816
        %v7822 = vunpack.c.l.s4 1966171168
        %v7823 = vunpack.c.0.s8 %v7822
        %v7824 = vlaneseq
        %v7825 = vshrl.u32 %v7824, 7
        %v7826 = vsub.s32 %v7823, %v7825
        %v7827 = vrot.slane %v585, %v7826
        %v7829 = vunpack.c.l.s4 1966171168
        %v7830 = vunpack.c.0.s8 %v7829
        %v7831 = vlaneseq
        %v7832 = vshrl.u32 %v7831, 7
        %v7833 = vsub.s32 %v7830, %v7832
        %v7834 = vrot.slane %v7827, %v7833
        %v7835 = vcombine.high %v586, %v586
        %v7837 = vunpack.c.l.s4 1966171168
        %v7838 = vunpack.c.0.s8 %v7837
        %v7839 = vlaneseq
        %v7840 = vshrl.u32 %v7839, 7
        %v7841 = vsub.s32 %v7838, %v7840
        %v7842 = vrot.slane %v586, %v7841
        %v7844 = vunpack.c.l.s4 1966171168
        %v7845 = vunpack.c.0.s8 %v7844
        %v7846 = vlaneseq
        %v7847 = vshrl.u32 %v7846, 7
        %v7848 = vsub.s32 %v7845, %v7847
        %v7849 = vrot.slane %v7835, %v7848
        %v7850 = vcombine.high %v7842, %v7842
        %v7851 = vcombine.high %v7849, %v7849
        %v7853 = vunpack.c.l.s4 1966171168
        %v7854 = vunpack.c.0.s8 %v7853
        %v7855 = vlaneseq
        %v7856 = vshrl.u32 %v7855, 7
        %v7857 = vsub.s32 %v7854, %v7856
        %v7858 = vrot.slane %v7842, %v7857
        %v7860 = vunpack.c.l.s4 1966171168
        %v7861 = vunpack.c.0.s8 %v7860
        %v7862 = vlaneseq
        %v7863 = vshrl.u32 %v7862, 7
        %v7864 = vsub.s32 %v7861, %v7863
        %v7865 = vrot.slane %v7849, %v7864
        %v7867 = vunpack.c.l.s4 1966171168
        %v7868 = vunpack.c.0.s8 %v7867
        %v7869 = vlaneseq
        %v7870 = vshrl.u32 %v7869, 7
        %v7871 = vsub.s32 %v7868, %v7870
        %v7872 = vrot.slane %v7850, %v7871
        %v7874 = vunpack.c.l.s4 1966171168
        %v7875 = vunpack.c.0.s8 %v7874
        %v7876 = vlaneseq
        %v7877 = vshrl.u32 %v7876, 7
        %v7878 = vsub.s32 %v7875, %v7877
        %v7879 = vrot.slane %v7851, %v7878
        %v7880 = vcombine.high %v7858, %v7858
        %v7881 = vcombine.high %v7865, %v7865
        %v7882 = vcombine.high %v7872, %v7872
        %v7883 = vcombine.high %v7879, %v7879
        %v7885 = vunpack.c.l.s4 1966171168
        %v7886 = vunpack.c.0.s8 %v7885
        %v7887 = vlaneseq
        %v7888 = vshrl.u32 %v7887, 7
        %v7889 = vsub.s32 %v7886, %v7888
        %v7890 = vrot.slane %v587, %v7889
        %v7892 = vunpack.c.l.s4 1966171168
        %v7893 = vunpack.c.0.s8 %v7892
        %v7894 = vlaneseq
        %v7895 = vshrl.u32 %v7894, 7
        %v7896 = vsub.s32 %v7893, %v7895
        %v7897 = vrot.slane %v7890, %v7896
        %v7898 = vcombine.high %v588, %v588
        %v7900 = vunpack.c.l.s4 1966171168
        %v7901 = vunpack.c.0.s8 %v7900
        %v7902 = vlaneseq
        %v7903 = vshrl.u32 %v7902, 7
        %v7904 = vsub.s32 %v7901, %v7903
        %v7905 = vrot.slane %v588, %v7904
        %v7907 = vunpack.c.l.s4 1966171168
        %v7908 = vunpack.c.0.s8 %v7907
        %v7909 = vlaneseq
        %v7910 = vshrl.u32 %v7909, 7
        %v7911 = vsub.s32 %v7908, %v7910
        %v7912 = vrot.slane %v7898, %v7911
        %v7913 = vcombine.high %v7905, %v7905
        %v7914 = vcombine.high %v7912, %v7912
        %v7916 = vunpack.c.l.s4 1966171168
        %v7917 = vunpack.c.0.s8 %v7916
        %v7918 = vlaneseq
        %v7919 = vshrl.u32 %v7918, 7
        %v7920 = vsub.s32 %v7917, %v7919
        %v7921 = vrot.slane %v7905, %v7920
        %v7923 = vunpack.c.l.s4 1966171168
        %v7924 = vunpack.c.0.s8 %v7923
        %v7925 = vlaneseq
        %v7926 = vshrl.u32 %v7925, 7
        %v7927 = vsub.s32 %v7924, %v7926
        %v7928 = vrot.slane %v7912, %v7927
        %v7930 = vunpack.c.l.s4 1966171168
        %v7931 = vunpack.c.0.s8 %v7930
        %v7932 = vlaneseq
        %v7933 = vshrl.u32 %v7932, 7
        %v7934 = vsub.s32 %v7931, %v7933
        %v7935 = vrot.slane %v7913, %v7934
        %v7937 = vunpack.c.l.s4 1966171168
        %v7938 = vunpack.c.0.s8 %v7937
        %v7939 = vlaneseq
        %v7940 = vshrl.u32 %v7939, 7
        %v7941 = vsub.s32 %v7938, %v7940
        %v7942 = vrot.slane %v7914, %v7941
        %v7943 = vcombine.high %v7921, %v7921
        %v7944 = vcombine.high %v7928, %v7928
        %v7945 = vcombine.high %v7935, %v7935
        %v7946 = vcombine.high %v7942, %v7942
        %v7948 = vunpack.c.l.s4 1966171168
        %v7949 = vunpack.c.0.s8 %v7948
        %v7950 = vlaneseq
        %v7951 = vshrl.u32 %v7950, 7
        %v7952 = vsub.s32 %v7949, %v7951
        %v7953 = vrot.slane %v589, %v7952
        %v7955 = vunpack.c.l.s4 1966171168
        %v7956 = vunpack.c.0.s8 %v7955
        %v7957 = vlaneseq
        %v7958 = vshrl.u32 %v7957, 7
        %v7959 = vsub.s32 %v7956, %v7958
        %v7960 = vrot.slane %v7953, %v7959
        %v7961 = vcombine.high %v590, %v590
        %v7963 = vunpack.c.l.s4 1966171168
        %v7964 = vunpack.c.0.s8 %v7963
        %v7965 = vlaneseq
        %v7966 = vshrl.u32 %v7965, 7
        %v7967 = vsub.s32 %v7964, %v7966
        %v7968 = vrot.slane %v590, %v7967
        %v7970 = vunpack.c.l.s4 1966171168
        %v7971 = vunpack.c.0.s8 %v7970
        %v7972 = vlaneseq
        %v7973 = vshrl.u32 %v7972, 7
        %v7974 = vsub.s32 %v7971, %v7973
        %v7975 = vrot.slane %v7961, %v7974
        %v7976 = vcombine.high %v7968, %v7968
        %v7977 = vcombine.high %v7975, %v7975
        %v7979 = vunpack.c.l.s4 1966171168
        %v7980 = vunpack.c.0.s8 %v7979
        %v7981 = vlaneseq
        %v7982 = vshrl.u32 %v7981, 7
        %v7983 = vsub.s32 %v7980, %v7982
        %v7984 = vrot.slane %v7968, %v7983
        %v7986 = vunpack.c.l.s4 1966171168
        %v7987 = vunpack.c.0.s8 %v7986
        %v7988 = vlaneseq
        %v7989 = vshrl.u32 %v7988, 7
        %v7990 = vsub.s32 %v7987, %v7989
        %v7991 = vrot.slane %v7975, %v7990
        %v7993 = vunpack.c.l.s4 1966171168
        %v7994 = vunpack.c.0.s8 %v7993
        %v7995 = vlaneseq
        %v7996 = vshrl.u32 %v7995, 7
        %v7997 = vsub.s32 %v7994, %v7996
        %v7998 = vrot.slane %v7976, %v7997
        %v8000 = vunpack.c.l.s4 1966171168
        %v8001 = vunpack.c.0.s8 %v8000
        %v8002 = vlaneseq
        %v8003 = vshrl.u32 %v8002, 7
        %v8004 = vsub.s32 %v8001, %v8003
        %v8005 = vrot.slane %v7977, %v8004
        %v8006 = vcombine.high %v7984, %v7984
        %v8007 = vcombine.high %v7991, %v7991
        %v8008 = vcombine.high %v7998, %v7998
        %v8009 = vcombine.high %v8005, %v8005
        %v8011 = vunpack.c.l.s4 1966171168
        %v8012 = vunpack.c.0.s8 %v8011
        %v8013 = vlaneseq
        %v8014 = vshrl.u32 %v8013, 7
        %v8015 = vsub.s32 %v8012, %v8014
        %v8016 = vrot.slane %v591, %v8015
        %v8018 = vunpack.c.l.s4 1966171168
        %v8019 = vunpack.c.0.s8 %v8018
        %v8020 = vlaneseq
        %v8021 = vshrl.u32 %v8020, 7
        %v8022 = vsub.s32 %v8019, %v8021
        %v8023 = vrot.slane %v8016, %v8022
        %v8024 = vcombine.high %v592, %v592
        %v8026 = vunpack.c.l.s4 1966171168
        %v8027 = vunpack.c.0.s8 %v8026
        %v8028 = vlaneseq
        %v8029 = vshrl.u32 %v8028, 7
        %v8030 = vsub.s32 %v8027, %v8029
        %v8031 = vrot.slane %v592, %v8030
        %v8033 = vunpack.c.l.s4 1966171168
        %v8034 = vunpack.c.0.s8 %v8033
        %v8035 = vlaneseq
        %v8036 = vshrl.u32 %v8035, 7
        %v8037 = vsub.s32 %v8034, %v8036
        %v8038 = vrot.slane %v8024, %v8037
        %v8039 = vcombine.high %v8031, %v8031
        %v8040 = vcombine.high %v8038, %v8038
        %v8042 = vunpack.c.l.s4 1966171168
        %v8043 = vunpack.c.0.s8 %v8042
        %v8044 = vlaneseq
        %v8045 = vshrl.u32 %v8044, 7
        %v8046 = vsub.s32 %v8043, %v8045
        %v8047 = vrot.slane %v8031, %v8046
        %v8049 = vunpack.c.l.s4 1966171168
        %v8050 = vunpack.c.0.s8 %v8049
        %v8051 = vlaneseq
        %v8052 = vshrl.u32 %v8051, 7
        %v8053 = vsub.s32 %v8050, %v8052
        %v8054 = vrot.slane %v8038, %v8053
        %v8056 = vunpack.c.l.s4 1966171168
        %v8057 = vunpack.c.0.s8 %v8056
        %v8058 = vlaneseq
        %v8059 = vshrl.u32 %v8058, 7
        %v8060 = vsub.s32 %v8057, %v8059
        %v8061 = vrot.slane %v8039, %v8060
        %v8063 = vunpack.c.l.s4 1966171168
        %v8064 = vunpack.c.0.s8 %v8063
        %v8065 = vlaneseq
        %v8066 = vshrl.u32 %v8065, 7
        %v8067 = vsub.s32 %v8064, %v8066
        %v8068 = vrot.slane %v8040, %v8067
        %v8069 = vcombine.high %v8047, %v8047
        %v8070 = vcombine.high %v8054, %v8054
        %v8071 = vcombine.high %v8061, %v8061
        %v8072 = vcombine.high %v8068, %v8068
        %v8074 = vunpack.c.l.s4 1966171168
        %v8075 = vunpack.c.0.s8 %v8074
        %v8076 = vlaneseq
        %v8077 = vshrl.u32 %v8076, 7
        %v8078 = vsub.s32 %v8075, %v8077
        %v8079 = vrot.slane %v593, %v8078
        %v8081 = vunpack.c.l.s4 1966171168
        %v8082 = vunpack.c.0.s8 %v8081
        %v8083 = vlaneseq
        %v8084 = vshrl.u32 %v8083, 7
        %v8085 = vsub.s32 %v8082, %v8084
        %v8086 = vrot.slane %v8079, %v8085
        %v8087 = vcombine.high %v594, %v594
        %v8089 = vunpack.c.l.s4 1966171168
        %v8090 = vunpack.c.0.s8 %v8089
        %v8091 = vlaneseq
        %v8092 = vshrl.u32 %v8091, 7
        %v8093 = vsub.s32 %v8090, %v8092
        %v8094 = vrot.slane %v594, %v8093
        %v8096 = vunpack.c.l.s4 1966171168
        %v8097 = vunpack.c.0.s8 %v8096
        %v8098 = vlaneseq
        %v8099 = vshrl.u32 %v8098, 7
        %v8100 = vsub.s32 %v8097, %v8099
        %v8101 = vrot.slane %v8087, %v8100
        %v8102 = vcombine.high %v8094, %v8094
        %v8103 = vcombine.high %v8101, %v8101
        %v8105 = vunpack.c.l.s4 1966171168
        %v8106 = vunpack.c.0.s8 %v8105
        %v8107 = vlaneseq
        %v8108 = vshrl.u32 %v8107, 7
        %v8109 = vsub.s32 %v8106, %v8108
        %v8110 = vrot.slane %v8094, %v8109
        %v8112 = vunpack.c.l.s4 1966171168
        %v8113 = vunpack.c.0.s8 %v8112
        %v8114 = vlaneseq
        %v8115 = vshrl.u32 %v8114, 7
        %v8116 = vsub.s32 %v8113, %v8115
        %v8117 = vrot.slane %v8101, %v8116
        %v8119 = vunpack.c.l.s4 1966171168
        %v8120 = vunpack.c.0.s8 %v8119
        %v8121 = vlaneseq
        %v8122 = vshrl.u32 %v8121, 7
        %v8123 = vsub.s32 %v8120, %v8122
        %v8124 = vrot.slane %v8102, %v8123
        %v8126 = vunpack.c.l.s4 1966171168
        %v8127 = vunpack.c.0.s8 %v8126
        %v8128 = vlaneseq
        %v8129 = vshrl.u32 %v8128, 7
        %v8130 = vsub.s32 %v8127, %v8129
        %v8131 = vrot.slane %v8103, %v8130
        %v8132 = vcombine.high %v8110, %v8110
        %v8133 = vcombine.high %v8117, %v8117
        %v8134 = vcombine.high %v8124, %v8124
        %v8135 = vcombine.high %v8131, %v8131
        %v8137 = vunpack.c.l.s4 1966171168
        %v8138 = vunpack.c.0.s8 %v8137
        %v8139 = vlaneseq
        %v8140 = vshrl.u32 %v8139, 7
        %v8141 = vsub.s32 %v8138, %v8140
        %v8142 = vrot.slane %v595, %v8141
        %v8144 = vunpack.c.l.s4 1966171168
        %v8145 = vunpack.c.0.s8 %v8144
        %v8146 = vlaneseq
        %v8147 = vshrl.u32 %v8146, 7
        %v8148 = vsub.s32 %v8145, %v8147
        %v8149 = vrot.slane %v8142, %v8148
        %v8150 = vcombine.high %v596, %v596
        %v8152 = vunpack.c.l.s4 1966171168
        %v8153 = vunpack.c.0.s8 %v8152
        %v8154 = vlaneseq
        %v8155 = vshrl.u32 %v8154, 7
        %v8156 = vsub.s32 %v8153, %v8155
        %v8157 = vrot.slane %v596, %v8156
        %v8159 = vunpack.c.l.s4 1966171168
        %v8160 = vunpack.c.0.s8 %v8159
        %v8161 = vlaneseq
        %v8162 = vshrl.u32 %v8161, 7
        %v8163 = vsub.s32 %v8160, %v8162
        %v8164 = vrot.slane %v8150, %v8163
        %v8165 = vcombine.high %v8157, %v8157
        %v8166 = vcombine.high %v8164, %v8164
        %v8168 = vunpack.c.l.s4 1966171168
        %v8169 = vunpack.c.0.s8 %v8168
        %v8170 = vlaneseq
        %v8171 = vshrl.u32 %v8170, 7
        %v8172 = vsub.s32 %v8169, %v8171
        %v8173 = vrot.slane %v8157, %v8172
        %v8175 = vunpack.c.l.s4 1966171168
        %v8176 = vunpack.c.0.s8 %v8175
        %v8177 = vlaneseq
        %v8178 = vshrl.u32 %v8177, 7
        %v8179 = vsub.s32 %v8176, %v8178
        %v8180 = vrot.slane %v8164, %v8179
        %v8182 = vunpack.c.l.s4 1966171168
        %v8183 = vunpack.c.0.s8 %v8182
        %v8184 = vlaneseq
        %v8185 = vshrl.u32 %v8184, 7
        %v8186 = vsub.s32 %v8183, %v8185
        %v8187 = vrot.slane %v8165, %v8186
        %v8189 = vunpack.c.l.s4 1966171168
        %v8190 = vunpack.c.0.s8 %v8189
        %v8191 = vlaneseq
        %v8192 = vshrl.u32 %v8191, 7
        %v8193 = vsub.s32 %v8190, %v8192
        %v8194 = vrot.slane %v8166, %v8193
        %v8195 = vcombine.high %v8173, %v8173
        %v8196 = vcombine.high %v8180, %v8180
        %v8197 = vcombine.high %v8187, %v8187
        %v8198 = vcombine.high %v8194, %v8194
        %v8200 = vunpack.c.l.s4 1966171168
        %v8201 = vunpack.c.0.s8 %v8200
        %v8202 = vlaneseq
        %v8203 = vshrl.u32 %v8202, 7
        %v8204 = vsub.s32 %v8201, %v8203
        %v8205 = vrot.slane %v597, %v8204
        %v8207 = vunpack.c.l.s4 1966171168
        %v8208 = vunpack.c.0.s8 %v8207
        %v8209 = vlaneseq
        %v8210 = vshrl.u32 %v8209, 7
        %v8211 = vsub.s32 %v8208, %v8210
        %v8212 = vrot.slane %v8205, %v8211
        %v8213 = vcombine.high %v598, %v598
        %v8215 = vunpack.c.l.s4 1966171168
        %v8216 = vunpack.c.0.s8 %v8215
        %v8217 = vlaneseq
        %v8218 = vshrl.u32 %v8217, 7
        %v8219 = vsub.s32 %v8216, %v8218
        %v8220 = vrot.slane %v598, %v8219
        %v8222 = vunpack.c.l.s4 1966171168
        %v8223 = vunpack.c.0.s8 %v8222
        %v8224 = vlaneseq
        %v8225 = vshrl.u32 %v8224, 7
        %v8226 = vsub.s32 %v8223, %v8225
        %v8227 = vrot.slane %v8213, %v8226
        %v8228 = vcombine.high %v8220, %v8220
        %v8229 = vcombine.high %v8227, %v8227
        %v8231 = vunpack.c.l.s4 1966171168
        %v8232 = vunpack.c.0.s8 %v8231
        %v8233 = vlaneseq
        %v8234 = vshrl.u32 %v8233, 7
        %v8235 = vsub.s32 %v8232, %v8234
        %v8236 = vrot.slane %v8220, %v8235
        %v8238 = vunpack.c.l.s4 1966171168
        %v8239 = vunpack.c.0.s8 %v8238
        %v8240 = vlaneseq
        %v8241 = vshrl.u32 %v8240, 7
        %v8242 = vsub.s32 %v8239, %v8241
        %v8243 = vrot.slane %v8227, %v8242
        %v8245 = vunpack.c.l.s4 1966171168
        %v8246 = vunpack.c.0.s8 %v8245
        %v8247 = vlaneseq
        %v8248 = vshrl.u32 %v8247, 7
        %v8249 = vsub.s32 %v8246, %v8248
        %v8250 = vrot.slane %v8228, %v8249
        %v8252 = vunpack.c.l.s4 1966171168
        %v8253 = vunpack.c.0.s8 %v8252
        %v8254 = vlaneseq
        %v8255 = vshrl.u32 %v8254, 7
        %v8256 = vsub.s32 %v8253, %v8255
        %v8257 = vrot.slane %v8229, %v8256
        %v8258 = vcombine.high %v8236, %v8236
        %v8259 = vcombine.high %v8243, %v8243
        %v8260 = vcombine.high %v8250, %v8250
        %v8261 = vcombine.high %v8257, %v8257
        %v8263 = vunpack.c.l.s4 1966171168
        %v8264 = vunpack.c.0.s8 %v8263
        %v8265 = vlaneseq
        %v8266 = vshrl.u32 %v8265, 7
        %v8267 = vsub.s32 %v8264, %v8266
        %v8268 = vrot.slane %v599, %v8267
        %v8270 = vunpack.c.l.s4 1966171168
        %v8271 = vunpack.c.0.s8 %v8270
        %v8272 = vlaneseq
        %v8273 = vshrl.u32 %v8272, 7
        %v8274 = vsub.s32 %v8271, %v8273
        %v8275 = vrot.slane %v8268, %v8274
        %v8276 = vcombine.high %v600, %v600
        %v8278 = vunpack.c.l.s4 1966171168
        %v8279 = vunpack.c.0.s8 %v8278
        %v8280 = vlaneseq
        %v8281 = vshrl.u32 %v8280, 7
        %v8282 = vsub.s32 %v8279, %v8281
        %v8283 = vrot.slane %v600, %v8282
        %v8285 = vunpack.c.l.s4 1966171168
        %v8286 = vunpack.c.0.s8 %v8285
        %v8287 = vlaneseq
        %v8288 = vshrl.u32 %v8287, 7
        %v8289 = vsub.s32 %v8286, %v8288
        %v8290 = vrot.slane %v8276, %v8289
        %v8291 = vcombine.high %v8283, %v8283
        %v8292 = vcombine.high %v8290, %v8290
        %v8294 = vunpack.c.l.s4 1966171168
        %v8295 = vunpack.c.0.s8 %v8294
        %v8296 = vlaneseq
        %v8297 = vshrl.u32 %v8296, 7
        %v8298 = vsub.s32 %v8295, %v8297
        %v8299 = vrot.slane %v8283, %v8298
        %v8301 = vunpack.c.l.s4 1966171168
        %v8302 = vunpack.c.0.s8 %v8301
        %v8303 = vlaneseq
        %v8304 = vshrl.u32 %v8303, 7
        %v8305 = vsub.s32 %v8302, %v8304
        %v8306 = vrot.slane %v8290, %v8305
        %v8308 = vunpack.c.l.s4 1966171168
        %v8309 = vunpack.c.0.s8 %v8308
        %v8310 = vlaneseq
        %v8311 = vshrl.u32 %v8310, 7
        %v8312 = vsub.s32 %v8309, %v8311
        %v8313 = vrot.slane %v8291, %v8312
        %v8315 = vunpack.c.l.s4 1966171168
        %v8316 = vunpack.c.0.s8 %v8315
        %v8317 = vlaneseq
        %v8318 = vshrl.u32 %v8317, 7
        %v8319 = vsub.s32 %v8316, %v8318
        %v8320 = vrot.slane %v8292, %v8319
        %v8321 = vcombine.high %v8299, %v8299
        %v8322 = vcombine.high %v8306, %v8306
        %v8323 = vcombine.high %v8313, %v8313
        %v8324 = vcombine.high %v8320, %v8320
        %v8326 = vunpack.c.l.s4 1966171168
        %v8327 = vunpack.c.0.s8 %v8326
        %v8328 = vlaneseq
        %v8329 = vshrl.u32 %v8328, 7
        %v8330 = vsub.s32 %v8327, %v8329
        %v8331 = vrot.slane %v601, %v8330
        %v8333 = vunpack.c.l.s4 1966171168
        %v8334 = vunpack.c.0.s8 %v8333
        %v8335 = vlaneseq
        %v8336 = vshrl.u32 %v8335, 7
        %v8337 = vsub.s32 %v8334, %v8336
        %v8338 = vrot.slane %v8331, %v8337
        %v8339 = vcombine.low %v7795, %v7809
        %v8340 = vcombine.low %v7817, %v7819
        %v8341 = vcombine.low %v7802, %v7816
        %v8342 = vcombine.low %v7818, %v7820
        %v8344 = vunpack.c.l.s4 1966171168
        %v8345 = vunpack.c.0.s8 %v8344
        %v8346 = vlaneseq
        %v8347 = vshrl.u32 %v8346, 7
        %v8348 = vsub.s32 %v8345, %v8347
        %v8349 = vrot.slane %v8339, %v8348
        %v8351 = vunpack.c.l.s4 1966171168
        %v8352 = vunpack.c.0.s8 %v8351
        %v8353 = vlaneseq
        %v8354 = vshrl.u32 %v8353, 7
        %v8355 = vsub.s32 %v8352, %v8354
        %v8356 = vrot.slane %v8340, %v8355
        %v8358 = vunpack.c.l.s4 1966171168
        %v8359 = vunpack.c.0.s8 %v8358
        %v8360 = vlaneseq
        %v8361 = vshrl.u32 %v8360, 7
        %v8362 = vsub.s32 %v8359, %v8361
        %v8363 = vrot.slane %v8341, %v8362
        %v8365 = vunpack.c.l.s4 1966171168
        %v8366 = vunpack.c.0.s8 %v8365
        %v8367 = vlaneseq
        %v8368 = vshrl.u32 %v8367, 7
        %v8369 = vsub.s32 %v8366, %v8368
        %v8370 = vrot.slane %v8342, %v8369
        %v8371 = vcombine.low %v8349, %v8356
        %v8372 = vcombine.low %v8363, %v8370
        %v8374 = vunpack.c.l.s4 1966171168
        %v8375 = vunpack.c.0.s8 %v8374
        %v8376 = vlaneseq
        %v8377 = vshrl.u32 %v8376, 7
        %v8378 = vsub.s32 %v8375, %v8377
        %v8379 = vrot.slane %v8371, %v8378
        %v8381 = vunpack.c.l.s4 1966171168
        %v8382 = vunpack.c.0.s8 %v8381
        %v8383 = vlaneseq
        %v8384 = vshrl.u32 %v8383, 7
        %v8385 = vsub.s32 %v8382, %v8384
        %v8386 = vrot.slane %v8372, %v8385
        %v8387 = vcombine.low %v8379, %v8386
        %v8388 = vcombine.low %v7834, %v7858
        %v8389 = vcombine.low %v7872, %v7880
        %v8390 = vcombine.low %v7882, %v7865
        %v8391 = vcombine.low %v7879, %v7881
        %v8393 = vunpack.c.l.s4 1966171168
        %v8394 = vunpack.c.0.s8 %v8393
        %v8395 = vlaneseq
        %v8396 = vshrl.u32 %v8395, 7
        %v8397 = vsub.s32 %v8394, %v8396
        %v8398 = vrot.slane %v8388, %v8397
        %v8400 = vunpack.c.l.s4 1966171168
        %v8401 = vunpack.c.0.s8 %v8400
        %v8402 = vlaneseq
        %v8403 = vshrl.u32 %v8402, 7
        %v8404 = vsub.s32 %v8401, %v8403
        %v8405 = vrot.slane %v8389, %v8404
        %v8407 = vunpack.c.l.s4 1966171168
        %v8408 = vunpack.c.0.s8 %v8407
        %v8409 = vlaneseq
        %v8410 = vshrl.u32 %v8409, 7
        %v8411 = vsub.s32 %v8408, %v8410
        %v8412 = vrot.slane %v8390, %v8411
        %v8414 = vunpack.c.l.s4 1966171168
        %v8415 = vunpack.c.0.s8 %v8414
        %v8416 = vlaneseq
        %v8417 = vshrl.u32 %v8416, 7
        %v8418 = vsub.s32 %v8415, %v8417
        %v8419 = vrot.slane %v8391, %v8418
        %v8420 = vcombine.low %v8398, %v8405
        %v8421 = vcombine.low %v8412, %v8419
        %v8423 = vunpack.c.l.s4 1966171168
        %v8424 = vunpack.c.0.s8 %v8423
        %v8425 = vlaneseq
        %v8426 = vshrl.u32 %v8425, 7
        %v8427 = vsub.s32 %v8424, %v8426
        %v8428 = vrot.slane %v8420, %v8427
        %v8430 = vunpack.c.l.s4 1966171168
        %v8431 = vunpack.c.0.s8 %v8430
        %v8432 = vlaneseq
        %v8433 = vshrl.u32 %v8432, 7
        %v8434 = vsub.s32 %v8431, %v8433
        %v8435 = vrot.slane %v8421, %v8434
        %v8436 = vcombine.low %v8428, %v8435
        %v8437 = vcombine.low %v7883, %v7897
        %v8438 = vcombine.low %v7921, %v7935
        %v8439 = vcombine.low %v7943, %v7945
        %v8440 = vcombine.low %v7928, %v7942
        %v8442 = vunpack.c.l.s4 1966171168
        %v8443 = vunpack.c.0.s8 %v8442
        %v8444 = vlaneseq
        %v8445 = vshrl.u32 %v8444, 7
        %v8446 = vsub.s32 %v8443, %v8445
        %v8447 = vrot.slane %v8437, %v8446
        %v8449 = vunpack.c.l.s4 1966171168
        %v8450 = vunpack.c.0.s8 %v8449
        %v8451 = vlaneseq
        %v8452 = vshrl.u32 %v8451, 7
        %v8453 = vsub.s32 %v8450, %v8452
        %v8454 = vrot.slane %v8438, %v8453
        %v8456 = vunpack.c.l.s4 1966171168
        %v8457 = vunpack.c.0.s8 %v8456
        %v8458 = vlaneseq
        %v8459 = vshrl.u32 %v8458, 7
        %v8460 = vsub.s32 %v8457, %v8459
        %v8461 = vrot.slane %v8439, %v8460
        %v8463 = vunpack.c.l.s4 1966171168
        %v8464 = vunpack.c.0.s8 %v8463
        %v8465 = vlaneseq
        %v8466 = vshrl.u32 %v8465, 7
        %v8467 = vsub.s32 %v8464, %v8466
        %v8468 = vrot.slane %v8440, %v8467
        %v8469 = vcombine.low %v8447, %v8454
        %v8470 = vcombine.low %v8461, %v8468
        %v8472 = vunpack.c.l.s4 1966171168
        %v8473 = vunpack.c.0.s8 %v8472
        %v8474 = vlaneseq
        %v8475 = vshrl.u32 %v8474, 7
        %v8476 = vsub.s32 %v8473, %v8475
        %v8477 = vrot.slane %v8469, %v8476
        %v8479 = vunpack.c.l.s4 1966171168
        %v8480 = vunpack.c.0.s8 %v8479
        %v8481 = vlaneseq
        %v8482 = vshrl.u32 %v8481, 7
        %v8483 = vsub.s32 %v8480, %v8482
        %v8484 = vrot.slane %v8470, %v8483
        %v8485 = vcombine.low %v8477, %v8484
        %v8486 = vcombine.low %v7944, %v7946
        %v8487 = vcombine.low %v7960, %v7984
        %v8488 = vcombine.low %v7998, %v8006
        %v8489 = vcombine.low %v8008, %v7991
        %v8491 = vunpack.c.l.s4 1966171168
        %v8492 = vunpack.c.0.s8 %v8491
        %v8493 = vlaneseq
        %v8494 = vshrl.u32 %v8493, 7
        %v8495 = vsub.s32 %v8492, %v8494
        %v8496 = vrot.slane %v8486, %v8495
        %v8498 = vunpack.c.l.s4 1966171168
        %v8499 = vunpack.c.0.s8 %v8498
        %v8500 = vlaneseq
        %v8501 = vshrl.u32 %v8500, 7
        %v8502 = vsub.s32 %v8499, %v8501
        %v8503 = vrot.slane %v8487, %v8502
        %v8505 = vunpack.c.l.s4 1966171168
        %v8506 = vunpack.c.0.s8 %v8505
        %v8507 = vlaneseq
        %v8508 = vshrl.u32 %v8507, 7
        %v8509 = vsub.s32 %v8506, %v8508
        %v8510 = vrot.slane %v8488, %v8509
        %v8512 = vunpack.c.l.s4 1966171168
        %v8513 = vunpack.c.0.s8 %v8512
        %v8514 = vlaneseq
        %v8515 = vshrl.u32 %v8514, 7
        %v8516 = vsub.s32 %v8513, %v8515
        %v8517 = vrot.slane %v8489, %v8516
        %v8518 = vcombine.low %v8496, %v8503
        %v8519 = vcombine.low %v8510, %v8517
        %v8521 = vunpack.c.l.s4 1966171168
        %v8522 = vunpack.c.0.s8 %v8521
        %v8523 = vlaneseq
        %v8524 = vshrl.u32 %v8523, 7
        %v8525 = vsub.s32 %v8522, %v8524
        %v8526 = vrot.slane %v8518, %v8525
        %v8528 = vunpack.c.l.s4 1966171168
        %v8529 = vunpack.c.0.s8 %v8528
        %v8530 = vlaneseq
        %v8531 = vshrl.u32 %v8530, 7
        %v8532 = vsub.s32 %v8529, %v8531
        %v8533 = vrot.slane %v8519, %v8532
        %v8534 = vcombine.low %v8526, %v8533
        %v8535 = vcombine.low %v8005, %v8007
        %v8536 = vcombine.low %v8009, %v8023
        %v8537 = vcombine.low %v8047, %v8061
        %v8538 = vcombine.low %v8069, %v8071
        %v8540 = vunpack.c.l.s4 1966171168
        %v8541 = vunpack.c.0.s8 %v8540
        %v8542 = vlaneseq
        %v8543 = vshrl.u32 %v8542, 7
        %v8544 = vsub.s32 %v8541, %v8543
        %v8545 = vrot.slane %v8535, %v8544
        %v8547 = vunpack.c.l.s4 1966171168
        %v8548 = vunpack.c.0.s8 %v8547
        %v8549 = vlaneseq
        %v8550 = vshrl.u32 %v8549, 7
        %v8551 = vsub.s32 %v8548, %v8550
        %v8552 = vrot.slane %v8536, %v8551
        %v8554 = vunpack.c.l.s4 1966171168
        %v8555 = vunpack.c.0.s8 %v8554
        %v8556 = vlaneseq
        %v8557 = vshrl.u32 %v8556, 7
        %v8558 = vsub.s32 %v8555, %v8557
        %v8559 = vrot.slane %v8537, %v8558
        %v8561 = vunpack.c.l.s4 1966171168
        %v8562 = vunpack.c.0.s8 %v8561
        %v8563 = vlaneseq
        %v8564 = vshrl.u32 %v8563, 7
        %v8565 = vsub.s32 %v8562, %v8564
        %v8566 = vrot.slane %v8538, %v8565
        %v8567 = vcombine.low %v8545, %v8552
        %v8568 = vcombine.low %v8559, %v8566
        %v8570 = vunpack.c.l.s4 1966171168
        %v8571 = vunpack.c.0.s8 %v8570
        %v8572 = vlaneseq
        %v8573 = vshrl.u32 %v8572, 7
        %v8574 = vsub.s32 %v8571, %v8573
        %v8575 = vrot.slane %v8567, %v8574
        %v8577 = vunpack.c.l.s4 1966171168
        %v8578 = vunpack.c.0.s8 %v8577
        %v8579 = vlaneseq
        %v8580 = vshrl.u32 %v8579, 7
        %v8581 = vsub.s32 %v8578, %v8580
        %v8582 = vrot.slane %v8568, %v8581
        %v8583 = vcombine.low %v8575, %v8582
        %v8584 = vcombine.low %v8054, %v8068
        %v8585 = vcombine.low %v8070, %v8072
        %v8586 = vcombine.low %v8086, %v8110
        %v8587 = vcombine.low %v8124, %v8132
        %v8589 = vunpack.c.l.s4 1966171168
        %v8590 = vunpack.c.0.s8 %v8589
        %v8591 = vlaneseq
        %v8592 = vshrl.u32 %v8591, 7
        %v8593 = vsub.s32 %v8590, %v8592
        %v8594 = vrot.slane %v8584, %v8593
        %v8596 = vunpack.c.l.s4 1966171168
        %v8597 = vunpack.c.0.s8 %v8596
        %v8598 = vlaneseq
        %v8599 = vshrl.u32 %v8598, 7
        %v8600 = vsub.s32 %v8597, %v8599
        %v8601 = vrot.slane %v8585, %v8600
        %v8603 = vunpack.c.l.s4 1966171168
        %v8604 = vunpack.c.0.s8 %v8603
        %v8605 = vlaneseq
        %v8606 = vshrl.u32 %v8605, 7
        %v8607 = vsub.s32 %v8604, %v8606
        %v8608 = vrot.slane %v8586, %v8607
        %v8610 = vunpack.c.l.s4 1966171168
        %v8611 = vunpack.c.0.s8 %v8610
        %v8612 = vlaneseq
        %v8613 = vshrl.u32 %v8612, 7
        %v8614 = vsub.s32 %v8611, %v8613
        %v8615 = vrot.slane %v8587, %v8614
        %v8616 = vcombine.low %v8594, %v8601
        %v8617 = vcombine.low %v8608, %v8615
        %v8619 = vunpack.c.l.s4 1966171168
        %v8620 = vunpack.c.0.s8 %v8619
        %v8621 = vlaneseq
        %v8622 = vshrl.u32 %v8621, 7
        %v8623 = vsub.s32 %v8620, %v8622
        %v8624 = vrot.slane %v8616, %v8623
        %v8626 = vunpack.c.l.s4 1966171168
        %v8627 = vunpack.c.0.s8 %v8626
        %v8628 = vlaneseq
        %v8629 = vshrl.u32 %v8628, 7
        %v8630 = vsub.s32 %v8627, %v8629
        %v8631 = vrot.slane %v8617, %v8630
        %v8632 = vcombine.low %v8624, %v8631
        %v8633 = vcombine.low %v8134, %v8117
        %v8634 = vcombine.low %v8131, %v8133
        %v8635 = vcombine.low %v8135, %v8149
        %v8636 = vcombine.low %v8173, %v8187
        %v8638 = vunpack.c.l.s4 1966171168
        %v8639 = vunpack.c.0.s8 %v8638
        %v8640 = vlaneseq
        %v8641 = vshrl.u32 %v8640, 7
        %v8642 = vsub.s32 %v8639, %v8641
        %v8643 = vrot.slane %v8633, %v8642
        %v8645 = vunpack.c.l.s4 1966171168
        %v8646 = vunpack.c.0.s8 %v8645
        %v8647 = vlaneseq
        %v8648 = vshrl.u32 %v8647, 7
        %v8649 = vsub.s32 %v8646, %v8648
        %v8650 = vrot.slane %v8634, %v8649
        %v8652 = vunpack.c.l.s4 1966171168
        %v8653 = vunpack.c.0.s8 %v8652
        %v8654 = vlaneseq
        %v8655 = vshrl.u32 %v8654, 7
        %v8656 = vsub.s32 %v8653, %v8655
        %v8657 = vrot.slane %v8635, %v8656
        %v8659 = vunpack.c.l.s4 1966171168
        %v8660 = vunpack.c.0.s8 %v8659
        %v8661 = vlaneseq
        %v8662 = vshrl.u32 %v8661, 7
        %v8663 = vsub.s32 %v8660, %v8662
        %v8664 = vrot.slane %v8636, %v8663
        %v8665 = vcombine.low %v8643, %v8650
        %v8666 = vcombine.low %v8657, %v8664
        %v8668 = vunpack.c.l.s4 1966171168
        %v8669 = vunpack.c.0.s8 %v8668
        %v8670 = vlaneseq
        %v8671 = vshrl.u32 %v8670, 7
        %v8672 = vsub.s32 %v8669, %v8671
        %v8673 = vrot.slane %v8665, %v8672
        %v8675 = vunpack.c.l.s4 1966171168
        %v8676 = vunpack.c.0.s8 %v8675
        %v8677 = vlaneseq
        %v8678 = vshrl.u32 %v8677, 7
        %v8679 = vsub.s32 %v8676, %v8678
        %v8680 = vrot.slane %v8666, %v8679
        %v8681 = vcombine.low %v8673, %v8680
        %v8682 = vcombine.low %v8195, %v8197
        %v8683 = vcombine.low %v8180, %v8194
        %v8684 = vcombine.low %v8196, %v8198
        %v8685 = vcombine.low %v8212, %v8236
        %v8687 = vunpack.c.l.s4 1966171168
        %v8688 = vunpack.c.0.s8 %v8687
        %v8689 = vlaneseq
        %v8690 = vshrl.u32 %v8689, 7
        %v8691 = vsub.s32 %v8688, %v8690
        %v8692 = vrot.slane %v8682, %v8691
        %v8694 = vunpack.c.l.s4 1966171168
        %v8695 = vunpack.c.0.s8 %v8694
        %v8696 = vlaneseq
        %v8697 = vshrl.u32 %v8696, 7
        %v8698 = vsub.s32 %v8695, %v8697
        %v8699 = vrot.slane %v8683, %v8698
        %v8701 = vunpack.c.l.s4 1966171168
        %v8702 = vunpack.c.0.s8 %v8701
        %v8703 = vlaneseq
        %v8704 = vshrl.u32 %v8703, 7
        %v8705 = vsub.s32 %v8702, %v8704
        %v8706 = vrot.slane %v8684, %v8705
        %v8708 = vunpack.c.l.s4 1966171168
        %v8709 = vunpack.c.0.s8 %v8708
        %v8710 = vlaneseq
        %v8711 = vshrl.u32 %v8710, 7
        %v8712 = vsub.s32 %v8709, %v8711
        %v8713 = vrot.slane %v8685, %v8712
        %v8714 = vcombine.low %v8692, %v8699
        %v8715 = vcombine.low %v8706, %v8713
        %v8717 = vunpack.c.l.s4 1966171168
        %v8718 = vunpack.c.0.s8 %v8717
        %v8719 = vlaneseq
        %v8720 = vshrl.u32 %v8719, 7
        %v8721 = vsub.s32 %v8718, %v8720
        %v8722 = vrot.slane %v8714, %v8721
        %v8724 = vunpack.c.l.s4 1966171168
        %v8725 = vunpack.c.0.s8 %v8724
        %v8726 = vlaneseq
        %v8727 = vshrl.u32 %v8726, 7
        %v8728 = vsub.s32 %v8725, %v8727
        %v8729 = vrot.slane %v8715, %v8728
        %v8730 = vcombine.low %v8722, %v8729
        %v8731 = vcombine.low %v8250, %v8258
        %v8732 = vcombine.low %v8260, %v8243
        %v8733 = vcombine.low %v8257, %v8259
        %v8734 = vcombine.low %v8261, %v8275
        %v8736 = vunpack.c.l.s4 1966171168
        %v8737 = vunpack.c.0.s8 %v8736
        %v8738 = vlaneseq
        %v8739 = vshrl.u32 %v8738, 7
        %v8740 = vsub.s32 %v8737, %v8739
        %v8741 = vrot.slane %v8731, %v8740
        %v8743 = vunpack.c.l.s4 1966171168
        %v8744 = vunpack.c.0.s8 %v8743
        %v8745 = vlaneseq
        %v8746 = vshrl.u32 %v8745, 7
        %v8747 = vsub.s32 %v8744, %v8746
        %v8748 = vrot.slane %v8732, %v8747
        %v8750 = vunpack.c.l.s4 1966171168
        %v8751 = vunpack.c.0.s8 %v8750
        %v8752 = vlaneseq
        %v8753 = vshrl.u32 %v8752, 7
        %v8754 = vsub.s32 %v8751, %v8753
        %v8755 = vrot.slane %v8733, %v8754
        %v8757 = vunpack.c.l.s4 1966171168
        %v8758 = vunpack.c.0.s8 %v8757
        %v8759 = vlaneseq
        %v8760 = vshrl.u32 %v8759, 7
        %v8761 = vsub.s32 %v8758, %v8760
        %v8762 = vrot.slane %v8734, %v8761
        %v8763 = vcombine.low %v8741, %v8748
        %v8764 = vcombine.low %v8755, %v8762
        %v8766 = vunpack.c.l.s4 1966171168
        %v8767 = vunpack.c.0.s8 %v8766
        %v8768 = vlaneseq
        %v8769 = vshrl.u32 %v8768, 7
        %v8770 = vsub.s32 %v8767, %v8769
        %v8771 = vrot.slane %v8763, %v8770
        %v8773 = vunpack.c.l.s4 1966171168
        %v8774 = vunpack.c.0.s8 %v8773
        %v8775 = vlaneseq
        %v8776 = vshrl.u32 %v8775, 7
        %v8777 = vsub.s32 %v8774, %v8776
        %v8778 = vrot.slane %v8764, %v8777
        %v8779 = vcombine.low %v8771, %v8778
        %v8780 = vcombine.low %v8299, %v8313
        %v8781 = vcombine.low %v8321, %v8323
        %v8782 = vcombine.low %v8306, %v8320
        %v8783 = vcombine.low %v8322, %v8324
        %v8785 = vunpack.c.l.s4 1966171168
        %v8786 = vunpack.c.0.s8 %v8785
        %v8787 = vlaneseq
        %v8788 = vshrl.u32 %v8787, 7
        %v8789 = vsub.s32 %v8786, %v8788
        %v8790 = vrot.slane %v8780, %v8789
        %v8792 = vunpack.c.l.s4 1966171168
        %v8793 = vunpack.c.0.s8 %v8792
        %v8794 = vlaneseq
        %v8795 = vshrl.u32 %v8794, 7
        %v8796 = vsub.s32 %v8793, %v8795
        %v8797 = vrot.slane %v8781, %v8796
        %v8799 = vunpack.c.l.s4 1966171168
        %v8800 = vunpack.c.0.s8 %v8799
        %v8801 = vlaneseq
        %v8802 = vshrl.u32 %v8801, 7
        %v8803 = vsub.s32 %v8800, %v8802
        %v8804 = vrot.slane %v8782, %v8803
        %v8806 = vunpack.c.l.s4 1966171168
        %v8807 = vunpack.c.0.s8 %v8806
        %v8808 = vlaneseq
        %v8809 = vshrl.u32 %v8808, 7
        %v8810 = vsub.s32 %v8807, %v8809
        %v8811 = vrot.slane %v8783, %v8810
        %v8812 = vcombine.low %v8790, %v8797
        %v8813 = vcombine.low %v8804, %v8811
        %v8815 = vunpack.c.l.s4 1966171168
        %v8816 = vunpack.c.0.s8 %v8815
        %v8817 = vlaneseq
        %v8818 = vshrl.u32 %v8817, 7
        %v8819 = vsub.s32 %v8816, %v8818
        %v8820 = vrot.slane %v8812, %v8819
        %v8822 = vunpack.c.l.s4 1966171168
        %v8823 = vunpack.c.0.s8 %v8822
        %v8824 = vlaneseq
        %v8825 = vshrl.u32 %v8824, 7
        %v8826 = vsub.s32 %v8823, %v8825
        %v8827 = vrot.slane %v8813, %v8826
        %v8828 = vcombine.low %v8820, %v8827
        %v8830 = vunpack.c.l.s4 1966171168
        %v8831 = vunpack.c.0.s8 %v8830
        %v8832 = vlaneseq
        %v8833 = vshrl.u32 %v8832, 7
        %v8834 = vsub.s32 %v8831, %v8833
        %v8835 = vrot.slane %v8338, %v8834
        %v8837 = vunpack.c.l.s4 1966171168
        %v8838 = vunpack.c.0.s8 %v8837
        %v8839 = vlaneseq
        %v8840 = vshrl.u32 %v8839, 7
        %v8841 = vsub.s32 %v8838, %v8840
        %v8842 = vrot.slane %v8835, %v8841
        %v8854 = vpack.c.bf16 %v8436, %v8387
        %v8855 = vpack.c.bf16 %v8534, %v8485
        %v8856 = vpack.c.bf16 %v8632, %v8583
        %v8857 = vpack.c.bf16 %v8730, %v8681
        %v8858 = vpack.c.bf16 %v8828, %v8779
        %v8859 = vpack.c.bf16 %v8842, %v8842
        %v8860 = vld [vmem:[%s4] sm:$0xf]
        %v8861 = vld [vmem:[%s4 + $0x4] sm:$0xf]
        %v8862 = vld [vmem:[%s4 + $0x8] sm:$0xf]
        %v8863 = vld [vmem:[%s4 + $0xc] sm:$0xf]
        %v8864 = vld [vmem:[%s5] sm:$0x1]
        %v8866 = vlaneseq
        %v8867 = vshrl.u32 %v8866, 7
        %v8868 = vsub.s32 0, %v8867
        %v8869 = vrot.slane %v8864, %v8868
        %v8875 = vunpack.c.l.b16 %v8860
        %v8876 = vunpack.c.l.b16 %v8861
        %v8877 = vunpack.c.l.b16 %v8862
        %v8878 = vunpack.c.l.b16 %v8863
        %v8879 = vpack.c.b16 %v8876, %v8875
        %v8880 = vpack.c.b16 %v8878, %v8877
        %v8884 = vsel %vm1731, %v8854, 0
        %v8887 = vsel %vm1731, %v8855, 0
        %v8890 = vsel %vm1731, %v8856, 0
        %v8893 = vsel %vm1731, %v8857, 0
        %v8896 = vsel %vm1731, %v8858, 0
        %v8899 = vsel %vm1731, %v8859, 0
        %8901 = vmatprep.subr.bf16.mxu0 0
        %8902 = vmatpush1.bf16.msra.mxu0 0
        %8903 = vmatprep.subr.bf16.mxu0 0
        %8904 = vmatpush1.bf16.msra.mxu0 0
        %8905 = vmatprep.subr.bf16.mxu0 0
        %8906 = vmatpush1.bf16.msra.mxu0 0
        %8907 = vmatprep.subr.bf16.mxu0 0
        %8908 = vmatpush1.bf16.msra.mxu0 0
        %8909 = vmatprep.subr.bf16.mxu0 0
        %8910 = vmatpush1.bf16.msra.mxu0 0
        %8911 = vmatprep.subr.bf16.mxu0 0
        %8912 = vmatpush1.bf16.msra.mxu0 0
        %8913 = vmatprep.subr.bf16.mxu0 0
        %8914 = vmatpush1.bf16.msra.mxu0 %v8880
        %8915 = vmatprep.subr.bf16.mxu0 0
        %8916 = vmatpush1.bf16.msra.mxu0 %v8879
        %8917 = vmatprep.subr.bf16.mxu0 0
        %8918 = vmatpush2.bf16.msra.mxu0 0
        %8919 = vmatprep.subr.bf16.mxu0 0
        %8920 = vmatpush2.bf16.msra.mxu0 0
        %8921 = vmatprep.subr.bf16.mxu0 0
        %8922 = vmatpush2.bf16.msra.mxu0 0
        %8923 = vmatprep.subr.bf16.mxu0 0
        %8924 = vmatpush2.bf16.msra.mxu0 0
        %8925 = vmatprep.subr.bf16.mxu0 0
        %8926 = vmatpush2.bf16.msra.mxu0 0
        %8927 = vmatprep.subr.bf16.mxu0 0
        %8928 = vmatpush2.bf16.msra.mxu0 0
        %8929 = vmatprep.subr.bf16.mxu0 0
        %8930 = vmatpush2.bf16.msra.mxu0 0
        %8931 = vmatprep.subr.bf16.mxu0 0
        %8932 = vmatpush2.bf16.msra.mxu0 0
        %8933 = vmatprep.mubr.bf16.mxu0 0
        %8934 = vmatmul.mubr.bf16.gmra.mxu0 %v8884
        %v8935 = vpop.f32.mrf.mxu0
        %v8936 = vadd.f32 %v8869, %v8935
        %v8937 = vpop.f32.mrf.mxu0
        %v8938 = vpop.f32.mrf.mxu0
        %v8939 = vadd.f32 %v8869, %v8938
        %v8940 = vpop.f32.mrf.mxu0
        %8941 = vmatprep.mubr.bf16.mxu0 0
        %8942 = vmatmul.mubr.bf16.gmra.mxu0 %v8887
        %v8943 = vpop.f32.mrf.mxu0
        %v8944 = vadd.f32 %v8869, %v8943
        %v8945 = vpop.f32.mrf.mxu0
        %v8946 = vpop.f32.mrf.mxu0
        %v8947 = vadd.f32 %v8869, %v8946
        %v8948 = vpop.f32.mrf.mxu0
        %8949 = vmatprep.mubr.bf16.mxu0 0
        %8950 = vmatmul.mubr.bf16.gmra.mxu0 %v8890
        %v8951 = vpop.f32.mrf.mxu0
        %v8952 = vadd.f32 %v8869, %v8951
        %v8953 = vpop.f32.mrf.mxu0
        %v8954 = vpop.f32.mrf.mxu0
        %v8955 = vadd.f32 %v8869, %v8954
        %v8956 = vpop.f32.mrf.mxu0
        %8957 = vmatprep.mubr.bf16.mxu0 0
        %8958 = vmatmul.mubr.bf16.gmra.mxu0 %v8893
        %v8959 = vpop.f32.mrf.mxu0
        %v8960 = vadd.f32 %v8869, %v8959
        %v8961 = vpop.f32.mrf.mxu0
        %v8962 = vpop.f32.mrf.mxu0
        %v8963 = vadd.f32 %v8869, %v8962
        %v8964 = vpop.f32.mrf.mxu0
        %8965 = vmatprep.mubr.bf16.mxu0 0
        %8966 = vmatmul.mubr.bf16.gmra.mxu0 %v8896
        %v8967 = vpop.f32.mrf.mxu0
        %v8968 = vadd.f32 %v8869, %v8967
        %v8969 = vpop.f32.mrf.mxu0
        %v8970 = vpop.f32.mrf.mxu0
        %v8971 = vadd.f32 %v8869, %v8970
        %v8972 = vpop.f32.mrf.mxu0
        %8973 = vmatprep.mubr.bf16.mxu0 0
        %8974 = vmatmul.mubr.bf16.gmra.mxu0 %v8899
        %v8975 = vpop.f32.mrf.mxu0
        %v8976 = vadd.f32 %v8869, %v8975
        %v8977 = vpop.f32.mrf.mxu0
        %v8978 = vpop.f32.mrf.mxu0
        %v8979 = vpop.f32.mrf.mxu0
        %8980 = vdwg.mxu0
        %v8981 = vmax.f32 %v8936, 0.0
        %v8982 = vmax.f32 %v8939, 0.0
        %v8983 = vmax.f32 %v8944, 0.0
        %v8984 = vmax.f32 %v8947, 0.0
        %v8985 = vmax.f32 %v8952, 0.0
        %v8986 = vmax.f32 %v8955, 0.0
        %v8987 = vmax.f32 %v8960, 0.0
        %v8988 = vmax.f32 %v8963, 0.0
        %v8989 = vmax.f32 %v8968, 0.0
        %v8990 = vmax.f32 %v8971, 0.0
        %v8991 = vmax.f32 %v8976, 0.0
        %v9003 = vcombine.high %v8981, %v8981
        %v9005 = vunpack.c.l.s4 1966171168
        %v9006 = vunpack.c.0.s8 %v9005
        %v9007 = vlaneseq
        %v9008 = vshrl.u32 %v9007, 7
        %v9009 = vsub.s32 %v9006, %v9008
        %v9010 = vrot.slane %v8981, %v9009
        %v9012 = vunpack.c.l.s4 1966171168
        %v9013 = vunpack.c.0.s8 %v9012
        %v9014 = vlaneseq
        %v9015 = vshrl.u32 %v9014, 7
        %v9016 = vsub.s32 %v9013, %v9015
        %v9017 = vrot.slane %v9003, %v9016
        %v9018 = vcombine.high %v9010, %v9010
        %v9019 = vcombine.high %v9017, %v9017
        %v9021 = vunpack.c.l.s4 1966171168
        %v9022 = vunpack.c.0.s8 %v9021
        %v9023 = vlaneseq
        %v9024 = vshrl.u32 %v9023, 7
        %v9025 = vsub.s32 %v9022, %v9024
        %v9026 = vrot.slane %v9010, %v9025
        %v9028 = vunpack.c.l.s4 1966171168
        %v9029 = vunpack.c.0.s8 %v9028
        %v9030 = vlaneseq
        %v9031 = vshrl.u32 %v9030, 7
        %v9032 = vsub.s32 %v9029, %v9031
        %v9033 = vrot.slane %v9017, %v9032
        %v9035 = vunpack.c.l.s4 1966171168
        %v9036 = vunpack.c.0.s8 %v9035
        %v9037 = vlaneseq
        %v9038 = vshrl.u32 %v9037, 7
        %v9039 = vsub.s32 %v9036, %v9038
        %v9040 = vrot.slane %v9018, %v9039
        %v9042 = vunpack.c.l.s4 1966171168
        %v9043 = vunpack.c.0.s8 %v9042
        %v9044 = vlaneseq
        %v9045 = vshrl.u32 %v9044, 7
        %v9046 = vsub.s32 %v9043, %v9045
        %v9047 = vrot.slane %v9019, %v9046
        %v9048 = vcombine.high %v9026, %v9026
        %v9049 = vcombine.high %v9033, %v9033
        %v9050 = vcombine.high %v9040, %v9040
        %v9051 = vcombine.high %v9047, %v9047
        %v9052 = vcombine.high %v8982, %v8982
        %v9054 = vunpack.c.l.s4 1966171168
        %v9055 = vunpack.c.0.s8 %v9054
        %v9056 = vlaneseq
        %v9057 = vshrl.u32 %v9056, 7
        %v9058 = vsub.s32 %v9055, %v9057
        %v9059 = vrot.slane %v8982, %v9058
        %v9061 = vunpack.c.l.s4 1966171168
        %v9062 = vunpack.c.0.s8 %v9061
        %v9063 = vlaneseq
        %v9064 = vshrl.u32 %v9063, 7
        %v9065 = vsub.s32 %v9062, %v9064
        %v9066 = vrot.slane %v9052, %v9065
        %v9067 = vcombine.high %v9059, %v9059
        %v9068 = vcombine.high %v9066, %v9066
        %v9070 = vunpack.c.l.s4 1966171168
        %v9071 = vunpack.c.0.s8 %v9070
        %v9072 = vlaneseq
        %v9073 = vshrl.u32 %v9072, 7
        %v9074 = vsub.s32 %v9071, %v9073
        %v9075 = vrot.slane %v9059, %v9074
        %v9077 = vunpack.c.l.s4 1966171168
        %v9078 = vunpack.c.0.s8 %v9077
        %v9079 = vlaneseq
        %v9080 = vshrl.u32 %v9079, 7
        %v9081 = vsub.s32 %v9078, %v9080
        %v9082 = vrot.slane %v9066, %v9081
        %v9084 = vunpack.c.l.s4 1966171168
        %v9085 = vunpack.c.0.s8 %v9084
        %v9086 = vlaneseq
        %v9087 = vshrl.u32 %v9086, 7
        %v9088 = vsub.s32 %v9085, %v9087
        %v9089 = vrot.slane %v9067, %v9088
        %v9091 = vunpack.c.l.s4 1966171168
        %v9092 = vunpack.c.0.s8 %v9091
        %v9093 = vlaneseq
        %v9094 = vshrl.u32 %v9093, 7
        %v9095 = vsub.s32 %v9092, %v9094
        %v9096 = vrot.slane %v9068, %v9095
        %v9097 = vcombine.high %v9075, %v9075
        %v9098 = vcombine.high %v9082, %v9082
        %v9099 = vcombine.high %v9089, %v9089
        %v9100 = vcombine.high %v9096, %v9096
        %v9101 = vcombine.high %v8983, %v8983
        %v9103 = vunpack.c.l.s4 1966171168
        %v9104 = vunpack.c.0.s8 %v9103
        %v9105 = vlaneseq
        %v9106 = vshrl.u32 %v9105, 7
        %v9107 = vsub.s32 %v9104, %v9106
        %v9108 = vrot.slane %v8983, %v9107
        %v9110 = vunpack.c.l.s4 1966171168
        %v9111 = vunpack.c.0.s8 %v9110
        %v9112 = vlaneseq
        %v9113 = vshrl.u32 %v9112, 7
        %v9114 = vsub.s32 %v9111, %v9113
        %v9115 = vrot.slane %v9101, %v9114
        %v9116 = vcombine.high %v9108, %v9108
        %v9117 = vcombine.high %v9115, %v9115
        %v9119 = vunpack.c.l.s4 1966171168
        %v9120 = vunpack.c.0.s8 %v9119
        %v9121 = vlaneseq
        %v9122 = vshrl.u32 %v9121, 7
        %v9123 = vsub.s32 %v9120, %v9122
        %v9124 = vrot.slane %v9108, %v9123
        %v9126 = vunpack.c.l.s4 1966171168
        %v9127 = vunpack.c.0.s8 %v9126
        %v9128 = vlaneseq
        %v9129 = vshrl.u32 %v9128, 7
        %v9130 = vsub.s32 %v9127, %v9129
        %v9131 = vrot.slane %v9115, %v9130
        %v9133 = vunpack.c.l.s4 1966171168
        %v9134 = vunpack.c.0.s8 %v9133
        %v9135 = vlaneseq
        %v9136 = vshrl.u32 %v9135, 7
        %v9137 = vsub.s32 %v9134, %v9136
        %v9138 = vrot.slane %v9116, %v9137
        %v9140 = vunpack.c.l.s4 1966171168
        %v9141 = vunpack.c.0.s8 %v9140
        %v9142 = vlaneseq
        %v9143 = vshrl.u32 %v9142, 7
        %v9144 = vsub.s32 %v9141, %v9143
        %v9145 = vrot.slane %v9117, %v9144
        %v9146 = vcombine.high %v9124, %v9124
        %v9147 = vcombine.high %v9131, %v9131
        %v9148 = vcombine.high %v9138, %v9138
        %v9149 = vcombine.high %v9145, %v9145
        %v9150 = vcombine.high %v8984, %v8984
        %v9152 = vunpack.c.l.s4 1966171168
        %v9153 = vunpack.c.0.s8 %v9152
        %v9154 = vlaneseq
        %v9155 = vshrl.u32 %v9154, 7
        %v9156 = vsub.s32 %v9153, %v9155
        %v9157 = vrot.slane %v8984, %v9156
        %v9159 = vunpack.c.l.s4 1966171168
        %v9160 = vunpack.c.0.s8 %v9159
        %v9161 = vlaneseq
        %v9162 = vshrl.u32 %v9161, 7
        %v9163 = vsub.s32 %v9160, %v9162
        %v9164 = vrot.slane %v9150, %v9163
        %v9165 = vcombine.high %v9157, %v9157
        %v9166 = vcombine.high %v9164, %v9164
        %v9168 = vunpack.c.l.s4 1966171168
        %v9169 = vunpack.c.0.s8 %v9168
        %v9170 = vlaneseq
        %v9171 = vshrl.u32 %v9170, 7
        %v9172 = vsub.s32 %v9169, %v9171
        %v9173 = vrot.slane %v9157, %v9172
        %v9175 = vunpack.c.l.s4 1966171168
        %v9176 = vunpack.c.0.s8 %v9175
        %v9177 = vlaneseq
        %v9178 = vshrl.u32 %v9177, 7
        %v9179 = vsub.s32 %v9176, %v9178
        %v9180 = vrot.slane %v9164, %v9179
        %v9182 = vunpack.c.l.s4 1966171168
        %v9183 = vunpack.c.0.s8 %v9182
        %v9184 = vlaneseq
        %v9185 = vshrl.u32 %v9184, 7
        %v9186 = vsub.s32 %v9183, %v9185
        %v9187 = vrot.slane %v9165, %v9186
        %v9189 = vunpack.c.l.s4 1966171168
        %v9190 = vunpack.c.0.s8 %v9189
        %v9191 = vlaneseq
        %v9192 = vshrl.u32 %v9191, 7
        %v9193 = vsub.s32 %v9190, %v9192
        %v9194 = vrot.slane %v9166, %v9193
        %v9195 = vcombine.high %v9173, %v9173
        %v9196 = vcombine.high %v9180, %v9180
        %v9197 = vcombine.high %v9187, %v9187
        %v9198 = vcombine.high %v9194, %v9194
        %v9199 = vcombine.high %v8985, %v8985
        %v9201 = vunpack.c.l.s4 1966171168
        %v9202 = vunpack.c.0.s8 %v9201
        %v9203 = vlaneseq
        %v9204 = vshrl.u32 %v9203, 7
        %v9205 = vsub.s32 %v9202, %v9204
        %v9206 = vrot.slane %v8985, %v9205
        %v9208 = vunpack.c.l.s4 1966171168
        %v9209 = vunpack.c.0.s8 %v9208
        %v9210 = vlaneseq
        %v9211 = vshrl.u32 %v9210, 7
        %v9212 = vsub.s32 %v9209, %v9211
        %v9213 = vrot.slane %v9199, %v9212
        %v9214 = vcombine.high %v9206, %v9206
        %v9215 = vcombine.high %v9213, %v9213
        %v9217 = vunpack.c.l.s4 1966171168
        %v9218 = vunpack.c.0.s8 %v9217
        %v9219 = vlaneseq
        %v9220 = vshrl.u32 %v9219, 7
        %v9221 = vsub.s32 %v9218, %v9220
        %v9222 = vrot.slane %v9206, %v9221
        %v9224 = vunpack.c.l.s4 1966171168
        %v9225 = vunpack.c.0.s8 %v9224
        %v9226 = vlaneseq
        %v9227 = vshrl.u32 %v9226, 7
        %v9228 = vsub.s32 %v9225, %v9227
        %v9229 = vrot.slane %v9213, %v9228
        %v9231 = vunpack.c.l.s4 1966171168
        %v9232 = vunpack.c.0.s8 %v9231
        %v9233 = vlaneseq
        %v9234 = vshrl.u32 %v9233, 7
        %v9235 = vsub.s32 %v9232, %v9234
        %v9236 = vrot.slane %v9214, %v9235
        %v9238 = vunpack.c.l.s4 1966171168
        %v9239 = vunpack.c.0.s8 %v9238
        %v9240 = vlaneseq
        %v9241 = vshrl.u32 %v9240, 7
        %v9242 = vsub.s32 %v9239, %v9241
        %v9243 = vrot.slane %v9215, %v9242
        %v9244 = vcombine.high %v9222, %v9222
        %v9245 = vcombine.high %v9229, %v9229
        %v9246 = vcombine.high %v9236, %v9236
        %v9247 = vcombine.high %v9243, %v9243
        %v9248 = vcombine.high %v8986, %v8986
        %v9250 = vunpack.c.l.s4 1966171168
        %v9251 = vunpack.c.0.s8 %v9250
        %v9252 = vlaneseq
        %v9253 = vshrl.u32 %v9252, 7
        %v9254 = vsub.s32 %v9251, %v9253
        %v9255 = vrot.slane %v8986, %v9254
        %v9257 = vunpack.c.l.s4 1966171168
        %v9258 = vunpack.c.0.s8 %v9257
        %v9259 = vlaneseq
        %v9260 = vshrl.u32 %v9259, 7
        %v9261 = vsub.s32 %v9258, %v9260
        %v9262 = vrot.slane %v9248, %v9261
        %v9263 = vcombine.high %v9255, %v9255
        %v9264 = vcombine.high %v9262, %v9262
        %v9266 = vunpack.c.l.s4 1966171168
        %v9267 = vunpack.c.0.s8 %v9266
        %v9268 = vlaneseq
        %v9269 = vshrl.u32 %v9268, 7
        %v9270 = vsub.s32 %v9267, %v9269
        %v9271 = vrot.slane %v9255, %v9270
        %v9273 = vunpack.c.l.s4 1966171168
        %v9274 = vunpack.c.0.s8 %v9273
        %v9275 = vlaneseq
        %v9276 = vshrl.u32 %v9275, 7
        %v9277 = vsub.s32 %v9274, %v9276
        %v9278 = vrot.slane %v9262, %v9277
        %v9280 = vunpack.c.l.s4 1966171168
        %v9281 = vunpack.c.0.s8 %v9280
        %v9282 = vlaneseq
        %v9283 = vshrl.u32 %v9282, 7
        %v9284 = vsub.s32 %v9281, %v9283
        %v9285 = vrot.slane %v9263, %v9284
        %v9287 = vunpack.c.l.s4 1966171168
        %v9288 = vunpack.c.0.s8 %v9287
        %v9289 = vlaneseq
        %v9290 = vshrl.u32 %v9289, 7
        %v9291 = vsub.s32 %v9288, %v9290
        %v9292 = vrot.slane %v9264, %v9291
        %v9293 = vcombine.high %v9271, %v9271
        %v9294 = vcombine.high %v9278, %v9278
        %v9295 = vcombine.high %v9285, %v9285
        %v9296 = vcombine.high %v9292, %v9292
        %v9297 = vcombine.high %v8987, %v8987
        %v9299 = vunpack.c.l.s4 1966171168
        %v9300 = vunpack.c.0.s8 %v9299
        %v9301 = vlaneseq
        %v9302 = vshrl.u32 %v9301, 7
        %v9303 = vsub.s32 %v9300, %v9302
        %v9304 = vrot.slane %v8987, %v9303
        %v9306 = vunpack.c.l.s4 1966171168
        %v9307 = vunpack.c.0.s8 %v9306
        %v9308 = vlaneseq
        %v9309 = vshrl.u32 %v9308, 7
        %v9310 = vsub.s32 %v9307, %v9309
        %v9311 = vrot.slane %v9297, %v9310
        %v9312 = vcombine.high %v9304, %v9304
        %v9313 = vcombine.high %v9311, %v9311
        %v9315 = vunpack.c.l.s4 1966171168
        %v9316 = vunpack.c.0.s8 %v9315
        %v9317 = vlaneseq
        %v9318 = vshrl.u32 %v9317, 7
        %v9319 = vsub.s32 %v9316, %v9318
        %v9320 = vrot.slane %v9304, %v9319
        %v9322 = vunpack.c.l.s4 1966171168
        %v9323 = vunpack.c.0.s8 %v9322
        %v9324 = vlaneseq
        %v9325 = vshrl.u32 %v9324, 7
        %v9326 = vsub.s32 %v9323, %v9325
        %v9327 = vrot.slane %v9311, %v9326
        %v9329 = vunpack.c.l.s4 1966171168
        %v9330 = vunpack.c.0.s8 %v9329
        %v9331 = vlaneseq
        %v9332 = vshrl.u32 %v9331, 7
        %v9333 = vsub.s32 %v9330, %v9332
        %v9334 = vrot.slane %v9312, %v9333
        %v9336 = vunpack.c.l.s4 1966171168
        %v9337 = vunpack.c.0.s8 %v9336
        %v9338 = vlaneseq
        %v9339 = vshrl.u32 %v9338, 7
        %v9340 = vsub.s32 %v9337, %v9339
        %v9341 = vrot.slane %v9313, %v9340
        %v9342 = vcombine.high %v9320, %v9320
        %v9343 = vcombine.high %v9327, %v9327
        %v9344 = vcombine.high %v9334, %v9334
        %v9345 = vcombine.high %v9341, %v9341
        %v9346 = vcombine.high %v8988, %v8988
        %v9348 = vunpack.c.l.s4 1966171168
        %v9349 = vunpack.c.0.s8 %v9348
        %v9350 = vlaneseq
        %v9351 = vshrl.u32 %v9350, 7
        %v9352 = vsub.s32 %v9349, %v9351
        %v9353 = vrot.slane %v8988, %v9352
        %v9355 = vunpack.c.l.s4 1966171168
        %v9356 = vunpack.c.0.s8 %v9355
        %v9357 = vlaneseq
        %v9358 = vshrl.u32 %v9357, 7
        %v9359 = vsub.s32 %v9356, %v9358
        %v9360 = vrot.slane %v9346, %v9359
        %v9361 = vcombine.high %v9353, %v9353
        %v9362 = vcombine.high %v9360, %v9360
        %v9364 = vunpack.c.l.s4 1966171168
        %v9365 = vunpack.c.0.s8 %v9364
        %v9366 = vlaneseq
        %v9367 = vshrl.u32 %v9366, 7
        %v9368 = vsub.s32 %v9365, %v9367
        %v9369 = vrot.slane %v9353, %v9368
        %v9371 = vunpack.c.l.s4 1966171168
        %v9372 = vunpack.c.0.s8 %v9371
        %v9373 = vlaneseq
        %v9374 = vshrl.u32 %v9373, 7
        %v9375 = vsub.s32 %v9372, %v9374
        %v9376 = vrot.slane %v9360, %v9375
        %v9378 = vunpack.c.l.s4 1966171168
        %v9379 = vunpack.c.0.s8 %v9378
        %v9380 = vlaneseq
        %v9381 = vshrl.u32 %v9380, 7
        %v9382 = vsub.s32 %v9379, %v9381
        %v9383 = vrot.slane %v9361, %v9382
        %v9385 = vunpack.c.l.s4 1966171168
        %v9386 = vunpack.c.0.s8 %v9385
        %v9387 = vlaneseq
        %v9388 = vshrl.u32 %v9387, 7
        %v9389 = vsub.s32 %v9386, %v9388
        %v9390 = vrot.slane %v9362, %v9389
        %v9391 = vcombine.high %v9369, %v9369
        %v9392 = vcombine.high %v9376, %v9376
        %v9393 = vcombine.high %v9383, %v9383
        %v9394 = vcombine.high %v9390, %v9390
        %v9395 = vcombine.high %v8989, %v8989
        %v9397 = vunpack.c.l.s4 1966171168
        %v9398 = vunpack.c.0.s8 %v9397
        %v9399 = vlaneseq
        %v9400 = vshrl.u32 %v9399, 7
        %v9401 = vsub.s32 %v9398, %v9400
        %v9402 = vrot.slane %v8989, %v9401
        %v9404 = vunpack.c.l.s4 1966171168
        %v9405 = vunpack.c.0.s8 %v9404
        %v9406 = vlaneseq
        %v9407 = vshrl.u32 %v9406, 7
        %v9408 = vsub.s32 %v9405, %v9407
        %v9409 = vrot.slane %v9395, %v9408
        %v9410 = vcombine.high %v9402, %v9402
        %v9411 = vcombine.high %v9409, %v9409
        %v9413 = vunpack.c.l.s4 1966171168
        %v9414 = vunpack.c.0.s8 %v9413
        %v9415 = vlaneseq
        %v9416 = vshrl.u32 %v9415, 7
        %v9417 = vsub.s32 %v9414, %v9416
        %v9418 = vrot.slane %v9402, %v9417
        %v9420 = vunpack.c.l.s4 1966171168
        %v9421 = vunpack.c.0.s8 %v9420
        %v9422 = vlaneseq
        %v9423 = vshrl.u32 %v9422, 7
        %v9424 = vsub.s32 %v9421, %v9423
        %v9425 = vrot.slane %v9409, %v9424
        %v9427 = vunpack.c.l.s4 1966171168
        %v9428 = vunpack.c.0.s8 %v9427
        %v9429 = vlaneseq
        %v9430 = vshrl.u32 %v9429, 7
        %v9431 = vsub.s32 %v9428, %v9430
        %v9432 = vrot.slane %v9410, %v9431
        %v9434 = vunpack.c.l.s4 1966171168
        %v9435 = vunpack.c.0.s8 %v9434
        %v9436 = vlaneseq
        %v9437 = vshrl.u32 %v9436, 7
        %v9438 = vsub.s32 %v9435, %v9437
        %v9439 = vrot.slane %v9411, %v9438
        %v9440 = vcombine.high %v9418, %v9418
        %v9441 = vcombine.high %v9425, %v9425
        %v9442 = vcombine.high %v9432, %v9432
        %v9443 = vcombine.high %v9439, %v9439
        %v9444 = vcombine.high %v8990, %v8990
        %v9446 = vunpack.c.l.s4 1966171168
        %v9447 = vunpack.c.0.s8 %v9446
        %v9448 = vlaneseq
        %v9449 = vshrl.u32 %v9448, 7
        %v9450 = vsub.s32 %v9447, %v9449
        %v9451 = vrot.slane %v8990, %v9450
        %v9453 = vunpack.c.l.s4 1966171168
        %v9454 = vunpack.c.0.s8 %v9453
        %v9455 = vlaneseq
        %v9456 = vshrl.u32 %v9455, 7
        %v9457 = vsub.s32 %v9454, %v9456
        %v9458 = vrot.slane %v9444, %v9457
        %v9459 = vcombine.high %v9451, %v9451
        %v9460 = vcombine.high %v9458, %v9458
        %v9462 = vunpack.c.l.s4 1966171168
        %v9463 = vunpack.c.0.s8 %v9462
        %v9464 = vlaneseq
        %v9465 = vshrl.u32 %v9464, 7
        %v9466 = vsub.s32 %v9463, %v9465
        %v9467 = vrot.slane %v9451, %v9466
        %v9469 = vunpack.c.l.s4 1966171168
        %v9470 = vunpack.c.0.s8 %v9469
        %v9471 = vlaneseq
        %v9472 = vshrl.u32 %v9471, 7
        %v9473 = vsub.s32 %v9470, %v9472
        %v9474 = vrot.slane %v9458, %v9473
        %v9476 = vunpack.c.l.s4 1966171168
        %v9477 = vunpack.c.0.s8 %v9476
        %v9478 = vlaneseq
        %v9479 = vshrl.u32 %v9478, 7
        %v9480 = vsub.s32 %v9477, %v9479
        %v9481 = vrot.slane %v9459, %v9480
        %v9483 = vunpack.c.l.s4 1966171168
        %v9484 = vunpack.c.0.s8 %v9483
        %v9485 = vlaneseq
        %v9486 = vshrl.u32 %v9485, 7
        %v9487 = vsub.s32 %v9484, %v9486
        %v9488 = vrot.slane %v9460, %v9487
        %v9489 = vcombine.high %v9467, %v9467
        %v9490 = vcombine.high %v9474, %v9474
        %v9491 = vcombine.high %v9481, %v9481
        %v9492 = vcombine.high %v9488, %v9488
        %v9494 = vunpack.c.l.s4 1966171168
        %v9495 = vunpack.c.0.s8 %v9494
        %v9496 = vlaneseq
        %v9497 = vshrl.u32 %v9496, 7
        %v9498 = vsub.s32 %v9495, %v9497
        %v9499 = vrot.slane %v8991, %v9498
        %v9501 = vunpack.c.l.s4 1966171168
        %v9502 = vunpack.c.0.s8 %v9501
        %v9503 = vlaneseq
        %v9504 = vshrl.u32 %v9503, 7
        %v9505 = vsub.s32 %v9502, %v9504
        %v9506 = vrot.slane %v9499, %v9505
        %v9507 = vcombine.low %v9026, %v9040
        %v9508 = vcombine.low %v9048, %v9050
        %v9509 = vcombine.low %v9033, %v9047
        %v9510 = vcombine.low %v9049, %v9051
        %v9512 = vunpack.c.l.s4 1966171168
        %v9513 = vunpack.c.0.s8 %v9512
        %v9514 = vlaneseq
        %v9515 = vshrl.u32 %v9514, 7
        %v9516 = vsub.s32 %v9513, %v9515
        %v9517 = vrot.slane %v9507, %v9516
        %v9519 = vunpack.c.l.s4 1966171168
        %v9520 = vunpack.c.0.s8 %v9519
        %v9521 = vlaneseq
        %v9522 = vshrl.u32 %v9521, 7
        %v9523 = vsub.s32 %v9520, %v9522
        %v9524 = vrot.slane %v9508, %v9523
        %v9526 = vunpack.c.l.s4 1966171168
        %v9527 = vunpack.c.0.s8 %v9526
        %v9528 = vlaneseq
        %v9529 = vshrl.u32 %v9528, 7
        %v9530 = vsub.s32 %v9527, %v9529
        %v9531 = vrot.slane %v9509, %v9530
        %v9533 = vunpack.c.l.s4 1966171168
        %v9534 = vunpack.c.0.s8 %v9533
        %v9535 = vlaneseq
        %v9536 = vshrl.u32 %v9535, 7
        %v9537 = vsub.s32 %v9534, %v9536
        %v9538 = vrot.slane %v9510, %v9537
        %v9539 = vcombine.low %v9517, %v9524
        %v9540 = vcombine.low %v9531, %v9538
        %v9542 = vunpack.c.l.s4 1966171168
        %v9543 = vunpack.c.0.s8 %v9542
        %v9544 = vlaneseq
        %v9545 = vshrl.u32 %v9544, 7
        %v9546 = vsub.s32 %v9543, %v9545
        %v9547 = vrot.slane %v9539, %v9546
        %v9549 = vunpack.c.l.s4 1966171168
        %v9550 = vunpack.c.0.s8 %v9549
        %v9551 = vlaneseq
        %v9552 = vshrl.u32 %v9551, 7
        %v9553 = vsub.s32 %v9550, %v9552
        %v9554 = vrot.slane %v9540, %v9553
        %v9555 = vcombine.low %v9547, %v9554
        %v9557 = vunpack.c.l.s4 1966171168
        %v9558 = vunpack.c.0.s8 %v9557
        %v9559 = vlaneseq
        %v9560 = vshrl.u32 %v9559, 7
        %v9561 = vsub.s32 %v9558, %v9560
        %v9562 = vrot.slane %v9075, %v9561
        %v9564 = vunpack.c.l.s4 1966171168
        %v9565 = vunpack.c.0.s8 %v9564
        %v9566 = vlaneseq
        %v9567 = vshrl.u32 %v9566, 7
        %v9568 = vsub.s32 %v9565, %v9567
        %v9569 = vrot.slane %v9562, %v9568
        %v9570 = vcombine.low %v9089, %v9097
        %v9571 = vcombine.low %v9099, %v9082
        %v9572 = vcombine.low %v9096, %v9098
        %v9573 = vcombine.low %v9100, %v9124
        %v9575 = vunpack.c.l.s4 1966171168
        %v9576 = vunpack.c.0.s8 %v9575
        %v9577 = vlaneseq
        %v9578 = vshrl.u32 %v9577, 7
        %v9579 = vsub.s32 %v9576, %v9578
        %v9580 = vrot.slane %v9570, %v9579
        %v9582 = vunpack.c.l.s4 1966171168
        %v9583 = vunpack.c.0.s8 %v9582
        %v9584 = vlaneseq
        %v9585 = vshrl.u32 %v9584, 7
        %v9586 = vsub.s32 %v9583, %v9585
        %v9587 = vrot.slane %v9571, %v9586
        %v9589 = vunpack.c.l.s4 1966171168
        %v9590 = vunpack.c.0.s8 %v9589
        %v9591 = vlaneseq
        %v9592 = vshrl.u32 %v9591, 7
        %v9593 = vsub.s32 %v9590, %v9592
        %v9594 = vrot.slane %v9572, %v9593
        %v9596 = vunpack.c.l.s4 1966171168
        %v9597 = vunpack.c.0.s8 %v9596
        %v9598 = vlaneseq
        %v9599 = vshrl.u32 %v9598, 7
        %v9600 = vsub.s32 %v9597, %v9599
        %v9601 = vrot.slane %v9573, %v9600
        %v9602 = vcombine.low %v9580, %v9587
        %v9603 = vcombine.low %v9594, %v9601
        %v9605 = vunpack.c.l.s4 1966171168
        %v9606 = vunpack.c.0.s8 %v9605
        %v9607 = vlaneseq
        %v9608 = vshrl.u32 %v9607, 7
        %v9609 = vsub.s32 %v9606, %v9608
        %v9610 = vrot.slane %v9602, %v9609
        %v9612 = vunpack.c.l.s4 1966171168
        %v9613 = vunpack.c.0.s8 %v9612
        %v9614 = vlaneseq
        %v9615 = vshrl.u32 %v9614, 7
        %v9616 = vsub.s32 %v9613, %v9615
        %v9617 = vrot.slane %v9603, %v9616
        %v9618 = vcombine.low %v9610, %v9617
        %v9620 = vunpack.c.l.s4 1966171168
        %v9621 = vunpack.c.0.s8 %v9620
        %v9622 = vlaneseq
        %v9623 = vshrl.u32 %v9622, 7
        %v9624 = vsub.s32 %v9621, %v9623
        %v9625 = vrot.slane %v9138, %v9624
        %v9627 = vunpack.c.l.s4 1966171168
        %v9628 = vunpack.c.0.s8 %v9627
        %v9629 = vlaneseq
        %v9630 = vshrl.u32 %v9629, 7
        %v9631 = vsub.s32 %v9628, %v9630
        %v9632 = vrot.slane %v9625, %v9631
        %v9633 = vcombine.low %v9146, %v9148
        %v9634 = vcombine.low %v9131, %v9145
        %v9635 = vcombine.low %v9147, %v9149
        %v9636 = vcombine.low %v9173, %v9187
        %v9638 = vunpack.c.l.s4 1966171168
        %v9639 = vunpack.c.0.s8 %v9638
        %v9640 = vlaneseq
        %v9641 = vshrl.u32 %v9640, 7
        %v9642 = vsub.s32 %v9639, %v9641
        %v9643 = vrot.slane %v9633, %v9642
        %v9645 = vunpack.c.l.s4 1966171168
        %v9646 = vunpack.c.0.s8 %v9645
        %v9647 = vlaneseq
        %v9648 = vshrl.u32 %v9647, 7
        %v9649 = vsub.s32 %v9646, %v9648
        %v9650 = vrot.slane %v9634, %v9649
        %v9652 = vunpack.c.l.s4 1966171168
        %v9653 = vunpack.c.0.s8 %v9652
        %v9654 = vlaneseq
        %v9655 = vshrl.u32 %v9654, 7
        %v9656 = vsub.s32 %v9653, %v9655
        %v9657 = vrot.slane %v9635, %v9656
        %v9659 = vunpack.c.l.s4 1966171168
        %v9660 = vunpack.c.0.s8 %v9659
        %v9661 = vlaneseq
        %v9662 = vshrl.u32 %v9661, 7
        %v9663 = vsub.s32 %v9660, %v9662
        %v9664 = vrot.slane %v9636, %v9663
        %v9665 = vcombine.low %v9643, %v9650
        %v9666 = vcombine.low %v9657, %v9664
        %v9668 = vunpack.c.l.s4 1966171168
        %v9669 = vunpack.c.0.s8 %v9668
        %v9670 = vlaneseq
        %v9671 = vshrl.u32 %v9670, 7
        %v9672 = vsub.s32 %v9669, %v9671
        %v9673 = vrot.slane %v9665, %v9672
        %v9675 = vunpack.c.l.s4 1966171168
        %v9676 = vunpack.c.0.s8 %v9675
        %v9677 = vlaneseq
        %v9678 = vshrl.u32 %v9677, 7
        %v9679 = vsub.s32 %v9676, %v9678
        %v9680 = vrot.slane %v9666, %v9679
        %v9681 = vcombine.low %v9673, %v9680
        %v9683 = vunpack.c.l.s4 1966171168
        %v9684 = vunpack.c.0.s8 %v9683
        %v9685 = vlaneseq
        %v9686 = vshrl.u32 %v9685, 7
        %v9687 = vsub.s32 %v9684, %v9686
        %v9688 = vrot.slane %v9195, %v9687
        %v9690 = vunpack.c.l.s4 1966171168
        %v9691 = vunpack.c.0.s8 %v9690
        %v9692 = vlaneseq
        %v9693 = vshrl.u32 %v9692, 7
        %v9694 = vsub.s32 %v9691, %v9693
        %v9695 = vrot.slane %v9688, %v9694
        %v9696 = vcombine.low %v9197, %v9180
        %v9697 = vcombine.low %v9194, %v9196
        %v9698 = vcombine.low %v9198, %v9222
        %v9699 = vcombine.low %v9236, %v9244
        %v9701 = vunpack.c.l.s4 1966171168
        %v9702 = vunpack.c.0.s8 %v9701
        %v9703 = vlaneseq
        %v9704 = vshrl.u32 %v9703, 7
        %v9705 = vsub.s32 %v9702, %v9704
        %v9706 = vrot.slane %v9696, %v9705
        %v9708 = vunpack.c.l.s4 1966171168
        %v9709 = vunpack.c.0.s8 %v9708
        %v9710 = vlaneseq
        %v9711 = vshrl.u32 %v9710, 7
        %v9712 = vsub.s32 %v9709, %v9711
        %v9713 = vrot.slane %v9697, %v9712
        %v9715 = vunpack.c.l.s4 1966171168
        %v9716 = vunpack.c.0.s8 %v9715
        %v9717 = vlaneseq
        %v9718 = vshrl.u32 %v9717, 7
        %v9719 = vsub.s32 %v9716, %v9718
        %v9720 = vrot.slane %v9698, %v9719
        %v9722 = vunpack.c.l.s4 1966171168
        %v9723 = vunpack.c.0.s8 %v9722
        %v9724 = vlaneseq
        %v9725 = vshrl.u32 %v9724, 7
        %v9726 = vsub.s32 %v9723, %v9725
        %v9727 = vrot.slane %v9699, %v9726
        %v9728 = vcombine.low %v9706, %v9713
        %v9729 = vcombine.low %v9720, %v9727
        %v9731 = vunpack.c.l.s4 1966171168
        %v9732 = vunpack.c.0.s8 %v9731
        %v9733 = vlaneseq
        %v9734 = vshrl.u32 %v9733, 7
        %v9735 = vsub.s32 %v9732, %v9734
        %v9736 = vrot.slane %v9728, %v9735
        %v9738 = vunpack.c.l.s4 1966171168
        %v9739 = vunpack.c.0.s8 %v9738
        %v9740 = vlaneseq
        %v9741 = vshrl.u32 %v9740, 7
        %v9742 = vsub.s32 %v9739, %v9741
        %v9743 = vrot.slane %v9729, %v9742
        %v9744 = vcombine.low %v9736, %v9743
        %v9746 = vunpack.c.l.s4 1966171168
        %v9747 = vunpack.c.0.s8 %v9746
        %v9748 = vlaneseq
        %v9749 = vshrl.u32 %v9748, 7
        %v9750 = vsub.s32 %v9747, %v9749
        %v9751 = vrot.slane %v9246, %v9750
        %v9753 = vunpack.c.l.s4 1966171168
        %v9754 = vunpack.c.0.s8 %v9753
        %v9755 = vlaneseq
        %v9756 = vshrl.u32 %v9755, 7
        %v9757 = vsub.s32 %v9754, %v9756
        %v9758 = vrot.slane %v9751, %v9757
        %v9759 = vcombine.low %v9229, %v9243
        %v9760 = vcombine.low %v9245, %v9247
        %v9761 = vcombine.low %v9271, %v9285
        %v9762 = vcombine.low %v9293, %v9295
        %v9764 = vunpack.c.l.s4 1966171168
        %v9765 = vunpack.c.0.s8 %v9764
        %v9766 = vlaneseq
        %v9767 = vshrl.u32 %v9766, 7
        %v9768 = vsub.s32 %v9765, %v9767
        %v9769 = vrot.slane %v9759, %v9768
        %v9771 = vunpack.c.l.s4 1966171168
        %v9772 = vunpack.c.0.s8 %v9771
        %v9773 = vlaneseq
        %v9774 = vshrl.u32 %v9773, 7
        %v9775 = vsub.s32 %v9772, %v9774
        %v9776 = vrot.slane %v9760, %v9775
        %v9778 = vunpack.c.l.s4 1966171168
        %v9779 = vunpack.c.0.s8 %v9778
        %v9780 = vlaneseq
        %v9781 = vshrl.u32 %v9780, 7
        %v9782 = vsub.s32 %v9779, %v9781
        %v9783 = vrot.slane %v9761, %v9782
        %v9785 = vunpack.c.l.s4 1966171168
        %v9786 = vunpack.c.0.s8 %v9785
        %v9787 = vlaneseq
        %v9788 = vshrl.u32 %v9787, 7
        %v9789 = vsub.s32 %v9786, %v9788
        %v9790 = vrot.slane %v9762, %v9789
        %v9791 = vcombine.low %v9769, %v9776
        %v9792 = vcombine.low %v9783, %v9790
        %v9794 = vunpack.c.l.s4 1966171168
        %v9795 = vunpack.c.0.s8 %v9794
        %v9796 = vlaneseq
        %v9797 = vshrl.u32 %v9796, 7
        %v9798 = vsub.s32 %v9795, %v9797
        %v9799 = vrot.slane %v9791, %v9798
        %v9801 = vunpack.c.l.s4 1966171168
        %v9802 = vunpack.c.0.s8 %v9801
        %v9803 = vlaneseq
        %v9804 = vshrl.u32 %v9803, 7
        %v9805 = vsub.s32 %v9802, %v9804
        %v9806 = vrot.slane %v9792, %v9805
        %v9807 = vcombine.low %v9799, %v9806
        %v9809 = vunpack.c.l.s4 1966171168
        %v9810 = vunpack.c.0.s8 %v9809
        %v9811 = vlaneseq
        %v9812 = vshrl.u32 %v9811, 7
        %v9813 = vsub.s32 %v9810, %v9812
        %v9814 = vrot.slane %v9278, %v9813
        %v9816 = vunpack.c.l.s4 1966171168
        %v9817 = vunpack.c.0.s8 %v9816
        %v9818 = vlaneseq
        %v9819 = vshrl.u32 %v9818, 7
        %v9820 = vsub.s32 %v9817, %v9819
        %v9821 = vrot.slane %v9814, %v9820
        %v9822 = vcombine.low %v9292, %v9294
        %v9823 = vcombine.low %v9296, %v9320
        %v9824 = vcombine.low %v9334, %v9342
        %v9825 = vcombine.low %v9344, %v9327
        %v9827 = vunpack.c.l.s4 1966171168
        %v9828 = vunpack.c.0.s8 %v9827
        %v9829 = vlaneseq
        %v9830 = vshrl.u32 %v9829, 7
        %v9831 = vsub.s32 %v9828, %v9830
        %v9832 = vrot.slane %v9822, %v9831
        %v9834 = vunpack.c.l.s4 1966171168
        %v9835 = vunpack.c.0.s8 %v9834
        %v9836 = vlaneseq
        %v9837 = vshrl.u32 %v9836, 7
        %v9838 = vsub.s32 %v9835, %v9837
        %v9839 = vrot.slane %v9823, %v9838
        %v9841 = vunpack.c.l.s4 1966171168
        %v9842 = vunpack.c.0.s8 %v9841
        %v9843 = vlaneseq
        %v9844 = vshrl.u32 %v9843, 7
        %v9845 = vsub.s32 %v9842, %v9844
        %v9846 = vrot.slane %v9824, %v9845
        %v9848 = vunpack.c.l.s4 1966171168
        %v9849 = vunpack.c.0.s8 %v9848
        %v9850 = vlaneseq
        %v9851 = vshrl.u32 %v9850, 7
        %v9852 = vsub.s32 %v9849, %v9851
        %v9853 = vrot.slane %v9825, %v9852
        %v9854 = vcombine.low %v9832, %v9839
        %v9855 = vcombine.low %v9846, %v9853
        %v9857 = vunpack.c.l.s4 1966171168
        %v9858 = vunpack.c.0.s8 %v9857
        %v9859 = vlaneseq
        %v9860 = vshrl.u32 %v9859, 7
        %v9861 = vsub.s32 %v9858, %v9860
        %v9862 = vrot.slane %v9854, %v9861
        %v9864 = vunpack.c.l.s4 1966171168
        %v9865 = vunpack.c.0.s8 %v9864
        %v9866 = vlaneseq
        %v9867 = vshrl.u32 %v9866, 7
        %v9868 = vsub.s32 %v9865, %v9867
        %v9869 = vrot.slane %v9855, %v9868
        %v9870 = vcombine.low %v9862, %v9869
        %v9872 = vunpack.c.l.s4 1966171168
        %v9873 = vunpack.c.0.s8 %v9872
        %v9874 = vlaneseq
        %v9875 = vshrl.u32 %v9874, 7
        %v9876 = vsub.s32 %v9873, %v9875
        %v9877 = vrot.slane %v9341, %v9876
        %v9879 = vunpack.c.l.s4 1966171168
        %v9880 = vunpack.c.0.s8 %v9879
        %v9881 = vlaneseq
        %v9882 = vshrl.u32 %v9881, 7
        %v9883 = vsub.s32 %v9880, %v9882
        %v9884 = vrot.slane %v9877, %v9883
        %v9885 = vcombine.low %v9343, %v9345
        %v9886 = vcombine.low %v9369, %v9383
        %v9887 = vcombine.low %v9391, %v9393
        %v9888 = vcombine.low %v9376, %v9390
        %v9890 = vunpack.c.l.s4 1966171168
        %v9891 = vunpack.c.0.s8 %v9890
        %v9892 = vlaneseq
        %v9893 = vshrl.u32 %v9892, 7
        %v9894 = vsub.s32 %v9891, %v9893
        %v9895 = vrot.slane %v9885, %v9894
        %v9897 = vunpack.c.l.s4 1966171168
        %v9898 = vunpack.c.0.s8 %v9897
        %v9899 = vlaneseq
        %v9900 = vshrl.u32 %v9899, 7
        %v9901 = vsub.s32 %v9898, %v9900
        %v9902 = vrot.slane %v9886, %v9901
        %v9904 = vunpack.c.l.s4 1966171168
        %v9905 = vunpack.c.0.s8 %v9904
        %v9906 = vlaneseq
        %v9907 = vshrl.u32 %v9906, 7
        %v9908 = vsub.s32 %v9905, %v9907
        %v9909 = vrot.slane %v9887, %v9908
        %v9911 = vunpack.c.l.s4 1966171168
        %v9912 = vunpack.c.0.s8 %v9911
        %v9913 = vlaneseq
        %v9914 = vshrl.u32 %v9913, 7
        %v9915 = vsub.s32 %v9912, %v9914
        %v9916 = vrot.slane %v9888, %v9915
        %v9917 = vcombine.low %v9895, %v9902
        %v9918 = vcombine.low %v9909, %v9916
        %v9920 = vunpack.c.l.s4 1966171168
        %v9921 = vunpack.c.0.s8 %v9920
        %v9922 = vlaneseq
        %v9923 = vshrl.u32 %v9922, 7
        %v9924 = vsub.s32 %v9921, %v9923
        %v9925 = vrot.slane %v9917, %v9924
        %v9927 = vunpack.c.l.s4 1966171168
        %v9928 = vunpack.c.0.s8 %v9927
        %v9929 = vlaneseq
        %v9930 = vshrl.u32 %v9929, 7
        %v9931 = vsub.s32 %v9928, %v9930
        %v9932 = vrot.slane %v9918, %v9931
        %v9933 = vcombine.low %v9925, %v9932
        %v9935 = vunpack.c.l.s4 1966171168
        %v9936 = vunpack.c.0.s8 %v9935
        %v9937 = vlaneseq
        %v9938 = vshrl.u32 %v9937, 7
        %v9939 = vsub.s32 %v9936, %v9938
        %v9940 = vrot.slane %v9392, %v9939
        %v9942 = vunpack.c.l.s4 1966171168
        %v9943 = vunpack.c.0.s8 %v9942
        %v9944 = vlaneseq
        %v9945 = vshrl.u32 %v9944, 7
        %v9946 = vsub.s32 %v9943, %v9945
        %v9947 = vrot.slane %v9940, %v9946
        %v9948 = vcombine.low %v9394, %v9418
        %v9949 = vcombine.low %v9432, %v9440
        %v9950 = vcombine.low %v9442, %v9425
        %v9951 = vcombine.low %v9439, %v9441
        %v9953 = vunpack.c.l.s4 1966171168
        %v9954 = vunpack.c.0.s8 %v9953
        %v9955 = vlaneseq
        %v9956 = vshrl.u32 %v9955, 7
        %v9957 = vsub.s32 %v9954, %v9956
        %v9958 = vrot.slane %v9948, %v9957
        %v9960 = vunpack.c.l.s4 1966171168
        %v9961 = vunpack.c.0.s8 %v9960
        %v9962 = vlaneseq
        %v9963 = vshrl.u32 %v9962, 7
        %v9964 = vsub.s32 %v9961, %v9963
        %v9965 = vrot.slane %v9949, %v9964
        %v9967 = vunpack.c.l.s4 1966171168
        %v9968 = vunpack.c.0.s8 %v9967
        %v9969 = vlaneseq
        %v9970 = vshrl.u32 %v9969, 7
        %v9971 = vsub.s32 %v9968, %v9970
        %v9972 = vrot.slane %v9950, %v9971
        %v9974 = vunpack.c.l.s4 1966171168
        %v9975 = vunpack.c.0.s8 %v9974
        %v9976 = vlaneseq
        %v9977 = vshrl.u32 %v9976, 7
        %v9978 = vsub.s32 %v9975, %v9977
        %v9979 = vrot.slane %v9951, %v9978
        %v9980 = vcombine.low %v9958, %v9965
        %v9981 = vcombine.low %v9972, %v9979
        %v9983 = vunpack.c.l.s4 1966171168
        %v9984 = vunpack.c.0.s8 %v9983
        %v9985 = vlaneseq
        %v9986 = vshrl.u32 %v9985, 7
        %v9987 = vsub.s32 %v9984, %v9986
        %v9988 = vrot.slane %v9980, %v9987
        %v9990 = vunpack.c.l.s4 1966171168
        %v9991 = vunpack.c.0.s8 %v9990
        %v9992 = vlaneseq
        %v9993 = vshrl.u32 %v9992, 7
        %v9994 = vsub.s32 %v9991, %v9993
        %v9995 = vrot.slane %v9981, %v9994
        %v9996 = vcombine.low %v9988, %v9995
        %v9998 = vunpack.c.l.s4 1966171168
        %v9999 = vunpack.c.0.s8 %v9998
        %v10000 = vlaneseq
        %v10001 = vshrl.u32 %v10000, 7
        %v10002 = vsub.s32 %v9999, %v10001
        %v10003 = vrot.slane %v9443, %v10002
        %v10005 = vunpack.c.l.s4 1966171168
        %v10006 = vunpack.c.0.s8 %v10005
        %v10007 = vlaneseq
        %v10008 = vshrl.u32 %v10007, 7
        %v10009 = vsub.s32 %v10006, %v10008
        %v10010 = vrot.slane %v10003, %v10009
        %v10011 = vcombine.low %v9467, %v9481
        %v10012 = vcombine.low %v9489, %v9491
        %v10013 = vcombine.low %v9474, %v9488
        %v10014 = vcombine.low %v9490, %v9492
        %v10016 = vunpack.c.l.s4 1966171168
        %v10017 = vunpack.c.0.s8 %v10016
        %v10018 = vlaneseq
        %v10019 = vshrl.u32 %v10018, 7
        %v10020 = vsub.s32 %v10017, %v10019
        %v10021 = vrot.slane %v10011, %v10020
        %v10023 = vunpack.c.l.s4 1966171168
        %v10024 = vunpack.c.0.s8 %v10023
        %v10025 = vlaneseq
        %v10026 = vshrl.u32 %v10025, 7
        %v10027 = vsub.s32 %v10024, %v10026
        %v10028 = vrot.slane %v10012, %v10027
        %v10030 = vunpack.c.l.s4 1966171168
        %v10031 = vunpack.c.0.s8 %v10030
        %v10032 = vlaneseq
        %v10033 = vshrl.u32 %v10032, 7
        %v10034 = vsub.s32 %v10031, %v10033
        %v10035 = vrot.slane %v10013, %v10034
        %v10037 = vunpack.c.l.s4 1966171168
        %v10038 = vunpack.c.0.s8 %v10037
        %v10039 = vlaneseq
        %v10040 = vshrl.u32 %v10039, 7
        %v10041 = vsub.s32 %v10038, %v10040
        %v10042 = vrot.slane %v10014, %v10041
        %v10043 = vcombine.low %v10021, %v10028
        %v10044 = vcombine.low %v10035, %v10042
        %v10046 = vunpack.c.l.s4 1966171168
        %v10047 = vunpack.c.0.s8 %v10046
        %v10048 = vlaneseq
        %v10049 = vshrl.u32 %v10048, 7
        %v10050 = vsub.s32 %v10047, %v10049
        %v10051 = vrot.slane %v10043, %v10050
        %v10053 = vunpack.c.l.s4 1966171168
        %v10054 = vunpack.c.0.s8 %v10053
        %v10055 = vlaneseq
        %v10056 = vshrl.u32 %v10055, 7
        %v10057 = vsub.s32 %v10054, %v10056
        %v10058 = vrot.slane %v10044, %v10057
        %v10059 = vcombine.low %v10051, %v10058
        %v10061 = vunpack.c.l.s4 1966171168
        %v10062 = vunpack.c.0.s8 %v10061
        %v10063 = vlaneseq
        %v10064 = vshrl.u32 %v10063, 7
        %v10065 = vsub.s32 %v10062, %v10064
        %v10066 = vrot.slane %v9506, %v10065
        %v10068 = vunpack.c.l.s4 1966171168
        %v10069 = vunpack.c.0.s8 %v10068
        %v10070 = vlaneseq
        %v10071 = vshrl.u32 %v10070, 7
        %v10072 = vsub.s32 %v10069, %v10071
        %v10073 = vrot.slane %v10066, %v10072
        %v10092 = vsel %vm4757, %v9555, 0.0
        %v10093 = vsel %vm4758, %v9569, 0.0
        %v10094 = vsel %vm4757, %v9618, 0.0
        %v10095 = vsel %vm4758, %v9632, 0.0
        %v10096 = vsel %vm4757, %v9681, 0.0
        %v10097 = vsel %vm4758, %v9695, 0.0
        %v10098 = vsel %vm4757, %v9744, 0.0
        %v10099 = vsel %vm4758, %v9758, 0.0
        %v10100 = vsel %vm4757, %v9807, 0.0
        %v10101 = vsel %vm4758, %v9821, 0.0
        %v10102 = vsel %vm4757, %v9870, 0.0
        %v10103 = vsel %vm4758, %v9884, 0.0
        %v10104 = vsel %vm4757, %v9933, 0.0
        %v10105 = vsel %vm4758, %v9947, 0.0
        %v10106 = vsel %vm4757, %v9996, 0.0
        %v10107 = vsel %vm4758, %v10010, 0.0
        %v10108 = vsel %vm4755, %v10059, 0.0
        %v10109 = vsel %vm4756, %v10073, 0.0
        %10110 = vst.msk [vmem:[#allocation5] sm:$0xff] %vm1731, %v10092
        %10111 = vst.msk [vmem:[#allocation5 + $0x8] sm:$0x1] %vm2974, %v10093
        %10112 = vst.msk [vmem:[#allocation5 + $0x10] sm:$0xff] %vm1731, %v10094
        %10113 = vst.msk [vmem:[#allocation5 + $0x18] sm:$0x1] %vm2974, %v10095
        %10114 = vst.msk [vmem:[#allocation5 + $0x20] sm:$0xff] %vm1731, %v10096
        %10115 = vst.msk [vmem:[#allocation5 + $0x28] sm:$0x1] %vm2974, %v10097
        %10116 = vst.msk [vmem:[#allocation5 + $0x30] sm:$0xff] %vm1731, %v10098
        %10117 = vst.msk [vmem:[#allocation5 + $0x38] sm:$0x1] %vm2974, %v10099
        %10118 = vst.msk [vmem:[#allocation5 + $0x40] sm:$0xff] %vm1731, %v10100
        %10119 = vst.msk [vmem:[#allocation5 + $0x48] sm:$0x1] %vm2974, %v10101
        %10120 = vst.msk [vmem:[#allocation5 + $0x50] sm:$0xff] %vm1731, %v10102
        %10121 = vst.msk [vmem:[#allocation5 + $0x58] sm:$0x1] %vm2974, %v10103
        %10122 = vst.msk [vmem:[#allocation5 + $0x60] sm:$0xff] %vm1731, %v10104
        %10123 = vst.msk [vmem:[#allocation5 + $0x68] sm:$0x1] %vm2974, %v10105
        %10124 = vst.msk [vmem:[#allocation5 + $0x70] sm:$0xff] %vm1731, %v10106
        %10125 = vst.msk [vmem:[#allocation5 + $0x78] sm:$0x1] %vm2974, %v10107
        %10126 = vst.msk [vmem:[#allocation5 + $0x80] sm:$0xff] %vm1731, %v10108
        %10127 = vst.msk [vmem:[#allocation5 + $0x88] sm:$0x1] %vm2974, %v10109
        %v10128 = vld [vmem:[%s6] sm:$0xff]
        %v10129 = vld [vmem:[%s6 + $0x8] sm:$0x1]
        %v10130 = vld [vmem:[%s10] sm:$0xff]
        %v10131 = vld [vmem:[%s10 + $0x8] sm:$0x1]
        %v10132 = vld [vmem:[#allocation2] sm:$0xff]
        %v10133 = vld [vmem:[#allocation2 + $0x10] sm:$0xff]
        %v10134 = vld [vmem:[#allocation2 + $0x20] sm:$0xff]
        %v10135 = vld [vmem:[#allocation2 + $0x30] sm:$0xff]
        %v10136 = vld [vmem:[#allocation2 + $0x40] sm:$0xff]
        %v10137 = vld [vmem:[#allocation2 + $0x50] sm:$0xff]
        %v10138 = vld [vmem:[#allocation2 + $0x60] sm:$0xff]
        %v10139 = vld [vmem:[#allocation2 + $0x70] sm:$0xff]
        %v10140 = vlaneseq
        %v10141 = vshrl.u32 %v10140, 7
        %v10142 = vsub.s32 0, %v10141
        %v10143 = vrot.slane %v10128, %v10142
        %v10144 = vmul.f32 %v10132, %v10143
        %v10145 = vmul.f32 %v10133, %v10143
        %v10146 = vmul.f32 %v10134, %v10143
        %v10147 = vmul.f32 %v10135, %v10143
        %v10148 = vmul.f32 %v10136, %v10143
        %v10149 = vmul.f32 %v10137, %v10143
        %v10150 = vmul.f32 %v10138, %v10143
        %v10151 = vmul.f32 %v10139, %v10143
        %v10152 = vadd.f32 %v10144, 0.0
        %v10153 = vadd.f32 %v10145, 0.0
        %v10154 = vadd.f32 %v10146, 0.0
        %v10155 = vadd.f32 %v10147, 0.0
        %v10156 = vadd.f32 %v10148, 0.0
        %v10157 = vadd.f32 %v10149, 0.0
        %v10158 = vadd.f32 %v10150, 0.0
        %v10159 = vadd.f32 %v10151, 0.0
        %v10160 = vlaneseq
        %v10161 = vshrl.u32 %v10160, 7
        %v10162 = vsub.s32 0, %v10161
        %v10163 = vrot.slane %v10130, %v10162
        %v10164 = vmul.f32 %v530, %v10163
        %v10165 = vmul.f32 %v532, %v10163
        %v10166 = vmul.f32 %v534, %v10163
        %v10167 = vmul.f32 %v536, %v10163
        %v10168 = vmul.f32 %v538, %v10163
        %v10169 = vmul.f32 %v540, %v10163
        %v10170 = vmul.f32 %v542, %v10163
        %v10171 = vmul.f32 %v544, %v10163
        %v10172 = vadd.f32 %v10164, 0.0
        %v10173 = vadd.f32 %v10165, 0.0
        %v10174 = vadd.f32 %v10166, 0.0
        %v10175 = vadd.f32 %v10167, 0.0
        %v10176 = vadd.f32 %v10168, 0.0
        %v10177 = vadd.f32 %v10169, 0.0
        %v10178 = vadd.f32 %v10170, 0.0
        %v10179 = vadd.f32 %v10171, 0.0
        %v10180 = vld [vmem:[#allocation3] sm:$0xff]
        %v10181 = vld [vmem:[#allocation3 + $0x10] sm:$0xff]
        %v10182 = vld [vmem:[#allocation3 + $0x20] sm:$0xff]
        %v10183 = vld [vmem:[#allocation3 + $0x30] sm:$0xff]
        %v10184 = vld [vmem:[#allocation3 + $0x40] sm:$0xff]
        %v10185 = vld [vmem:[#allocation3 + $0x50] sm:$0xff]
        %v10186 = vld [vmem:[#allocation3 + $0x60] sm:$0xff]
        %v10187 = vld [vmem:[#allocation3 + $0x70] sm:$0xff]
        %v10188 = vlaneseq
        %v10189 = vshrl.u32 %v10188, 7
        %v10190 = vsub.s32 1, %v10189
        %v10191 = vrot.slane %v10128, %v10190
        %v10192 = vmul.f32 %v10180, %v10191
        %v10193 = vmul.f32 %v10181, %v10191
        %v10194 = vmul.f32 %v10182, %v10191
        %v10195 = vmul.f32 %v10183, %v10191
        %v10196 = vmul.f32 %v10184, %v10191
        %v10197 = vmul.f32 %v10185, %v10191
        %v10198 = vmul.f32 %v10186, %v10191
        %v10199 = vmul.f32 %v10187, %v10191
        %v10200 = vadd.f32 %v10152, %v10192
        %v10201 = vadd.f32 %v10153, %v10193
        %v10202 = vadd.f32 %v10154, %v10194
        %v10203 = vadd.f32 %v10155, %v10195
        %v10204 = vadd.f32 %v10156, %v10196
        %v10205 = vadd.f32 %v10157, %v10197
        %v10206 = vadd.f32 %v10158, %v10198
        %v10207 = vadd.f32 %v10159, %v10199
        %v10208 = vlaneseq
        %v10209 = vshrl.u32 %v10208, 7
        %v10210 = vsub.s32 1, %v10209
        %v10211 = vrot.slane %v10130, %v10210
        %v10212 = vmul.f32 %v548, %v10211
        %v10213 = vmul.f32 %v550, %v10211
        %v10214 = vmul.f32 %v552, %v10211
        %v10215 = vmul.f32 %v554, %v10211
        %v10216 = vmul.f32 %v556, %v10211
        %v10217 = vmul.f32 %v558, %v10211
        %v10218 = vmul.f32 %v560, %v10211
        %v10219 = vmul.f32 %v562, %v10211
        %v10220 = vadd.f32 %v10172, %v10212
        %v10221 = vadd.f32 %v10173, %v10213
        %v10222 = vadd.f32 %v10174, %v10214
        %v10223 = vadd.f32 %v10175, %v10215
        %v10224 = vadd.f32 %v10176, %v10216
        %v10225 = vadd.f32 %v10177, %v10217
        %v10226 = vadd.f32 %v10178, %v10218
        %v10227 = vadd.f32 %v10179, %v10219
        %v10228 = vld [vmem:[#allocation2 + $0x1] sm:$0xff]
        %v10229 = vld [vmem:[#allocation2 + $0x11] sm:$0xff]
        %v10230 = vld [vmem:[#allocation2 + $0x21] sm:$0xff]
        %v10231 = vld [vmem:[#allocation2 + $0x31] sm:$0xff]
        %v10232 = vld [vmem:[#allocation2 + $0x41] sm:$0xff]
        %v10233 = vld [vmem:[#allocation2 + $0x51] sm:$0xff]
        %v10234 = vld [vmem:[#allocation2 + $0x61] sm:$0xff]
        %v10235 = vld [vmem:[#allocation2 + $0x71] sm:$0xff]
        %v10236 = vlaneseq
        %v10237 = vshrl.u32 %v10236, 7
        %v10238 = vsub.s32 2, %v10237
        %v10239 = vrot.slane %v10128, %v10238
        %v10240 = vmul.f32 %v10228, %v10239
        %v10241 = vmul.f32 %v10229, %v10239
        %v10242 = vmul.f32 %v10230, %v10239
        %v10243 = vmul.f32 %v10231, %v10239
        %v10244 = vmul.f32 %v10232, %v10239
        %v10245 = vmul.f32 %v10233, %v10239
        %v10246 = vmul.f32 %v10234, %v10239
        %v10247 = vmul.f32 %v10235, %v10239
        %v10248 = vadd.f32 %v10200, %v10240
        %v10249 = vadd.f32 %v10201, %v10241
        %v10250 = vadd.f32 %v10202, %v10242
        %v10251 = vadd.f32 %v10203, %v10243
        %v10252 = vadd.f32 %v10204, %v10244
        %v10253 = vadd.f32 %v10205, %v10245
        %v10254 = vadd.f32 %v10206, %v10246
        %v10255 = vadd.f32 %v10207, %v10247
        %v10256 = vlaneseq
        %v10257 = vshrl.u32 %v10256, 7
        %v10258 = vsub.s32 2, %v10257
        %v10259 = vrot.slane %v10130, %v10258
        %v10260 = vmul.f32 %v530, %v10259
        %v10261 = vmul.f32 %v531, %v10259
        %v10262 = vmul.f32 %v532, %v10259
        %v10263 = vmul.f32 %v533, %v10259
        %v10264 = vmul.f32 %v534, %v10259
        %v10265 = vmul.f32 %v535, %v10259
        %v10266 = vmul.f32 %v536, %v10259
        %v10267 = vmul.f32 %v537, %v10259
        %v10268 = vmul.f32 %v538, %v10259
        %v10269 = vmul.f32 %v539, %v10259
        %v10270 = vmul.f32 %v540, %v10259
        %v10271 = vmul.f32 %v541, %v10259
        %v10272 = vmul.f32 %v542, %v10259
        %v10273 = vmul.f32 %v543, %v10259
        %v10274 = vmul.f32 %v544, %v10259
        %v10275 = vmul.f32 %v545, %v10259
        %vm10292 = vcmask 1046528
        %v10293 = vrot.slane %v10260, 1
        %v10294 = vrot.slane %v10261, 1
        %v10295 = vsel %vm10292, %v10293, %v10294
        %v10296 = vrot.slane %v10262, 1
        %v10297 = vrot.slane %v10263, 1
        %v10298 = vsel %vm10292, %v10296, %v10297
        %v10299 = vrot.slane %v10264, 1
        %v10300 = vrot.slane %v10265, 1
        %v10301 = vsel %vm10292, %v10299, %v10300
        %v10302 = vrot.slane %v10266, 1
        %v10303 = vrot.slane %v10267, 1
        %v10304 = vsel %vm10292, %v10302, %v10303
        %v10305 = vrot.slane %v10268, 1
        %v10306 = vrot.slane %v10269, 1
        %v10307 = vsel %vm10292, %v10305, %v10306
        %v10308 = vrot.slane %v10270, 1
        %v10309 = vrot.slane %v10271, 1
        %v10310 = vsel %vm10292, %v10308, %v10309
        %v10311 = vrot.slane %v10272, 1
        %v10312 = vrot.slane %v10273, 1
        %v10313 = vsel %vm10292, %v10311, %v10312
        %v10314 = vrot.slane %v10274, 1
        %v10315 = vrot.slane %v10275, 1
        %v10316 = vsel %vm10292, %v10314, %v10315
        %v10325 = vadd.f32 %v10220, %v10295
        %v10326 = vadd.f32 %v10221, %v10298
        %v10327 = vadd.f32 %v10222, %v10301
        %v10328 = vadd.f32 %v10223, %v10304
        %v10329 = vadd.f32 %v10224, %v10307
        %v10330 = vadd.f32 %v10225, %v10310
        %v10331 = vadd.f32 %v10226, %v10313
        %v10332 = vadd.f32 %v10227, %v10316
        %v10333 = vld [vmem:[#allocation4] sm:$0xff]
        %v10334 = vld [vmem:[#allocation4 + $0x10] sm:$0xff]
        %v10335 = vld [vmem:[#allocation4 + $0x20] sm:$0xff]
        %v10336 = vld [vmem:[#allocation4 + $0x30] sm:$0xff]
        %v10337 = vld [vmem:[#allocation4 + $0x40] sm:$0xff]
        %v10338 = vld [vmem:[#allocation4 + $0x50] sm:$0xff]
        %v10339 = vld [vmem:[#allocation4 + $0x60] sm:$0xff]
        %v10340 = vld [vmem:[#allocation4 + $0x70] sm:$0xff]
        %v10341 = vlaneseq
        %v10342 = vshrl.u32 %v10341, 7
        %v10343 = vsub.s32 3, %v10342
        %v10344 = vrot.slane %v10128, %v10343
        %v10345 = vmul.f32 %v10333, %v10344
        %v10346 = vmul.f32 %v10334, %v10344
        %v10347 = vmul.f32 %v10335, %v10344
        %v10348 = vmul.f32 %v10336, %v10344
        %v10349 = vmul.f32 %v10337, %v10344
        %v10350 = vmul.f32 %v10338, %v10344
        %v10351 = vmul.f32 %v10339, %v10344
        %v10352 = vmul.f32 %v10340, %v10344
        %v10353 = vadd.f32 %v10248, %v10345
        %v10354 = vadd.f32 %v10249, %v10346
        %v10355 = vadd.f32 %v10250, %v10347
        %v10356 = vadd.f32 %v10251, %v10348
        %v10357 = vadd.f32 %v10252, %v10349
        %v10358 = vadd.f32 %v10253, %v10350
        %v10359 = vadd.f32 %v10254, %v10351
        %v10360 = vadd.f32 %v10255, %v10352
        %v10361 = vlaneseq
        %v10362 = vshrl.u32 %v10361, 7
        %v10363 = vsub.s32 3, %v10362
        %v10364 = vrot.slane %v10130, %v10363
        %v10365 = vmul.f32 %v566, %v10364
        %v10366 = vmul.f32 %v568, %v10364
        %v10367 = vmul.f32 %v570, %v10364
        %v10368 = vmul.f32 %v572, %v10364
        %v10369 = vmul.f32 %v574, %v10364
        %v10370 = vmul.f32 %v576, %v10364
        %v10371 = vmul.f32 %v578, %v10364
        %v10372 = vmul.f32 %v580, %v10364
        %v10373 = vadd.f32 %v10325, %v10365
        %v10374 = vadd.f32 %v10326, %v10366
        %v10375 = vadd.f32 %v10327, %v10367
        %v10376 = vadd.f32 %v10328, %v10368
        %v10377 = vadd.f32 %v10329, %v10369
        %v10378 = vadd.f32 %v10330, %v10370
        %v10379 = vadd.f32 %v10331, %v10371
        %v10380 = vadd.f32 %v10332, %v10372
        %v10381 = vld [vmem:[#allocation5] sm:$0xff]
        %v10382 = vld [vmem:[#allocation5 + $0x10] sm:$0xff]
        %v10383 = vld [vmem:[#allocation5 + $0x20] sm:$0xff]
        %v10384 = vld [vmem:[#allocation5 + $0x30] sm:$0xff]
        %v10385 = vld [vmem:[#allocation5 + $0x40] sm:$0xff]
        %v10386 = vld [vmem:[#allocation5 + $0x50] sm:$0xff]
        %v10387 = vld [vmem:[#allocation5 + $0x60] sm:$0xff]
        %v10388 = vld [vmem:[#allocation5 + $0x70] sm:$0xff]
        %v10389 = vlaneseq
        %v10390 = vshrl.u32 %v10389, 7
        %v10391 = vsub.s32 4, %v10390
        %v10392 = vrot.slane %v10128, %v10391
        %v10393 = vmul.f32 %v10381, %v10392
        %v10394 = vmul.f32 %v10382, %v10392
        %v10395 = vmul.f32 %v10383, %v10392
        %v10396 = vmul.f32 %v10384, %v10392
        %v10397 = vmul.f32 %v10385, %v10392
        %v10398 = vmul.f32 %v10386, %v10392
        %v10399 = vmul.f32 %v10387, %v10392
        %v10400 = vmul.f32 %v10388, %v10392
        %v10401 = vadd.f32 %v10353, %v10393
        %v10402 = vadd.f32 %v10354, %v10394
        %v10403 = vadd.f32 %v10355, %v10395
        %v10404 = vadd.f32 %v10356, %v10396
        %v10405 = vadd.f32 %v10357, %v10397
        %v10406 = vadd.f32 %v10358, %v10398
        %v10407 = vadd.f32 %v10359, %v10399
        %v10408 = vadd.f32 %v10360, %v10400
        %v10409 = vlaneseq
        %v10410 = vshrl.u32 %v10409, 7
        %v10411 = vsub.s32 4, %v10410
        %v10412 = vrot.slane %v10130, %v10411
        %v10413 = vmul.f32 %v584, %v10412
        %v10414 = vmul.f32 %v586, %v10412
        %v10415 = vmul.f32 %v588, %v10412
        %v10416 = vmul.f32 %v590, %v10412
        %v10417 = vmul.f32 %v592, %v10412
        %v10418 = vmul.f32 %v594, %v10412
        %v10419 = vmul.f32 %v596, %v10412
        %v10420 = vmul.f32 %v598, %v10412
        %v10421 = vadd.f32 %v10373, %v10413
        %v10422 = vadd.f32 %v10374, %v10414
        %v10423 = vadd.f32 %v10375, %v10415
        %v10424 = vadd.f32 %v10376, %v10416
        %v10425 = vadd.f32 %v10377, %v10417
        %v10426 = vadd.f32 %v10378, %v10418
        %v10427 = vadd.f32 %v10379, %v10419
        %v10428 = vadd.f32 %v10380, %v10420
        %v10429 = vld [vmem:[#allocation4 + $0x1] sm:$0xff]
        %v10430 = vld [vmem:[#allocation4 + $0x11] sm:$0xff]
        %v10431 = vld [vmem:[#allocation4 + $0x21] sm:$0xff]
        %v10432 = vld [vmem:[#allocation4 + $0x31] sm:$0xff]
        %v10433 = vld [vmem:[#allocation4 + $0x41] sm:$0xff]
        %v10434 = vld [vmem:[#allocation4 + $0x51] sm:$0xff]
        %v10435 = vld [vmem:[#allocation4 + $0x61] sm:$0xff]
        %v10436 = vld [vmem:[#allocation4 + $0x71] sm:$0xff]
        %v10437 = vlaneseq
        %v10438 = vshrl.u32 %v10437, 7
        %v10439 = vsub.s32 5, %v10438
        %v10440 = vrot.slane %v10128, %v10439
        %v10441 = vmul.f32 %v10429, %v10440
        %v10442 = vmul.f32 %v10430, %v10440
        %v10443 = vmul.f32 %v10431, %v10440
        %v10444 = vmul.f32 %v10432, %v10440
        %v10445 = vmul.f32 %v10433, %v10440
        %v10446 = vmul.f32 %v10434, %v10440
        %v10447 = vmul.f32 %v10435, %v10440
        %v10448 = vmul.f32 %v10436, %v10440
        %v10449 = vadd.f32 %v10401, %v10441
        %v10450 = vadd.f32 %v10402, %v10442
        %v10451 = vadd.f32 %v10403, %v10443
        %v10452 = vadd.f32 %v10404, %v10444
        %v10453 = vadd.f32 %v10405, %v10445
        %v10454 = vadd.f32 %v10406, %v10446
        %v10455 = vadd.f32 %v10407, %v10447
        %v10456 = vadd.f32 %v10408, %v10448
        %v10457 = vlaneseq
        %v10458 = vshrl.u32 %v10457, 7
        %v10459 = vsub.s32 5, %v10458
        %v10460 = vrot.slane %v10130, %v10459
        %v10461 = vmul.f32 %v566, %v10460
        %v10462 = vmul.f32 %v567, %v10460
        %v10463 = vmul.f32 %v568, %v10460
        %v10464 = vmul.f32 %v569, %v10460
        %v10465 = vmul.f32 %v570, %v10460
        %v10466 = vmul.f32 %v571, %v10460
        %v10467 = vmul.f32 %v572, %v10460
        %v10468 = vmul.f32 %v573, %v10460
        %v10469 = vmul.f32 %v574, %v10460
        %v10470 = vmul.f32 %v575, %v10460
        %v10471 = vmul.f32 %v576, %v10460
        %v10472 = vmul.f32 %v577, %v10460
        %v10473 = vmul.f32 %v578, %v10460
        %v10474 = vmul.f32 %v579, %v10460
        %v10475 = vmul.f32 %v580, %v10460
        %v10476 = vmul.f32 %v581, %v10460
        %v10493 = vrot.slane %v10461, 1
        %v10494 = vrot.slane %v10462, 1
        %v10495 = vsel %vm10292, %v10493, %v10494
        %v10496 = vrot.slane %v10463, 1
        %v10497 = vrot.slane %v10464, 1
        %v10498 = vsel %vm10292, %v10496, %v10497
        %v10499 = vrot.slane %v10465, 1
        %v10500 = vrot.slane %v10466, 1
        %v10501 = vsel %vm10292, %v10499, %v10500
        %v10502 = vrot.slane %v10467, 1
        %v10503 = vrot.slane %v10468, 1
        %v10504 = vsel %vm10292, %v10502, %v10503
        %v10505 = vrot.slane %v10469, 1
        %v10506 = vrot.slane %v10470, 1
        %v10507 = vsel %vm10292, %v10505, %v10506
        %v10508 = vrot.slane %v10471, 1
        %v10509 = vrot.slane %v10472, 1
        %v10510 = vsel %vm10292, %v10508, %v10509
        %v10511 = vrot.slane %v10473, 1
        %v10512 = vrot.slane %v10474, 1
        %v10513 = vsel %vm10292, %v10511, %v10512
        %v10514 = vrot.slane %v10475, 1
        %v10515 = vrot.slane %v10476, 1
        %v10516 = vsel %vm10292, %v10514, %v10515
        %v10525 = vadd.f32 %v10421, %v10495
        %v10526 = vadd.f32 %v10422, %v10498
        %v10527 = vadd.f32 %v10423, %v10501
        %v10528 = vadd.f32 %v10424, %v10504
        %v10529 = vadd.f32 %v10425, %v10507
        %v10530 = vadd.f32 %v10426, %v10510
        %v10531 = vadd.f32 %v10427, %v10513
        %v10532 = vadd.f32 %v10428, %v10516
        %s10533 = scalar_lea.vmem [#allocation2], 16
        %v10534 = vld [vmem:[%s10533] sm:$0xff]
        %v10535 = vld [vmem:[%s10533 + $0x10] sm:$0xff]
        %v10536 = vld [vmem:[%s10533 + $0x20] sm:$0xff]
        %v10537 = vld [vmem:[%s10533 + $0x30] sm:$0xff]
        %v10538 = vld [vmem:[%s10533 + $0x40] sm:$0xff]
        %v10539 = vld [vmem:[%s10533 + $0x50] sm:$0xff]
        %v10540 = vld [vmem:[%s10533 + $0x60] sm:$0xff]
        %v10541 = vld [vmem:[%s10533 + $0x70] sm:$0xff]
        %v10542 = vlaneseq
        %v10543 = vshrl.u32 %v10542, 7
        %v10544 = vsub.s32 6, %v10543
        %v10545 = vrot.slane %v10128, %v10544
        %v10546 = vmul.f32 %v10534, %v10545
        %v10547 = vmul.f32 %v10535, %v10545
        %v10548 = vmul.f32 %v10536, %v10545
        %v10549 = vmul.f32 %v10537, %v10545
        %v10550 = vmul.f32 %v10538, %v10545
        %v10551 = vmul.f32 %v10539, %v10545
        %v10552 = vmul.f32 %v10540, %v10545
        %v10553 = vmul.f32 %v10541, %v10545
        %v10554 = vadd.f32 %v10449, %v10546
        %v10555 = vadd.f32 %v10450, %v10547
        %v10556 = vadd.f32 %v10451, %v10548
        %v10557 = vadd.f32 %v10452, %v10549
        %v10558 = vadd.f32 %v10453, %v10550
        %v10559 = vadd.f32 %v10454, %v10551
        %v10560 = vadd.f32 %v10455, %v10552
        %v10561 = vadd.f32 %v10456, %v10553
        %v10562 = vlaneseq
        %v10563 = vshrl.u32 %v10562, 7
        %v10564 = vsub.s32 6, %v10563
        %v10565 = vrot.slane %v10130, %v10564
        %v10566 = vmul.f32 %v532, %v10565
        %v10567 = vmul.f32 %v534, %v10565
        %v10568 = vmul.f32 %v536, %v10565
        %v10569 = vmul.f32 %v538, %v10565
        %v10570 = vmul.f32 %v540, %v10565
        %v10571 = vmul.f32 %v542, %v10565
        %v10572 = vmul.f32 %v544, %v10565
        %v10573 = vmul.f32 %v546, %v10565
        %v10574 = vadd.f32 %v10525, %v10566
        %v10575 = vadd.f32 %v10526, %v10567
        %v10576 = vadd.f32 %v10527, %v10568
        %v10577 = vadd.f32 %v10528, %v10569
        %v10578 = vadd.f32 %v10529, %v10570
        %v10579 = vadd.f32 %v10530, %v10571
        %v10580 = vadd.f32 %v10531, %v10572
        %v10581 = vadd.f32 %v10532, %v10573
        %s10582 = scalar_lea.vmem [#allocation3], 16
        %v10583 = vld [vmem:[%s10582] sm:$0xff]
        %v10584 = vld [vmem:[%s10582 + $0x10] sm:$0xff]
        %v10585 = vld [vmem:[%s10582 + $0x20] sm:$0xff]
        %v10586 = vld [vmem:[%s10582 + $0x30] sm:$0xff]
        %v10587 = vld [vmem:[%s10582 + $0x40] sm:$0xff]
        %v10588 = vld [vmem:[%s10582 + $0x50] sm:$0xff]
        %v10589 = vld [vmem:[%s10582 + $0x60] sm:$0xff]
        %v10590 = vld [vmem:[%s10582 + $0x70] sm:$0xff]
        %v10591 = vlaneseq
        %v10592 = vshrl.u32 %v10591, 7
        %v10593 = vsub.s32 7, %v10592
        %v10594 = vrot.slane %v10128, %v10593
        %v10595 = vmul.f32 %v10583, %v10594
        %v10596 = vmul.f32 %v10584, %v10594
        %v10597 = vmul.f32 %v10585, %v10594
        %v10598 = vmul.f32 %v10586, %v10594
        %v10599 = vmul.f32 %v10587, %v10594
        %v10600 = vmul.f32 %v10588, %v10594
        %v10601 = vmul.f32 %v10589, %v10594
        %v10602 = vmul.f32 %v10590, %v10594
        %v10603 = vadd.f32 %v10554, %v10595
        %v10604 = vadd.f32 %v10555, %v10596
        %v10605 = vadd.f32 %v10556, %v10597
        %v10606 = vadd.f32 %v10557, %v10598
        %v10607 = vadd.f32 %v10558, %v10599
        %v10608 = vadd.f32 %v10559, %v10600
        %v10609 = vadd.f32 %v10560, %v10601
        %v10610 = vadd.f32 %v10561, %v10602
        %v10611 = vlaneseq
        %v10612 = vshrl.u32 %v10611, 7
        %v10613 = vsub.s32 7, %v10612
        %v10614 = vrot.slane %v10130, %v10613
        %v10615 = vmul.f32 %v550, %v10614
        %v10616 = vmul.f32 %v552, %v10614
        %v10617 = vmul.f32 %v554, %v10614
        %v10618 = vmul.f32 %v556, %v10614
        %v10619 = vmul.f32 %v558, %v10614
        %v10620 = vmul.f32 %v560, %v10614
        %v10621 = vmul.f32 %v562, %v10614
        %v10622 = vmul.f32 %v564, %v10614
        %v10623 = vadd.f32 %v10574, %v10615
        %v10624 = vadd.f32 %v10575, %v10616
        %v10625 = vadd.f32 %v10576, %v10617
        %v10626 = vadd.f32 %v10577, %v10618
        %v10627 = vadd.f32 %v10578, %v10619
        %v10628 = vadd.f32 %v10579, %v10620
        %v10629 = vadd.f32 %v10580, %v10621
        %v10630 = vadd.f32 %v10581, %v10622
        %v10631 = vld [vmem:[%s10533 + $0x1] sm:$0xff]
        %v10632 = vld [vmem:[%s10533 + $0x11] sm:$0xff]
        %v10633 = vld [vmem:[%s10533 + $0x21] sm:$0xff]
        %v10634 = vld [vmem:[%s10533 + $0x31] sm:$0xff]
        %v10635 = vld [vmem:[%s10533 + $0x41] sm:$0xff]
        %v10636 = vld [vmem:[%s10533 + $0x51] sm:$0xff]
        %v10637 = vld [vmem:[%s10533 + $0x61] sm:$0xff]
        %v10638 = vld [vmem:[%s10533 + $0x71] sm:$0xff]
        %v10639 = vlaneseq
        %v10640 = vshrl.u32 %v10639, 7
        %v10641 = vsub.s32 0, %v10640
        %v10642 = vrot.slane %v10129, %v10641
        %v10643 = vmul.f32 %v10631, %v10642
        %v10644 = vmul.f32 %v10632, %v10642
        %v10645 = vmul.f32 %v10633, %v10642
        %v10646 = vmul.f32 %v10634, %v10642
        %v10647 = vmul.f32 %v10635, %v10642
        %v10648 = vmul.f32 %v10636, %v10642
        %v10649 = vmul.f32 %v10637, %v10642
        %v10650 = vmul.f32 %v10638, %v10642
        %v10651 = vadd.f32 %v10603, %v10643
        %v10652 = vadd.f32 %v10604, %v10644
        %v10653 = vadd.f32 %v10605, %v10645
        %v10654 = vadd.f32 %v10606, %v10646
        %v10655 = vadd.f32 %v10607, %v10647
        %v10656 = vadd.f32 %v10608, %v10648
        %v10657 = vadd.f32 %v10609, %v10649
        %v10658 = vadd.f32 %v10610, %v10650
        %v10659 = vlaneseq
        %v10660 = vshrl.u32 %v10659, 7
        %v10661 = vsub.s32 0, %v10660
        %v10662 = vrot.slane %v10131, %v10661
        %v10663 = vmul.f32 %v532, %v10662
        %v10664 = vmul.f32 %v533, %v10662
        %v10665 = vmul.f32 %v534, %v10662
        %v10666 = vmul.f32 %v535, %v10662
        %v10667 = vmul.f32 %v536, %v10662
        %v10668 = vmul.f32 %v537, %v10662
        %v10669 = vmul.f32 %v538, %v10662
        %v10670 = vmul.f32 %v539, %v10662
        %v10671 = vmul.f32 %v540, %v10662
        %v10672 = vmul.f32 %v541, %v10662
        %v10673 = vmul.f32 %v542, %v10662
        %v10674 = vmul.f32 %v543, %v10662
        %v10675 = vmul.f32 %v544, %v10662
        %v10676 = vmul.f32 %v545, %v10662
        %v10677 = vmul.f32 %v546, %v10662
        %v10678 = vmul.f32 %v547, %v10662
        %v10695 = vrot.slane %v10663, 1
        %v10696 = vrot.slane %v10664, 1
        %v10697 = vsel %vm10292, %v10695, %v10696
        %v10698 = vrot.slane %v10665, 1
        %v10699 = vrot.slane %v10666, 1
        %v10700 = vsel %vm10292, %v10698, %v10699
        %v10701 = vrot.slane %v10667, 1
        %v10702 = vrot.slane %v10668, 1
        %v10703 = vsel %vm10292, %v10701, %v10702
        %v10704 = vrot.slane %v10669, 1
        %v10705 = vrot.slane %v10670, 1
        %v10706 = vsel %vm10292, %v10704, %v10705
        %v10707 = vrot.slane %v10671, 1
        %v10708 = vrot.slane %v10672, 1
        %v10709 = vsel %vm10292, %v10707, %v10708
        %v10710 = vrot.slane %v10673, 1
        %v10711 = vrot.slane %v10674, 1
        %v10712 = vsel %vm10292, %v10710, %v10711
        %v10713 = vrot.slane %v10675, 1
        %v10714 = vrot.slane %v10676, 1
        %v10715 = vsel %vm10292, %v10713, %v10714
        %v10716 = vrot.slane %v10677, 1
        %v10717 = vrot.slane %v10678, 1
        %v10718 = vsel %vm10292, %v10716, %v10717
        %v10727 = vadd.f32 %v10623, %v10697
        %v10728 = vadd.f32 %v10624, %v10700
        %v10729 = vadd.f32 %v10625, %v10703
        %v10730 = vadd.f32 %v10626, %v10706
        %v10731 = vadd.f32 %v10627, %v10709
        %v10732 = vadd.f32 %v10628, %v10712
        %v10733 = vadd.f32 %v10629, %v10715
        %v10734 = vadd.f32 %v10630, %v10718
        %v10735 = vld [vmem:[%s7] sm:$0x1]
        %v10737 = vlaneseq
        %v10738 = vshrl.u32 %v10737, 7
        %v10739 = vsub.s32 0, %v10738
        %v10740 = vrot.slane %v10735, %v10739
        %v10742 = vadd.f32 %v10651, %v10740
        %v10743 = vadd.f32 %v10652, %v10740
        %v10744 = vadd.f32 %v10653, %v10740
        %v10745 = vadd.f32 %v10654, %v10740
        %v10746 = vadd.f32 %v10655, %v10740
        %v10747 = vadd.f32 %v10656, %v10740
        %v10748 = vadd.f32 %v10657, %v10740
        %v10749 = vadd.f32 %v10658, %v10740
        %v10750 = vld [vmem:[%s11] sm:$0x1]
        %v10752 = vlaneseq
        %v10753 = vshrl.u32 %v10752, 7
        %v10754 = vsub.s32 0, %v10753
        %v10755 = vrot.slane %v10750, %v10754
        %v10757 = vadd.f32 %v10727, %v10755
        %v10758 = vadd.f32 %v10728, %v10755
        %v10759 = vadd.f32 %v10729, %v10755
        %v10760 = vadd.f32 %v10730, %v10755
        %v10761 = vadd.f32 %v10731, %v10755
        %v10762 = vadd.f32 %v10732, %v10755
        %v10763 = vadd.f32 %v10733, %v10755
        %v10764 = vadd.f32 %v10734, %v10755
        %v10765 = vpack.c.bf16 %v10743, %v10742
        %v10766 = vpack.c.bf16 %v10745, %v10744
        %v10767 = vpack.c.bf16 %v10747, %v10746
        %v10768 = vpack.c.bf16 %v10749, %v10748
        %v10769 = vld [vmem:[%s8] sm:$0xf]
        %v10770 = vld [vmem:[%s8 + $0x4] sm:$0xf]
        %v10771 = vld [vmem:[%s8 + $0x8] sm:$0xf]
        %v10772 = vld [vmem:[%s8 + $0xc] sm:$0xf]
        %v10773 = vld [vmem:[%s9] sm:$0x1]
        %v10775 = vlaneseq
        %v10776 = vshrl.u32 %v10775, 7
        %v10777 = vsub.s32 0, %v10776
        %v10778 = vrot.slane %v10773, %v10777
        %v10784 = vunpack.c.l.b16 %v10769
        %v10785 = vunpack.c.l.b16 %v10770
        %v10786 = vunpack.c.l.b16 %v10771
        %v10787 = vunpack.c.l.b16 %v10772
        %v10788 = vpack.c.b16 %v10785, %v10784
        %v10789 = vpack.c.b16 %v10787, %v10786
        %v10793 = vsel %vm1731, %v10765, 0
        %v10796 = vsel %vm1731, %v10766, 0
        %v10799 = vsel %vm1731, %v10767, 0
        %v10802 = vsel %vm1731, %v10768, 0
        %10804 = vmatprep.subr.bf16.mxu0 0
        %10805 = vmatpush1.bf16.msra.mxu0 0
        %10806 = vmatprep.subr.bf16.mxu0 0
        %10807 = vmatpush1.bf16.msra.mxu0 0
        %10808 = vmatprep.subr.bf16.mxu0 0
        %10809 = vmatpush1.bf16.msra.mxu0 0
        %10810 = vmatprep.subr.bf16.mxu0 0
        %10811 = vmatpush1.bf16.msra.mxu0 0
        %10812 = vmatprep.subr.bf16.mxu0 0
        %10813 = vmatpush1.bf16.msra.mxu0 0
        %10814 = vmatprep.subr.bf16.mxu0 0
        %10815 = vmatpush1.bf16.msra.mxu0 0
        %10816 = vmatprep.subr.bf16.mxu0 0
        %10817 = vmatpush1.bf16.msra.mxu0 %v10789
        %10818 = vmatprep.subr.bf16.mxu0 0
        %10819 = vmatpush1.bf16.msra.mxu0 %v10788
        %10820 = vmatprep.subr.bf16.mxu0 0
        %10821 = vmatpush2.bf16.msra.mxu0 0
        %10822 = vmatprep.subr.bf16.mxu0 0
        %10823 = vmatpush2.bf16.msra.mxu0 0
        %10824 = vmatprep.subr.bf16.mxu0 0
        %10825 = vmatpush2.bf16.msra.mxu0 0
        %10826 = vmatprep.subr.bf16.mxu0 0
        %10827 = vmatpush2.bf16.msra.mxu0 0
        %10828 = vmatprep.subr.bf16.mxu0 0
        %10829 = vmatpush2.bf16.msra.mxu0 0
        %10830 = vmatprep.subr.bf16.mxu0 0
        %10831 = vmatpush2.bf16.msra.mxu0 0
        %10832 = vmatprep.subr.bf16.mxu0 0
        %10833 = vmatpush2.bf16.msra.mxu0 0
        %10834 = vmatprep.subr.bf16.mxu0 0
        %10835 = vmatpush2.bf16.msra.mxu0 0
        %10836 = vmatprep.mubr.bf16.mxu0 0
        %10837 = vmatmul.mubr.bf16.gmra.mxu0 %v10793
        %v10838 = vpop.f32.mrf.mxu0
        %v10839 = vadd.f32 %v10778, %v10838
        %v10840 = vpop.f32.mrf.mxu0
        %v10841 = vpop.f32.mrf.mxu0
        %v10842 = vadd.f32 %v10778, %v10841
        %v10843 = vpop.f32.mrf.mxu0
        %10844 = vmatprep.mubr.bf16.mxu0 0
        %10845 = vmatmul.mubr.bf16.gmra.mxu0 %v10796
        %v10846 = vpop.f32.mrf.mxu0
        %v10847 = vadd.f32 %v10778, %v10846
        %v10848 = vpop.f32.mrf.mxu0
        %v10849 = vpop.f32.mrf.mxu0
        %v10850 = vadd.f32 %v10778, %v10849
        %v10851 = vpop.f32.mrf.mxu0
        %10852 = vmatprep.mubr.bf16.mxu0 0
        %10853 = vmatmul.mubr.bf16.gmra.mxu0 %v10799
        %v10854 = vpop.f32.mrf.mxu0
        %v10855 = vadd.f32 %v10778, %v10854
        %v10856 = vpop.f32.mrf.mxu0
        %v10857 = vpop.f32.mrf.mxu0
        %v10858 = vadd.f32 %v10778, %v10857
        %v10859 = vpop.f32.mrf.mxu0
        %10860 = vmatprep.mubr.bf16.mxu0 0
        %10861 = vmatmul.mubr.bf16.gmra.mxu0 %v10802
        %v10862 = vpop.f32.mrf.mxu0
        %v10863 = vadd.f32 %v10778, %v10862
        %v10864 = vpop.f32.mrf.mxu0
        %v10865 = vpop.f32.mrf.mxu0
        %v10866 = vadd.f32 %v10778, %v10865
        %v10867 = vpop.f32.mrf.mxu0
        %10868 = vdwg.mxu0
        %v10869 = vmax.f32 %v10839, 0.0
        %v10870 = vmax.f32 %v10842, 0.0
        %v10871 = vmax.f32 %v10847, 0.0
        %v10872 = vmax.f32 %v10850, 0.0
        %v10873 = vmax.f32 %v10855, 0.0
        %v10874 = vmax.f32 %v10858, 0.0
        %v10875 = vmax.f32 %v10863, 0.0
        %v10876 = vmax.f32 %v10866, 0.0
        %v10877 = vpack.c.bf16 %v10758, %v10757
        %v10878 = vpack.c.bf16 %v10760, %v10759
        %v10879 = vpack.c.bf16 %v10762, %v10761
        %v10880 = vpack.c.bf16 %v10764, %v10763
        %v10881 = vld [vmem:[%s12] sm:$0xf]
        %v10882 = vld [vmem:[%s12 + $0x4] sm:$0xf]
        %v10883 = vld [vmem:[%s12 + $0x8] sm:$0xf]
        %v10884 = vld [vmem:[%s12 + $0xc] sm:$0xf]
        %v10885 = vld [vmem:[%s13] sm:$0x1]
        %v10887 = vlaneseq
        %v10888 = vshrl.u32 %v10887, 7
        %v10889 = vsub.s32 0, %v10888
        %v10890 = vrot.slane %v10885, %v10889
        %v10896 = vunpack.c.l.b16 %v10881
        %v10897 = vunpack.c.l.b16 %v10882
        %v10898 = vunpack.c.l.b16 %v10883
        %v10899 = vunpack.c.l.b16 %v10884
        %v10900 = vpack.c.b16 %v10897, %v10896
        %v10901 = vpack.c.b16 %v10899, %v10898
        %v10905 = vsel %vm1731, %v10877, 0
        %v10908 = vsel %vm1731, %v10878, 0
        %v10911 = vsel %vm1731, %v10879, 0
        %v10914 = vsel %vm1731, %v10880, 0
        %10916 = vmatprep.subr.bf16.mxu0 0
        %10917 = vmatpush1.bf16.msra.mxu0 0
        %10918 = vmatprep.subr.bf16.mxu0 0
        %10919 = vmatpush1.bf16.msra.mxu0 0
        %10920 = vmatprep.subr.bf16.mxu0 0
        %10921 = vmatpush1.bf16.msra.mxu0 0
        %10922 = vmatprep.subr.bf16.mxu0 0
        %10923 = vmatpush1.bf16.msra.mxu0 0
        %10924 = vmatprep.subr.bf16.mxu0 0
        %10925 = vmatpush1.bf16.msra.mxu0 0
        %10926 = vmatprep.subr.bf16.mxu0 0
        %10927 = vmatpush1.bf16.msra.mxu0 0
        %10928 = vmatprep.subr.bf16.mxu0 0
        %10929 = vmatpush1.bf16.msra.mxu0 %v10901
        %10930 = vmatprep.subr.bf16.mxu0 0
        %10931 = vmatpush1.bf16.msra.mxu0 %v10900
        %10932 = vmatprep.subr.bf16.mxu0 0
        %10933 = vmatpush2.bf16.msra.mxu0 0
        %10934 = vmatprep.subr.bf16.mxu0 0
        %10935 = vmatpush2.bf16.msra.mxu0 0
        %10936 = vmatprep.subr.bf16.mxu0 0
        %10937 = vmatpush2.bf16.msra.mxu0 0
        %10938 = vmatprep.subr.bf16.mxu0 0
        %10939 = vmatpush2.bf16.msra.mxu0 0
        %10940 = vmatprep.subr.bf16.mxu0 0
        %10941 = vmatpush2.bf16.msra.mxu0 0
        %10942 = vmatprep.subr.bf16.mxu0 0
        %10943 = vmatpush2.bf16.msra.mxu0 0
        %10944 = vmatprep.subr.bf16.mxu0 0
        %10945 = vmatpush2.bf16.msra.mxu0 0
        %10946 = vmatprep.subr.bf16.mxu0 0
        %10947 = vmatpush2.bf16.msra.mxu0 0
        %10948 = vmatprep.mubr.bf16.mxu0 0
        %10949 = vmatmul.mubr.bf16.gmra.mxu0 %v10905
        %v10950 = vpop.f32.mrf.mxu0
        %v10951 = vadd.f32 %v10890, %v10950
        %v10952 = vpop.f32.mrf.mxu0
        %v10953 = vpop.f32.mrf.mxu0
        %v10954 = vadd.f32 %v10890, %v10953
        %v10955 = vpop.f32.mrf.mxu0
        %10956 = vmatprep.mubr.bf16.mxu0 0
        %10957 = vmatmul.mubr.bf16.gmra.mxu0 %v10908
        %v10958 = vpop.f32.mrf.mxu0
        %v10959 = vadd.f32 %v10890, %v10958
        %v10960 = vpop.f32.mrf.mxu0
        %v10961 = vpop.f32.mrf.mxu0
        %v10962 = vadd.f32 %v10890, %v10961
        %v10963 = vpop.f32.mrf.mxu0
        %10964 = vmatprep.mubr.bf16.mxu0 0
        %10965 = vmatmul.mubr.bf16.gmra.mxu0 %v10911
        %v10966 = vpop.f32.mrf.mxu0
        %v10967 = vadd.f32 %v10890, %v10966
        %v10968 = vpop.f32.mrf.mxu0
        %v10969 = vpop.f32.mrf.mxu0
        %v10970 = vadd.f32 %v10890, %v10969
        %v10971 = vpop.f32.mrf.mxu0
        %10972 = vmatprep.mubr.bf16.mxu0 0
        %10973 = vmatmul.mubr.bf16.gmra.mxu0 %v10914
        %v10974 = vpop.f32.mrf.mxu0
        %v10975 = vadd.f32 %v10890, %v10974
        %v10976 = vpop.f32.mrf.mxu0
        %v10977 = vpop.f32.mrf.mxu0
        %v10978 = vadd.f32 %v10890, %v10977
        %v10979 = vpop.f32.mrf.mxu0
        %10980 = vdwg.mxu0
        %v10981 = vmax.f32 %v10951, 0.0
        %v10982 = vmax.f32 %v10954, 0.0
        %v10983 = vmax.f32 %v10959, 0.0
        %v10984 = vmax.f32 %v10962, 0.0
        %v10985 = vmax.f32 %v10967, 0.0
        %v10986 = vmax.f32 %v10970, 0.0
        %v10987 = vmax.f32 %v10975, 0.0
        %v10988 = vmax.f32 %v10978, 0.0
        %10997 = vrot.lane.b32.xlu0 %v10869, 32
        %v10998 = vpop.permute.xlu0 %10997
        %10999 = vrot.lane.b32.xlu0 %v10870, 32
        %v11000 = vpop.permute.xlu0 %10999
        %11001 = vrot.lane.b32.xlu0 %v10871, 32
        %v11002 = vpop.permute.xlu0 %11001
        %11003 = vrot.lane.b32.xlu0 %v10872, 32
        %v11004 = vpop.permute.xlu0 %11003
        %11005 = vrot.lane.b32.xlu0 %v10873, 32
        %v11006 = vpop.permute.xlu0 %11005
        %11007 = vrot.lane.b32.xlu0 %v10874, 32
        %v11008 = vpop.permute.xlu0 %11007
        %11009 = vrot.lane.b32.xlu0 %v10875, 32
        %v11010 = vpop.permute.xlu0 %11009
        %11011 = vrot.lane.b32.xlu0 %v10876, 32
        %v11012 = vpop.permute.xlu0 %11011
        %v11021 = vsel %vm1731, %v10981, %v10998
        %v11022 = vsel %vm1731, %v10982, %v11000
        %v11023 = vsel %vm1731, %v10983, %v11002
        %v11024 = vsel %vm1731, %v10984, %v11004
        %v11025 = vsel %vm1731, %v10985, %v11006
        %v11026 = vsel %vm1731, %v10986, %v11008
        %v11027 = vsel %vm1731, %v10987, %v11010
        %v11028 = vsel %vm1731, %v10988, %v11012
        %vm11029 = vcmask 523264
        %11030 = vst.msk [vmem:[%s505] sm:$0xff] %vm11029, %v11021
        %11031 = vst.msk [vmem:[%s505 + $0x8] sm:$0xff] %vm11029, %v11022
        %11032 = vst.msk [vmem:[%s505 + $0x10] sm:$0xff] %vm11029, %v11023
        %11033 = vst.msk [vmem:[%s505 + $0x18] sm:$0xff] %vm11029, %v11024
        %11034 = vst.msk [vmem:[%s505 + $0x20] sm:$0xff] %vm11029, %v11025
        %11035 = vst.msk [vmem:[%s505 + $0x28] sm:$0xff] %vm11029, %v11026
        %11036 = vst.msk [vmem:[%s505 + $0x30] sm:$0xff] %vm11029, %v11027
        %11037 = vst.msk [vmem:[%s505 + $0x38] sm:$0xff] %vm11029, %v11028
        %s11038 = sand.u32 %s350, 1
        %s11039 = scalar_lea.sflag [#allocation7], %s11038
        %s11040 = sand.u32 %s350, 1
        %s11041 = smul.addr %s11040, 64
        %s11042 = scalar_lea.vmem [#allocation6], %s11041
        // Predicated region
        $region77: #{_lambda_.1} parent=75 // pred_check
          %p11043 = pneg %p360
        $region78: #{_lambda_.1} parent=75 // pred_check_branch
          %11045 = sbr.rel (%p11043) target = $region80
        $region79: #{_lambda_.1} parent=75 // pred_region
          %s11047 = ssub.s32 1024, 1024
          %11048 = vsyncadd %s11039, %s11047
          %s11049 = smul.addr %s28, 8
          %s11050 = smul.addr %s11049, 128
          %s11051 = scalar_lea.hbm %s14, %s11050
          %s11052 = sshll.u32 %s11042, 4
          %s11053 = int_to_ptr.vmem [resolvable:$true] %s11052
          %11058 = dma.vmem_to_hbm [thread:$0]  %s11053, 1024, %s11051, %s11039, 128, 128, 8
        $region80: #{_lambda_.1} parent=75 // pred_fallthru
          _
      $region76: #{_lambda_.1} parent=5 // pred_fallthru
        _
      %p11059 = scmp.le.s32.totalorder 2, %s23
      // Predicated region
      $region81: #{_lambda_.1} parent=5 // pred_check
        %p11060 = pneg %p11059
      $region82: #{_lambda_.1} parent=5 // pred_check_branch
        %11062 = sbr.rel (%p11060) target = $region84
      $region83: #{_lambda_.1} parent=5 // pred_region
        %s11063 = ssub.s32 %s23, 2
        // Predicated region
        $region85: #{_lambda_.1} parent=83 // pred_check
          %p11064 = pneg %p366
        $region86: #{_lambda_.1} parent=83 // pred_check_branch
          %11066 = sbr.rel (%p11064) target = $region88
        $region87: #{_lambda_.1} parent=83 // pred_region
          %s11067 = sand.u32 %s351, 1
          %s11068 = scalar_lea.sflag [#allocation7], %s11067
          %s11069 = sand.u32 %s351, 1
          %s11070 = smul.addr %s11069, 64
          %s11071 = scalar_lea.vmem [#allocation6], %s11070
          %11072 = dma.done %s11068, 1024
        $region88: #{_lambda_.1} parent=83 // pred_fallthru
          _
      $region84: #{_lambda_.1} parent=5 // pred_fallthru
        _
    $region6: #{_lambda_.1} parent=1 // loop_footer
      %s27 = sadd.s32 1, %s23
    $region7: #{_lambda_.1} parent=1 // loop_footer_branch
      %22 = sbr.rel target = $region3
    $region8: #{_lambda_.1} parent=1 // loop_exit
      _
    %11073 = vsyncpa [#allocation7], 1
    %s11074 = scalar_lea.sflag [#allocation7], 1
    %11075 = vsyncpa %s11074, 1

</llo_original>
